<compile_context>
chip_gen: v6e
topology: v6e:2x2x1
jax: 0.10.0
libtpu: 0.0.40
codegen_flags: <defaults>
</compile_context>

<pallas_src>
from functools import partial

import numpy as np

import jax
import jax.numpy as jnp
from jax import lax
from jax.experimental import pallas as pl
from jax.experimental.pallas import tpu as pltpu

_EPS = 1e-5

# Images per conv-kernel grid step.  Trades O(B^2) block-diagonal row-select
# FLOPs against MXU M-fill / per-step overhead; 8 keeps the overhead ~16% while
# giving M=152-256 on the dominant matmuls (also a perfect fit for v5e's
# 128-row MXU and v7x's smaller VMEM).
B_TILE = 8


# ----------------------------- Pallas kernels ------------------------------

def _shift_up(a, d):
    """a[r] <- a[r+d], zero fill at the bottom.

    Cross-image rows produced by the shift are junk and are always dropped by
    the block-diagonal row-selection matmuls, so shifting the whole batched
    slab at once is exact for every valid output row.
    """
    if d == 0:
        return a
    z = jnp.zeros((d, a.shape[1]), a.dtype)
    return jnp.concatenate([a[d:], z], axis=0)


def conv_stack_kernel(x_ref, w1_ref, sh1_ref, sel1_ref, g1_ref,
                      w2_ref, sh2_ref, sel2_ref, g2_ref, o_ref):
    """Fused conv1+BN+ReLU+pool1 -> conv2+BN+ReLU+pool2 for B_TILE images.

    x_ref:   (B*32, 32)  bf16   zero-padded 32x32 images stacked along rows
    o_ref:   (B*8, 256)  bf16   pooled layer-2 features (8 rows x 8*32 lanes)
    """
    X = x_ref[...]                                          # (B*32, 32) bf16

    # ---- layer 1: conv(3x3,1->16) + folded BN + ReLU (one K=96 matmul) -----
    xcat = jnp.concatenate([X, _shift_up(X, 1), _shift_up(X, 2)], axis=1)
    y1 = jnp.dot(xcat, w1_ref[...], preferred_element_type=jnp.float32)
    y1 = jnp.maximum(y1 + sh1_ref[...], 0.0).astype(jnp.bfloat16)  # (B*32,480)
    # valid conv rows per image: h = 0..29; h = 30,31 are junk.

    # ---- pool1 (2x2/2): row max -> block-diag row select (+row pad) --------
    r1 = jnp.maximum(y1, _shift_up(y1, 1))                  # pooled at even h
    l2rows = jnp.dot(g1_ref[...], r1,
                     preferred_element_type=jnp.float32).astype(jnp.bfloat16)
    # l2rows: (B*19, 480), per image [0,0, pooled rows 0..14, 0, 0].
    # even/odd column select (zero col padding folded into sel1)
    l2 = jnp.maximum(
        jnp.dot(l2rows, sel1_ref[0], preferred_element_type=jnp.float32),
        jnp.dot(l2rows, sel1_ref[1], preferred_element_type=jnp.float32),
    ).astype(jnp.bfloat16)                                  # (B*19, 304)

    # ---- layer 2: conv(3x3,16->32) + folded BN + ReLU (3 K=304 matmuls) ----
    acc = jnp.dot(l2, w2_ref[0], preferred_element_type=jnp.float32)
    acc = acc + jnp.dot(_shift_up(l2, 1), w2_ref[1],
                        preferred_element_type=jnp.float32)
    acc = acc + jnp.dot(_shift_up(l2, 2), w2_ref[2],
                        preferred_element_type=jnp.float32)
    y2 = jnp.maximum(acc + sh2_ref[...], 0.0).astype(jnp.bfloat16)  # (B*19,544)
    # valid conv rows per image: h = 0..16; h = 17,18 are junk.

    # ---- pool2 (2x2/2, floor): row max -> block-diag row select ------------
    r2 = jnp.maximum(y2, _shift_up(y2, 1))
    r2rows = jnp.dot(g2_ref[...], r2,
                     preferred_element_type=jnp.float32).astype(jnp.bfloat16)
    feat = jnp.maximum(
        jnp.dot(r2rows, sel2_ref[0], preferred_element_type=jnp.float32),
        jnp.dot(r2rows, sel2_ref[1], preferred_element_type=jnp.float32),
    )                                                       # (B*8, 256)
    o_ref[...] = feat.astype(jnp.bfloat16)


def mlp_kernel(x_ref, w1_ref, b1_ref, w2_ref, b2_ref, w3_ref, b3_ref, o_ref):
    """Linear(2048,64)+ReLU -> Linear(64,32)+ReLU -> Linear(32,128-padded)."""
    h = jnp.dot(x_ref[...], w1_ref[...],
                preferred_element_type=jnp.float32) + b1_ref[...]
    h = jnp.maximum(h, 0.0).astype(jnp.bfloat16)
    h = jnp.dot(h, w2_ref[...],
                preferred_element_type=jnp.float32) + b2_ref[...]
    h = jnp.maximum(h, 0.0).astype(jnp.bfloat16)
    o_ref[...] = jnp.dot(h, w3_ref[...],
                         preferred_element_type=jnp.float32) + b3_ref[...]


# --------------------------- parameter packing ------------------------------

def _make_big_conv_weight(w_oihw, bn_scale, w_pad):
    """Block-banded weight turning a 3x3 conv into kh row-slab matmuls.

    Activations are laid out as (H_pad, W_pad*Cin); the conv output is
    (Ho, Wo*Cout) with
      big[di, (j+dj)*Cin + ci, j*Cout + co] = w[co, ci, di, dj] * bn_scale[co].
    """
    cout, cin, kh, kw = w_oihw.shape
    wo = w_pad - (kw - 1)
    big = np.zeros((kh, w_pad * cin, wo * cout), np.float32)
    for di in range(kh):
        for dj in range(kw):
            blk = w_oihw[:, :, di, dj].T * bn_scale[None, :]      # (cin, cout)
            for j in range(wo):
                big[di, (j + dj) * cin:(j + dj + 1) * cin,
                    j * cout:(j + 1) * cout] += blk
    return big


def _make_col_pool_mat(wo, c, col_pad):
    """0/1 matrices (2, wo*c, (wo//2 + 2*col_pad)*c) picking even/odd W
    positions; zero column padding for the next conv is built in."""
    wp = wo // 2
    sel = np.zeros((2, wo * c, (wp + 2 * col_pad) * c), np.float32)
    for j in range(wp):
        for ch in range(c):
            sel[0, (2 * j) * c + ch, (col_pad + j) * c + ch] = 1.0
            sel[1, (2 * j + 1) * c + ch, (col_pad + j) * c + ch] = 1.0
    return sel


def _make_row_pool_mat(b, in_rows, n_pairs, row_pad):
    """Block-diagonal 0/1 matrix (b*(n_pairs+2*row_pad), b*in_rows): for each
    image block, picks the even (already row-maxed) rows and inserts row_pad
    zero rows above/below (next conv's zero row padding for free)."""
    out_rows = n_pairs + 2 * row_pad
    g = np.zeros((b * out_rows, b * in_rows), np.float32)
    for i in range(b):
        for p in range(n_pairs):
            g[i * out_rows + row_pad + p, i * in_rows + 2 * p] = 1.0
    return g


def init_params(num_classes=10, seed=42):
    """Random weights (PyTorch layouts) + folded/packed Pallas kernel params."""
    keys = jax.random.split(jax.random.PRNGKey(seed), 5)
    sc = 0.1

    def rand(key, shape):
        return sc * jax.random.normal(key, shape, jnp.float32)

    def linear(key, fin, fout):
        kw_, kb_ = jax.random.split(key)
        return rand(kw_, (fin, fout)), rand(kb_, (1, fout))

    k1w, k1b = jax.random.split(keys[0])
    k2w, k2b = jax.random.split(keys[1])
    raw = {
        "w1": rand(k1w, (16, 1, 3, 3)), "b1": rand(k1b, (16,)),   # OIHW
        "w2": rand(k2w, (32, 16, 3, 3)), "b2": rand(k2b, (32,)),
    }
    raw["mw1"], raw["mb1"] = linear(keys[2], 8 * 8 * 32, 64)  # rows: NCHW flatten
    raw["mw2"], raw["mb2"] = linear(keys[3], 64, 32)
    raw["mw3"], raw["mb3"] = linear(keys[4], 32, num_classes)

    # BatchNorm2d eval with init running stats: gamma=1, beta=0, mean=0, var=1.
    def conv_pack(w, b, cout, w_pad):
        gamma = np.ones((cout,), np.float32)
        beta = np.zeros((cout,), np.float32)
        mean = np.zeros((cout,), np.float32)
        var = np.ones((cout,), np.float32)
        s = gamma / np.sqrt(var + _EPS)                    # BN scale
        shift = beta - mean * s + np.asarray(b) * s        # conv bias folded in
        big = _make_big_conv_weight(np.asarray(w), s, w_pad)
        wo = big.shape[2] // cout
        shift_t = np.tile(shift, wo)[None, :]              # (1, Wo*Cout)
        return big, np.asarray(shift_t, np.float32)

    params = {}
    # layer1: 28 -> pad 2 -> 32, conv -> 30, pool -> 15 (re-padded to 19).
    big1, sh1 = conv_pack(raw["w1"], raw["b1"], 16, 32)        # (3,32,480)
    params["w1cat"] = jnp.asarray(big1.reshape(3 * 32, 480), jnp.bfloat16)
    params["shift1"] = jnp.asarray(sh1, jnp.float32)
    # layer2: 19 (pre-padded) -> conv -> 17, pool -> 8 (floor mode).
    big2, sh2 = conv_pack(raw["w2"], raw["b2"], 32, 19)        # (3,304,544)
    params["w2big"] = jnp.asarray(big2, jnp.bfloat16)
    params["shift2"] = jnp.asarray(sh2, jnp.float32)

    # Pooling matrices (0/1 -> exact in bf16).
    params["sel1"] = jnp.asarray(_make_col_pool_mat(30, 16, col_pad=2),
                                 jnp.bfloat16)                 # (2,480,304)
    params["sel2"] = jnp.asarray(_make_col_pool_mat(17, 32, col_pad=0),
                                 jnp.bfloat16)                 # (2,544,256)
    params["g1"] = jnp.asarray(
        _make_row_pool_mat(B_TILE, 32, 15, row_pad=2), jnp.bfloat16)  # (B*19,B*32)
    params["g2"] = jnp.asarray(
        _make_row_pool_mat(B_TILE, 19, 8, row_pad=0), jnp.bfloat16)   # (B*8,B*19)

    # Permute fc1 rows so it consumes the kernel's (H, W*C) flatten directly
    # (PyTorch flattens NCHW: row = c*64 + q*8 + j; kernel: q*256 + j*32 + c).
    perm = np.zeros((8 * 8 * 32,), np.int64)
    for q in range(8):
        for j in range(8):
            for c in range(32):
                perm[q * 256 + j * 32 + c] = c * 64 + q * 8 + j
    params["mw1"] = jnp.asarray(np.asarray(raw["mw1"])[perm], jnp.bfloat16)
    params["mb1"] = raw["mb1"]
    params["mw2"] = raw["mw2"].astype(jnp.bfloat16)
    params["mb2"] = raw["mb2"]
    # Zero-pad fc3 to a 128-lane-dense output block; logits sliced outside.
    ncp = ((num_classes + 127) // 128) * 128
    mw3p = np.zeros((32, ncp), np.float32)
    mw3p[:, :num_classes] = np.asarray(raw["mw3"])
    mb3p = np.zeros((1, ncp), np.float32)
    mb3p[:, :num_classes] = np.asarray(raw["mb3"])
    params["mw3"] = jnp.asarray(mw3p, jnp.bfloat16)
    params["mb3"] = jnp.asarray(mb3p, jnp.float32)
    return params, raw


# ------------------------------ forward pass ---------------------------------

def mlp_conv_net_forward(x_nchw, params, num_classes=10):
    n = x_nchw.shape[0]
    assert x_nchw.shape[1:] == (1, 28, 28), x_nchw.shape
    n_pad = ((n + B_TILE - 1) // B_TILE) * B_TILE

    # XLA glue before the fused kernel: batch pad to a multiple of B_TILE,
    # conv1 zero-pad (2 each side), bf16 cast, and a contiguous 2-D relayout.
    xp = jnp.pad(x_nchw[:, 0, :, :], ((0, n_pad - n), (2, 2), (2, 2)))
    xp = xp.astype(jnp.bfloat16).reshape(n_pad * 32, 32)

    w1cat, sh1 = params["w1cat"], params["shift1"]
    w2big, sh2 = params["w2big"], params["shift2"]
    sel1, g1 = params["sel1"], params["g1"]
    sel2, g2 = params["sel2"], params["g2"]

    conv_out = pl.pallas_call(
        conv_stack_kernel,
        out_shape=jax.ShapeDtypeStruct((n_pad * 8, 256), jnp.bfloat16),
        grid_spec=pltpu.PrefetchScalarGridSpec(
            num_scalar_prefetch=0,
            grid=(n_pad // B_TILE,),
            in_specs=[
                pl.BlockSpec((B_TILE * 32, 32), lambda i: (i, 0)),
                # constant block indices -> weights stay VMEM-resident
                pl.BlockSpec(w1cat.shape, lambda i: (0, 0)),
                pl.BlockSpec(sh1.shape, lambda i: (0, 0)),
                pl.BlockSpec(sel1.shape, lambda i: (0, 0, 0)),
                pl.BlockSpec(g1.shape, lambda i: (0, 0)),
                pl.BlockSpec(w2big.shape, lambda i: (0, 0, 0)),
                pl.BlockSpec(sh2.shape, lambda i: (0, 0)),
                pl.BlockSpec(sel2.shape, lambda i: (0, 0, 0)),
                pl.BlockSpec(g2.shape, lambda i: (0, 0)),
            ],
            out_specs=pl.BlockSpec((B_TILE * 8, 256), lambda i: (i, 0)),
        ),
        compiler_params=pltpu.CompilerParams(
            dimension_semantics=("parallel",),      # v7x: split steps across TCs
            vmem_limit_bytes=32 * 1024 * 1024,      # well under v7x's 64 MiB
        ),
    )(xp, w1cat, sh1, sel1, g1, w2big, sh2, sel2, g2)

    # Contiguous (H, W*C) flatten (bf16, 4 KiB/image); fc1 rows were permuted
    # at init to match, so no runtime NHWC->NCHW transpose is needed.
    feats = conv_out.reshape(n_pad, 8 * 256)

    ncp = params["mw3"].shape[1]
    tile_n = 8
    for cand in (256, 128, 64, 32, 16, 8):
        if n_pad % cand == 0:
            tile_n = cand
            break

    logits_p = pl.pallas_call(
        mlp_kernel,
        out_shape=jax.ShapeDtypeStruct((n_pad, ncp), jnp.float32),
        grid_spec=pltpu.PrefetchScalarGridSpec(
            num_scalar_prefetch=0,
            grid=(n_pad // tile_n,),
            in_specs=[
                pl.BlockSpec((tile_n, feats.shape[1]), lambda i: (i, 0)),
                pl.BlockSpec(params["mw1"].shape, lambda i: (0, 0)),
                pl.BlockSpec(params["mb1"].shape, lambda i: (0, 0)),
                pl.BlockSpec(params["mw2"].shape, lambda i: (0, 0)),
                pl.BlockSpec(params["mb2"].shape, lambda i: (0, 0)),
                pl.BlockSpec(params["mw3"].shape, lambda i: (0, 0)),
                pl.BlockSpec(params["mb3"].shape, lambda i: (0, 0)),
            ],
            out_specs=pl.BlockSpec((tile_n, ncp), lambda i: (i, 0)),
        ),
        compiler_params=pltpu.CompilerParams(
            dimension_semantics=("parallel",),
        ),
    )(feats, params["mw1"], params["mb1"], params["mw2"], params["mb2"],
      params["mw3"], params["mb3"])

    # Drop the batch padding and the fc3 lane padding outside the kernel.
    return logits_p[:n, :num_classes]


# ------------------------- pure-JAX f32 reference ----------------------------

def reference_forward(x_nchw, raw):
    def layer(x, w, b):
        y = lax.conv_general_dilated(
            x, w, window_strides=(1, 1), padding=((2, 2), (2, 2)),
            dimension_numbers=("NCHW", "OIHW", "NCHW"))
        y = (y + b[None, :, None, None]) / jnp.sqrt(1.0 + _EPS)  # BN eval, init stats
        y = jnp.maximum(y, 0.0)
        n, c, h, w_ = y.shape
        hp, wp = h // 2, w_ // 2
        y = y[:, :, :hp * 2, :wp * 2].reshape(n, c, hp, 2, wp, 2)
        return jnp.max(y, axis=(3, 5))

    out = layer(x_nchw, raw["w1"], raw["b1"])
    out = layer(out, raw["w2"], raw["b2"])
    f = out.reshape(out.shape[0], -1)                      # NCHW flatten
    h = jnp.maximum(f @ raw["mw1"] + raw["mb1"], 0.0)
    h = jnp.maximum(h @ raw["mw2"] + raw["mb2"], 0.0)
    return h @ raw["mw3"] + raw["mb3"]


if __name__ == "__main__":
    # MNIST-like input: the mlp head requires 8*8*32 flattened features, which
    # pins the spatial size to 28x28 for a 1-channel input.
    x = jax.random.normal(jax.random.PRNGKey(0), (2, 1, 28, 28), jnp.float32)
    params, raw = init_params(num_classes=10)

    fwd = jax.jit(partial(mlp_conv_net_forward, num_classes=10))
    logits = fwd(x, params)
    jax.block_until_ready(logits)

    assert logits.shape == (2, 10), logits.shape
    assert bool(jnp.all(jnp.isfinite(logits)))

    # Loose-tolerance check vs the f32 reference (kernel matmuls use bf16
    # operands with f32 accumulation).
    ref = reference_forward(x, raw)
    err = float(jnp.max(jnp.abs(logits - ref)))
    assert err < 0.1, f"kernel vs f32 reference: max abs err {err}"
    print("KERNEL_OK")
</pallas_src>

<mosaic_0001>
module attributes {stable_mosaic.version = 11 : i64} {
  func.func @conv_stack_kernel(%arg0: i32, %arg1: memref<256x32xbf16, #tpu.memory_space<vmem>>, %arg2: memref<96x480xbf16, #tpu.memory_space<vmem>>, %arg3: memref<1x480xf32, #tpu.memory_space<vmem>>, %arg4: memref<2x480x304xbf16, #tpu.memory_space<vmem>>, %arg5: memref<152x256xbf16, #tpu.memory_space<vmem>>, %arg6: memref<3x304x544xbf16, #tpu.memory_space<vmem>>, %arg7: memref<1x544xf32, #tpu.memory_space<vmem>>, %arg8: memref<2x544x256xbf16, #tpu.memory_space<vmem>>, %arg9: memref<64x152xbf16, #tpu.memory_space<vmem>>, %arg10: memref<64x256xbf16, #tpu.memory_space<vmem>>) attributes {dimension_semantics = [#tpu.dimension_semantics<parallel>], iteration_bounds = array<i64: 1>, scalar_prefetch = 0 : i64, scratch_operands = 0 : i64, tpu.core_type = #tpu.core_type<tc>, window_params = [{transform_indices = @transform_0, window_bounds = array<i64: 256, 32>}, {pipeline_mode = #tpu.pipeline_mode<synchronous>, transform_indices = @transform_1, window_bounds = array<i64: 96, 480>}, {pipeline_mode = #tpu.pipeline_mode<synchronous>, transform_indices = @transform_2, window_bounds = array<i64: 1, 480>}, {pipeline_mode = #tpu.pipeline_mode<synchronous>, transform_indices = @transform_3, window_bounds = array<i64: 2, 480, 304>}, {pipeline_mode = #tpu.pipeline_mode<synchronous>, transform_indices = @transform_4, window_bounds = array<i64: 152, 256>}, {pipeline_mode = #tpu.pipeline_mode<synchronous>, transform_indices = @transform_5, window_bounds = array<i64: 3, 304, 544>}, {pipeline_mode = #tpu.pipeline_mode<synchronous>, transform_indices = @transform_6, window_bounds = array<i64: 1, 544>}, {pipeline_mode = #tpu.pipeline_mode<synchronous>, transform_indices = @transform_7, window_bounds = array<i64: 2, 544, 256>}, {pipeline_mode = #tpu.pipeline_mode<synchronous>, transform_indices = @transform_8, window_bounds = array<i64: 64, 152>}, {transform_indices = @transform_9, window_bounds = array<i64: 64, 256>}]} {
    %c0 = arith.constant 0 : index
    %c0_0 = arith.constant 0 : index
    %0 = vector.load %arg1[%c0, %c0_0] : memref<256x32xbf16, #tpu.memory_space<vmem>>, vector<256x32xbf16>
    %cst = arith.constant 0.000000e+00 : bf16
    %1 = vector.broadcast %cst : bf16 to vector<1x32xbf16>
    %2 = vector.extract_strided_slice %0 {offsets = [1, 0], sizes = [255, 32], strides = [1, 1]} : vector<256x32xbf16> to vector<255x32xbf16>
    %3 = tpu.concatenate %2, %1 in 0 : vector<255x32xbf16>, vector<1x32xbf16> -> vector<256x32xbf16>
    %cst_1 = arith.constant 0.000000e+00 : bf16
    %4 = vector.broadcast %cst_1 : bf16 to vector<2x32xbf16>
    %5 = vector.extract_strided_slice %0 {offsets = [2, 0], sizes = [254, 32], strides = [1, 1]} : vector<256x32xbf16> to vector<254x32xbf16>
    %6 = tpu.concatenate %5, %4 in 0 : vector<254x32xbf16>, vector<2x32xbf16> -> vector<256x32xbf16>
    %7 = tpu.concatenate %0, %3, %6 in 1 : vector<256x32xbf16>, vector<256x32xbf16>, vector<256x32xbf16> -> vector<256x96xbf16>
    %c0_2 = arith.constant 0 : index
    %c0_3 = arith.constant 0 : index
    %8 = vector.load %arg2[%c0_2, %c0_3] : memref<96x480xbf16, #tpu.memory_space<vmem>>, vector<96x480xbf16>
    %cst_4 = arith.constant dense<0.000000e+00> : vector<256x480xf32>
    %9 = tpu.matmul %7, %8, %cst_4 {dimension_numbers = #tpu.dot_dimension_numbers<[1], [0], [0], [1], [0, 0, 1, 1], [], []>} : vector<256x96xbf16>, vector<96x480xbf16>, vector<256x480xf32> -> vector<256x480xf32>
    %c0_5 = arith.constant 0 : index
    %c0_6 = arith.constant 0 : index
    %10 = vector.load %arg3[%c0_5, %c0_6] : memref<1x480xf32, #tpu.memory_space<vmem>>, vector<1x480xf32>
    %11 = vector.broadcast %10 : vector<1x480xf32> to vector<256x480xf32>
    %12 = arith.addf %9, %11 : vector<256x480xf32>
    %cst_7 = arith.constant 0.000000e+00 : f32
    %13 = vector.broadcast %cst_7 : f32 to vector<256x480xf32>
    %14 = arith.maximumf %12, %13 : vector<256x480xf32>
    %15 = arith.truncf %14 : vector<256x480xf32> to vector<256x480xbf16>
    %cst_8 = arith.constant 0.000000e+00 : bf16
    %16 = vector.broadcast %cst_8 : bf16 to vector<1x480xbf16>
    %17 = vector.extract_strided_slice %15 {offsets = [1, 0], sizes = [255, 480], strides = [1, 1]} : vector<256x480xbf16> to vector<255x480xbf16>
    %18 = tpu.concatenate %17, %16 in 0 : vector<255x480xbf16>, vector<1x480xbf16> -> vector<256x480xbf16>
    %19 = arith.maximumf %15, %18 : vector<256x480xbf16>
    %c0_9 = arith.constant 0 : index
    %c0_10 = arith.constant 0 : index
    %20 = vector.load %arg5[%c0_9, %c0_10] : memref<152x256xbf16, #tpu.memory_space<vmem>>, vector<152x256xbf16>
    %cst_11 = arith.constant dense<0.000000e+00> : vector<152x480xf32>
    %21 = tpu.matmul %20, %19, %cst_11 {dimension_numbers = #tpu.dot_dimension_numbers<[1], [0], [0], [1], [0, 0, 1, 1], [], []>} : vector<152x256xbf16>, vector<256x480xbf16>, vector<152x480xf32> -> vector<152x480xf32>
    %22 = arith.truncf %21 : vector<152x480xf32> to vector<152x480xbf16>
    %c0_12 = arith.constant 0 : index
    %c0_13 = arith.constant 0 : index
    %c0_14 = arith.constant 0 : index
    %23 = vector.load %arg4[%c0_12, %c0_13, %c0_14] : memref<2x480x304xbf16, #tpu.memory_space<vmem>>, vector<1x480x304xbf16>
    %24 = vector.shape_cast %23 : vector<1x480x304xbf16> to vector<480x304xbf16>
    %cst_15 = arith.constant dense<0.000000e+00> : vector<152x304xf32>
    %25 = tpu.matmul %22, %24, %cst_15 {dimension_numbers = #tpu.dot_dimension_numbers<[1], [0], [0], [1], [0, 0, 1, 1], [], []>} : vector<152x480xbf16>, vector<480x304xbf16>, vector<152x304xf32> -> vector<152x304xf32>
    %c1 = arith.constant 1 : index
    %c0_16 = arith.constant 0 : index
    %c0_17 = arith.constant 0 : index
    %26 = vector.load %arg4[%c1, %c0_16, %c0_17] : memref<2x480x304xbf16, #tpu.memory_space<vmem>>, vector<1x480x304xbf16>
    %27 = vector.shape_cast %26 : vector<1x480x304xbf16> to vector<480x304xbf16>
    %cst_18 = arith.constant dense<0.000000e+00> : vector<152x304xf32>
    %28 = tpu.matmul %22, %27, %cst_18 {dimension_numbers = #tpu.dot_dimension_numbers<[1], [0], [0], [1], [0, 0, 1, 1], [], []>} : vector<152x480xbf16>, vector<480x304xbf16>, vector<152x304xf32> -> vector<152x304xf32>
    %29 = arith.maximumf %25, %28 : vector<152x304xf32>
    %30 = arith.truncf %29 : vector<152x304xf32> to vector<152x304xbf16>
    %c0_19 = arith.constant 0 : index
    %c0_20 = arith.constant 0 : index
    %c0_21 = arith.constant 0 : index
    %31 = vector.load %arg6[%c0_19, %c0_20, %c0_21] : memref<3x304x544xbf16, #tpu.memory_space<vmem>>, vector<1x304x544xbf16>
    %32 = vector.shape_cast %31 : vector<1x304x544xbf16> to vector<304x544xbf16>
    %cst_22 = arith.constant dense<0.000000e+00> : vector<152x544xf32>
    %33 = tpu.matmul %30, %32, %cst_22 {dimension_numbers = #tpu.dot_dimension_numbers<[1], [0], [0], [1], [0, 0, 1, 1], [], []>} : vector<152x304xbf16>, vector<304x544xbf16>, vector<152x544xf32> -> vector<152x544xf32>
    %cst_23 = arith.constant 0.000000e+00 : bf16
    %34 = vector.broadcast %cst_23 : bf16 to vector<1x304xbf16>
    %35 = vector.extract_strided_slice %30 {offsets = [1, 0], sizes = [151, 304], strides = [1, 1]} : vector<152x304xbf16> to vector<151x304xbf16>
    %36 = tpu.concatenate %35, %34 in 0 : vector<151x304xbf16>, vector<1x304xbf16> -> vector<152x304xbf16>
    %c1_24 = arith.constant 1 : index
    %c0_25 = arith.constant 0 : index
    %c0_26 = arith.constant 0 : index
    %37 = vector.load %arg6[%c1_24, %c0_25, %c0_26] : memref<3x304x544xbf16, #tpu.memory_space<vmem>>, vector<1x304x544xbf16>
    %38 = vector.shape_cast %37 : vector<1x304x544xbf16> to vector<304x544xbf16>
    %cst_27 = arith.constant dense<0.000000e+00> : vector<152x544xf32>
    %39 = tpu.matmul %36, %38, %cst_27 {dimension_numbers = #tpu.dot_dimension_numbers<[1], [0], [0], [1], [0, 0, 1, 1], [], []>} : vector<152x304xbf16>, vector<304x544xbf16>, vector<152x544xf32> -> vector<152x544xf32>
    %40 = arith.addf %33, %39 : vector<152x544xf32>
    %cst_28 = arith.constant 0.000000e+00 : bf16
    %41 = vector.broadcast %cst_28 : bf16 to vector<2x304xbf16>
    %42 = vector.extract_strided_slice %30 {offsets = [2, 0], sizes = [150, 304], strides = [1, 1]} : vector<152x304xbf16> to vector<150x304xbf16>
    %43 = tpu.concatenate %42, %41 in 0 : vector<150x304xbf16>, vector<2x304xbf16> -> vector<152x304xbf16>
    %c2 = arith.constant 2 : index
    %c0_29 = arith.constant 0 : index
    %c0_30 = arith.constant 0 : index
    %44 = vector.load %arg6[%c2, %c0_29, %c0_30] : memref<3x304x544xbf16, #tpu.memory_space<vmem>>, vector<1x304x544xbf16>
    %45 = vector.shape_cast %44 : vector<1x304x544xbf16> to vector<304x544xbf16>
    %cst_31 = arith.constant dense<0.000000e+00> : vector<152x544xf32>
    %46 = tpu.matmul %43, %45, %cst_31 {dimension_numbers = #tpu.dot_dimension_numbers<[1], [0], [0], [1], [0, 0, 1, 1], [], []>} : vector<152x304xbf16>, vector<304x544xbf16>, vector<152x544xf32> -> vector<152x544xf32>
    %47 = arith.addf %40, %46 : vector<152x544xf32>
    %c0_32 = arith.constant 0 : index
    %c0_33 = arith.constant 0 : index
    %48 = vector.load %arg7[%c0_32, %c0_33] : memref<1x544xf32, #tpu.memory_space<vmem>>, vector<1x544xf32>
    %49 = vector.broadcast %48 : vector<1x544xf32> to vector<152x544xf32>
    %50 = arith.addf %47, %49 : vector<152x544xf32>
    %cst_34 = arith.constant 0.000000e+00 : f32
    %51 = vector.broadcast %cst_34 : f32 to vector<152x544xf32>
    %52 = arith.maximumf %50, %51 : vector<152x544xf32>
    %53 = arith.truncf %52 : vector<152x544xf32> to vector<152x544xbf16>
    %cst_35 = arith.constant 0.000000e+00 : bf16
    %54 = vector.broadcast %cst_35 : bf16 to vector<1x544xbf16>
    %55 = vector.extract_strided_slice %53 {offsets = [1, 0], sizes = [151, 544], strides = [1, 1]} : vector<152x544xbf16> to vector<151x544xbf16>
    %56 = tpu.concatenate %55, %54 in 0 : vector<151x544xbf16>, vector<1x544xbf16> -> vector<152x544xbf16>
    %57 = arith.maximumf %53, %56 : vector<152x544xbf16>
    %c0_36 = arith.constant 0 : index
    %c0_37 = arith.constant 0 : index
    %58 = vector.load %arg9[%c0_36, %c0_37] : memref<64x152xbf16, #tpu.memory_space<vmem>>, vector<64x152xbf16>
    %cst_38 = arith.constant dense<0.000000e+00> : vector<64x544xf32>
    %59 = tpu.matmul %58, %57, %cst_38 {dimension_numbers = #tpu.dot_dimension_numbers<[1], [0], [0], [1], [0, 0, 1, 1], [], []>} : vector<64x152xbf16>, vector<152x544xbf16>, vector<64x544xf32> -> vector<64x544xf32>
    %60 = arith.truncf %59 : vector<64x544xf32> to vector<64x544xbf16>
    %c0_39 = arith.constant 0 : index
    %c0_40 = arith.constant 0 : index
    %c0_41 = arith.constant 0 : index
    %61 = vector.load %arg8[%c0_39, %c0_40, %c0_41] : memref<2x544x256xbf16, #tpu.memory_space<vmem>>, vector<1x544x256xbf16>
    %62 = vector.shape_cast %61 : vector<1x544x256xbf16> to vector<544x256xbf16>
    %cst_42 = arith.constant dense<0.000000e+00> : vector<64x256xf32>
    %63 = tpu.matmul %60, %62, %cst_42 {dimension_numbers = #tpu.dot_dimension_numbers<[1], [0], [0], [1], [0, 0, 1, 1], [], []>} : vector<64x544xbf16>, vector<544x256xbf16>, vector<64x256xf32> -> vector<64x256xf32>
    %c1_43 = arith.constant 1 : index
    %c0_44 = arith.constant 0 : index
    %c0_45 = arith.constant 0 : index
    %64 = vector.load %arg8[%c1_43, %c0_44, %c0_45] : memref<2x544x256xbf16, #tpu.memory_space<vmem>>, vector<1x544x256xbf16>
    %65 = vector.shape_cast %64 : vector<1x544x256xbf16> to vector<544x256xbf16>
    %cst_46 = arith.constant dense<0.000000e+00> : vector<64x256xf32>
    %66 = tpu.matmul %60, %65, %cst_46 {dimension_numbers = #tpu.dot_dimension_numbers<[1], [0], [0], [1], [0, 0, 1, 1], [], []>} : vector<64x544xbf16>, vector<544x256xbf16>, vector<64x256xf32> -> vector<64x256xf32>
    %67 = arith.maximumf %63, %66 : vector<64x256xf32>
    %68 = arith.truncf %67 : vector<64x256xf32> to vector<64x256xbf16>
    %c0_47 = arith.constant 0 : index
    %c0_48 = arith.constant 0 : index
    %69 = vector.load %arg10[%c0_47, %c0_48] : memref<64x256xbf16, #tpu.memory_space<vmem>>, vector<64x256xbf16>
    tpu.vector_store %arg10[%c0_47, %c0_48], %68 {strides = array<i32>} : memref<64x256xbf16, #tpu.memory_space<vmem>>, vector<64x256xbf16>,
    return
  }
  func.func @transform_0(%arg0: i32) -> (i32, i32) {
    %c0_i32 = arith.constant 0 : i32
    %c0_i32_0 = arith.constant 0 : i32
    return %arg0, %c0_i32 : i32, i32
  }
  func.func @transform_1(%arg0: i32) -> (i32, i32) {
    %c0_i32 = arith.constant 0 : i32
    %c0_i32_0 = arith.constant 0 : i32
    %c0_i32_1 = arith.constant 0 : i32
    return %c0_i32, %c0_i32_0 : i32, i32
  }
  func.func @transform_2(%arg0: i32) -> (i32, i32) {
    %c0_i32 = arith.constant 0 : i32
    %c0_i32_0 = arith.constant 0 : i32
    %c0_i32_1 = arith.constant 0 : i32
    return %c0_i32, %c0_i32_0 : i32, i32
  }
  func.func @transform_3(%arg0: i32) -> (i32, i32, i32) {
    %c0_i32 = arith.constant 0 : i32
    %c0_i32_0 = arith.constant 0 : i32
    %c0_i32_1 = arith.constant 0 : i32
    %c0_i32_2 = arith.constant 0 : i32
    return %c0_i32, %c0_i32_0, %c0_i32_1 : i32, i32, i32
  }
  func.func @transform_4(%arg0: i32) -> (i32, i32) {
    %c0_i32 = arith.constant 0 : i32
    %c0_i32_0 = arith.constant 0 : i32
    %c0_i32_1 = arith.constant 0 : i32
    return %c0_i32, %c0_i32_0 : i32, i32
  }
  func.func @transform_5(%arg0: i32) -> (i32, i32, i32) {
    %c0_i32 = arith.constant 0 : i32
    %c0_i32_0 = arith.constant 0 : i32
    %c0_i32_1 = arith.constant 0 : i32
    %c0_i32_2 = arith.constant 0 : i32
    return %c0_i32, %c0_i32_0, %c0_i32_1 : i32, i32, i32
  }
  func.func @transform_6(%arg0: i32) -> (i32, i32) {
    %c0_i32 = arith.constant 0 : i32
    %c0_i32_0 = arith.constant 0 : i32
    %c0_i32_1 = arith.constant 0 : i32
    return %c0_i32, %c0_i32_0 : i32, i32
  }
  func.func @transform_7(%arg0: i32) -> (i32, i32, i32) {
    %c0_i32 = arith.constant 0 : i32
    %c0_i32_0 = arith.constant 0 : i32
    %c0_i32_1 = arith.constant 0 : i32
    %c0_i32_2 = arith.constant 0 : i32
    return %c0_i32, %c0_i32_0, %c0_i32_1 : i32, i32, i32
  }
  func.func @transform_8(%arg0: i32) -> (i32, i32) {
    %c0_i32 = arith.constant 0 : i32
    %c0_i32_0 = arith.constant 0 : i32
    %c0_i32_1 = arith.constant 0 : i32
    return %c0_i32, %c0_i32_0 : i32, i32
  }
  func.func @transform_9(%arg0: i32) -> (i32, i32) {
    %c0_i32 = arith.constant 0 : i32
    %c0_i32_0 = arith.constant 0 : i32
    return %arg0, %c0_i32 : i32, i32
  }
}

module attributes {stable_mosaic.version = 11 : i64} {
  func.func @mlp_kernel(%arg0: i32, %arg1: memref<8x2048xbf16, #tpu.memory_space<vmem>>, %arg2: memref<2048x64xbf16, #tpu.memory_space<vmem>>, %arg3: memref<1x64xf32, #tpu.memory_space<vmem>>, %arg4: memref<64x32xbf16, #tpu.memory_space<vmem>>, %arg5: memref<1x32xf32, #tpu.memory_space<vmem>>, %arg6: memref<32x128xbf16, #tpu.memory_space<vmem>>, %arg7: memref<1x128xf32, #tpu.memory_space<vmem>>, %arg8: memref<8x128xf32, #tpu.memory_space<vmem>>) attributes {dimension_semantics = [#tpu.dimension_semantics<parallel>], iteration_bounds = array<i64: 1>, scalar_prefetch = 0 : i64, scratch_operands = 0 : i64, tpu.core_type = #tpu.core_type<tc>, window_params = [{transform_indices = @transform_0, window_bounds = array<i64: 8, 2048>}, {pipeline_mode = #tpu.pipeline_mode<synchronous>, transform_indices = @transform_1, window_bounds = array<i64: 2048, 64>}, {pipeline_mode = #tpu.pipeline_mode<synchronous>, transform_indices = @transform_2, window_bounds = array<i64: 1, 64>}, {pipeline_mode = #tpu.pipeline_mode<synchronous>, transform_indices = @transform_3, window_bounds = array<i64: 64, 32>}, {pipeline_mode = #tpu.pipeline_mode<synchronous>, transform_indices = @transform_4, window_bounds = array<i64: 1, 32>}, {pipeline_mode = #tpu.pipeline_mode<synchronous>, transform_indices = @transform_5, window_bounds = array<i64: 32, 128>}, {pipeline_mode = #tpu.pipeline_mode<synchronous>, transform_indices = @transform_6, window_bounds = array<i64: 1, 128>}, {transform_indices = @transform_7, window_bounds = array<i64: 8, 128>}]} {
    %c0 = arith.constant 0 : index
    %c0_0 = arith.constant 0 : index
    %0 = vector.load %arg1[%c0, %c0_0] : memref<8x2048xbf16, #tpu.memory_space<vmem>>, vector<8x2048xbf16>
    %c0_1 = arith.constant 0 : index
    %c0_2 = arith.constant 0 : index
    %1 = vector.load %arg2[%c0_1, %c0_2] : memref<2048x64xbf16, #tpu.memory_space<vmem>>, vector<2048x64xbf16>
    %cst = arith.constant dense<0.000000e+00> : vector<8x64xf32>
    %2 = tpu.matmul %0, %1, %cst {dimension_numbers = #tpu.dot_dimension_numbers<[1], [0], [0], [1], [0, 0, 1, 1], [], []>} : vector<8x2048xbf16>, vector<2048x64xbf16>, vector<8x64xf32> -> vector<8x64xf32>
    %c0_3 = arith.constant 0 : index
    %c0_4 = arith.constant 0 : index
    %3 = vector.load %arg3[%c0_3, %c0_4] : memref<1x64xf32, #tpu.memory_space<vmem>>, vector<1x64xf32>
    %4 = vector.broadcast %3 : vector<1x64xf32> to vector<8x64xf32>
    %5 = arith.addf %2, %4 : vector<8x64xf32>
    %cst_5 = arith.constant 0.000000e+00 : f32
    %6 = vector.broadcast %cst_5 : f32 to vector<8x64xf32>
    %7 = arith.maximumf %5, %6 : vector<8x64xf32>
    %8 = arith.truncf %7 : vector<8x64xf32> to vector<8x64xbf16>
    %c0_6 = arith.constant 0 : index
    %c0_7 = arith.constant 0 : index
    %9 = vector.load %arg4[%c0_6, %c0_7] : memref<64x32xbf16, #tpu.memory_space<vmem>>, vector<64x32xbf16>
    %cst_8 = arith.constant dense<0.000000e+00> : vector<8x32xf32>
    %10 = tpu.matmul %8, %9, %cst_8 {dimension_numbers = #tpu.dot_dimension_numbers<[1], [0], [0], [1], [0, 0, 1, 1], [], []>} : vector<8x64xbf16>, vector<64x32xbf16>, vector<8x32xf32> -> vector<8x32xf32>
    %c0_9 = arith.constant 0 : index
    %c0_10 = arith.constant 0 : index
    %11 = vector.load %arg5[%c0_9, %c0_10] : memref<1x32xf32, #tpu.memory_space<vmem>>, vector<1x32xf32>
    %12 = vector.broadcast %11 : vector<1x32xf32> to vector<8x32xf32>
    %13 = arith.addf %10, %12 : vector<8x32xf32>
    %cst_11 = arith.constant 0.000000e+00 : f32
    %14 = vector.broadcast %cst_11 : f32 to vector<8x32xf32>
    %15 = arith.maximumf %13, %14 : vector<8x32xf32>
    %16 = arith.truncf %15 : vector<8x32xf32> to vector<8x32xbf16>
    %c0_12 = arith.constant 0 : index
    %c0_13 = arith.constant 0 : index
    %17 = vector.load %arg6[%c0_12, %c0_13] : memref<32x128xbf16, #tpu.memory_space<vmem>>, vector<32x128xbf16>
    %cst_14 = arith.constant dense<0.000000e+00> : vector<8x128xf32>
    %18 = tpu.matmul %16, %17, %cst_14 {dimension_numbers = #tpu.dot_dimension_numbers<[1], [0], [0], [1], [0, 0, 1, 1], [], []>} : vector<8x32xbf16>, vector<32x128xbf16>, vector<8x128xf32> -> vector<8x128xf32>
    %c0_15 = arith.constant 0 : index
    %c0_16 = arith.constant 0 : index
    %19 = vector.load %arg7[%c0_15, %c0_16] : memref<1x128xf32, #tpu.memory_space<vmem>>, vector<1x128xf32>
    %20 = vector.broadcast %19 : vector<1x128xf32> to vector<8x128xf32>
    %21 = arith.addf %18, %20 : vector<8x128xf32>
    %c0_17 = arith.constant 0 : index
    %c0_18 = arith.constant 0 : index
    %22 = vector.load %arg8[%c0_17, %c0_18] : memref<8x128xf32, #tpu.memory_space<vmem>>, vector<8x128xf32>
    tpu.vector_store %arg8[%c0_17, %c0_18], %21 {strides = array<i32>} : memref<8x128xf32, #tpu.memory_space<vmem>>, vector<8x128xf32>,
    return
  }
  func.func @transform_0(%arg0: i32) -> (i32, i32) {
    %c0_i32 = arith.constant 0 : i32
    %c0_i32_0 = arith.constant 0 : i32
    return %arg0, %c0_i32 : i32, i32
  }
  func.func @transform_1(%arg0: i32) -> (i32, i32) {
    %c0_i32 = arith.constant 0 : i32
    %c0_i32_0 = arith.constant 0 : i32
    %c0_i32_1 = arith.constant 0 : i32
    return %c0_i32, %c0_i32_0 : i32, i32
  }
  func.func @transform_2(%arg0: i32) -> (i32, i32) {
    %c0_i32 = arith.constant 0 : i32
    %c0_i32_0 = arith.constant 0 : i32
    %c0_i32_1 = arith.constant 0 : i32
    return %c0_i32, %c0_i32_0 : i32, i32
  }
  func.func @transform_3(%arg0: i32) -> (i32, i32) {
    %c0_i32 = arith.constant 0 : i32
    %c0_i32_0 = arith.constant 0 : i32
    %c0_i32_1 = arith.constant 0 : i32
    return %c0_i32, %c0_i32_0 : i32, i32
  }
  func.func @transform_4(%arg0: i32) -> (i32, i32) {
    %c0_i32 = arith.constant 0 : i32
    %c0_i32_0 = arith.constant 0 : i32
    %c0_i32_1 = arith.constant 0 : i32
    return %c0_i32, %c0_i32_0 : i32, i32
  }
  func.func @transform_5(%arg0: i32) -> (i32, i32) {
    %c0_i32 = arith.constant 0 : i32
    %c0_i32_0 = arith.constant 0 : i32
    %c0_i32_1 = arith.constant 0 : i32
    return %c0_i32, %c0_i32_0 : i32, i32
  }
  func.func @transform_6(%arg0: i32) -> (i32, i32) {
    %c0_i32 = arith.constant 0 : i32
    %c0_i32_0 = arith.constant 0 : i32
    %c0_i32_1 = arith.constant 0 : i32
    return %c0_i32, %c0_i32_0 : i32, i32
  }
  func.func @transform_7(%arg0: i32) -> (i32, i32) {
    %c0_i32 = arith.constant 0 : i32
    %c0_i32_0 = arith.constant 0 : i32
    return %arg0, %c0_i32 : i32, i32
  }
}

</mosaic_0001>

<llo_original>
// kernel: mlp_conv_net_forward.3
$region0: #{mlp_conv_net_forward.3}
  #allocation0 [shape = 'u32[]', space=smem, size = 0x4, offset = 0x4, fixed_abs, tag = 'smem constant byte address 0x4 - core index']
  #allocation1 [shape = 'u32[144,128]{1,0:T(1,128)}', space=vmem, size = 0x12000, scoped, tag = 'internal scratch']
  %s0 = inlined_call_operand.vmem [shape: bf16[8,2048], index: 0, kind: input, shape index: {}]
  %s1 = inlined_call_operand.vmem [shape: bf16[2048,64], index: 1, kind: input, shape index: {}]
  %s2 = inlined_call_operand.vmem [shape: f32[1,64], index: 2, kind: input, shape index: {}]
  %s3 = inlined_call_operand.vmem [shape: bf16[64,32], index: 3, kind: input, shape index: {}]
  %s4 = inlined_call_operand.vmem [shape: f32[1,32], index: 4, kind: input, shape index: {}]
  %s5 = inlined_call_operand.vmem [shape: bf16[32,128], index: 5, kind: input, shape index: {}]
  %s6 = inlined_call_operand.vmem [shape: f32[1,128], index: 6, kind: input, shape index: {}]
  %s7 = inlined_call_operand.vmem [shape: f32[8,128], index: 7, kind: output, shape index: {}]
  %s8 = sld [smem:[#allocation0]]
  $region38: #{mlp_conv_net_forward.3} parent=0
    _
  %s10 = ssub.s32 1, %s8
  %s11 = scalar_select 0, %s10, %s8
  // Predicated region
  $region2: #{mlp_conv_net_forward.3} parent=0 // pred_check
    _
  $region3: #{mlp_conv_net_forward.3} parent=0 // pred_check_branch
    %13 = sbr.rel (0) target = $region5
  $region4: #{mlp_conv_net_forward.3} parent=0 // pred_region
    _
  $region5: #{mlp_conv_net_forward.3} parent=0 // pred_fallthru
    _
  // Predicated region
  $region6: #{mlp_conv_net_forward.3} parent=0 // pred_check
    _
  $region7: #{mlp_conv_net_forward.3} parent=0 // pred_check_branch
    %15 = sbr.rel (0) target = $region9
  $region8: #{mlp_conv_net_forward.3} parent=0 // pred_region
    _
  $region9: #{mlp_conv_net_forward.3} parent=0 // pred_fallthru
    _
  // Predicated region
  $region10: #{mlp_conv_net_forward.3} parent=0 // pred_check
    _
  $region11: #{mlp_conv_net_forward.3} parent=0 // pred_check_branch
    %17 = sbr.rel (0) target = $region13
  $region12: #{mlp_conv_net_forward.3} parent=0 // pred_region
    _
  $region13: #{mlp_conv_net_forward.3} parent=0 // pred_fallthru
    _
  // Predicated region
  $region14: #{mlp_conv_net_forward.3} parent=0 // pred_check
    _
  $region15: #{mlp_conv_net_forward.3} parent=0 // pred_check_branch
    %19 = sbr.rel (0) target = $region17
  $region16: #{mlp_conv_net_forward.3} parent=0 // pred_region
    _
  $region17: #{mlp_conv_net_forward.3} parent=0 // pred_fallthru
    _
  // Predicated region
  $region18: #{mlp_conv_net_forward.3} parent=0 // pred_check
    _
  $region19: #{mlp_conv_net_forward.3} parent=0 // pred_check_branch
    %21 = sbr.rel (0) target = $region21
  $region20: #{mlp_conv_net_forward.3} parent=0 // pred_region
    _
  $region21: #{mlp_conv_net_forward.3} parent=0 // pred_fallthru
    _
  // Predicated region
  $region22: #{mlp_conv_net_forward.3} parent=0 // pred_check
    _
  $region23: #{mlp_conv_net_forward.3} parent=0 // pred_check_branch
    %23 = sbr.rel (0) target = $region25
  $region24: #{mlp_conv_net_forward.3} parent=0 // pred_region
    _
  $region25: #{mlp_conv_net_forward.3} parent=0 // pred_fallthru
    _
  // Predicated region
  $region26: #{mlp_conv_net_forward.3} parent=0 // pred_check
    _
  $region27: #{mlp_conv_net_forward.3} parent=0 // pred_check_branch
    %25 = sbr.rel (0) target = $region29
  $region28: #{mlp_conv_net_forward.3} parent=0 // pred_region
    _
  $region29: #{mlp_conv_net_forward.3} parent=0 // pred_fallthru
    _
  %v27 = vld [vmem:[%s0] sm:$0xff]
  %v28 = vld [vmem:[%s0 + $0x8] sm:$0xff]
  %v29 = vld [vmem:[%s0 + $0x10] sm:$0xff]
  %v30 = vld [vmem:[%s0 + $0x18] sm:$0xff]
  %v31 = vld [vmem:[%s0 + $0x20] sm:$0xff]
  %v32 = vld [vmem:[%s0 + $0x28] sm:$0xff]
  %v33 = vld [vmem:[%s0 + $0x30] sm:$0xff]
  %v34 = vld [vmem:[%s0 + $0x38] sm:$0xff]
  %v35 = vld [vmem:[%s1] sm:$0xf]
  %v36 = vld [vmem:[%s1 + $0x4] sm:$0xf]
  %v37 = vld [vmem:[%s1 + $0x8] sm:$0xf]
  %v38 = vld [vmem:[%s1 + $0xc] sm:$0xf]
  %v39 = vld [vmem:[%s1 + $0x10] sm:$0xf]
  %v40 = vld [vmem:[%s1 + $0x14] sm:$0xf]
  %v41 = vld [vmem:[%s1 + $0x18] sm:$0xf]
  %v42 = vld [vmem:[%s1 + $0x1c] sm:$0xf]
  %v43 = vld [vmem:[%s1 + $0x20] sm:$0xf]
  %v44 = vld [vmem:[%s1 + $0x24] sm:$0xf]
  %v45 = vld [vmem:[%s1 + $0x28] sm:$0xf]
  %v46 = vld [vmem:[%s1 + $0x2c] sm:$0xf]
  %v47 = vld [vmem:[%s1 + $0x30] sm:$0xf]
  %v48 = vld [vmem:[%s1 + $0x34] sm:$0xf]
  %v49 = vld [vmem:[%s1 + $0x38] sm:$0xf]
  %v50 = vld [vmem:[%s1 + $0x3c] sm:$0xf]
  %v51 = vld [vmem:[%s1 + $0x40] sm:$0xf]
  %v52 = vld [vmem:[%s1 + $0x44] sm:$0xf]
  %v53 = vld [vmem:[%s1 + $0x48] sm:$0xf]
  %v54 = vld [vmem:[%s1 + $0x4c] sm:$0xf]
  %v55 = vld [vmem:[%s1 + $0x50] sm:$0xf]
  %v56 = vld [vmem:[%s1 + $0x54] sm:$0xf]
  %v57 = vld [vmem:[%s1 + $0x58] sm:$0xf]
  %v58 = vld [vmem:[%s1 + $0x5c] sm:$0xf]
  %v59 = vld [vmem:[%s1 + $0x60] sm:$0xf]
  %v60 = vld [vmem:[%s1 + $0x64] sm:$0xf]
  %v61 = vld [vmem:[%s1 + $0x68] sm:$0xf]
  %v62 = vld [vmem:[%s1 + $0x6c] sm:$0xf]
  %v63 = vld [vmem:[%s1 + $0x70] sm:$0xf]
  %v64 = vld [vmem:[%s1 + $0x74] sm:$0xf]
  %v65 = vld [vmem:[%s1 + $0x78] sm:$0xf]
  %v66 = vld [vmem:[%s1 + $0x7c] sm:$0xf]
  %v67 = vld [vmem:[%s1 + $0x80] sm:$0xf]
  %v68 = vld [vmem:[%s1 + $0x84] sm:$0xf]
  %v69 = vld [vmem:[%s1 + $0x88] sm:$0xf]
  %v70 = vld [vmem:[%s1 + $0x8c] sm:$0xf]
  %v71 = vld [vmem:[%s1 + $0x90] sm:$0xf]
  %v72 = vld [vmem:[%s1 + $0x94] sm:$0xf]
  %v73 = vld [vmem:[%s1 + $0x98] sm:$0xf]
  %v74 = vld [vmem:[%s1 + $0x9c] sm:$0xf]
  %v75 = vld [vmem:[%s1 + $0xa0] sm:$0xf]
  %v76 = vld [vmem:[%s1 + $0xa4] sm:$0xf]
  %v77 = vld [vmem:[%s1 + $0xa8] sm:$0xf]
  %v78 = vld [vmem:[%s1 + $0xac] sm:$0xf]
  %v79 = vld [vmem:[%s1 + $0xb0] sm:$0xf]
  %v80 = vld [vmem:[%s1 + $0xb4] sm:$0xf]
  %v81 = vld [vmem:[%s1 + $0xb8] sm:$0xf]
  %v82 = vld [vmem:[%s1 + $0xbc] sm:$0xf]
  %v83 = vld [vmem:[%s1 + $0xc0] sm:$0xf]
  %v84 = vld [vmem:[%s1 + $0xc4] sm:$0xf]
  %v85 = vld [vmem:[%s1 + $0xc8] sm:$0xf]
  %v86 = vld [vmem:[%s1 + $0xcc] sm:$0xf]
  %v87 = vld [vmem:[%s1 + $0xd0] sm:$0xf]
  %v88 = vld [vmem:[%s1 + $0xd4] sm:$0xf]
  %v89 = vld [vmem:[%s1 + $0xd8] sm:$0xf]
  %v90 = vld [vmem:[%s1 + $0xdc] sm:$0xf]
  %v91 = vld [vmem:[%s1 + $0xe0] sm:$0xf]
  %v92 = vld [vmem:[%s1 + $0xe4] sm:$0xf]
  %v93 = vld [vmem:[%s1 + $0xe8] sm:$0xf]
  %v94 = vld [vmem:[%s1 + $0xec] sm:$0xf]
  %v95 = vld [vmem:[%s1 + $0xf0] sm:$0xf]
  %v96 = vld [vmem:[%s1 + $0xf4] sm:$0xf]
  %v97 = vld [vmem:[%s1 + $0xf8] sm:$0xf]
  %v98 = vld [vmem:[%s1 + $0xfc] sm:$0xf]
  %v99 = vld [vmem:[%s1 + $0x100] sm:$0xf]
  %v100 = vld [vmem:[%s1 + $0x104] sm:$0xf]
  %v101 = vld [vmem:[%s1 + $0x108] sm:$0xf]
  %v102 = vld [vmem:[%s1 + $0x10c] sm:$0xf]
  %v103 = vld [vmem:[%s1 + $0x110] sm:$0xf]
  %v104 = vld [vmem:[%s1 + $0x114] sm:$0xf]
  %v105 = vld [vmem:[%s1 + $0x118] sm:$0xf]
  %v106 = vld [vmem:[%s1 + $0x11c] sm:$0xf]
  %v107 = vld [vmem:[%s1 + $0x120] sm:$0xf]
  %v108 = vld [vmem:[%s1 + $0x124] sm:$0xf]
  %v109 = vld [vmem:[%s1 + $0x128] sm:$0xf]
  %v110 = vld [vmem:[%s1 + $0x12c] sm:$0xf]
  %v111 = vld [vmem:[%s1 + $0x130] sm:$0xf]
  %v112 = vld [vmem:[%s1 + $0x134] sm:$0xf]
  %v113 = vld [vmem:[%s1 + $0x138] sm:$0xf]
  %v114 = vld [vmem:[%s1 + $0x13c] sm:$0xf]
  %v115 = vld [vmem:[%s1 + $0x140] sm:$0xf]
  %v116 = vld [vmem:[%s1 + $0x144] sm:$0xf]
  %v117 = vld [vmem:[%s1 + $0x148] sm:$0xf]
  %v118 = vld [vmem:[%s1 + $0x14c] sm:$0xf]
  %v119 = vld [vmem:[%s1 + $0x150] sm:$0xf]
  %v120 = vld [vmem:[%s1 + $0x154] sm:$0xf]
  %v121 = vld [vmem:[%s1 + $0x158] sm:$0xf]
  %v122 = vld [vmem:[%s1 + $0x15c] sm:$0xf]
  %v123 = vld [vmem:[%s1 + $0x160] sm:$0xf]
  %v124 = vld [vmem:[%s1 + $0x164] sm:$0xf]
  %v125 = vld [vmem:[%s1 + $0x168] sm:$0xf]
  %v126 = vld [vmem:[%s1 + $0x16c] sm:$0xf]
  %v127 = vld [vmem:[%s1 + $0x170] sm:$0xf]
  %v128 = vld [vmem:[%s1 + $0x174] sm:$0xf]
  %v129 = vld [vmem:[%s1 + $0x178] sm:$0xf]
  %v130 = vld [vmem:[%s1 + $0x17c] sm:$0xf]
  %v131 = vld [vmem:[%s1 + $0x180] sm:$0xf]
  %v132 = vld [vmem:[%s1 + $0x184] sm:$0xf]
  %v133 = vld [vmem:[%s1 + $0x188] sm:$0xf]
  %v134 = vld [vmem:[%s1 + $0x18c] sm:$0xf]
  %v135 = vld [vmem:[%s1 + $0x190] sm:$0xf]
  %v136 = vld [vmem:[%s1 + $0x194] sm:$0xf]
  %v137 = vld [vmem:[%s1 + $0x198] sm:$0xf]
  %v138 = vld [vmem:[%s1 + $0x19c] sm:$0xf]
  %v139 = vld [vmem:[%s1 + $0x1a0] sm:$0xf]
  %v140 = vld [vmem:[%s1 + $0x1a4] sm:$0xf]
  %v141 = vld [vmem:[%s1 + $0x1a8] sm:$0xf]
  %v142 = vld [vmem:[%s1 + $0x1ac] sm:$0xf]
  %v143 = vld [vmem:[%s1 + $0x1b0] sm:$0xf]
  %v144 = vld [vmem:[%s1 + $0x1b4] sm:$0xf]
  %v145 = vld [vmem:[%s1 + $0x1b8] sm:$0xf]
  %v146 = vld [vmem:[%s1 + $0x1bc] sm:$0xf]
  %v147 = vld [vmem:[%s1 + $0x1c0] sm:$0xf]
  %v148 = vld [vmem:[%s1 + $0x1c4] sm:$0xf]
  %v149 = vld [vmem:[%s1 + $0x1c8] sm:$0xf]
  %v150 = vld [vmem:[%s1 + $0x1cc] sm:$0xf]
  %v151 = vld [vmem:[%s1 + $0x1d0] sm:$0xf]
  %v152 = vld [vmem:[%s1 + $0x1d4] sm:$0xf]
  %v153 = vld [vmem:[%s1 + $0x1d8] sm:$0xf]
  %v154 = vld [vmem:[%s1 + $0x1dc] sm:$0xf]
  %v155 = vld [vmem:[%s1 + $0x1e0] sm:$0xf]
  %v156 = vld [vmem:[%s1 + $0x1e4] sm:$0xf]
  %v157 = vld [vmem:[%s1 + $0x1e8] sm:$0xf]
  %v158 = vld [vmem:[%s1 + $0x1ec] sm:$0xf]
  %v159 = vld [vmem:[%s1 + $0x1f0] sm:$0xf]
  %v160 = vld [vmem:[%s1 + $0x1f4] sm:$0xf]
  %v161 = vld [vmem:[%s1 + $0x1f8] sm:$0xf]
  %v162 = vld [vmem:[%s1 + $0x1fc] sm:$0xf]
  %v163 = vld [vmem:[%s1 + $0x200] sm:$0xf]
  %v164 = vld [vmem:[%s1 + $0x204] sm:$0xf]
  %v165 = vld [vmem:[%s1 + $0x208] sm:$0xf]
  %v166 = vld [vmem:[%s1 + $0x20c] sm:$0xf]
  %v167 = vld [vmem:[%s1 + $0x210] sm:$0xf]
  %v168 = vld [vmem:[%s1 + $0x214] sm:$0xf]
  %v169 = vld [vmem:[%s1 + $0x218] sm:$0xf]
  %v170 = vld [vmem:[%s1 + $0x21c] sm:$0xf]
  %v171 = vld [vmem:[%s1 + $0x220] sm:$0xf]
  %v172 = vld [vmem:[%s1 + $0x224] sm:$0xf]
  %v173 = vld [vmem:[%s1 + $0x228] sm:$0xf]
  %v174 = vld [vmem:[%s1 + $0x22c] sm:$0xf]
  %v175 = vld [vmem:[%s1 + $0x230] sm:$0xf]
  %v176 = vld [vmem:[%s1 + $0x234] sm:$0xf]
  %v177 = vld [vmem:[%s1 + $0x238] sm:$0xf]
  %v178 = vld [vmem:[%s1 + $0x23c] sm:$0xf]
  %v179 = vld [vmem:[%s1 + $0x240] sm:$0xf]
  %v180 = vld [vmem:[%s1 + $0x244] sm:$0xf]
  %v181 = vld [vmem:[%s1 + $0x248] sm:$0xf]
  %v182 = vld [vmem:[%s1 + $0x24c] sm:$0xf]
  %v183 = vld [vmem:[%s1 + $0x250] sm:$0xf]
  %v184 = vld [vmem:[%s1 + $0x254] sm:$0xf]
  %v185 = vld [vmem:[%s1 + $0x258] sm:$0xf]
  %v186 = vld [vmem:[%s1 + $0x25c] sm:$0xf]
  %v187 = vld [vmem:[%s1 + $0x260] sm:$0xf]
  %v188 = vld [vmem:[%s1 + $0x264] sm:$0xf]
  %v189 = vld [vmem:[%s1 + $0x268] sm:$0xf]
  %v190 = vld [vmem:[%s1 + $0x26c] sm:$0xf]
  %v191 = vld [vmem:[%s1 + $0x270] sm:$0xf]
  %v192 = vld [vmem:[%s1 + $0x274] sm:$0xf]
  %v193 = vld [vmem:[%s1 + $0x278] sm:$0xf]
  %v194 = vld [vmem:[%s1 + $0x27c] sm:$0xf]
  %v195 = vld [vmem:[%s1 + $0x280] sm:$0xf]
  %v196 = vld [vmem:[%s1 + $0x284] sm:$0xf]
  %v197 = vld [vmem:[%s1 + $0x288] sm:$0xf]
  %v198 = vld [vmem:[%s1 + $0x28c] sm:$0xf]
  %v199 = vld [vmem:[%s1 + $0x290] sm:$0xf]
  %v200 = vld [vmem:[%s1 + $0x294] sm:$0xf]
  %v201 = vld [vmem:[%s1 + $0x298] sm:$0xf]
  %v202 = vld [vmem:[%s1 + $0x29c] sm:$0xf]
  %v203 = vld [vmem:[%s1 + $0x2a0] sm:$0xf]
  %v204 = vld [vmem:[%s1 + $0x2a4] sm:$0xf]
  %v205 = vld [vmem:[%s1 + $0x2a8] sm:$0xf]
  %v206 = vld [vmem:[%s1 + $0x2ac] sm:$0xf]
  %v207 = vld [vmem:[%s1 + $0x2b0] sm:$0xf]
  %v208 = vld [vmem:[%s1 + $0x2b4] sm:$0xf]
  %v209 = vld [vmem:[%s1 + $0x2b8] sm:$0xf]
  %v210 = vld [vmem:[%s1 + $0x2bc] sm:$0xf]
  %v211 = vld [vmem:[%s1 + $0x2c0] sm:$0xf]
  %v212 = vld [vmem:[%s1 + $0x2c4] sm:$0xf]
  %v213 = vld [vmem:[%s1 + $0x2c8] sm:$0xf]
  %v214 = vld [vmem:[%s1 + $0x2cc] sm:$0xf]
  %v215 = vld [vmem:[%s1 + $0x2d0] sm:$0xf]
  %v216 = vld [vmem:[%s1 + $0x2d4] sm:$0xf]
  %v217 = vld [vmem:[%s1 + $0x2d8] sm:$0xf]
  %v218 = vld [vmem:[%s1 + $0x2dc] sm:$0xf]
  %v219 = vld [vmem:[%s1 + $0x2e0] sm:$0xf]
  %v220 = vld [vmem:[%s1 + $0x2e4] sm:$0xf]
  %v221 = vld [vmem:[%s1 + $0x2e8] sm:$0xf]
  %v222 = vld [vmem:[%s1 + $0x2ec] sm:$0xf]
  %v223 = vld [vmem:[%s1 + $0x2f0] sm:$0xf]
  %v224 = vld [vmem:[%s1 + $0x2f4] sm:$0xf]
  %v225 = vld [vmem:[%s1 + $0x2f8] sm:$0xf]
  %v226 = vld [vmem:[%s1 + $0x2fc] sm:$0xf]
  %v227 = vld [vmem:[%s1 + $0x300] sm:$0xf]
  %v228 = vld [vmem:[%s1 + $0x304] sm:$0xf]
  %v229 = vld [vmem:[%s1 + $0x308] sm:$0xf]
  %v230 = vld [vmem:[%s1 + $0x30c] sm:$0xf]
  %v231 = vld [vmem:[%s1 + $0x310] sm:$0xf]
  %v232 = vld [vmem:[%s1 + $0x314] sm:$0xf]
  %v233 = vld [vmem:[%s1 + $0x318] sm:$0xf]
  %v234 = vld [vmem:[%s1 + $0x31c] sm:$0xf]
  %v235 = vld [vmem:[%s1 + $0x320] sm:$0xf]
  %v236 = vld [vmem:[%s1 + $0x324] sm:$0xf]
  %v237 = vld [vmem:[%s1 + $0x328] sm:$0xf]
  %v238 = vld [vmem:[%s1 + $0x32c] sm:$0xf]
  %v239 = vld [vmem:[%s1 + $0x330] sm:$0xf]
  %v240 = vld [vmem:[%s1 + $0x334] sm:$0xf]
  %v241 = vld [vmem:[%s1 + $0x338] sm:$0xf]
  %v242 = vld [vmem:[%s1 + $0x33c] sm:$0xf]
  %v243 = vld [vmem:[%s1 + $0x340] sm:$0xf]
  %v244 = vld [vmem:[%s1 + $0x344] sm:$0xf]
  %v245 = vld [vmem:[%s1 + $0x348] sm:$0xf]
  %v246 = vld [vmem:[%s1 + $0x34c] sm:$0xf]
  %v247 = vld [vmem:[%s1 + $0x350] sm:$0xf]
  %v248 = vld [vmem:[%s1 + $0x354] sm:$0xf]
  %v249 = vld [vmem:[%s1 + $0x358] sm:$0xf]
  %v250 = vld [vmem:[%s1 + $0x35c] sm:$0xf]
  %v251 = vld [vmem:[%s1 + $0x360] sm:$0xf]
  %v252 = vld [vmem:[%s1 + $0x364] sm:$0xf]
  %v253 = vld [vmem:[%s1 + $0x368] sm:$0xf]
  %v254 = vld [vmem:[%s1 + $0x36c] sm:$0xf]
  %v255 = vld [vmem:[%s1 + $0x370] sm:$0xf]
  %v256 = vld [vmem:[%s1 + $0x374] sm:$0xf]
  %v257 = vld [vmem:[%s1 + $0x378] sm:$0xf]
  %v258 = vld [vmem:[%s1 + $0x37c] sm:$0xf]
  %v259 = vld [vmem:[%s1 + $0x380] sm:$0xf]
  %v260 = vld [vmem:[%s1 + $0x384] sm:$0xf]
  %v261 = vld [vmem:[%s1 + $0x388] sm:$0xf]
  %v262 = vld [vmem:[%s1 + $0x38c] sm:$0xf]
  %v263 = vld [vmem:[%s1 + $0x390] sm:$0xf]
  %v264 = vld [vmem:[%s1 + $0x394] sm:$0xf]
  %v265 = vld [vmem:[%s1 + $0x398] sm:$0xf]
  %v266 = vld [vmem:[%s1 + $0x39c] sm:$0xf]
  %v267 = vld [vmem:[%s1 + $0x3a0] sm:$0xf]
  %v268 = vld [vmem:[%s1 + $0x3a4] sm:$0xf]
  %v269 = vld [vmem:[%s1 + $0x3a8] sm:$0xf]
  %v270 = vld [vmem:[%s1 + $0x3ac] sm:$0xf]
  %v271 = vld [vmem:[%s1 + $0x3b0] sm:$0xf]
  %v272 = vld [vmem:[%s1 + $0x3b4] sm:$0xf]
  %v273 = vld [vmem:[%s1 + $0x3b8] sm:$0xf]
  %v274 = vld [vmem:[%s1 + $0x3bc] sm:$0xf]
  %v275 = vld [vmem:[%s1 + $0x3c0] sm:$0xf]
  %v276 = vld [vmem:[%s1 + $0x3c4] sm:$0xf]
  %v277 = vld [vmem:[%s1 + $0x3c8] sm:$0xf]
  %v278 = vld [vmem:[%s1 + $0x3cc] sm:$0xf]
  %v279 = vld [vmem:[%s1 + $0x3d0] sm:$0xf]
  %v280 = vld [vmem:[%s1 + $0x3d4] sm:$0xf]
  %v281 = vld [vmem:[%s1 + $0x3d8] sm:$0xf]
  %v282 = vld [vmem:[%s1 + $0x3dc] sm:$0xf]
  %v283 = vld [vmem:[%s1 + $0x3e0] sm:$0xf]
  %v284 = vld [vmem:[%s1 + $0x3e4] sm:$0xf]
  %v285 = vld [vmem:[%s1 + $0x3e8] sm:$0xf]
  %v286 = vld [vmem:[%s1 + $0x3ec] sm:$0xf]
  %v287 = vld [vmem:[%s1 + $0x3f0] sm:$0xf]
  %v288 = vld [vmem:[%s1 + $0x3f4] sm:$0xf]
  %v289 = vld [vmem:[%s1 + $0x3f8] sm:$0xf]
  %v290 = vld [vmem:[%s1 + $0x3fc] sm:$0xf]
  %v291 = vld [vmem:[%s2] sm:$0x1]
  %v293 = vlaneseq
  %v294 = vshrl.u32 %v293, 7
  %v295 = vsub.s32 0, %v294
  %v296 = vrot.slane %v291, %v295
  %v306 = vunpack.c.l.b16 %v27
  %v307 = vunpack.c.h.b16 %v27
  %v308 = vunpack.c.l.b16 %v28
  %v309 = vunpack.c.h.b16 %v28
  %v310 = vunpack.c.l.b16 %v29
  %v311 = vunpack.c.h.b16 %v29
  %v312 = vunpack.c.l.b16 %v30
  %v313 = vunpack.c.h.b16 %v30
  %v314 = vunpack.c.l.b16 %v31
  %v315 = vunpack.c.h.b16 %v31
  %v316 = vunpack.c.l.b16 %v32
  %v317 = vunpack.c.h.b16 %v32
  %v318 = vunpack.c.l.b16 %v33
  %v319 = vunpack.c.h.b16 %v33
  %v320 = vunpack.c.l.b16 %v34
  %v321 = vunpack.c.h.b16 %v34
  %v322 = vpack.c.b16 %v306, %v306
  %v323 = vpack.c.b16 %v307, %v307
  %v324 = vpack.c.b16 %v308, %v308
  %v325 = vpack.c.b16 %v309, %v309
  %v326 = vpack.c.b16 %v310, %v310
  %v327 = vpack.c.b16 %v311, %v311
  %v328 = vpack.c.b16 %v312, %v312
  %v329 = vpack.c.b16 %v313, %v313
  %v330 = vpack.c.b16 %v314, %v314
  %v331 = vpack.c.b16 %v315, %v315
  %v332 = vpack.c.b16 %v316, %v316
  %v333 = vpack.c.b16 %v317, %v317
  %v334 = vpack.c.b16 %v318, %v318
  %v335 = vpack.c.b16 %v319, %v319
  %v336 = vpack.c.b16 %v320, %v320
  %v337 = vpack.c.b16 %v321, %v321
  %v610 = vunpack.c.l.b16 %v35
  %v611 = vunpack.c.l.b16 %v36
  %v612 = vunpack.c.l.b16 %v37
  %v613 = vunpack.c.l.b16 %v38
  %v614 = vunpack.c.l.b16 %v39
  %v615 = vunpack.c.l.b16 %v40
  %v616 = vunpack.c.l.b16 %v41
  %v617 = vunpack.c.l.b16 %v42
  %v618 = vunpack.c.l.b16 %v43
  %v619 = vunpack.c.l.b16 %v44
  %v620 = vunpack.c.l.b16 %v45
  %v621 = vunpack.c.l.b16 %v46
  %v622 = vunpack.c.l.b16 %v47
  %v623 = vunpack.c.l.b16 %v48
  %v624 = vunpack.c.l.b16 %v49
  %v625 = vunpack.c.l.b16 %v50
  %v626 = vunpack.c.l.b16 %v51
  %v627 = vunpack.c.l.b16 %v52
  %v628 = vunpack.c.l.b16 %v53
  %v629 = vunpack.c.l.b16 %v54
  %v630 = vunpack.c.l.b16 %v55
  %v631 = vunpack.c.l.b16 %v56
  %v632 = vunpack.c.l.b16 %v57
  %v633 = vunpack.c.l.b16 %v58
  %v634 = vunpack.c.l.b16 %v59
  %v635 = vunpack.c.l.b16 %v60
  %v636 = vunpack.c.l.b16 %v61
  %v637 = vunpack.c.l.b16 %v62
  %v638 = vunpack.c.l.b16 %v63
  %v639 = vunpack.c.l.b16 %v64
  %v640 = vunpack.c.l.b16 %v65
  %v641 = vunpack.c.l.b16 %v66
  %v642 = vunpack.c.l.b16 %v67
  %v643 = vunpack.c.l.b16 %v68
  %v644 = vunpack.c.l.b16 %v69
  %v645 = vunpack.c.l.b16 %v70
  %v646 = vunpack.c.l.b16 %v71
  %v647 = vunpack.c.l.b16 %v72
  %v648 = vunpack.c.l.b16 %v73
  %v649 = vunpack.c.l.b16 %v74
  %v650 = vunpack.c.l.b16 %v75
  %v651 = vunpack.c.l.b16 %v76
  %v652 = vunpack.c.l.b16 %v77
  %v653 = vunpack.c.l.b16 %v78
  %v654 = vunpack.c.l.b16 %v79
  %v655 = vunpack.c.l.b16 %v80
  %v656 = vunpack.c.l.b16 %v81
  %v657 = vunpack.c.l.b16 %v82
  %v658 = vunpack.c.l.b16 %v83
  %v659 = vunpack.c.l.b16 %v84
  %v660 = vunpack.c.l.b16 %v85
  %v661 = vunpack.c.l.b16 %v86
  %v662 = vunpack.c.l.b16 %v87
  %v663 = vunpack.c.l.b16 %v88
  %v664 = vunpack.c.l.b16 %v89
  %v665 = vunpack.c.l.b16 %v90
  %v666 = vunpack.c.l.b16 %v91
  %v667 = vunpack.c.l.b16 %v92
  %v668 = vunpack.c.l.b16 %v93
  %v669 = vunpack.c.l.b16 %v94
  %v670 = vunpack.c.l.b16 %v95
  %v671 = vunpack.c.l.b16 %v96
  %v672 = vunpack.c.l.b16 %v97
  %v673 = vunpack.c.l.b16 %v98
  %v674 = vunpack.c.l.b16 %v99
  %v675 = vunpack.c.l.b16 %v100
  %v676 = vunpack.c.l.b16 %v101
  %v677 = vunpack.c.l.b16 %v102
  %v678 = vunpack.c.l.b16 %v103
  %v679 = vunpack.c.l.b16 %v104
  %v680 = vunpack.c.l.b16 %v105
  %v681 = vunpack.c.l.b16 %v106
  %v682 = vunpack.c.l.b16 %v107
  %v683 = vunpack.c.l.b16 %v108
  %v684 = vunpack.c.l.b16 %v109
  %v685 = vunpack.c.l.b16 %v110
  %v686 = vunpack.c.l.b16 %v111
  %v687 = vunpack.c.l.b16 %v112
  %v688 = vunpack.c.l.b16 %v113
  %v689 = vunpack.c.l.b16 %v114
  %v690 = vunpack.c.l.b16 %v115
  %v691 = vunpack.c.l.b16 %v116
  %v692 = vunpack.c.l.b16 %v117
  %v693 = vunpack.c.l.b16 %v118
  %v694 = vunpack.c.l.b16 %v119
  %v695 = vunpack.c.l.b16 %v120
  %v696 = vunpack.c.l.b16 %v121
  %v697 = vunpack.c.l.b16 %v122
  %v698 = vunpack.c.l.b16 %v123
  %v699 = vunpack.c.l.b16 %v124
  %v700 = vunpack.c.l.b16 %v125
  %v701 = vunpack.c.l.b16 %v126
  %v702 = vunpack.c.l.b16 %v127
  %v703 = vunpack.c.l.b16 %v128
  %v704 = vunpack.c.l.b16 %v129
  %v705 = vunpack.c.l.b16 %v130
  %v706 = vunpack.c.l.b16 %v131
  %v707 = vunpack.c.l.b16 %v132
  %v708 = vunpack.c.l.b16 %v133
  %v709 = vunpack.c.l.b16 %v134
  %v710 = vunpack.c.l.b16 %v135
  %v711 = vunpack.c.l.b16 %v136
  %v712 = vunpack.c.l.b16 %v137
  %v713 = vunpack.c.l.b16 %v138
  %v714 = vunpack.c.l.b16 %v139
  %v715 = vunpack.c.l.b16 %v140
  %v716 = vunpack.c.l.b16 %v141
  %v717 = vunpack.c.l.b16 %v142
  %v718 = vunpack.c.l.b16 %v143
  %v719 = vunpack.c.l.b16 %v144
  %v720 = vunpack.c.l.b16 %v145
  %v721 = vunpack.c.l.b16 %v146
  %v722 = vunpack.c.l.b16 %v147
  %v723 = vunpack.c.l.b16 %v148
  %v724 = vunpack.c.l.b16 %v149
  %v725 = vunpack.c.l.b16 %v150
  %v726 = vunpack.c.l.b16 %v151
  %v727 = vunpack.c.l.b16 %v152
  %v728 = vunpack.c.l.b16 %v153
  %v729 = vunpack.c.l.b16 %v154
  %v730 = vunpack.c.l.b16 %v155
  %v731 = vunpack.c.l.b16 %v156
  %v732 = vunpack.c.l.b16 %v157
  %v733 = vunpack.c.l.b16 %v158
  %v734 = vunpack.c.l.b16 %v159
  %v735 = vunpack.c.l.b16 %v160
  %v736 = vunpack.c.l.b16 %v161
  %v737 = vunpack.c.l.b16 %v162
  %v738 = vunpack.c.l.b16 %v163
  %v739 = vunpack.c.l.b16 %v164
  %v740 = vunpack.c.l.b16 %v165
  %v741 = vunpack.c.l.b16 %v166
  %v742 = vunpack.c.l.b16 %v167
  %v743 = vunpack.c.l.b16 %v168
  %v744 = vunpack.c.l.b16 %v169
  %v745 = vunpack.c.l.b16 %v170
  %v746 = vunpack.c.l.b16 %v171
  %v747 = vunpack.c.l.b16 %v172
  %v748 = vunpack.c.l.b16 %v173
  %v749 = vunpack.c.l.b16 %v174
  %v750 = vunpack.c.l.b16 %v175
  %v751 = vunpack.c.l.b16 %v176
  %v752 = vunpack.c.l.b16 %v177
  %v753 = vunpack.c.l.b16 %v178
  %v754 = vunpack.c.l.b16 %v179
  %v755 = vunpack.c.l.b16 %v180
  %v756 = vunpack.c.l.b16 %v181
  %v757 = vunpack.c.l.b16 %v182
  %v758 = vunpack.c.l.b16 %v183
  %v759 = vunpack.c.l.b16 %v184
  %v760 = vunpack.c.l.b16 %v185
  %v761 = vunpack.c.l.b16 %v186
  %v762 = vunpack.c.l.b16 %v187
  %v763 = vunpack.c.l.b16 %v188
  %v764 = vunpack.c.l.b16 %v189
  %v765 = vunpack.c.l.b16 %v190
  %v766 = vunpack.c.l.b16 %v191
  %v767 = vunpack.c.l.b16 %v192
  %v768 = vunpack.c.l.b16 %v193
  %v769 = vunpack.c.l.b16 %v194
  %v770 = vunpack.c.l.b16 %v195
  %v771 = vunpack.c.l.b16 %v196
  %v772 = vunpack.c.l.b16 %v197
  %v773 = vunpack.c.l.b16 %v198
  %v774 = vunpack.c.l.b16 %v199
  %v775 = vunpack.c.l.b16 %v200
  %v776 = vunpack.c.l.b16 %v201
  %v777 = vunpack.c.l.b16 %v202
  %v778 = vunpack.c.l.b16 %v203
  %v779 = vunpack.c.l.b16 %v204
  %v780 = vunpack.c.l.b16 %v205
  %v781 = vunpack.c.l.b16 %v206
  %v782 = vunpack.c.l.b16 %v207
  %v783 = vunpack.c.l.b16 %v208
  %v784 = vunpack.c.l.b16 %v209
  %v785 = vunpack.c.l.b16 %v210
  %v786 = vunpack.c.l.b16 %v211
  %v787 = vunpack.c.l.b16 %v212
  %v788 = vunpack.c.l.b16 %v213
  %v789 = vunpack.c.l.b16 %v214
  %v790 = vunpack.c.l.b16 %v215
  %v791 = vunpack.c.l.b16 %v216
  %v792 = vunpack.c.l.b16 %v217
  %v793 = vunpack.c.l.b16 %v218
  %v794 = vunpack.c.l.b16 %v219
  %v795 = vunpack.c.l.b16 %v220
  %v796 = vunpack.c.l.b16 %v221
  %v797 = vunpack.c.l.b16 %v222
  %v798 = vunpack.c.l.b16 %v223
  %v799 = vunpack.c.l.b16 %v224
  %v800 = vunpack.c.l.b16 %v225
  %v801 = vunpack.c.l.b16 %v226
  %v802 = vunpack.c.l.b16 %v227
  %v803 = vunpack.c.l.b16 %v228
  %v804 = vunpack.c.l.b16 %v229
  %v805 = vunpack.c.l.b16 %v230
  %v806 = vunpack.c.l.b16 %v231
  %v807 = vunpack.c.l.b16 %v232
  %v808 = vunpack.c.l.b16 %v233
  %v809 = vunpack.c.l.b16 %v234
  %v810 = vunpack.c.l.b16 %v235
  %v811 = vunpack.c.l.b16 %v236
  %v812 = vunpack.c.l.b16 %v237
  %v813 = vunpack.c.l.b16 %v238
  %v814 = vunpack.c.l.b16 %v239
  %v815 = vunpack.c.l.b16 %v240
  %v816 = vunpack.c.l.b16 %v241
  %v817 = vunpack.c.l.b16 %v242
  %v818 = vunpack.c.l.b16 %v243
  %v819 = vunpack.c.l.b16 %v244
  %v820 = vunpack.c.l.b16 %v245
  %v821 = vunpack.c.l.b16 %v246
  %v822 = vunpack.c.l.b16 %v247
  %v823 = vunpack.c.l.b16 %v248
  %v824 = vunpack.c.l.b16 %v249
  %v825 = vunpack.c.l.b16 %v250
  %v826 = vunpack.c.l.b16 %v251
  %v827 = vunpack.c.l.b16 %v252
  %v828 = vunpack.c.l.b16 %v253
  %v829 = vunpack.c.l.b16 %v254
  %v830 = vunpack.c.l.b16 %v255
  %v831 = vunpack.c.l.b16 %v256
  %v832 = vunpack.c.l.b16 %v257
  %v833 = vunpack.c.l.b16 %v258
  %v834 = vunpack.c.l.b16 %v259
  %v835 = vunpack.c.l.b16 %v260
  %v836 = vunpack.c.l.b16 %v261
  %v837 = vunpack.c.l.b16 %v262
  %v838 = vunpack.c.l.b16 %v263
  %v839 = vunpack.c.l.b16 %v264
  %v840 = vunpack.c.l.b16 %v265
  %v841 = vunpack.c.l.b16 %v266
  %v842 = vunpack.c.l.b16 %v267
  %v843 = vunpack.c.l.b16 %v268
  %v844 = vunpack.c.l.b16 %v269
  %v845 = vunpack.c.l.b16 %v270
  %v846 = vunpack.c.l.b16 %v271
  %v847 = vunpack.c.l.b16 %v272
  %v848 = vunpack.c.l.b16 %v273
  %v849 = vunpack.c.l.b16 %v274
  %v850 = vunpack.c.l.b16 %v275
  %v851 = vunpack.c.l.b16 %v276
  %v852 = vunpack.c.l.b16 %v277
  %v853 = vunpack.c.l.b16 %v278
  %v854 = vunpack.c.l.b16 %v279
  %v855 = vunpack.c.l.b16 %v280
  %v856 = vunpack.c.l.b16 %v281
  %v857 = vunpack.c.l.b16 %v282
  %v858 = vunpack.c.l.b16 %v283
  %v859 = vunpack.c.l.b16 %v284
  %v860 = vunpack.c.l.b16 %v285
  %v861 = vunpack.c.l.b16 %v286
  %v862 = vunpack.c.l.b16 %v287
  %v863 = vunpack.c.l.b16 %v288
  %v864 = vunpack.c.l.b16 %v289
  %v865 = vunpack.c.l.b16 %v290
  %v866 = vpack.c.b16 %v611, %v610
  %v867 = vpack.c.b16 %v613, %v612
  %v868 = vpack.c.b16 %v615, %v614
  %v869 = vpack.c.b16 %v617, %v616
  %v870 = vpack.c.b16 %v619, %v618
  %v871 = vpack.c.b16 %v621, %v620
  %v872 = vpack.c.b16 %v623, %v622
  %v873 = vpack.c.b16 %v625, %v624
  %v874 = vpack.c.b16 %v627, %v626
  %v875 = vpack.c.b16 %v629, %v628
  %v876 = vpack.c.b16 %v631, %v630
  %v877 = vpack.c.b16 %v633, %v632
  %v878 = vpack.c.b16 %v635, %v634
  %v879 = vpack.c.b16 %v637, %v636
  %v880 = vpack.c.b16 %v639, %v638
  %v881 = vpack.c.b16 %v641, %v640
  %v882 = vpack.c.b16 %v643, %v642
  %v883 = vpack.c.b16 %v645, %v644
  %v884 = vpack.c.b16 %v647, %v646
  %v885 = vpack.c.b16 %v649, %v648
  %v886 = vpack.c.b16 %v651, %v650
  %v887 = vpack.c.b16 %v653, %v652
  %v888 = vpack.c.b16 %v655, %v654
  %v889 = vpack.c.b16 %v657, %v656
  %v890 = vpack.c.b16 %v659, %v658
  %v891 = vpack.c.b16 %v661, %v660
  %v892 = vpack.c.b16 %v663, %v662
  %v893 = vpack.c.b16 %v665, %v664
  %v894 = vpack.c.b16 %v667, %v666
  %v895 = vpack.c.b16 %v669, %v668
  %v896 = vpack.c.b16 %v671, %v670
  %v897 = vpack.c.b16 %v673, %v672
  %v898 = vpack.c.b16 %v675, %v674
  %v899 = vpack.c.b16 %v677, %v676
  %v900 = vpack.c.b16 %v679, %v678
  %v901 = vpack.c.b16 %v681, %v680
  %v902 = vpack.c.b16 %v683, %v682
  %v903 = vpack.c.b16 %v685, %v684
  %v904 = vpack.c.b16 %v687, %v686
  %v905 = vpack.c.b16 %v689, %v688
  %v906 = vpack.c.b16 %v691, %v690
  %v907 = vpack.c.b16 %v693, %v692
  %v908 = vpack.c.b16 %v695, %v694
  %v909 = vpack.c.b16 %v697, %v696
  %v910 = vpack.c.b16 %v699, %v698
  %v911 = vpack.c.b16 %v701, %v700
  %v912 = vpack.c.b16 %v703, %v702
  %v913 = vpack.c.b16 %v705, %v704
  %v914 = vpack.c.b16 %v707, %v706
  %v915 = vpack.c.b16 %v709, %v708
  %v916 = vpack.c.b16 %v711, %v710
  %v917 = vpack.c.b16 %v713, %v712
  %v918 = vpack.c.b16 %v715, %v714
  %v919 = vpack.c.b16 %v717, %v716
  %v920 = vpack.c.b16 %v719, %v718
  %v921 = vpack.c.b16 %v721, %v720
  %v922 = vpack.c.b16 %v723, %v722
  %v923 = vpack.c.b16 %v725, %v724
  %v924 = vpack.c.b16 %v727, %v726
  %v925 = vpack.c.b16 %v729, %v728
  %v926 = vpack.c.b16 %v731, %v730
  %v927 = vpack.c.b16 %v733, %v732
  %v928 = vpack.c.b16 %v735, %v734
  %v929 = vpack.c.b16 %v737, %v736
  %v930 = vpack.c.b16 %v739, %v738
  %v931 = vpack.c.b16 %v741, %v740
  %v932 = vpack.c.b16 %v743, %v742
  %v933 = vpack.c.b16 %v745, %v744
  %v934 = vpack.c.b16 %v747, %v746
  %v935 = vpack.c.b16 %v749, %v748
  %v936 = vpack.c.b16 %v751, %v750
  %v937 = vpack.c.b16 %v753, %v752
  %v938 = vpack.c.b16 %v755, %v754
  %v939 = vpack.c.b16 %v757, %v756
  %v940 = vpack.c.b16 %v759, %v758
  %v941 = vpack.c.b16 %v761, %v760
  %v942 = vpack.c.b16 %v763, %v762
  %v943 = vpack.c.b16 %v765, %v764
  %v944 = vpack.c.b16 %v767, %v766
  %v945 = vpack.c.b16 %v769, %v768
  %v946 = vpack.c.b16 %v771, %v770
  %v947 = vpack.c.b16 %v773, %v772
  %v948 = vpack.c.b16 %v775, %v774
  %v949 = vpack.c.b16 %v777, %v776
  %v950 = vpack.c.b16 %v779, %v778
  %v951 = vpack.c.b16 %v781, %v780
  %v952 = vpack.c.b16 %v783, %v782
  %v953 = vpack.c.b16 %v785, %v784
  %v954 = vpack.c.b16 %v787, %v786
  %v955 = vpack.c.b16 %v789, %v788
  %v956 = vpack.c.b16 %v791, %v790
  %v957 = vpack.c.b16 %v793, %v792
  %v958 = vpack.c.b16 %v795, %v794
  %v959 = vpack.c.b16 %v797, %v796
  %v960 = vpack.c.b16 %v799, %v798
  %v961 = vpack.c.b16 %v801, %v800
  %v962 = vpack.c.b16 %v803, %v802
  %v963 = vpack.c.b16 %v805, %v804
  %v964 = vpack.c.b16 %v807, %v806
  %v965 = vpack.c.b16 %v809, %v808
  %v966 = vpack.c.b16 %v811, %v810
  %v967 = vpack.c.b16 %v813, %v812
  %v968 = vpack.c.b16 %v815, %v814
  %v969 = vpack.c.b16 %v817, %v816
  %v970 = vpack.c.b16 %v819, %v818
  %v971 = vpack.c.b16 %v821, %v820
  %v972 = vpack.c.b16 %v823, %v822
  %v973 = vpack.c.b16 %v825, %v824
  %v974 = vpack.c.b16 %v827, %v826
  %v975 = vpack.c.b16 %v829, %v828
  %v976 = vpack.c.b16 %v831, %v830
  %v977 = vpack.c.b16 %v833, %v832
  %v978 = vpack.c.b16 %v835, %v834
  %v979 = vpack.c.b16 %v837, %v836
  %v980 = vpack.c.b16 %v839, %v838
  %v981 = vpack.c.b16 %v841, %v840
  %v982 = vpack.c.b16 %v843, %v842
  %v983 = vpack.c.b16 %v845, %v844
  %v984 = vpack.c.b16 %v847, %v846
  %v985 = vpack.c.b16 %v849, %v848
  %v986 = vpack.c.b16 %v851, %v850
  %v987 = vpack.c.b16 %v853, %v852
  %v988 = vpack.c.b16 %v855, %v854
  %v989 = vpack.c.b16 %v857, %v856
  %v990 = vpack.c.b16 %v859, %v858
  %v991 = vpack.c.b16 %v861, %v860
  %v992 = vpack.c.b16 %v863, %v862
  %v993 = vpack.c.b16 %v865, %v864
  %1122 = vmatprep.subr.bf16.mxu0 0
  %1123 = vmatpush1.bf16.msra.mxu0 %v873
  %1124 = vmatprep.subr.bf16.mxu0 0
  %1125 = vmatpush1.bf16.msra.mxu0 %v872
  %1126 = vmatprep.subr.bf16.mxu0 0
  %1127 = vmatpush1.bf16.msra.mxu0 %v871
  %1128 = vmatprep.subr.bf16.mxu0 0
  %1129 = vmatpush1.bf16.msra.mxu0 %v870
  %1130 = vmatprep.subr.bf16.mxu0 0
  %1131 = vmatpush1.bf16.msra.mxu0 %v869
  %1132 = vmatprep.subr.bf16.mxu0 0
  %1133 = vmatpush1.bf16.msra.mxu0 %v868
  %1134 = vmatprep.subr.bf16.mxu0 0
  %1135 = vmatpush1.bf16.msra.mxu0 %v867
  %1136 = vmatprep.subr.bf16.mxu0 0
  %1137 = vmatpush1.bf16.msra.mxu0 %v866
  %1138 = vmatprep.subr.bf16.mxu0 0
  %1139 = vmatpush2.bf16.msra.mxu0 %v881
  %1140 = vmatprep.subr.bf16.mxu0 0
  %1141 = vmatpush2.bf16.msra.mxu0 %v880
  %1142 = vmatprep.subr.bf16.mxu0 0
  %1143 = vmatpush2.bf16.msra.mxu0 %v879
  %1144 = vmatprep.subr.bf16.mxu0 0
  %1145 = vmatpush2.bf16.msra.mxu0 %v878
  %1146 = vmatprep.subr.bf16.mxu0 0
  %1147 = vmatpush2.bf16.msra.mxu0 %v877
  %1148 = vmatprep.subr.bf16.mxu0 0
  %1149 = vmatpush2.bf16.msra.mxu0 %v876
  %1150 = vmatprep.subr.bf16.mxu0 0
  %1151 = vmatpush2.bf16.msra.mxu0 %v875
  %1152 = vmatprep.subr.bf16.mxu0 0
  %1153 = vmatpush2.bf16.msra.mxu0 %v874
  %1154 = vmatprep.mubr.bf16.mxu0 %v323
  %1155 = vmatmul.mubr.bf16.gmra.mxu0 %v322
  %v1156 = vpop.f32.mrf.mxu0
  %v1157 = vadd.f32 %v296, %v1156
  %v1158 = vpop.f32.mrf.mxu0
  %v1159 = vpop.f32.mrf.mxu0
  %v1160 = vpop.f32.mrf.mxu0
  %1161 = vdwg.mxu0
  %1162 = vmatprep.subr.bf16.mxu0 0
  %1163 = vmatpush1.bf16.msra.mxu0 %v889
  %1164 = vmatprep.subr.bf16.mxu0 0
  %1165 = vmatpush1.bf16.msra.mxu0 %v888
  %1166 = vmatprep.subr.bf16.mxu0 0
  %1167 = vmatpush1.bf16.msra.mxu0 %v887
  %1168 = vmatprep.subr.bf16.mxu0 0
  %1169 = vmatpush1.bf16.msra.mxu0 %v886
  %1170 = vmatprep.subr.bf16.mxu0 0
  %1171 = vmatpush1.bf16.msra.mxu0 %v885
  %1172 = vmatprep.subr.bf16.mxu0 0
  %1173 = vmatpush1.bf16.msra.mxu0 %v884
  %1174 = vmatprep.subr.bf16.mxu0 0
  %1175 = vmatpush1.bf16.msra.mxu0 %v883
  %1176 = vmatprep.subr.bf16.mxu0 0
  %1177 = vmatpush1.bf16.msra.mxu0 %v882
  %1178 = vmatprep.subr.bf16.mxu0 0
  %1179 = vmatpush2.bf16.msra.mxu0 %v897
  %1180 = vmatprep.subr.bf16.mxu0 0
  %1181 = vmatpush2.bf16.msra.mxu0 %v896
  %1182 = vmatprep.subr.bf16.mxu0 0
  %1183 = vmatpush2.bf16.msra.mxu0 %v895
  %1184 = vmatprep.subr.bf16.mxu0 0
  %1185 = vmatpush2.bf16.msra.mxu0 %v894
  %1186 = vmatprep.subr.bf16.mxu0 0
  %1187 = vmatpush2.bf16.msra.mxu0 %v893
  %1188 = vmatprep.subr.bf16.mxu0 0
  %1189 = vmatpush2.bf16.msra.mxu0 %v892
  %1190 = vmatprep.subr.bf16.mxu0 0
  %1191 = vmatpush2.bf16.msra.mxu0 %v891
  %1192 = vmatprep.subr.bf16.mxu0 0
  %1193 = vmatpush2.bf16.msra.mxu0 %v890
  %1194 = vmatprep.mubr.bf16.mxu0 %v325
  %1195 = vmatmul.mubr.bf16.gmra.mxu0 %v324
  %v1196 = vpop.f32.mrf.mxu0
  %v1197 = vadd.f32 %v1157, %v1196
  %v1198 = vpop.f32.mrf.mxu0
  %v1199 = vpop.f32.mrf.mxu0
  %v1200 = vpop.f32.mrf.mxu0
  %1201 = vdwg.mxu0
  %1202 = vmatprep.subr.bf16.mxu0 0
  %1203 = vmatpush1.bf16.msra.mxu0 %v905
  %1204 = vmatprep.subr.bf16.mxu0 0
  %1205 = vmatpush1.bf16.msra.mxu0 %v904
  %1206 = vmatprep.subr.bf16.mxu0 0
  %1207 = vmatpush1.bf16.msra.mxu0 %v903
  %1208 = vmatprep.subr.bf16.mxu0 0
  %1209 = vmatpush1.bf16.msra.mxu0 %v902
  %1210 = vmatprep.subr.bf16.mxu0 0
  %1211 = vmatpush1.bf16.msra.mxu0 %v901
  %1212 = vmatprep.subr.bf16.mxu0 0
  %1213 = vmatpush1.bf16.msra.mxu0 %v900
  %1214 = vmatprep.subr.bf16.mxu0 0
  %1215 = vmatpush1.bf16.msra.mxu0 %v899
  %1216 = vmatprep.subr.bf16.mxu0 0
  %1217 = vmatpush1.bf16.msra.mxu0 %v898
  %1218 = vmatprep.subr.bf16.mxu0 0
  %1219 = vmatpush2.bf16.msra.mxu0 %v913
  %1220 = vmatprep.subr.bf16.mxu0 0
  %1221 = vmatpush2.bf16.msra.mxu0 %v912
  %1222 = vmatprep.subr.bf16.mxu0 0
  %1223 = vmatpush2.bf16.msra.mxu0 %v911
  %1224 = vmatprep.subr.bf16.mxu0 0
  %1225 = vmatpush2.bf16.msra.mxu0 %v910
  %1226 = vmatprep.subr.bf16.mxu0 0
  %1227 = vmatpush2.bf16.msra.mxu0 %v909
  %1228 = vmatprep.subr.bf16.mxu0 0
  %1229 = vmatpush2.bf16.msra.mxu0 %v908
  %1230 = vmatprep.subr.bf16.mxu0 0
  %1231 = vmatpush2.bf16.msra.mxu0 %v907
  %1232 = vmatprep.subr.bf16.mxu0 0
  %1233 = vmatpush2.bf16.msra.mxu0 %v906
  %1234 = vmatprep.mubr.bf16.mxu0 %v327
  %1235 = vmatmul.mubr.bf16.gmra.mxu0 %v326
  %v1236 = vpop.f32.mrf.mxu0
  %v1237 = vadd.f32 %v1197, %v1236
  %v1238 = vpop.f32.mrf.mxu0
  %v1239 = vpop.f32.mrf.mxu0
  %v1240 = vpop.f32.mrf.mxu0
  %1241 = vdwg.mxu0
  %1242 = vmatprep.subr.bf16.mxu0 0
  %1243 = vmatpush1.bf16.msra.mxu0 %v921
  %1244 = vmatprep.subr.bf16.mxu0 0
  %1245 = vmatpush1.bf16.msra.mxu0 %v920
  %1246 = vmatprep.subr.bf16.mxu0 0
  %1247 = vmatpush1.bf16.msra.mxu0 %v919
  %1248 = vmatprep.subr.bf16.mxu0 0
  %1249 = vmatpush1.bf16.msra.mxu0 %v918
  %1250 = vmatprep.subr.bf16.mxu0 0
  %1251 = vmatpush1.bf16.msra.mxu0 %v917
  %1252 = vmatprep.subr.bf16.mxu0 0
  %1253 = vmatpush1.bf16.msra.mxu0 %v916
  %1254 = vmatprep.subr.bf16.mxu0 0
  %1255 = vmatpush1.bf16.msra.mxu0 %v915
  %1256 = vmatprep.subr.bf16.mxu0 0
  %1257 = vmatpush1.bf16.msra.mxu0 %v914
  %1258 = vmatprep.subr.bf16.mxu0 0
  %1259 = vmatpush2.bf16.msra.mxu0 %v929
  %1260 = vmatprep.subr.bf16.mxu0 0
  %1261 = vmatpush2.bf16.msra.mxu0 %v928
  %1262 = vmatprep.subr.bf16.mxu0 0
  %1263 = vmatpush2.bf16.msra.mxu0 %v927
  %1264 = vmatprep.subr.bf16.mxu0 0
  %1265 = vmatpush2.bf16.msra.mxu0 %v926
  %1266 = vmatprep.subr.bf16.mxu0 0
  %1267 = vmatpush2.bf16.msra.mxu0 %v925
  %1268 = vmatprep.subr.bf16.mxu0 0
  %1269 = vmatpush2.bf16.msra.mxu0 %v924
  %1270 = vmatprep.subr.bf16.mxu0 0
  %1271 = vmatpush2.bf16.msra.mxu0 %v923
  %1272 = vmatprep.subr.bf16.mxu0 0
  %1273 = vmatpush2.bf16.msra.mxu0 %v922
  %1274 = vmatprep.mubr.bf16.mxu0 %v329
  %1275 = vmatmul.mubr.bf16.gmra.mxu0 %v328
  %v1276 = vpop.f32.mrf.mxu0
  %v1277 = vadd.f32 %v1237, %v1276
  %v1278 = vpop.f32.mrf.mxu0
  %v1279 = vpop.f32.mrf.mxu0
  %v1280 = vpop.f32.mrf.mxu0
  %1281 = vdwg.mxu0
  %1282 = vmatprep.subr.bf16.mxu0 0
  %1283 = vmatpush1.bf16.msra.mxu0 %v937
  %1284 = vmatprep.subr.bf16.mxu0 0
  %1285 = vmatpush1.bf16.msra.mxu0 %v936
  %1286 = vmatprep.subr.bf16.mxu0 0
  %1287 = vmatpush1.bf16.msra.mxu0 %v935
  %1288 = vmatprep.subr.bf16.mxu0 0
  %1289 = vmatpush1.bf16.msra.mxu0 %v934
  %1290 = vmatprep.subr.bf16.mxu0 0
  %1291 = vmatpush1.bf16.msra.mxu0 %v933
  %1292 = vmatprep.subr.bf16.mxu0 0
  %1293 = vmatpush1.bf16.msra.mxu0 %v932
  %1294 = vmatprep.subr.bf16.mxu0 0
  %1295 = vmatpush1.bf16.msra.mxu0 %v931
  %1296 = vmatprep.subr.bf16.mxu0 0
  %1297 = vmatpush1.bf16.msra.mxu0 %v930
  %1298 = vmatprep.subr.bf16.mxu0 0
  %1299 = vmatpush2.bf16.msra.mxu0 %v945
  %1300 = vmatprep.subr.bf16.mxu0 0
  %1301 = vmatpush2.bf16.msra.mxu0 %v944
  %1302 = vmatprep.subr.bf16.mxu0 0
  %1303 = vmatpush2.bf16.msra.mxu0 %v943
  %1304 = vmatprep.subr.bf16.mxu0 0
  %1305 = vmatpush2.bf16.msra.mxu0 %v942
  %1306 = vmatprep.subr.bf16.mxu0 0
  %1307 = vmatpush2.bf16.msra.mxu0 %v941
  %1308 = vmatprep.subr.bf16.mxu0 0
  %1309 = vmatpush2.bf16.msra.mxu0 %v940
  %1310 = vmatprep.subr.bf16.mxu0 0
  %1311 = vmatpush2.bf16.msra.mxu0 %v939
  %1312 = vmatprep.subr.bf16.mxu0 0
  %1313 = vmatpush2.bf16.msra.mxu0 %v938
  %1314 = vmatprep.mubr.bf16.mxu0 %v331
  %1315 = vmatmul.mubr.bf16.gmra.mxu0 %v330
  %v1316 = vpop.f32.mrf.mxu0
  %v1317 = vadd.f32 %v1277, %v1316
  %v1318 = vpop.f32.mrf.mxu0
  %v1319 = vpop.f32.mrf.mxu0
  %v1320 = vpop.f32.mrf.mxu0
  %1321 = vdwg.mxu0
  %1322 = vmatprep.subr.bf16.mxu0 0
  %1323 = vmatpush1.bf16.msra.mxu0 %v953
  %1324 = vmatprep.subr.bf16.mxu0 0
  %1325 = vmatpush1.bf16.msra.mxu0 %v952
  %1326 = vmatprep.subr.bf16.mxu0 0
  %1327 = vmatpush1.bf16.msra.mxu0 %v951
  %1328 = vmatprep.subr.bf16.mxu0 0
  %1329 = vmatpush1.bf16.msra.mxu0 %v950
  %1330 = vmatprep.subr.bf16.mxu0 0
  %1331 = vmatpush1.bf16.msra.mxu0 %v949
  %1332 = vmatprep.subr.bf16.mxu0 0
  %1333 = vmatpush1.bf16.msra.mxu0 %v948
  %1334 = vmatprep.subr.bf16.mxu0 0
  %1335 = vmatpush1.bf16.msra.mxu0 %v947
  %1336 = vmatprep.subr.bf16.mxu0 0
  %1337 = vmatpush1.bf16.msra.mxu0 %v946
  %1338 = vmatprep.subr.bf16.mxu0 0
  %1339 = vmatpush2.bf16.msra.mxu0 %v961
  %1340 = vmatprep.subr.bf16.mxu0 0
  %1341 = vmatpush2.bf16.msra.mxu0 %v960
  %1342 = vmatprep.subr.bf16.mxu0 0
  %1343 = vmatpush2.bf16.msra.mxu0 %v959
  %1344 = vmatprep.subr.bf16.mxu0 0
  %1345 = vmatpush2.bf16.msra.mxu0 %v958
  %1346 = vmatprep.subr.bf16.mxu0 0
  %1347 = vmatpush2.bf16.msra.mxu0 %v957
  %1348 = vmatprep.subr.bf16.mxu0 0
  %1349 = vmatpush2.bf16.msra.mxu0 %v956
  %1350 = vmatprep.subr.bf16.mxu0 0
  %1351 = vmatpush2.bf16.msra.mxu0 %v955
  %1352 = vmatprep.subr.bf16.mxu0 0
  %1353 = vmatpush2.bf16.msra.mxu0 %v954
  %1354 = vmatprep.mubr.bf16.mxu0 %v333
  %1355 = vmatmul.mubr.bf16.gmra.mxu0 %v332
  %v1356 = vpop.f32.mrf.mxu0
  %v1357 = vadd.f32 %v1317, %v1356
  %v1358 = vpop.f32.mrf.mxu0
  %v1359 = vpop.f32.mrf.mxu0
  %v1360 = vpop.f32.mrf.mxu0
  %1361 = vdwg.mxu0
  %1362 = vmatprep.subr.bf16.mxu0 0
  %1363 = vmatpush1.bf16.msra.mxu0 %v969
  %1364 = vmatprep.subr.bf16.mxu0 0
  %1365 = vmatpush1.bf16.msra.mxu0 %v968
  %1366 = vmatprep.subr.bf16.mxu0 0
  %1367 = vmatpush1.bf16.msra.mxu0 %v967
  %1368 = vmatprep.subr.bf16.mxu0 0
  %1369 = vmatpush1.bf16.msra.mxu0 %v966
  %1370 = vmatprep.subr.bf16.mxu0 0
  %1371 = vmatpush1.bf16.msra.mxu0 %v965
  %1372 = vmatprep.subr.bf16.mxu0 0
  %1373 = vmatpush1.bf16.msra.mxu0 %v964
  %1374 = vmatprep.subr.bf16.mxu0 0
  %1375 = vmatpush1.bf16.msra.mxu0 %v963
  %1376 = vmatprep.subr.bf16.mxu0 0
  %1377 = vmatpush1.bf16.msra.mxu0 %v962
  %1378 = vmatprep.subr.bf16.mxu0 0
  %1379 = vmatpush2.bf16.msra.mxu0 %v977
  %1380 = vmatprep.subr.bf16.mxu0 0
  %1381 = vmatpush2.bf16.msra.mxu0 %v976
  %1382 = vmatprep.subr.bf16.mxu0 0
  %1383 = vmatpush2.bf16.msra.mxu0 %v975
  %1384 = vmatprep.subr.bf16.mxu0 0
  %1385 = vmatpush2.bf16.msra.mxu0 %v974
  %1386 = vmatprep.subr.bf16.mxu0 0
  %1387 = vmatpush2.bf16.msra.mxu0 %v973
  %1388 = vmatprep.subr.bf16.mxu0 0
  %1389 = vmatpush2.bf16.msra.mxu0 %v972
  %1390 = vmatprep.subr.bf16.mxu0 0
  %1391 = vmatpush2.bf16.msra.mxu0 %v971
  %1392 = vmatprep.subr.bf16.mxu0 0
  %1393 = vmatpush2.bf16.msra.mxu0 %v970
  %1394 = vmatprep.mubr.bf16.mxu0 %v335
  %1395 = vmatmul.mubr.bf16.gmra.mxu0 %v334
  %v1396 = vpop.f32.mrf.mxu0
  %v1397 = vadd.f32 %v1357, %v1396
  %v1398 = vpop.f32.mrf.mxu0
  %v1399 = vpop.f32.mrf.mxu0
  %v1400 = vpop.f32.mrf.mxu0
  %1401 = vdwg.mxu0
  %1402 = vmatprep.subr.bf16.mxu0 0
  %1403 = vmatpush1.bf16.msra.mxu0 %v985
  %1404 = vmatprep.subr.bf16.mxu0 0
  %1405 = vmatpush1.bf16.msra.mxu0 %v984
  %1406 = vmatprep.subr.bf16.mxu0 0
  %1407 = vmatpush1.bf16.msra.mxu0 %v983
  %1408 = vmatprep.subr.bf16.mxu0 0
  %1409 = vmatpush1.bf16.msra.mxu0 %v982
  %1410 = vmatprep.subr.bf16.mxu0 0
  %1411 = vmatpush1.bf16.msra.mxu0 %v981
  %1412 = vmatprep.subr.bf16.mxu0 0
  %1413 = vmatpush1.bf16.msra.mxu0 %v980
  %1414 = vmatprep.subr.bf16.mxu0 0
  %1415 = vmatpush1.bf16.msra.mxu0 %v979
  %1416 = vmatprep.subr.bf16.mxu0 0
  %1417 = vmatpush1.bf16.msra.mxu0 %v978
  %1418 = vmatprep.subr.bf16.mxu0 0
  %1419 = vmatpush2.bf16.msra.mxu0 %v993
  %1420 = vmatprep.subr.bf16.mxu0 0
  %1421 = vmatpush2.bf16.msra.mxu0 %v992
  %1422 = vmatprep.subr.bf16.mxu0 0
  %1423 = vmatpush2.bf16.msra.mxu0 %v991
  %1424 = vmatprep.subr.bf16.mxu0 0
  %1425 = vmatpush2.bf16.msra.mxu0 %v990
  %1426 = vmatprep.subr.bf16.mxu0 0
  %1427 = vmatpush2.bf16.msra.mxu0 %v989
  %1428 = vmatprep.subr.bf16.mxu0 0
  %1429 = vmatpush2.bf16.msra.mxu0 %v988
  %1430 = vmatprep.subr.bf16.mxu0 0
  %1431 = vmatpush2.bf16.msra.mxu0 %v987
  %1432 = vmatprep.subr.bf16.mxu0 0
  %1433 = vmatpush2.bf16.msra.mxu0 %v986
  %1434 = vmatprep.mubr.bf16.mxu0 %v337
  %1435 = vmatmul.mubr.bf16.gmra.mxu0 %v336
  %v1436 = vpop.f32.mrf.mxu0
  %v1437 = vadd.f32 %v1397, %v1436
  %v1438 = vpop.f32.mrf.mxu0
  %v1439 = vpop.f32.mrf.mxu0
  %v1440 = vpop.f32.mrf.mxu0
  %1441 = vdwg.mxu0
  %v1442 = vmax.f32 %v1437, 0.0
  %v1443 = vpack.c.bf16 %v1442, %v1442
  %v1444 = vld [vmem:[%s3] sm:$0xf]
  %v1445 = vld [vmem:[%s3 + $0x4] sm:$0xf]
  %v1446 = vld [vmem:[%s3 + $0x8] sm:$0xf]
  %v1447 = vld [vmem:[%s3 + $0xc] sm:$0xf]
  %v1448 = vld [vmem:[%s3 + $0x10] sm:$0xf]
  %v1449 = vld [vmem:[%s3 + $0x14] sm:$0xf]
  %v1450 = vld [vmem:[%s3 + $0x18] sm:$0xf]
  %v1451 = vld [vmem:[%s3 + $0x1c] sm:$0xf]
  %v1452 = vld [vmem:[%s4] sm:$0x1]
  %v1454 = vlaneseq
  %v1455 = vshrl.u32 %v1454, 7
  %v1456 = vsub.s32 0, %v1455
  %v1457 = vrot.slane %v1452, %v1456
  %v1467 = vunpack.c.l.b16 %v1444
  %v1468 = vunpack.c.l.b16 %v1445
  %v1469 = vunpack.c.l.b16 %v1446
  %v1470 = vunpack.c.l.b16 %v1447
  %v1471 = vunpack.c.l.b16 %v1448
  %v1472 = vunpack.c.l.b16 %v1449
  %v1473 = vunpack.c.l.b16 %v1450
  %v1474 = vunpack.c.l.b16 %v1451
  %v1475 = vpack.c.b16 %v1468, %v1467
  %v1476 = vpack.c.b16 %v1470, %v1469
  %v1477 = vpack.c.b16 %v1472, %v1471
  %v1478 = vpack.c.b16 %v1474, %v1473
  %vm1483 = vcmask 523264
  %v1485 = vsel %vm1483, %v1443, 0
  %1487 = vmatprep.subr.bf16.mxu0 0
  %1488 = vmatpush1.bf16.msra.mxu0 0
  %1489 = vmatprep.subr.bf16.mxu0 0
  %1490 = vmatpush1.bf16.msra.mxu0 0
  %1491 = vmatprep.subr.bf16.mxu0 0
  %1492 = vmatpush1.bf16.msra.mxu0 0
  %1493 = vmatprep.subr.bf16.mxu0 0
  %1494 = vmatpush1.bf16.msra.mxu0 0
  %1495 = vmatprep.subr.bf16.mxu0 0
  %1496 = vmatpush1.bf16.msra.mxu0 %v1478
  %1497 = vmatprep.subr.bf16.mxu0 0
  %1498 = vmatpush1.bf16.msra.mxu0 %v1477
  %1499 = vmatprep.subr.bf16.mxu0 0
  %1500 = vmatpush1.bf16.msra.mxu0 %v1476
  %1501 = vmatprep.subr.bf16.mxu0 0
  %1502 = vmatpush1.bf16.msra.mxu0 %v1475
  %1503 = vmatprep.subr.bf16.mxu0 0
  %1504 = vmatpush2.bf16.msra.mxu0 0
  %1505 = vmatprep.subr.bf16.mxu0 0
  %1506 = vmatpush2.bf16.msra.mxu0 0
  %1507 = vmatprep.subr.bf16.mxu0 0
  %1508 = vmatpush2.bf16.msra.mxu0 0
  %1509 = vmatprep.subr.bf16.mxu0 0
  %1510 = vmatpush2.bf16.msra.mxu0 0
  %1511 = vmatprep.subr.bf16.mxu0 0
  %1512 = vmatpush2.bf16.msra.mxu0 0
  %1513 = vmatprep.subr.bf16.mxu0 0
  %1514 = vmatpush2.bf16.msra.mxu0 0
  %1515 = vmatprep.subr.bf16.mxu0 0
  %1516 = vmatpush2.bf16.msra.mxu0 0
  %1517 = vmatprep.subr.bf16.mxu0 0
  %1518 = vmatpush2.bf16.msra.mxu0 0
  %1519 = vmatprep.mubr.bf16.mxu0 0
  %1520 = vmatmul.mubr.bf16.gmra.mxu0 %v1485
  %v1521 = vpop.f32.mrf.mxu0
  %v1522 = vadd.f32 %v1457, %v1521
  %v1523 = vpop.f32.mrf.mxu0
  %v1524 = vpop.f32.mrf.mxu0
  %v1525 = vpop.f32.mrf.mxu0
  %1526 = vdwg.mxu0
  %v1527 = vmax.f32 %v1522, 0.0
  %v1528 = vpack.c.bf16 %v1527, %v1527
  %v1529 = vld [vmem:[%s5] sm:$0xf]
  %v1530 = vld [vmem:[%s5 + $0x4] sm:$0xf]
  %v1531 = vld [vmem:[%s5 + $0x8] sm:$0xf]
  %v1532 = vld [vmem:[%s5 + $0xc] sm:$0xf]
  %v1533 = vld [vmem:[%s6] sm:$0x1]
  %v1535 = vlaneseq
  %v1536 = vshrl.u32 %v1535, 7
  %v1537 = vsub.s32 0, %v1536
  %v1538 = vrot.slane %v1533, %v1537
  %v1544 = vunpack.c.l.b16 %v1529
  %v1545 = vunpack.c.l.b16 %v1530
  %v1546 = vunpack.c.l.b16 %v1531
  %v1547 = vunpack.c.l.b16 %v1532
  %v1548 = vpack.c.b16 %v1545, %v1544
  %v1549 = vpack.c.b16 %v1547, %v1546
  %vm1552 = vcmask 261120
  %v1554 = vsel %vm1552, %v1528, 0
  %1556 = vmatprep.subr.bf16.mxu0 0
  %1557 = vmatpush1.bf16.msra.mxu0 0
  %1558 = vmatprep.subr.bf16.mxu0 0
  %1559 = vmatpush1.bf16.msra.mxu0 0
  %1560 = vmatprep.subr.bf16.mxu0 0
  %1561 = vmatpush1.bf16.msra.mxu0 0
  %1562 = vmatprep.subr.bf16.mxu0 0
  %1563 = vmatpush1.bf16.msra.mxu0 0
  %1564 = vmatprep.subr.bf16.mxu0 0
  %1565 = vmatpush1.bf16.msra.mxu0 0
  %1566 = vmatprep.subr.bf16.mxu0 0
  %1567 = vmatpush1.bf16.msra.mxu0 0
  %1568 = vmatprep.subr.bf16.mxu0 0
  %1569 = vmatpush1.bf16.msra.mxu0 %v1549
  %1570 = vmatprep.subr.bf16.mxu0 0
  %1571 = vmatpush1.bf16.msra.mxu0 %v1548
  %1572 = vmatprep.subr.bf16.mxu0 0
  %1573 = vmatpush2.bf16.msra.mxu0 0
  %1574 = vmatprep.subr.bf16.mxu0 0
  %1575 = vmatpush2.bf16.msra.mxu0 0
  %1576 = vmatprep.subr.bf16.mxu0 0
  %1577 = vmatpush2.bf16.msra.mxu0 0
  %1578 = vmatprep.subr.bf16.mxu0 0
  %1579 = vmatpush2.bf16.msra.mxu0 0
  %1580 = vmatprep.subr.bf16.mxu0 0
  %1581 = vmatpush2.bf16.msra.mxu0 0
  %1582 = vmatprep.subr.bf16.mxu0 0
  %1583 = vmatpush2.bf16.msra.mxu0 0
  %1584 = vmatprep.subr.bf16.mxu0 0
  %1585 = vmatpush2.bf16.msra.mxu0 0
  %1586 = vmatprep.subr.bf16.mxu0 0
  %1587 = vmatpush2.bf16.msra.mxu0 0
  %1588 = vmatprep.mubr.bf16.mxu0 0
  %1589 = vmatmul.mubr.bf16.gmra.mxu0 %v1554
  %v1590 = vpop.f32.mrf.mxu0
  %v1591 = vadd.f32 %v1538, %v1590
  %v1592 = vpop.f32.mrf.mxu0
  %v1593 = vpop.f32.mrf.mxu0
  %v1594 = vpop.f32.mrf.mxu0
  %1595 = vdwg.mxu0
  %1596 = vst [vmem:[%s7] sm:$0xff] %v1591
  // Predicated region
  $region30: #{mlp_conv_net_forward.3} parent=0 // pred_check
    _
  $region31: #{mlp_conv_net_forward.3} parent=0 // pred_check_branch
    %1598 = sbr.rel (0) target = $region33
  $region32: #{mlp_conv_net_forward.3} parent=0 // pred_region
    _
  $region33: #{mlp_conv_net_forward.3} parent=0 // pred_fallthru
    _
  // Predicated region
  $region34: #{mlp_conv_net_forward.3} parent=0 // pred_check
    _
  $region35: #{mlp_conv_net_forward.3} parent=0 // pred_check_branch
    %1600 = sbr.rel (0) target = $region37
  $region36: #{mlp_conv_net_forward.3} parent=0 // pred_region
    _
  $region37: #{mlp_conv_net_forward.3} parent=0 // pred_fallthru
    _

// kernel: mlp_conv_net_forward.2
$region0: #{mlp_conv_net_forward.2}
  #allocation0 [shape = 'u32[]', space=smem, size = 0x4, offset = 0x4, fixed_abs, tag = 'smem constant byte address 0x4 - core index']
  #allocation1 [shape = 'u32[144,128]{1,0:T(1,128)}', space=vmem, size = 0x12000, scoped, tag = 'internal scratch']
  %s0 = inlined_call_operand.vmem [shape: bf16[256,32], index: 0, kind: input, shape index: {}]
  %s1 = inlined_call_operand.vmem [shape: bf16[96,480], index: 1, kind: input, shape index: {}]
  %s2 = inlined_call_operand.vmem [shape: f32[1,480], index: 2, kind: input, shape index: {}]
  %s3 = inlined_call_operand.vmem [shape: bf16[2,480,304], index: 3, kind: input, shape index: {}]
  %s4 = inlined_call_operand.vmem [shape: bf16[152,256], index: 4, kind: input, shape index: {}]
  %s5 = inlined_call_operand.vmem [shape: bf16[3,304,544], index: 5, kind: input, shape index: {}]
  %s6 = inlined_call_operand.vmem [shape: f32[1,544], index: 6, kind: input, shape index: {}]
  %s7 = inlined_call_operand.hbm [shape: bf16[2,544,256], index: 7, kind: input, shape index: {}]
  %s8 = inlined_call_operand.vmem [shape: bf16[64,152], index: 8, kind: input, shape index: {}]
  %s9 = inlined_call_operand.vmem [shape: bf16[64,256], index: 9, kind: output, shape index: {}]
  %s10 = sld [smem:[#allocation0]]
  $region50: #{mlp_conv_net_forward.2} parent=0
    _
  %s12 = ssub.s32 1, %s10
  %s13 = scalar_select 0, %s12, %s10
  $region1: #{mlp_conv_net_forward.2} parent=0
    #allocation2 [shape = 'u8[557056]{0}', space=vmem, size = 0x88000, scoped, tag = 'input window, operand 7, single buffered']
    #allocation3 [shape = 's32[1]{0}', space=sflag, size = 0x4, scoped, tag = 'scoped memory for mlp_conv_net_forward.2']
    %14 = vsyncpa [#allocation3], 0
    // Predicated region
    $region2: #{mlp_conv_net_forward.2} parent=1 // pred_check
      _
    $region3: #{mlp_conv_net_forward.2} parent=1 // pred_check_branch
      %16 = sbr.rel (0) target = $region5
    $region4: #{mlp_conv_net_forward.2} parent=1 // pred_region
      _
    $region5: #{mlp_conv_net_forward.2} parent=1 // pred_fallthru
      _
    // Predicated region
    $region6: #{mlp_conv_net_forward.2} parent=1 // pred_check
      _
    $region7: #{mlp_conv_net_forward.2} parent=1 // pred_check_branch
      %18 = sbr.rel (0) target = $region9
    $region8: #{mlp_conv_net_forward.2} parent=1 // pred_region
      _
    $region9: #{mlp_conv_net_forward.2} parent=1 // pred_fallthru
      _
    // Predicated region
    $region10: #{mlp_conv_net_forward.2} parent=1 // pred_check
      _
    $region11: #{mlp_conv_net_forward.2} parent=1 // pred_check_branch
      %20 = sbr.rel (0) target = $region13
    $region12: #{mlp_conv_net_forward.2} parent=1 // pred_region
      _
    $region13: #{mlp_conv_net_forward.2} parent=1 // pred_fallthru
      _
    // Predicated region
    $region14: #{mlp_conv_net_forward.2} parent=1 // pred_check
      _
    $region15: #{mlp_conv_net_forward.2} parent=1 // pred_check_branch
      %22 = sbr.rel (0) target = $region17
    $region16: #{mlp_conv_net_forward.2} parent=1 // pred_region
      _
    $region17: #{mlp_conv_net_forward.2} parent=1 // pred_fallthru
      _
    // Predicated region
    $region18: #{mlp_conv_net_forward.2} parent=1 // pred_check
      _
    $region19: #{mlp_conv_net_forward.2} parent=1 // pred_check_branch
      %24 = sbr.rel (0) target = $region21
    $region20: #{mlp_conv_net_forward.2} parent=1 // pred_region
      _
    $region21: #{mlp_conv_net_forward.2} parent=1 // pred_fallthru
      _
    // Predicated region
    $region22: #{mlp_conv_net_forward.2} parent=1 // pred_check
      _
    $region23: #{mlp_conv_net_forward.2} parent=1 // pred_check_branch
      %26 = sbr.rel (0) target = $region25
    $region24: #{mlp_conv_net_forward.2} parent=1 // pred_region
      _
    $region25: #{mlp_conv_net_forward.2} parent=1 // pred_fallthru
      _
    // Predicated region
    $region26: #{mlp_conv_net_forward.2} parent=1 // pred_check
      _
    $region27: #{mlp_conv_net_forward.2} parent=1 // pred_check_branch
      %28 = sbr.rel (0) target = $region29
    $region28: #{mlp_conv_net_forward.2} parent=1 // pred_region
      _
    $region29: #{mlp_conv_net_forward.2} parent=1 // pred_fallthru
      _
    // Predicated region
    $region30: #{mlp_conv_net_forward.2} parent=1 // pred_check
      _
    $region31: #{mlp_conv_net_forward.2} parent=1 // pred_check_branch
      %30 = sbr.rel (0) target = $region33
    $region32: #{mlp_conv_net_forward.2} parent=1 // pred_region
      %s32 = ssub.s32 17408, 17408
      %33 = vsyncadd [#allocation3], %s32
      %s34 = sshll.u32 [#allocation2], 4
      %s35 = int_to_ptr.vmem [resolvable:$true] %s34
      %40 = dma.hbm_to_vmem [thread:$0]  %s7, 17408, %s35, [#allocation3], 128, 128, 8
    $region33: #{mlp_conv_net_forward.2} parent=1 // pred_fallthru
      _
    // Predicated region
    $region34: #{mlp_conv_net_forward.2} parent=1 // pred_check
      _
    $region35: #{mlp_conv_net_forward.2} parent=1 // pred_check_branch
      %42 = sbr.rel (0) target = $region37
    $region36: #{mlp_conv_net_forward.2} parent=1 // pred_region
      _
    $region37: #{mlp_conv_net_forward.2} parent=1 // pred_fallthru
      _
    // Predicated region
    $region38: #{mlp_conv_net_forward.2} parent=1 // pred_check
      _
    $region39: #{mlp_conv_net_forward.2} parent=1 // pred_check_branch
      %44 = sbr.rel (0) target = $region41
    $region40: #{mlp_conv_net_forward.2} parent=1 // pred_region
      %45 = dma.done [#allocation3], 17408
    $region41: #{mlp_conv_net_forward.2} parent=1 // pred_fallthru
      _
    %v47 = vld [vmem:[%s0] sm:$0xf]
    %v48 = vld [vmem:[%s0 + $0x4] sm:$0xf]
    %v49 = vld [vmem:[%s0 + $0x8] sm:$0xf]
    %v50 = vld [vmem:[%s0 + $0xc] sm:$0xf]
    %v51 = vld [vmem:[%s0 + $0x10] sm:$0xf]
    %v52 = vld [vmem:[%s0 + $0x14] sm:$0xf]
    %v53 = vld [vmem:[%s0 + $0x18] sm:$0xf]
    %v54 = vld [vmem:[%s0 + $0x1c] sm:$0xf]
    %v55 = vld [vmem:[%s0 + $0x20] sm:$0xf]
    %v56 = vld [vmem:[%s0 + $0x24] sm:$0xf]
    %v57 = vld [vmem:[%s0 + $0x28] sm:$0xf]
    %v58 = vld [vmem:[%s0 + $0x2c] sm:$0xf]
    %v59 = vld [vmem:[%s0 + $0x30] sm:$0xf]
    %v60 = vld [vmem:[%s0 + $0x34] sm:$0xf]
    %v61 = vld [vmem:[%s0 + $0x38] sm:$0xf]
    %v62 = vld [vmem:[%s0 + $0x3c] sm:$0xf]
    %v63 = vld [vmem:[%s0 + $0x40] sm:$0xf]
    %v64 = vld [vmem:[%s0 + $0x44] sm:$0xf]
    %v65 = vld [vmem:[%s0 + $0x48] sm:$0xf]
    %v66 = vld [vmem:[%s0 + $0x4c] sm:$0xf]
    %v67 = vld [vmem:[%s0 + $0x50] sm:$0xf]
    %v68 = vld [vmem:[%s0 + $0x54] sm:$0xf]
    %v69 = vld [vmem:[%s0 + $0x58] sm:$0xf]
    %v70 = vld [vmem:[%s0 + $0x5c] sm:$0xf]
    %v71 = vld [vmem:[%s0 + $0x60] sm:$0xf]
    %v72 = vld [vmem:[%s0 + $0x64] sm:$0xf]
    %v73 = vld [vmem:[%s0 + $0x68] sm:$0xf]
    %v74 = vld [vmem:[%s0 + $0x6c] sm:$0xf]
    %v75 = vld [vmem:[%s0 + $0x70] sm:$0xf]
    %v76 = vld [vmem:[%s0 + $0x74] sm:$0xf]
    %v77 = vld [vmem:[%s0 + $0x78] sm:$0xf]
    %v78 = vld [vmem:[%s0 + $0x7c] sm:$0xf]
    %v111 = vunpack.c.l.b16 %v47
    %v112 = vunpack.c.l.b16 %v48
    %v113 = vunpack.c.l.b16 %v49
    %v114 = vunpack.c.l.b16 %v50
    %v115 = vunpack.c.l.b16 %v51
    %v116 = vunpack.c.l.b16 %v52
    %v117 = vunpack.c.l.b16 %v53
    %v118 = vunpack.c.l.b16 %v54
    %v119 = vunpack.c.l.b16 %v55
    %v120 = vunpack.c.l.b16 %v56
    %v121 = vunpack.c.l.b16 %v57
    %v122 = vunpack.c.l.b16 %v58
    %v123 = vunpack.c.l.b16 %v59
    %v124 = vunpack.c.l.b16 %v60
    %v125 = vunpack.c.l.b16 %v61
    %v126 = vunpack.c.l.b16 %v62
    %v127 = vunpack.c.l.b16 %v63
    %v128 = vunpack.c.l.b16 %v64
    %v129 = vunpack.c.l.b16 %v65
    %v130 = vunpack.c.l.b16 %v66
    %v131 = vunpack.c.l.b16 %v67
    %v132 = vunpack.c.l.b16 %v68
    %v133 = vunpack.c.l.b16 %v69
    %v134 = vunpack.c.l.b16 %v70
    %v135 = vunpack.c.l.b16 %v71
    %v136 = vunpack.c.l.b16 %v72
    %v137 = vunpack.c.l.b16 %v73
    %v138 = vunpack.c.l.b16 %v74
    %v139 = vunpack.c.l.b16 %v75
    %v140 = vunpack.c.l.b16 %v76
    %v141 = vunpack.c.l.b16 %v77
    %v142 = vunpack.c.l.b16 %v78
    %v143 = vpack.c.b16 %v112, %v111
    %v144 = vpack.c.b16 %v114, %v113
    %v145 = vpack.c.b16 %v116, %v115
    %v146 = vpack.c.b16 %v118, %v117
    %v147 = vpack.c.b16 %v120, %v119
    %v148 = vpack.c.b16 %v122, %v121
    %v149 = vpack.c.b16 %v124, %v123
    %v150 = vpack.c.b16 %v126, %v125
    %v151 = vpack.c.b16 %v128, %v127
    %v152 = vpack.c.b16 %v130, %v129
    %v153 = vpack.c.b16 %v132, %v131
    %v154 = vpack.c.b16 %v134, %v133
    %v155 = vpack.c.b16 %v136, %v135
    %v156 = vpack.c.b16 %v138, %v137
    %v157 = vpack.c.b16 %v140, %v139
    %v158 = vpack.c.b16 %v142, %v141
    %vm159 = vsmask.f32 7424
    %v161 = vshrl.u32 %v143, 16
    %v163 = vshll.u32 %v143, 16
    %v165 = vrot.slane %v163, 1
    %v166 = vor.u32 %v161, %v165
    %v168 = vshll.u32 %v144, 16
    %v170 = vrot.slane %v168, 1
    %v171 = vsel %vm159, %v166, %v170
    %v172 = vshrl.u32 %v144, 16
    %v174 = vor.u32 %v172, %v170
    %v176 = vshll.u32 %v145, 16
    %v178 = vrot.slane %v176, 1
    %v179 = vsel %vm159, %v174, %v178
    %v180 = vshrl.u32 %v145, 16
    %v182 = vor.u32 %v180, %v178
    %v184 = vshll.u32 %v146, 16
    %v186 = vrot.slane %v184, 1
    %v187 = vsel %vm159, %v182, %v186
    %v188 = vshrl.u32 %v146, 16
    %v190 = vor.u32 %v188, %v186
    %v192 = vshll.u32 %v147, 16
    %v194 = vrot.slane %v192, 1
    %v195 = vsel %vm159, %v190, %v194
    %v196 = vshrl.u32 %v147, 16
    %v198 = vor.u32 %v196, %v194
    %v200 = vshll.u32 %v148, 16
    %v202 = vrot.slane %v200, 1
    %v203 = vsel %vm159, %v198, %v202
    %v204 = vshrl.u32 %v148, 16
    %v206 = vor.u32 %v204, %v202
    %v208 = vshll.u32 %v149, 16
    %v210 = vrot.slane %v208, 1
    %v211 = vsel %vm159, %v206, %v210
    %v212 = vshrl.u32 %v149, 16
    %v214 = vor.u32 %v212, %v210
    %v216 = vshll.u32 %v150, 16
    %v218 = vrot.slane %v216, 1
    %v219 = vsel %vm159, %v214, %v218
    %v220 = vshrl.u32 %v150, 16
    %v222 = vor.u32 %v220, %v218
    %v224 = vshll.u32 %v151, 16
    %v226 = vrot.slane %v224, 1
    %v227 = vsel %vm159, %v222, %v226
    %v228 = vshrl.u32 %v151, 16
    %v230 = vor.u32 %v228, %v226
    %v232 = vshll.u32 %v152, 16
    %v234 = vrot.slane %v232, 1
    %v235 = vsel %vm159, %v230, %v234
    %v236 = vshrl.u32 %v152, 16
    %v238 = vor.u32 %v236, %v234
    %v240 = vshll.u32 %v153, 16
    %v242 = vrot.slane %v240, 1
    %v243 = vsel %vm159, %v238, %v242
    %v244 = vshrl.u32 %v153, 16
    %v246 = vor.u32 %v244, %v242
    %v248 = vshll.u32 %v154, 16
    %v250 = vrot.slane %v248, 1
    %v251 = vsel %vm159, %v246, %v250
    %v252 = vshrl.u32 %v154, 16
    %v254 = vor.u32 %v252, %v250
    %v256 = vshll.u32 %v155, 16
    %v258 = vrot.slane %v256, 1
    %v259 = vsel %vm159, %v254, %v258
    %v260 = vshrl.u32 %v155, 16
    %v262 = vor.u32 %v260, %v258
    %v264 = vshll.u32 %v156, 16
    %v266 = vrot.slane %v264, 1
    %v267 = vsel %vm159, %v262, %v266
    %v268 = vshrl.u32 %v156, 16
    %v270 = vor.u32 %v268, %v266
    %v272 = vshll.u32 %v157, 16
    %v274 = vrot.slane %v272, 1
    %v275 = vsel %vm159, %v270, %v274
    %v276 = vshrl.u32 %v157, 16
    %v278 = vor.u32 %v276, %v274
    %v280 = vshll.u32 %v158, 16
    %v282 = vrot.slane %v280, 1
    %v283 = vsel %vm159, %v278, %v282
    %v284 = vshrl.u32 %v158, 16
    %v286 = vor.u32 %v284, %v282
    %vm288 = vcmask 1047552
    %vm289 = vmand %vm288, %vm159
    %v290 = vsel %vm289, %v286, 0
    %vm291 = vcmask 1046528
    %v292 = vrot.slane %v143, 1
    %v293 = vrot.slane %v144, 1
    %v294 = vsel %vm291, %v292, %v293
    %v295 = vrot.slane %v145, 1
    %v296 = vsel %vm291, %v293, %v295
    %v297 = vrot.slane %v146, 1
    %v298 = vsel %vm291, %v295, %v297
    %v299 = vrot.slane %v147, 1
    %v300 = vsel %vm291, %v297, %v299
    %v301 = vrot.slane %v148, 1
    %v302 = vsel %vm291, %v299, %v301
    %v303 = vrot.slane %v149, 1
    %v304 = vsel %vm291, %v301, %v303
    %v305 = vrot.slane %v150, 1
    %v306 = vsel %vm291, %v303, %v305
    %v307 = vrot.slane %v151, 1
    %v308 = vsel %vm291, %v305, %v307
    %v309 = vrot.slane %v152, 1
    %v310 = vsel %vm291, %v307, %v309
    %v311 = vrot.slane %v153, 1
    %v312 = vsel %vm291, %v309, %v311
    %v313 = vrot.slane %v154, 1
    %v314 = vsel %vm291, %v311, %v313
    %v315 = vrot.slane %v155, 1
    %v316 = vsel %vm291, %v313, %v315
    %v317 = vrot.slane %v156, 1
    %v318 = vsel %vm291, %v315, %v317
    %v319 = vrot.slane %v157, 1
    %v320 = vsel %vm291, %v317, %v319
    %v321 = vrot.slane %v158, 1
    %v322 = vsel %vm291, %v319, %v321
    %vm323 = vcmask 1046528
    %v326 = vsel %vm323, %v321, 0
    %328 = vrot.lane.b32.xlu0 %v171, 32
    %v329 = vpop.permute.xlu0 %328
    %330 = vrot.lane.b32.xlu0 %v179, 32
    %v331 = vpop.permute.xlu0 %330
    %332 = vrot.lane.b32.xlu0 %v187, 32
    %v333 = vpop.permute.xlu0 %332
    %334 = vrot.lane.b32.xlu0 %v195, 32
    %v335 = vpop.permute.xlu0 %334
    %336 = vrot.lane.b32.xlu0 %v203, 32
    %v337 = vpop.permute.xlu0 %336
    %338 = vrot.lane.b32.xlu0 %v211, 32
    %v339 = vpop.permute.xlu0 %338
    %340 = vrot.lane.b32.xlu0 %v219, 32
    %v341 = vpop.permute.xlu0 %340
    %342 = vrot.lane.b32.xlu0 %v227, 32
    %v343 = vpop.permute.xlu0 %342
    %344 = vrot.lane.b32.xlu0 %v235, 32
    %v345 = vpop.permute.xlu0 %344
    %346 = vrot.lane.b32.xlu0 %v243, 32
    %v347 = vpop.permute.xlu0 %346
    %348 = vrot.lane.b32.xlu0 %v251, 32
    %v349 = vpop.permute.xlu0 %348
    %350 = vrot.lane.b32.xlu0 %v259, 32
    %v351 = vpop.permute.xlu0 %350
    %352 = vrot.lane.b32.xlu0 %v267, 32
    %v353 = vpop.permute.xlu0 %352
    %354 = vrot.lane.b32.xlu0 %v275, 32
    %v355 = vpop.permute.xlu0 %354
    %356 = vrot.lane.b32.xlu0 %v283, 32
    %v357 = vpop.permute.xlu0 %356
    %358 = vrot.lane.b32.xlu0 %v290, 32
    %v359 = vpop.permute.xlu0 %358
    %361 = vrot.lane.b32.xlu0 %v294, 64
    %v362 = vpop.permute.xlu0 %361
    %363 = vrot.lane.b32.xlu0 %v296, 64
    %v364 = vpop.permute.xlu0 %363
    %365 = vrot.lane.b32.xlu0 %v298, 64
    %v366 = vpop.permute.xlu0 %365
    %367 = vrot.lane.b32.xlu0 %v300, 64
    %v368 = vpop.permute.xlu0 %367
    %369 = vrot.lane.b32.xlu0 %v302, 64
    %v370 = vpop.permute.xlu0 %369
    %371 = vrot.lane.b32.xlu0 %v304, 64
    %v372 = vpop.permute.xlu0 %371
    %373 = vrot.lane.b32.xlu0 %v306, 64
    %v374 = vpop.permute.xlu0 %373
    %375 = vrot.lane.b32.xlu0 %v308, 64
    %v376 = vpop.permute.xlu0 %375
    %377 = vrot.lane.b32.xlu0 %v310, 64
    %v378 = vpop.permute.xlu0 %377
    %379 = vrot.lane.b32.xlu0 %v312, 64
    %v380 = vpop.permute.xlu0 %379
    %381 = vrot.lane.b32.xlu0 %v314, 64
    %v382 = vpop.permute.xlu0 %381
    %383 = vrot.lane.b32.xlu0 %v316, 64
    %v384 = vpop.permute.xlu0 %383
    %385 = vrot.lane.b32.xlu0 %v318, 64
    %v386 = vpop.permute.xlu0 %385
    %387 = vrot.lane.b32.xlu0 %v320, 64
    %v388 = vpop.permute.xlu0 %387
    %389 = vrot.lane.b32.xlu0 %v322, 64
    %v390 = vpop.permute.xlu0 %389
    %391 = vrot.lane.b32.xlu0 %v326, 64
    %v392 = vpop.permute.xlu0 %391
    %vm393 = vcmask 261120
    %v395 = vsel %vm393, %v143, %v329
    %v397 = vsel %vm393, %v144, %v331
    %v399 = vsel %vm393, %v145, %v333
    %v401 = vsel %vm393, %v146, %v335
    %v403 = vsel %vm393, %v147, %v337
    %v405 = vsel %vm393, %v148, %v339
    %v407 = vsel %vm393, %v149, %v341
    %v409 = vsel %vm393, %v150, %v343
    %v411 = vsel %vm393, %v151, %v345
    %v413 = vsel %vm393, %v152, %v347
    %v415 = vsel %vm393, %v153, %v349
    %v417 = vsel %vm393, %v154, %v351
    %v419 = vsel %vm393, %v155, %v353
    %v421 = vsel %vm393, %v156, %v355
    %v423 = vsel %vm393, %v157, %v357
    %v425 = vsel %vm393, %v158, %v359
    %vm426 = vcmask 523264
    %v428 = vsel %vm426, %v395, %v362
    %v430 = vsel %vm426, %v397, %v364
    %v432 = vsel %vm426, %v399, %v366
    %v434 = vsel %vm426, %v401, %v368
    %v436 = vsel %vm426, %v403, %v370
    %v438 = vsel %vm426, %v405, %v372
    %v440 = vsel %vm426, %v407, %v374
    %v442 = vsel %vm426, %v409, %v376
    %v444 = vsel %vm426, %v411, %v378
    %v446 = vsel %vm426, %v413, %v380
    %v448 = vsel %vm426, %v415, %v382
    %v450 = vsel %vm426, %v417, %v384
    %v452 = vsel %vm426, %v419, %v386
    %v454 = vsel %vm426, %v421, %v388
    %v456 = vsel %vm426, %v423, %v390
    %v458 = vsel %vm426, %v425, %v392
    %v459 = vld [vmem:[%s1] sm:$0xff]
    %v460 = vld [vmem:[%s1 + $0x8] sm:$0xff]
    %v461 = vld [vmem:[%s1 + $0x10] sm:$0xff]
    %v462 = vld [vmem:[%s1 + $0x18] sm:$0xff]
    %v463 = vld [vmem:[%s1 + $0x20] sm:$0xff]
    %v464 = vld [vmem:[%s1 + $0x28] sm:$0xff]
    %v465 = vld [vmem:[%s1 + $0x30] sm:$0xff]
    %v466 = vld [vmem:[%s1 + $0x38] sm:$0xff]
    %v467 = vld [vmem:[%s1 + $0x40] sm:$0xff]
    %v468 = vld [vmem:[%s1 + $0x48] sm:$0xff]
    %v469 = vld [vmem:[%s1 + $0x50] sm:$0xff]
    %v470 = vld [vmem:[%s1 + $0x58] sm:$0xff]
    %v471 = vld [vmem:[%s1 + $0x60] sm:$0xff]
    %v472 = vld [vmem:[%s1 + $0x68] sm:$0xff]
    %v473 = vld [vmem:[%s1 + $0x70] sm:$0xff]
    %v474 = vld [vmem:[%s1 + $0x78] sm:$0xff]
    %v475 = vld [vmem:[%s1 + $0x80] sm:$0xff]
    %v476 = vld [vmem:[%s1 + $0x88] sm:$0xff]
    %v477 = vld [vmem:[%s1 + $0x90] sm:$0xff]
    %v478 = vld [vmem:[%s1 + $0x98] sm:$0xff]
    %v479 = vld [vmem:[%s1 + $0xa0] sm:$0xff]
    %v480 = vld [vmem:[%s1 + $0xa8] sm:$0xff]
    %v481 = vld [vmem:[%s1 + $0xb0] sm:$0xff]
    %v482 = vld [vmem:[%s1 + $0xb8] sm:$0xff]
    %v483 = vld [vmem:[%s2] sm:$0xf]
    %v485 = vlaneseq
    %v486 = vshrl.u32 %v485, 7
    %v487 = vsub.s32 0, %v486
    %v488 = vrot.slane %v483, %v487
    %v489 = vlaneseq
    %v490 = vshrl.u32 %v489, 7
    %v491 = vsub.s32 1, %v490
    %v492 = vrot.slane %v483, %v491
    %v493 = vlaneseq
    %v494 = vshrl.u32 %v493, 7
    %v495 = vsub.s32 2, %v494
    %v496 = vrot.slane %v483, %v495
    %v497 = vlaneseq
    %v498 = vshrl.u32 %v497, 7
    %v499 = vsub.s32 3, %v498
    %v500 = vrot.slane %v483, %v499
    %v529 = vunpack.c.l.b16 %v459
    %v530 = vunpack.c.h.b16 %v459
    %v531 = vunpack.c.l.b16 %v460
    %v532 = vunpack.c.h.b16 %v460
    %v533 = vunpack.c.l.b16 %v461
    %v534 = vunpack.c.h.b16 %v461
    %v535 = vunpack.c.l.b16 %v462
    %v536 = vunpack.c.h.b16 %v462
    %v537 = vunpack.c.l.b16 %v463
    %v538 = vunpack.c.h.b16 %v463
    %v539 = vunpack.c.l.b16 %v464
    %v540 = vunpack.c.h.b16 %v464
    %v541 = vunpack.c.l.b16 %v465
    %v542 = vunpack.c.h.b16 %v465
    %v543 = vunpack.c.l.b16 %v466
    %v544 = vunpack.c.h.b16 %v466
    %v545 = vunpack.c.l.b16 %v467
    %v546 = vunpack.c.h.b16 %v467
    %v547 = vunpack.c.l.b16 %v468
    %v548 = vunpack.c.h.b16 %v468
    %v549 = vunpack.c.l.b16 %v469
    %v550 = vunpack.c.h.b16 %v469
    %v551 = vunpack.c.l.b16 %v470
    %v552 = vunpack.c.h.b16 %v470
    %v553 = vunpack.c.l.b16 %v471
    %v554 = vunpack.c.h.b16 %v471
    %v555 = vunpack.c.l.b16 %v472
    %v556 = vunpack.c.h.b16 %v472
    %v557 = vunpack.c.l.b16 %v473
    %v558 = vunpack.c.h.b16 %v473
    %v559 = vunpack.c.l.b16 %v474
    %v560 = vunpack.c.h.b16 %v474
    %v561 = vunpack.c.l.b16 %v475
    %v562 = vunpack.c.h.b16 %v475
    %v563 = vunpack.c.l.b16 %v476
    %v564 = vunpack.c.h.b16 %v476
    %v565 = vunpack.c.l.b16 %v477
    %v566 = vunpack.c.h.b16 %v477
    %v567 = vunpack.c.l.b16 %v478
    %v568 = vunpack.c.h.b16 %v478
    %v569 = vunpack.c.l.b16 %v479
    %v570 = vunpack.c.h.b16 %v479
    %v571 = vunpack.c.l.b16 %v480
    %v572 = vunpack.c.h.b16 %v480
    %v573 = vunpack.c.l.b16 %v481
    %v574 = vunpack.c.h.b16 %v481
    %v575 = vunpack.c.l.b16 %v482
    %v576 = vunpack.c.h.b16 %v482
    %v577 = vpack.c.b16 %v533, %v529
    %v578 = vpack.c.b16 %v534, %v530
    %v579 = vpack.c.b16 %v535, %v531
    %v580 = vpack.c.b16 %v536, %v532
    %v581 = vpack.c.b16 %v541, %v537
    %v582 = vpack.c.b16 %v542, %v538
    %v583 = vpack.c.b16 %v543, %v539
    %v584 = vpack.c.b16 %v544, %v540
    %v585 = vpack.c.b16 %v549, %v545
    %v586 = vpack.c.b16 %v550, %v546
    %v587 = vpack.c.b16 %v551, %v547
    %v588 = vpack.c.b16 %v552, %v548
    %v589 = vpack.c.b16 %v557, %v553
    %v590 = vpack.c.b16 %v558, %v554
    %v591 = vpack.c.b16 %v559, %v555
    %v592 = vpack.c.b16 %v560, %v556
    %v593 = vpack.c.b16 %v565, %v561
    %v594 = vpack.c.b16 %v566, %v562
    %v595 = vpack.c.b16 %v567, %v563
    %v596 = vpack.c.b16 %v568, %v564
    %v597 = vpack.c.b16 %v573, %v569
    %v598 = vpack.c.b16 %v574, %v570
    %v599 = vpack.c.b16 %v575, %v571
    %v600 = vpack.c.b16 %v576, %v572
    %vm625 = vcmask 785408
    %v626 = vsel %vm625, %v428, 0
    %v628 = vsel %vm625, %v430, 0
    %v630 = vsel %vm625, %v432, 0
    %v632 = vsel %vm625, %v434, 0
    %v634 = vsel %vm625, %v436, 0
    %v636 = vsel %vm625, %v438, 0
    %v638 = vsel %vm625, %v440, 0
    %v640 = vsel %vm625, %v442, 0
    %v642 = vsel %vm625, %v444, 0
    %v644 = vsel %vm625, %v446, 0
    %v646 = vsel %vm625, %v448, 0
    %v648 = vsel %vm625, %v450, 0
    %v650 = vsel %vm625, %v452, 0
    %v652 = vsel %vm625, %v454, 0
    %v654 = vsel %vm625, %v456, 0
    %v656 = vsel %vm625, %v458, 0
    %658 = vmatprep.subr.bf16.mxu0 0
    %659 = vmatpush1.bf16.msra.mxu0 0
    %660 = vmatprep.subr.bf16.mxu0 0
    %661 = vmatpush1.bf16.msra.mxu0 0
    %662 = vmatprep.subr.bf16.mxu0 %v598
    %663 = vmatpush1.bf16.msra.mxu0 %v597
    %664 = vmatprep.subr.bf16.mxu0 %v594
    %665 = vmatpush1.bf16.msra.mxu0 %v593
    %666 = vmatprep.subr.bf16.mxu0 %v590
    %667 = vmatpush1.bf16.msra.mxu0 %v589
    %668 = vmatprep.subr.bf16.mxu0 %v586
    %669 = vmatpush1.bf16.msra.mxu0 %v585
    %670 = vmatprep.subr.bf16.mxu0 %v582
    %671 = vmatpush1.bf16.msra.mxu0 %v581
    %672 = vmatprep.subr.bf16.mxu0 %v578
    %673 = vmatpush1.bf16.msra.mxu0 %v577
    %674 = vmatprep.subr.bf16.mxu0 0
    %675 = vmatpush2.bf16.msra.mxu0 0
    %676 = vmatprep.subr.bf16.mxu0 0
    %677 = vmatpush2.bf16.msra.mxu0 0
    %678 = vmatprep.subr.bf16.mxu0 0
    %679 = vmatpush2.bf16.msra.mxu0 0
    %680 = vmatprep.subr.bf16.mxu0 0
    %681 = vmatpush2.bf16.msra.mxu0 0
    %682 = vmatprep.subr.bf16.mxu0 0
    %683 = vmatpush2.bf16.msra.mxu0 0
    %684 = vmatprep.subr.bf16.mxu0 0
    %685 = vmatpush2.bf16.msra.mxu0 0
    %686 = vmatprep.subr.bf16.mxu0 0
    %687 = vmatpush2.bf16.msra.mxu0 0
    %688 = vmatprep.subr.bf16.mxu0 0
    %689 = vmatpush2.bf16.msra.mxu0 0
    %690 = vmatprep.mubr.bf16.mxu0 0
    %691 = vmatmul.mubr.bf16.gmra.mxu0 %v626
    %v692 = vpop.f32.mrf.mxu0
    %v693 = vadd.f32 %v488, %v692
    %v694 = vpop.f32.mrf.mxu0
    %v695 = vadd.f32 %v492, %v694
    %v696 = vpop.f32.mrf.mxu0
    %v697 = vadd.f32 %v488, %v696
    %v698 = vpop.f32.mrf.mxu0
    %v699 = vadd.f32 %v492, %v698
    %700 = vmatprep.mubr.bf16.mxu0 0
    %701 = vmatmul.mubr.bf16.gmra.mxu0 %v628
    %v702 = vpop.f32.mrf.mxu0
    %v703 = vadd.f32 %v488, %v702
    %v704 = vpop.f32.mrf.mxu0
    %v705 = vadd.f32 %v492, %v704
    %v706 = vpop.f32.mrf.mxu0
    %v707 = vadd.f32 %v488, %v706
    %v708 = vpop.f32.mrf.mxu0
    %v709 = vadd.f32 %v492, %v708
    %710 = vmatprep.mubr.bf16.mxu0 0
    %711 = vmatmul.mubr.bf16.gmra.mxu0 %v630
    %v712 = vpop.f32.mrf.mxu0
    %v713 = vadd.f32 %v488, %v712
    %v714 = vpop.f32.mrf.mxu0
    %v715 = vadd.f32 %v492, %v714
    %v716 = vpop.f32.mrf.mxu0
    %v717 = vadd.f32 %v488, %v716
    %v718 = vpop.f32.mrf.mxu0
    %v719 = vadd.f32 %v492, %v718
    %720 = vmatprep.mubr.bf16.mxu0 0
    %721 = vmatmul.mubr.bf16.gmra.mxu0 %v632
    %v722 = vpop.f32.mrf.mxu0
    %v723 = vadd.f32 %v488, %v722
    %v724 = vpop.f32.mrf.mxu0
    %v725 = vadd.f32 %v492, %v724
    %v726 = vpop.f32.mrf.mxu0
    %v727 = vadd.f32 %v488, %v726
    %v728 = vpop.f32.mrf.mxu0
    %v729 = vadd.f32 %v492, %v728
    %730 = vmatprep.mubr.bf16.mxu0 0
    %731 = vmatmul.mubr.bf16.gmra.mxu0 %v634
    %v732 = vpop.f32.mrf.mxu0
    %v733 = vadd.f32 %v488, %v732
    %v734 = vpop.f32.mrf.mxu0
    %v735 = vadd.f32 %v492, %v734
    %v736 = vpop.f32.mrf.mxu0
    %v737 = vadd.f32 %v488, %v736
    %v738 = vpop.f32.mrf.mxu0
    %v739 = vadd.f32 %v492, %v738
    %740 = vmatprep.mubr.bf16.mxu0 0
    %741 = vmatmul.mubr.bf16.gmra.mxu0 %v636
    %v742 = vpop.f32.mrf.mxu0
    %v743 = vadd.f32 %v488, %v742
    %v744 = vpop.f32.mrf.mxu0
    %v745 = vadd.f32 %v492, %v744
    %v746 = vpop.f32.mrf.mxu0
    %v747 = vadd.f32 %v488, %v746
    %v748 = vpop.f32.mrf.mxu0
    %v749 = vadd.f32 %v492, %v748
    %750 = vmatprep.mubr.bf16.mxu0 0
    %751 = vmatmul.mubr.bf16.gmra.mxu0 %v638
    %v752 = vpop.f32.mrf.mxu0
    %v753 = vadd.f32 %v488, %v752
    %v754 = vpop.f32.mrf.mxu0
    %v755 = vadd.f32 %v492, %v754
    %v756 = vpop.f32.mrf.mxu0
    %v757 = vadd.f32 %v488, %v756
    %v758 = vpop.f32.mrf.mxu0
    %v759 = vadd.f32 %v492, %v758
    %760 = vmatprep.mubr.bf16.mxu0 0
    %761 = vmatmul.mubr.bf16.gmra.mxu0 %v640
    %v762 = vpop.f32.mrf.mxu0
    %v763 = vadd.f32 %v488, %v762
    %v764 = vpop.f32.mrf.mxu0
    %v765 = vadd.f32 %v492, %v764
    %v766 = vpop.f32.mrf.mxu0
    %v767 = vadd.f32 %v488, %v766
    %v768 = vpop.f32.mrf.mxu0
    %v769 = vadd.f32 %v492, %v768
    %770 = vmatprep.mubr.bf16.mxu0 0
    %771 = vmatmul.mubr.bf16.gmra.mxu0 %v642
    %v772 = vpop.f32.mrf.mxu0
    %v773 = vadd.f32 %v488, %v772
    %v774 = vpop.f32.mrf.mxu0
    %v775 = vadd.f32 %v492, %v774
    %v776 = vpop.f32.mrf.mxu0
    %v777 = vadd.f32 %v488, %v776
    %v778 = vpop.f32.mrf.mxu0
    %v779 = vadd.f32 %v492, %v778
    %780 = vmatprep.mubr.bf16.mxu0 0
    %781 = vmatmul.mubr.bf16.gmra.mxu0 %v644
    %v782 = vpop.f32.mrf.mxu0
    %v783 = vadd.f32 %v488, %v782
    %v784 = vpop.f32.mrf.mxu0
    %v785 = vadd.f32 %v492, %v784
    %v786 = vpop.f32.mrf.mxu0
    %v787 = vadd.f32 %v488, %v786
    %v788 = vpop.f32.mrf.mxu0
    %v789 = vadd.f32 %v492, %v788
    %790 = vmatprep.mubr.bf16.mxu0 0
    %791 = vmatmul.mubr.bf16.gmra.mxu0 %v646
    %v792 = vpop.f32.mrf.mxu0
    %v793 = vadd.f32 %v488, %v792
    %v794 = vpop.f32.mrf.mxu0
    %v795 = vadd.f32 %v492, %v794
    %v796 = vpop.f32.mrf.mxu0
    %v797 = vadd.f32 %v488, %v796
    %v798 = vpop.f32.mrf.mxu0
    %v799 = vadd.f32 %v492, %v798
    %800 = vmatprep.mubr.bf16.mxu0 0
    %801 = vmatmul.mubr.bf16.gmra.mxu0 %v648
    %v802 = vpop.f32.mrf.mxu0
    %v803 = vadd.f32 %v488, %v802
    %v804 = vpop.f32.mrf.mxu0
    %v805 = vadd.f32 %v492, %v804
    %v806 = vpop.f32.mrf.mxu0
    %v807 = vadd.f32 %v488, %v806
    %v808 = vpop.f32.mrf.mxu0
    %v809 = vadd.f32 %v492, %v808
    %810 = vmatprep.mubr.bf16.mxu0 0
    %811 = vmatmul.mubr.bf16.gmra.mxu0 %v650
    %v812 = vpop.f32.mrf.mxu0
    %v813 = vadd.f32 %v488, %v812
    %v814 = vpop.f32.mrf.mxu0
    %v815 = vadd.f32 %v492, %v814
    %v816 = vpop.f32.mrf.mxu0
    %v817 = vadd.f32 %v488, %v816
    %v818 = vpop.f32.mrf.mxu0
    %v819 = vadd.f32 %v492, %v818
    %820 = vmatprep.mubr.bf16.mxu0 0
    %821 = vmatmul.mubr.bf16.gmra.mxu0 %v652
    %v822 = vpop.f32.mrf.mxu0
    %v823 = vadd.f32 %v488, %v822
    %v824 = vpop.f32.mrf.mxu0
    %v825 = vadd.f32 %v492, %v824
    %v826 = vpop.f32.mrf.mxu0
    %v827 = vadd.f32 %v488, %v826
    %v828 = vpop.f32.mrf.mxu0
    %v829 = vadd.f32 %v492, %v828
    %830 = vmatprep.mubr.bf16.mxu0 0
    %831 = vmatmul.mubr.bf16.gmra.mxu0 %v654
    %v832 = vpop.f32.mrf.mxu0
    %v833 = vadd.f32 %v488, %v832
    %v834 = vpop.f32.mrf.mxu0
    %v835 = vadd.f32 %v492, %v834
    %v836 = vpop.f32.mrf.mxu0
    %v837 = vadd.f32 %v488, %v836
    %v838 = vpop.f32.mrf.mxu0
    %v839 = vadd.f32 %v492, %v838
    %840 = vmatprep.mubr.bf16.mxu0 0
    %841 = vmatmul.mubr.bf16.gmra.mxu0 %v656
    %v842 = vpop.f32.mrf.mxu0
    %v843 = vadd.f32 %v488, %v842
    %v844 = vpop.f32.mrf.mxu0
    %v845 = vadd.f32 %v492, %v844
    %v846 = vpop.f32.mrf.mxu0
    %v847 = vadd.f32 %v488, %v846
    %v848 = vpop.f32.mrf.mxu0
    %v849 = vadd.f32 %v492, %v848
    %850 = vdwg.mxu0
    %851 = vmatprep.subr.bf16.mxu0 0
    %852 = vmatpush1.bf16.msra.mxu0 0
    %853 = vmatprep.subr.bf16.mxu0 0
    %854 = vmatpush1.bf16.msra.mxu0 0
    %855 = vmatprep.subr.bf16.mxu0 %v600
    %856 = vmatpush1.bf16.msra.mxu0 %v599
    %857 = vmatprep.subr.bf16.mxu0 %v596
    %858 = vmatpush1.bf16.msra.mxu0 %v595
    %859 = vmatprep.subr.bf16.mxu0 %v592
    %860 = vmatpush1.bf16.msra.mxu0 %v591
    %861 = vmatprep.subr.bf16.mxu0 %v588
    %862 = vmatpush1.bf16.msra.mxu0 %v587
    %863 = vmatprep.subr.bf16.mxu0 %v584
    %864 = vmatpush1.bf16.msra.mxu0 %v583
    %865 = vmatprep.subr.bf16.mxu0 %v580
    %866 = vmatpush1.bf16.msra.mxu0 %v579
    %867 = vmatprep.subr.bf16.mxu0 0
    %868 = vmatpush2.bf16.msra.mxu0 0
    %869 = vmatprep.subr.bf16.mxu0 0
    %870 = vmatpush2.bf16.msra.mxu0 0
    %871 = vmatprep.subr.bf16.mxu0 0
    %872 = vmatpush2.bf16.msra.mxu0 0
    %873 = vmatprep.subr.bf16.mxu0 0
    %874 = vmatpush2.bf16.msra.mxu0 0
    %875 = vmatprep.subr.bf16.mxu0 0
    %876 = vmatpush2.bf16.msra.mxu0 0
    %877 = vmatprep.subr.bf16.mxu0 0
    %878 = vmatpush2.bf16.msra.mxu0 0
    %879 = vmatprep.subr.bf16.mxu0 0
    %880 = vmatpush2.bf16.msra.mxu0 0
    %881 = vmatprep.subr.bf16.mxu0 0
    %882 = vmatpush2.bf16.msra.mxu0 0
    %883 = vmatprep.mubr.bf16.mxu0 0
    %884 = vmatmul.mubr.bf16.gmra.mxu0 %v626
    %v885 = vpop.f32.mrf.mxu0
    %v886 = vadd.f32 %v496, %v885
    %v887 = vpop.f32.mrf.mxu0
    %v888 = vadd.f32 %v500, %v887
    %v889 = vpop.f32.mrf.mxu0
    %v890 = vadd.f32 %v496, %v889
    %v891 = vpop.f32.mrf.mxu0
    %v892 = vadd.f32 %v500, %v891
    %893 = vmatprep.mubr.bf16.mxu0 0
    %894 = vmatmul.mubr.bf16.gmra.mxu0 %v628
    %v895 = vpop.f32.mrf.mxu0
    %v896 = vadd.f32 %v496, %v895
    %v897 = vpop.f32.mrf.mxu0
    %v898 = vadd.f32 %v500, %v897
    %v899 = vpop.f32.mrf.mxu0
    %v900 = vadd.f32 %v496, %v899
    %v901 = vpop.f32.mrf.mxu0
    %v902 = vadd.f32 %v500, %v901
    %903 = vmatprep.mubr.bf16.mxu0 0
    %904 = vmatmul.mubr.bf16.gmra.mxu0 %v630
    %v905 = vpop.f32.mrf.mxu0
    %v906 = vadd.f32 %v496, %v905
    %v907 = vpop.f32.mrf.mxu0
    %v908 = vadd.f32 %v500, %v907
    %v909 = vpop.f32.mrf.mxu0
    %v910 = vadd.f32 %v496, %v909
    %v911 = vpop.f32.mrf.mxu0
    %v912 = vadd.f32 %v500, %v911
    %913 = vmatprep.mubr.bf16.mxu0 0
    %914 = vmatmul.mubr.bf16.gmra.mxu0 %v632
    %v915 = vpop.f32.mrf.mxu0
    %v916 = vadd.f32 %v496, %v915
    %v917 = vpop.f32.mrf.mxu0
    %v918 = vadd.f32 %v500, %v917
    %v919 = vpop.f32.mrf.mxu0
    %v920 = vadd.f32 %v496, %v919
    %v921 = vpop.f32.mrf.mxu0
    %v922 = vadd.f32 %v500, %v921
    %923 = vmatprep.mubr.bf16.mxu0 0
    %924 = vmatmul.mubr.bf16.gmra.mxu0 %v634
    %v925 = vpop.f32.mrf.mxu0
    %v926 = vadd.f32 %v496, %v925
    %v927 = vpop.f32.mrf.mxu0
    %v928 = vadd.f32 %v500, %v927
    %v929 = vpop.f32.mrf.mxu0
    %v930 = vadd.f32 %v496, %v929
    %v931 = vpop.f32.mrf.mxu0
    %v932 = vadd.f32 %v500, %v931
    %933 = vmatprep.mubr.bf16.mxu0 0
    %934 = vmatmul.mubr.bf16.gmra.mxu0 %v636
    %v935 = vpop.f32.mrf.mxu0
    %v936 = vadd.f32 %v496, %v935
    %v937 = vpop.f32.mrf.mxu0
    %v938 = vadd.f32 %v500, %v937
    %v939 = vpop.f32.mrf.mxu0
    %v940 = vadd.f32 %v496, %v939
    %v941 = vpop.f32.mrf.mxu0
    %v942 = vadd.f32 %v500, %v941
    %943 = vmatprep.mubr.bf16.mxu0 0
    %944 = vmatmul.mubr.bf16.gmra.mxu0 %v638
    %v945 = vpop.f32.mrf.mxu0
    %v946 = vadd.f32 %v496, %v945
    %v947 = vpop.f32.mrf.mxu0
    %v948 = vadd.f32 %v500, %v947
    %v949 = vpop.f32.mrf.mxu0
    %v950 = vadd.f32 %v496, %v949
    %v951 = vpop.f32.mrf.mxu0
    %v952 = vadd.f32 %v500, %v951
    %953 = vmatprep.mubr.bf16.mxu0 0
    %954 = vmatmul.mubr.bf16.gmra.mxu0 %v640
    %v955 = vpop.f32.mrf.mxu0
    %v956 = vadd.f32 %v496, %v955
    %v957 = vpop.f32.mrf.mxu0
    %v958 = vadd.f32 %v500, %v957
    %v959 = vpop.f32.mrf.mxu0
    %v960 = vadd.f32 %v496, %v959
    %v961 = vpop.f32.mrf.mxu0
    %v962 = vadd.f32 %v500, %v961
    %963 = vmatprep.mubr.bf16.mxu0 0
    %964 = vmatmul.mubr.bf16.gmra.mxu0 %v642
    %v965 = vpop.f32.mrf.mxu0
    %v966 = vadd.f32 %v496, %v965
    %v967 = vpop.f32.mrf.mxu0
    %v968 = vadd.f32 %v500, %v967
    %v969 = vpop.f32.mrf.mxu0
    %v970 = vadd.f32 %v496, %v969
    %v971 = vpop.f32.mrf.mxu0
    %v972 = vadd.f32 %v500, %v971
    %973 = vmatprep.mubr.bf16.mxu0 0
    %974 = vmatmul.mubr.bf16.gmra.mxu0 %v644
    %v975 = vpop.f32.mrf.mxu0
    %v976 = vadd.f32 %v496, %v975
    %v977 = vpop.f32.mrf.mxu0
    %v978 = vadd.f32 %v500, %v977
    %v979 = vpop.f32.mrf.mxu0
    %v980 = vadd.f32 %v496, %v979
    %v981 = vpop.f32.mrf.mxu0
    %v982 = vadd.f32 %v500, %v981
    %983 = vmatprep.mubr.bf16.mxu0 0
    %984 = vmatmul.mubr.bf16.gmra.mxu0 %v646
    %v985 = vpop.f32.mrf.mxu0
    %v986 = vadd.f32 %v496, %v985
    %v987 = vpop.f32.mrf.mxu0
    %v988 = vadd.f32 %v500, %v987
    %v989 = vpop.f32.mrf.mxu0
    %v990 = vadd.f32 %v496, %v989
    %v991 = vpop.f32.mrf.mxu0
    %v992 = vadd.f32 %v500, %v991
    %993 = vmatprep.mubr.bf16.mxu0 0
    %994 = vmatmul.mubr.bf16.gmra.mxu0 %v648
    %v995 = vpop.f32.mrf.mxu0
    %v996 = vadd.f32 %v496, %v995
    %v997 = vpop.f32.mrf.mxu0
    %v998 = vadd.f32 %v500, %v997
    %v999 = vpop.f32.mrf.mxu0
    %v1000 = vadd.f32 %v496, %v999
    %v1001 = vpop.f32.mrf.mxu0
    %v1002 = vadd.f32 %v500, %v1001
    %1003 = vmatprep.mubr.bf16.mxu0 0
    %1004 = vmatmul.mubr.bf16.gmra.mxu0 %v650
    %v1005 = vpop.f32.mrf.mxu0
    %v1006 = vadd.f32 %v496, %v1005
    %v1007 = vpop.f32.mrf.mxu0
    %v1008 = vadd.f32 %v500, %v1007
    %v1009 = vpop.f32.mrf.mxu0
    %v1010 = vadd.f32 %v496, %v1009
    %v1011 = vpop.f32.mrf.mxu0
    %v1012 = vadd.f32 %v500, %v1011
    %1013 = vmatprep.mubr.bf16.mxu0 0
    %1014 = vmatmul.mubr.bf16.gmra.mxu0 %v652
    %v1015 = vpop.f32.mrf.mxu0
    %v1016 = vadd.f32 %v496, %v1015
    %v1017 = vpop.f32.mrf.mxu0
    %v1018 = vadd.f32 %v500, %v1017
    %v1019 = vpop.f32.mrf.mxu0
    %v1020 = vadd.f32 %v496, %v1019
    %v1021 = vpop.f32.mrf.mxu0
    %v1022 = vadd.f32 %v500, %v1021
    %1023 = vmatprep.mubr.bf16.mxu0 0
    %1024 = vmatmul.mubr.bf16.gmra.mxu0 %v654
    %v1025 = vpop.f32.mrf.mxu0
    %v1026 = vadd.f32 %v496, %v1025
    %v1027 = vpop.f32.mrf.mxu0
    %v1028 = vadd.f32 %v500, %v1027
    %v1029 = vpop.f32.mrf.mxu0
    %v1030 = vadd.f32 %v496, %v1029
    %v1031 = vpop.f32.mrf.mxu0
    %v1032 = vadd.f32 %v500, %v1031
    %1033 = vmatprep.mubr.bf16.mxu0 0
    %1034 = vmatmul.mubr.bf16.gmra.mxu0 %v656
    %v1035 = vpop.f32.mrf.mxu0
    %v1036 = vadd.f32 %v496, %v1035
    %v1037 = vpop.f32.mrf.mxu0
    %v1038 = vadd.f32 %v500, %v1037
    %v1039 = vpop.f32.mrf.mxu0
    %v1040 = vadd.f32 %v496, %v1039
    %v1041 = vpop.f32.mrf.mxu0
    %v1042 = vadd.f32 %v500, %v1041
    %1043 = vdwg.mxu0
    %v1044 = vmax.f32 %v693, 0.0
    %v1045 = vmax.f32 %v695, 0.0
    %v1046 = vmax.f32 %v886, 0.0
    %v1047 = vmax.f32 %v888, 0.0
    %v1048 = vmax.f32 %v697, 0.0
    %v1049 = vmax.f32 %v699, 0.0
    %v1050 = vmax.f32 %v890, 0.0
    %v1051 = vmax.f32 %v892, 0.0
    %v1052 = vmax.f32 %v703, 0.0
    %v1053 = vmax.f32 %v705, 0.0
    %v1054 = vmax.f32 %v896, 0.0
    %v1055 = vmax.f32 %v898, 0.0
    %v1056 = vmax.f32 %v707, 0.0
    %v1057 = vmax.f32 %v709, 0.0
    %v1058 = vmax.f32 %v900, 0.0
    %v1059 = vmax.f32 %v902, 0.0
    %v1060 = vmax.f32 %v713, 0.0
    %v1061 = vmax.f32 %v715, 0.0
    %v1062 = vmax.f32 %v906, 0.0
    %v1063 = vmax.f32 %v908, 0.0
    %v1064 = vmax.f32 %v717, 0.0
    %v1065 = vmax.f32 %v719, 0.0
    %v1066 = vmax.f32 %v910, 0.0
    %v1067 = vmax.f32 %v912, 0.0
    %v1068 = vmax.f32 %v723, 0.0
    %v1069 = vmax.f32 %v725, 0.0
    %v1070 = vmax.f32 %v916, 0.0
    %v1071 = vmax.f32 %v918, 0.0
    %v1072 = vmax.f32 %v727, 0.0
    %v1073 = vmax.f32 %v729, 0.0
    %v1074 = vmax.f32 %v920, 0.0
    %v1075 = vmax.f32 %v922, 0.0
    %v1076 = vmax.f32 %v733, 0.0
    %v1077 = vmax.f32 %v735, 0.0
    %v1078 = vmax.f32 %v926, 0.0
    %v1079 = vmax.f32 %v928, 0.0
    %v1080 = vmax.f32 %v737, 0.0
    %v1081 = vmax.f32 %v739, 0.0
    %v1082 = vmax.f32 %v930, 0.0
    %v1083 = vmax.f32 %v932, 0.0
    %v1084 = vmax.f32 %v743, 0.0
    %v1085 = vmax.f32 %v745, 0.0
    %v1086 = vmax.f32 %v936, 0.0
    %v1087 = vmax.f32 %v938, 0.0
    %v1088 = vmax.f32 %v747, 0.0
    %v1089 = vmax.f32 %v749, 0.0
    %v1090 = vmax.f32 %v940, 0.0
    %v1091 = vmax.f32 %v942, 0.0
    %v1092 = vmax.f32 %v753, 0.0
    %v1093 = vmax.f32 %v755, 0.0
    %v1094 = vmax.f32 %v946, 0.0
    %v1095 = vmax.f32 %v948, 0.0
    %v1096 = vmax.f32 %v757, 0.0
    %v1097 = vmax.f32 %v759, 0.0
    %v1098 = vmax.f32 %v950, 0.0
    %v1099 = vmax.f32 %v952, 0.0
    %v1100 = vmax.f32 %v763, 0.0
    %v1101 = vmax.f32 %v765, 0.0
    %v1102 = vmax.f32 %v956, 0.0
    %v1103 = vmax.f32 %v958, 0.0
    %v1104 = vmax.f32 %v767, 0.0
    %v1105 = vmax.f32 %v769, 0.0
    %v1106 = vmax.f32 %v960, 0.0
    %v1107 = vmax.f32 %v962, 0.0
    %v1108 = vmax.f32 %v773, 0.0
    %v1109 = vmax.f32 %v775, 0.0
    %v1110 = vmax.f32 %v966, 0.0
    %v1111 = vmax.f32 %v968, 0.0
    %v1112 = vmax.f32 %v777, 0.0
    %v1113 = vmax.f32 %v779, 0.0
    %v1114 = vmax.f32 %v970, 0.0
    %v1115 = vmax.f32 %v972, 0.0
    %v1116 = vmax.f32 %v783, 0.0
    %v1117 = vmax.f32 %v785, 0.0
    %v1118 = vmax.f32 %v976, 0.0
    %v1119 = vmax.f32 %v978, 0.0
    %v1120 = vmax.f32 %v787, 0.0
    %v1121 = vmax.f32 %v789, 0.0
    %v1122 = vmax.f32 %v980, 0.0
    %v1123 = vmax.f32 %v982, 0.0
    %v1124 = vmax.f32 %v793, 0.0
    %v1125 = vmax.f32 %v795, 0.0
    %v1126 = vmax.f32 %v986, 0.0
    %v1127 = vmax.f32 %v988, 0.0
    %v1128 = vmax.f32 %v797, 0.0
    %v1129 = vmax.f32 %v799, 0.0
    %v1130 = vmax.f32 %v990, 0.0
    %v1131 = vmax.f32 %v992, 0.0
    %v1132 = vmax.f32 %v803, 0.0
    %v1133 = vmax.f32 %v805, 0.0
    %v1134 = vmax.f32 %v996, 0.0
    %v1135 = vmax.f32 %v998, 0.0
    %v1136 = vmax.f32 %v807, 0.0
    %v1137 = vmax.f32 %v809, 0.0
    %v1138 = vmax.f32 %v1000, 0.0
    %v1139 = vmax.f32 %v1002, 0.0
    %v1140 = vmax.f32 %v813, 0.0
    %v1141 = vmax.f32 %v815, 0.0
    %v1142 = vmax.f32 %v1006, 0.0
    %v1143 = vmax.f32 %v1008, 0.0
    %v1144 = vmax.f32 %v817, 0.0
    %v1145 = vmax.f32 %v819, 0.0
    %v1146 = vmax.f32 %v1010, 0.0
    %v1147 = vmax.f32 %v1012, 0.0
    %v1148 = vmax.f32 %v823, 0.0
    %v1149 = vmax.f32 %v825, 0.0
    %v1150 = vmax.f32 %v1016, 0.0
    %v1151 = vmax.f32 %v1018, 0.0
    %v1152 = vmax.f32 %v827, 0.0
    %v1153 = vmax.f32 %v829, 0.0
    %v1154 = vmax.f32 %v1020, 0.0
    %v1155 = vmax.f32 %v1022, 0.0
    %v1156 = vmax.f32 %v833, 0.0
    %v1157 = vmax.f32 %v835, 0.0
    %v1158 = vmax.f32 %v1026, 0.0
    %v1159 = vmax.f32 %v1028, 0.0
    %v1160 = vmax.f32 %v837, 0.0
    %v1161 = vmax.f32 %v839, 0.0
    %v1162 = vmax.f32 %v1030, 0.0
    %v1163 = vmax.f32 %v1032, 0.0
    %v1164 = vmax.f32 %v843, 0.0
    %v1165 = vmax.f32 %v845, 0.0
    %v1166 = vmax.f32 %v1036, 0.0
    %v1167 = vmax.f32 %v1038, 0.0
    %v1168 = vmax.f32 %v847, 0.0
    %v1169 = vmax.f32 %v849, 0.0
    %v1170 = vmax.f32 %v1040, 0.0
    %v1171 = vmax.f32 %v1042, 0.0
    %v1172 = vpack.c.bf16 %v1048, %v1044
    %v1173 = vpack.c.bf16 %v1049, %v1045
    %v1174 = vpack.c.bf16 %v1050, %v1046
    %v1175 = vpack.c.bf16 %v1051, %v1047
    %v1176 = vpack.c.bf16 %v1056, %v1052
    %v1177 = vpack.c.bf16 %v1057, %v1053
    %v1178 = vpack.c.bf16 %v1058, %v1054
    %v1179 = vpack.c.bf16 %v1059, %v1055
    %v1180 = vpack.c.bf16 %v1064, %v1060
    %v1181 = vpack.c.bf16 %v1065, %v1061
    %v1182 = vpack.c.bf16 %v1066, %v1062
    %v1183 = vpack.c.bf16 %v1067, %v1063
    %v1184 = vpack.c.bf16 %v1072, %v1068
    %v1185 = vpack.c.bf16 %v1073, %v1069
    %v1186 = vpack.c.bf16 %v1074, %v1070
    %v1187 = vpack.c.bf16 %v1075, %v1071
    %v1188 = vpack.c.bf16 %v1080, %v1076
    %v1189 = vpack.c.bf16 %v1081, %v1077
    %v1190 = vpack.c.bf16 %v1082, %v1078
    %v1191 = vpack.c.bf16 %v1083, %v1079
    %v1192 = vpack.c.bf16 %v1088, %v1084
    %v1193 = vpack.c.bf16 %v1089, %v1085
    %v1194 = vpack.c.bf16 %v1090, %v1086
    %v1195 = vpack.c.bf16 %v1091, %v1087
    %v1196 = vpack.c.bf16 %v1096, %v1092
    %v1197 = vpack.c.bf16 %v1097, %v1093
    %v1198 = vpack.c.bf16 %v1098, %v1094
    %v1199 = vpack.c.bf16 %v1099, %v1095
    %v1200 = vpack.c.bf16 %v1104, %v1100
    %v1201 = vpack.c.bf16 %v1105, %v1101
    %v1202 = vpack.c.bf16 %v1106, %v1102
    %v1203 = vpack.c.bf16 %v1107, %v1103
    %v1204 = vpack.c.bf16 %v1112, %v1108
    %v1205 = vpack.c.bf16 %v1113, %v1109
    %v1206 = vpack.c.bf16 %v1114, %v1110
    %v1207 = vpack.c.bf16 %v1115, %v1111
    %v1208 = vpack.c.bf16 %v1120, %v1116
    %v1209 = vpack.c.bf16 %v1121, %v1117
    %v1210 = vpack.c.bf16 %v1122, %v1118
    %v1211 = vpack.c.bf16 %v1123, %v1119
    %v1212 = vpack.c.bf16 %v1128, %v1124
    %v1213 = vpack.c.bf16 %v1129, %v1125
    %v1214 = vpack.c.bf16 %v1130, %v1126
    %v1215 = vpack.c.bf16 %v1131, %v1127
    %v1216 = vpack.c.bf16 %v1136, %v1132
    %v1217 = vpack.c.bf16 %v1137, %v1133
    %v1218 = vpack.c.bf16 %v1138, %v1134
    %v1219 = vpack.c.bf16 %v1139, %v1135
    %v1220 = vpack.c.bf16 %v1144, %v1140
    %v1221 = vpack.c.bf16 %v1145, %v1141
    %v1222 = vpack.c.bf16 %v1146, %v1142
    %v1223 = vpack.c.bf16 %v1147, %v1143
    %v1224 = vpack.c.bf16 %v1152, %v1148
    %v1225 = vpack.c.bf16 %v1153, %v1149
    %v1226 = vpack.c.bf16 %v1154, %v1150
    %v1227 = vpack.c.bf16 %v1155, %v1151
    %v1228 = vpack.c.bf16 %v1160, %v1156
    %v1229 = vpack.c.bf16 %v1161, %v1157
    %v1230 = vpack.c.bf16 %v1162, %v1158
    %v1231 = vpack.c.bf16 %v1163, %v1159
    %v1232 = vpack.c.bf16 %v1168, %v1164
    %v1233 = vpack.c.bf16 %v1169, %v1165
    %v1234 = vpack.c.bf16 %v1170, %v1166
    %v1235 = vpack.c.bf16 %v1171, %v1167
    %v1237 = vshrl.u32 %v1172, 16
    %v1239 = vshll.u32 %v1172, 16
    %v1241 = vrot.slane %v1239, 1
    %v1242 = vor.u32 %v1237, %v1241
    %v1244 = vshll.u32 %v1176, 16
    %v1246 = vrot.slane %v1244, 1
    %v1247 = vsel %vm159, %v1242, %v1246
    %v1249 = vshrl.u32 %v1173, 16
    %v1251 = vshll.u32 %v1173, 16
    %v1253 = vrot.slane %v1251, 1
    %v1254 = vor.u32 %v1249, %v1253
    %v1256 = vshll.u32 %v1177, 16
    %v1258 = vrot.slane %v1256, 1
    %v1259 = vsel %vm159, %v1254, %v1258
    %v1261 = vshrl.u32 %v1174, 16
    %v1263 = vshll.u32 %v1174, 16
    %v1265 = vrot.slane %v1263, 1
    %v1266 = vor.u32 %v1261, %v1265
    %v1268 = vshll.u32 %v1178, 16
    %v1270 = vrot.slane %v1268, 1
    %v1271 = vsel %vm159, %v1266, %v1270
    %v1273 = vshrl.u32 %v1175, 16
    %v1275 = vshll.u32 %v1175, 16
    %v1277 = vrot.slane %v1275, 1
    %v1278 = vor.u32 %v1273, %v1277
    %v1280 = vshll.u32 %v1179, 16
    %v1282 = vrot.slane %v1280, 1
    %v1283 = vsel %vm159, %v1278, %v1282
    %v1284 = vshrl.u32 %v1176, 16
    %v1286 = vor.u32 %v1284, %v1246
    %v1288 = vshll.u32 %v1180, 16
    %v1290 = vrot.slane %v1288, 1
    %v1291 = vsel %vm159, %v1286, %v1290
    %v1292 = vshrl.u32 %v1177, 16
    %v1294 = vor.u32 %v1292, %v1258
    %v1296 = vshll.u32 %v1181, 16
    %v1298 = vrot.slane %v1296, 1
    %v1299 = vsel %vm159, %v1294, %v1298
    %v1300 = vshrl.u32 %v1178, 16
    %v1302 = vor.u32 %v1300, %v1270
    %v1304 = vshll.u32 %v1182, 16
    %v1306 = vrot.slane %v1304, 1
    %v1307 = vsel %vm159, %v1302, %v1306
    %v1308 = vshrl.u32 %v1179, 16
    %v1310 = vor.u32 %v1308, %v1282
    %v1312 = vshll.u32 %v1183, 16
    %v1314 = vrot.slane %v1312, 1
    %v1315 = vsel %vm159, %v1310, %v1314
    %v1316 = vshrl.u32 %v1180, 16
    %v1318 = vor.u32 %v1316, %v1290
    %v1320 = vshll.u32 %v1184, 16
    %v1322 = vrot.slane %v1320, 1
    %v1323 = vsel %vm159, %v1318, %v1322
    %v1324 = vshrl.u32 %v1181, 16
    %v1326 = vor.u32 %v1324, %v1298
    %v1328 = vshll.u32 %v1185, 16
    %v1330 = vrot.slane %v1328, 1
    %v1331 = vsel %vm159, %v1326, %v1330
    %v1332 = vshrl.u32 %v1182, 16
    %v1334 = vor.u32 %v1332, %v1306
    %v1336 = vshll.u32 %v1186, 16
    %v1338 = vrot.slane %v1336, 1
    %v1339 = vsel %vm159, %v1334, %v1338
    %v1340 = vshrl.u32 %v1183, 16
    %v1342 = vor.u32 %v1340, %v1314
    %v1344 = vshll.u32 %v1187, 16
    %v1346 = vrot.slane %v1344, 1
    %v1347 = vsel %vm159, %v1342, %v1346
    %v1348 = vshrl.u32 %v1184, 16
    %v1350 = vor.u32 %v1348, %v1322
    %v1352 = vshll.u32 %v1188, 16
    %v1354 = vrot.slane %v1352, 1
    %v1355 = vsel %vm159, %v1350, %v1354
    %v1356 = vshrl.u32 %v1185, 16
    %v1358 = vor.u32 %v1356, %v1330
    %v1360 = vshll.u32 %v1189, 16
    %v1362 = vrot.slane %v1360, 1
    %v1363 = vsel %vm159, %v1358, %v1362
    %v1364 = vshrl.u32 %v1186, 16
    %v1366 = vor.u32 %v1364, %v1338
    %v1368 = vshll.u32 %v1190, 16
    %v1370 = vrot.slane %v1368, 1
    %v1371 = vsel %vm159, %v1366, %v1370
    %v1372 = vshrl.u32 %v1187, 16
    %v1374 = vor.u32 %v1372, %v1346
    %v1376 = vshll.u32 %v1191, 16
    %v1378 = vrot.slane %v1376, 1
    %v1379 = vsel %vm159, %v1374, %v1378
    %v1380 = vshrl.u32 %v1188, 16
    %v1382 = vor.u32 %v1380, %v1354
    %v1384 = vshll.u32 %v1192, 16
    %v1386 = vrot.slane %v1384, 1
    %v1387 = vsel %vm159, %v1382, %v1386
    %v1388 = vshrl.u32 %v1189, 16
    %v1390 = vor.u32 %v1388, %v1362
    %v1392 = vshll.u32 %v1193, 16
    %v1394 = vrot.slane %v1392, 1
    %v1395 = vsel %vm159, %v1390, %v1394
    %v1396 = vshrl.u32 %v1190, 16
    %v1398 = vor.u32 %v1396, %v1370
    %v1400 = vshll.u32 %v1194, 16
    %v1402 = vrot.slane %v1400, 1
    %v1403 = vsel %vm159, %v1398, %v1402
    %v1404 = vshrl.u32 %v1191, 16
    %v1406 = vor.u32 %v1404, %v1378
    %v1408 = vshll.u32 %v1195, 16
    %v1410 = vrot.slane %v1408, 1
    %v1411 = vsel %vm159, %v1406, %v1410
    %v1412 = vshrl.u32 %v1192, 16
    %v1414 = vor.u32 %v1412, %v1386
    %v1416 = vshll.u32 %v1196, 16
    %v1418 = vrot.slane %v1416, 1
    %v1419 = vsel %vm159, %v1414, %v1418
    %v1420 = vshrl.u32 %v1193, 16
    %v1422 = vor.u32 %v1420, %v1394
    %v1424 = vshll.u32 %v1197, 16
    %v1426 = vrot.slane %v1424, 1
    %v1427 = vsel %vm159, %v1422, %v1426
    %v1428 = vshrl.u32 %v1194, 16
    %v1430 = vor.u32 %v1428, %v1402
    %v1432 = vshll.u32 %v1198, 16
    %v1434 = vrot.slane %v1432, 1
    %v1435 = vsel %vm159, %v1430, %v1434
    %v1436 = vshrl.u32 %v1195, 16
    %v1438 = vor.u32 %v1436, %v1410
    %v1440 = vshll.u32 %v1199, 16
    %v1442 = vrot.slane %v1440, 1
    %v1443 = vsel %vm159, %v1438, %v1442
    %v1444 = vshrl.u32 %v1196, 16
    %v1446 = vor.u32 %v1444, %v1418
    %v1448 = vshll.u32 %v1200, 16
    %v1450 = vrot.slane %v1448, 1
    %v1451 = vsel %vm159, %v1446, %v1450
    %v1452 = vshrl.u32 %v1197, 16
    %v1454 = vor.u32 %v1452, %v1426
    %v1456 = vshll.u32 %v1201, 16
    %v1458 = vrot.slane %v1456, 1
    %v1459 = vsel %vm159, %v1454, %v1458
    %v1460 = vshrl.u32 %v1198, 16
    %v1462 = vor.u32 %v1460, %v1434
    %v1464 = vshll.u32 %v1202, 16
    %v1466 = vrot.slane %v1464, 1
    %v1467 = vsel %vm159, %v1462, %v1466
    %v1468 = vshrl.u32 %v1199, 16
    %v1470 = vor.u32 %v1468, %v1442
    %v1472 = vshll.u32 %v1203, 16
    %v1474 = vrot.slane %v1472, 1
    %v1475 = vsel %vm159, %v1470, %v1474
    %v1476 = vshrl.u32 %v1200, 16
    %v1478 = vor.u32 %v1476, %v1450
    %v1480 = vshll.u32 %v1204, 16
    %v1482 = vrot.slane %v1480, 1
    %v1483 = vsel %vm159, %v1478, %v1482
    %v1484 = vshrl.u32 %v1201, 16
    %v1486 = vor.u32 %v1484, %v1458
    %v1488 = vshll.u32 %v1205, 16
    %v1490 = vrot.slane %v1488, 1
    %v1491 = vsel %vm159, %v1486, %v1490
    %v1492 = vshrl.u32 %v1202, 16
    %v1494 = vor.u32 %v1492, %v1466
    %v1496 = vshll.u32 %v1206, 16
    %v1498 = vrot.slane %v1496, 1
    %v1499 = vsel %vm159, %v1494, %v1498
    %v1500 = vshrl.u32 %v1203, 16
    %v1502 = vor.u32 %v1500, %v1474
    %v1504 = vshll.u32 %v1207, 16
    %v1506 = vrot.slane %v1504, 1
    %v1507 = vsel %vm159, %v1502, %v1506
    %v1508 = vshrl.u32 %v1204, 16
    %v1510 = vor.u32 %v1508, %v1482
    %v1512 = vshll.u32 %v1208, 16
    %v1514 = vrot.slane %v1512, 1
    %v1515 = vsel %vm159, %v1510, %v1514
    %v1516 = vshrl.u32 %v1205, 16
    %v1518 = vor.u32 %v1516, %v1490
    %v1520 = vshll.u32 %v1209, 16
    %v1522 = vrot.slane %v1520, 1
    %v1523 = vsel %vm159, %v1518, %v1522
    %v1524 = vshrl.u32 %v1206, 16
    %v1526 = vor.u32 %v1524, %v1498
    %v1528 = vshll.u32 %v1210, 16
    %v1530 = vrot.slane %v1528, 1
    %v1531 = vsel %vm159, %v1526, %v1530
    %v1532 = vshrl.u32 %v1207, 16
    %v1534 = vor.u32 %v1532, %v1506
    %v1536 = vshll.u32 %v1211, 16
    %v1538 = vrot.slane %v1536, 1
    %v1539 = vsel %vm159, %v1534, %v1538
    %v1540 = vshrl.u32 %v1208, 16
    %v1542 = vor.u32 %v1540, %v1514
    %v1544 = vshll.u32 %v1212, 16
    %v1546 = vrot.slane %v1544, 1
    %v1547 = vsel %vm159, %v1542, %v1546
    %v1548 = vshrl.u32 %v1209, 16
    %v1550 = vor.u32 %v1548, %v1522
    %v1552 = vshll.u32 %v1213, 16
    %v1554 = vrot.slane %v1552, 1
    %v1555 = vsel %vm159, %v1550, %v1554
    %v1556 = vshrl.u32 %v1210, 16
    %v1558 = vor.u32 %v1556, %v1530
    %v1560 = vshll.u32 %v1214, 16
    %v1562 = vrot.slane %v1560, 1
    %v1563 = vsel %vm159, %v1558, %v1562
    %v1564 = vshrl.u32 %v1211, 16
    %v1566 = vor.u32 %v1564, %v1538
    %v1568 = vshll.u32 %v1215, 16
    %v1570 = vrot.slane %v1568, 1
    %v1571 = vsel %vm159, %v1566, %v1570
    %v1572 = vshrl.u32 %v1212, 16
    %v1574 = vor.u32 %v1572, %v1546
    %v1576 = vshll.u32 %v1216, 16
    %v1578 = vrot.slane %v1576, 1
    %v1579 = vsel %vm159, %v1574, %v1578
    %v1580 = vshrl.u32 %v1213, 16
    %v1582 = vor.u32 %v1580, %v1554
    %v1584 = vshll.u32 %v1217, 16
    %v1586 = vrot.slane %v1584, 1
    %v1587 = vsel %vm159, %v1582, %v1586
    %v1588 = vshrl.u32 %v1214, 16
    %v1590 = vor.u32 %v1588, %v1562
    %v1592 = vshll.u32 %v1218, 16
    %v1594 = vrot.slane %v1592, 1
    %v1595 = vsel %vm159, %v1590, %v1594
    %v1596 = vshrl.u32 %v1215, 16
    %v1598 = vor.u32 %v1596, %v1570
    %v1600 = vshll.u32 %v1219, 16
    %v1602 = vrot.slane %v1600, 1
    %v1603 = vsel %vm159, %v1598, %v1602
    %v1604 = vshrl.u32 %v1216, 16
    %v1606 = vor.u32 %v1604, %v1578
    %v1608 = vshll.u32 %v1220, 16
    %v1610 = vrot.slane %v1608, 1
    %v1611 = vsel %vm159, %v1606, %v1610
    %v1612 = vshrl.u32 %v1217, 16
    %v1614 = vor.u32 %v1612, %v1586
    %v1616 = vshll.u32 %v1221, 16
    %v1618 = vrot.slane %v1616, 1
    %v1619 = vsel %vm159, %v1614, %v1618
    %v1620 = vshrl.u32 %v1218, 16
    %v1622 = vor.u32 %v1620, %v1594
    %v1624 = vshll.u32 %v1222, 16
    %v1626 = vrot.slane %v1624, 1
    %v1627 = vsel %vm159, %v1622, %v1626
    %v1628 = vshrl.u32 %v1219, 16
    %v1630 = vor.u32 %v1628, %v1602
    %v1632 = vshll.u32 %v1223, 16
    %v1634 = vrot.slane %v1632, 1
    %v1635 = vsel %vm159, %v1630, %v1634
    %v1636 = vshrl.u32 %v1220, 16
    %v1638 = vor.u32 %v1636, %v1610
    %v1640 = vshll.u32 %v1224, 16
    %v1642 = vrot.slane %v1640, 1
    %v1643 = vsel %vm159, %v1638, %v1642
    %v1644 = vshrl.u32 %v1221, 16
    %v1646 = vor.u32 %v1644, %v1618
    %v1648 = vshll.u32 %v1225, 16
    %v1650 = vrot.slane %v1648, 1
    %v1651 = vsel %vm159, %v1646, %v1650
    %v1652 = vshrl.u32 %v1222, 16
    %v1654 = vor.u32 %v1652, %v1626
    %v1656 = vshll.u32 %v1226, 16
    %v1658 = vrot.slane %v1656, 1
    %v1659 = vsel %vm159, %v1654, %v1658
    %v1660 = vshrl.u32 %v1223, 16
    %v1662 = vor.u32 %v1660, %v1634
    %v1664 = vshll.u32 %v1227, 16
    %v1666 = vrot.slane %v1664, 1
    %v1667 = vsel %vm159, %v1662, %v1666
    %v1668 = vshrl.u32 %v1224, 16
    %v1670 = vor.u32 %v1668, %v1642
    %v1672 = vshll.u32 %v1228, 16
    %v1674 = vrot.slane %v1672, 1
    %v1675 = vsel %vm159, %v1670, %v1674
    %v1676 = vshrl.u32 %v1225, 16
    %v1678 = vor.u32 %v1676, %v1650
    %v1680 = vshll.u32 %v1229, 16
    %v1682 = vrot.slane %v1680, 1
    %v1683 = vsel %vm159, %v1678, %v1682
    %v1684 = vshrl.u32 %v1226, 16
    %v1686 = vor.u32 %v1684, %v1658
    %v1688 = vshll.u32 %v1230, 16
    %v1690 = vrot.slane %v1688, 1
    %v1691 = vsel %vm159, %v1686, %v1690
    %v1692 = vshrl.u32 %v1227, 16
    %v1694 = vor.u32 %v1692, %v1666
    %v1696 = vshll.u32 %v1231, 16
    %v1698 = vrot.slane %v1696, 1
    %v1699 = vsel %vm159, %v1694, %v1698
    %v1700 = vshrl.u32 %v1228, 16
    %v1702 = vor.u32 %v1700, %v1674
    %v1704 = vshll.u32 %v1232, 16
    %v1706 = vrot.slane %v1704, 1
    %v1707 = vsel %vm159, %v1702, %v1706
    %v1708 = vshrl.u32 %v1229, 16
    %v1710 = vor.u32 %v1708, %v1682
    %v1712 = vshll.u32 %v1233, 16
    %v1714 = vrot.slane %v1712, 1
    %v1715 = vsel %vm159, %v1710, %v1714
    %v1716 = vshrl.u32 %v1230, 16
    %v1718 = vor.u32 %v1716, %v1690
    %v1720 = vshll.u32 %v1234, 16
    %v1722 = vrot.slane %v1720, 1
    %v1723 = vsel %vm159, %v1718, %v1722
    %v1724 = vshrl.u32 %v1231, 16
    %v1726 = vor.u32 %v1724, %v1698
    %v1728 = vshll.u32 %v1235, 16
    %v1730 = vrot.slane %v1728, 1
    %v1731 = vsel %vm159, %v1726, %v1730
    %v1732 = vshrl.u32 %v1232, 16
    %v1734 = vor.u32 %v1732, %v1706
    %v1735 = vshrl.u32 %v1233, 16
    %v1737 = vor.u32 %v1735, %v1714
    %v1738 = vshrl.u32 %v1234, 16
    %v1740 = vor.u32 %v1738, %v1722
    %v1741 = vshrl.u32 %v1235, 16
    %v1743 = vor.u32 %v1741, %v1730
    %v1808 = vsel %vm289, %v1734, 0
    %v1809 = vsel %vm289, %v1737, 0
    %v1810 = vsel %vm289, %v1740, 0
    %v1811 = vsel %vm289, %v1743, 0
    %v1812 = vmax.bf16 %v1172, %v1247
    %v1813 = vmax.bf16 %v1173, %v1259
    %v1814 = vmax.bf16 %v1174, %v1271
    %v1815 = vmax.bf16 %v1175, %v1283
    %v1816 = vmax.bf16 %v1176, %v1291
    %v1817 = vmax.bf16 %v1177, %v1299
    %v1818 = vmax.bf16 %v1178, %v1307
    %v1819 = vmax.bf16 %v1179, %v1315
    %v1820 = vmax.bf16 %v1180, %v1323
    %v1821 = vmax.bf16 %v1181, %v1331
    %v1822 = vmax.bf16 %v1182, %v1339
    %v1823 = vmax.bf16 %v1183, %v1347
    %v1824 = vmax.bf16 %v1184, %v1355
    %v1825 = vmax.bf16 %v1185, %v1363
    %v1826 = vmax.bf16 %v1186, %v1371
    %v1827 = vmax.bf16 %v1187, %v1379
    %v1828 = vmax.bf16 %v1188, %v1387
    %v1829 = vmax.bf16 %v1189, %v1395
    %v1830 = vmax.bf16 %v1190, %v1403
    %v1831 = vmax.bf16 %v1191, %v1411
    %v1832 = vmax.bf16 %v1192, %v1419
    %v1833 = vmax.bf16 %v1193, %v1427
    %v1834 = vmax.bf16 %v1194, %v1435
    %v1835 = vmax.bf16 %v1195, %v1443
    %v1836 = vmax.bf16 %v1196, %v1451
    %v1837 = vmax.bf16 %v1197, %v1459
    %v1838 = vmax.bf16 %v1198, %v1467
    %v1839 = vmax.bf16 %v1199, %v1475
    %v1840 = vmax.bf16 %v1200, %v1483
    %v1841 = vmax.bf16 %v1201, %v1491
    %v1842 = vmax.bf16 %v1202, %v1499
    %v1843 = vmax.bf16 %v1203, %v1507
    %v1844 = vmax.bf16 %v1204, %v1515
    %v1845 = vmax.bf16 %v1205, %v1523
    %v1846 = vmax.bf16 %v1206, %v1531
    %v1847 = vmax.bf16 %v1207, %v1539
    %v1848 = vmax.bf16 %v1208, %v1547
    %v1849 = vmax.bf16 %v1209, %v1555
    %v1850 = vmax.bf16 %v1210, %v1563
    %v1851 = vmax.bf16 %v1211, %v1571
    %v1852 = vmax.bf16 %v1212, %v1579
    %v1853 = vmax.bf16 %v1213, %v1587
    %v1854 = vmax.bf16 %v1214, %v1595
    %v1855 = vmax.bf16 %v1215, %v1603
    %v1856 = vmax.bf16 %v1216, %v1611
    %v1857 = vmax.bf16 %v1217, %v1619
    %v1858 = vmax.bf16 %v1218, %v1627
    %v1859 = vmax.bf16 %v1219, %v1635
    %v1860 = vmax.bf16 %v1220, %v1643
    %v1861 = vmax.bf16 %v1221, %v1651
    %v1862 = vmax.bf16 %v1222, %v1659
    %v1863 = vmax.bf16 %v1223, %v1667
    %v1864 = vmax.bf16 %v1224, %v1675
    %v1865 = vmax.bf16 %v1225, %v1683
    %v1866 = vmax.bf16 %v1226, %v1691
    %v1867 = vmax.bf16 %v1227, %v1699
    %v1868 = vmax.bf16 %v1228, %v1707
    %v1869 = vmax.bf16 %v1229, %v1715
    %v1870 = vmax.bf16 %v1230, %v1723
    %v1871 = vmax.bf16 %v1231, %v1731
    %v1872 = vmax.bf16 %v1232, %v1808
    %v1873 = vmax.bf16 %v1233, %v1809
    %v1874 = vmax.bf16 %v1234, %v1810
    %v1875 = vmax.bf16 %v1235, %v1811
    %v1876 = vld [vmem:[%s4] sm:$0xff]
    %v1877 = vld [vmem:[%s4 + $0x8] sm:$0xff]
    %v1878 = vld [vmem:[%s4 + $0x10] sm:$0xff]
    %v1879 = vld [vmem:[%s4 + $0x18] sm:$0xff]
    %v1880 = vld [vmem:[%s4 + $0x20] sm:$0xff]
    %v1881 = vld [vmem:[%s4 + $0x28] sm:$0xff]
    %v1882 = vld [vmem:[%s4 + $0x30] sm:$0xff]
    %v1883 = vld [vmem:[%s4 + $0x38] sm:$0xff]
    %v1884 = vld [vmem:[%s4 + $0x40] sm:$0xff]
    %v1885 = vld [vmem:[%s4 + $0x48] sm:$0xff]
    %v1886 = vld [vmem:[%s4 + $0x50] sm:$0xff]
    %v1887 = vld [vmem:[%s4 + $0x58] sm:$0xff]
    %v1888 = vld [vmem:[%s4 + $0x60] sm:$0xff]
    %v1889 = vld [vmem:[%s4 + $0x68] sm:$0xff]
    %v1890 = vld [vmem:[%s4 + $0x70] sm:$0xff]
    %v1891 = vld [vmem:[%s4 + $0x78] sm:$0xff]
    %v1892 = vld [vmem:[%s4 + $0x80] sm:$0xff]
    %v1893 = vld [vmem:[%s4 + $0x88] sm:$0xff]
    %v1894 = vld [vmem:[%s4 + $0x90] sm:$0xff]
    %v1914 = vunpack.c.l.b16 %v1876
    %v1915 = vunpack.c.h.b16 %v1876
    %v1916 = vunpack.c.l.b16 %v1877
    %v1917 = vunpack.c.h.b16 %v1877
    %v1918 = vunpack.c.l.b16 %v1878
    %v1919 = vunpack.c.h.b16 %v1878
    %v1920 = vunpack.c.l.b16 %v1879
    %v1921 = vunpack.c.h.b16 %v1879
    %v1922 = vunpack.c.l.b16 %v1880
    %v1923 = vunpack.c.h.b16 %v1880
    %v1924 = vunpack.c.l.b16 %v1881
    %v1925 = vunpack.c.h.b16 %v1881
    %v1926 = vunpack.c.l.b16 %v1882
    %v1927 = vunpack.c.h.b16 %v1882
    %v1928 = vunpack.c.l.b16 %v1883
    %v1929 = vunpack.c.h.b16 %v1883
    %v1930 = vunpack.c.l.b16 %v1884
    %v1931 = vunpack.c.h.b16 %v1884
    %v1932 = vunpack.c.l.b16 %v1885
    %v1933 = vunpack.c.h.b16 %v1885
    %v1934 = vunpack.c.l.b16 %v1886
    %v1935 = vunpack.c.h.b16 %v1886
    %v1936 = vunpack.c.l.b16 %v1887
    %v1937 = vunpack.c.h.b16 %v1887
    %v1938 = vunpack.c.l.b16 %v1888
    %v1939 = vunpack.c.h.b16 %v1888
    %v1940 = vunpack.c.l.b16 %v1889
    %v1941 = vunpack.c.h.b16 %v1889
    %v1942 = vunpack.c.l.b16 %v1890
    %v1943 = vunpack.c.h.b16 %v1890
    %v1944 = vunpack.c.l.b16 %v1891
    %v1945 = vunpack.c.h.b16 %v1891
    %v1946 = vunpack.c.l.b16 %v1892
    %v1947 = vunpack.c.h.b16 %v1892
    %v1948 = vunpack.c.l.b16 %v1893
    %v1949 = vunpack.c.h.b16 %v1893
    %v1950 = vunpack.c.l.b16 %v1894
    %v1951 = vunpack.c.h.b16 %v1894
    %v1952 = vpack.c.b16 %v1916, %v1914
    %v1953 = vpack.c.b16 %v1917, %v1915
    %v1954 = vpack.c.b16 %v1920, %v1918
    %v1955 = vpack.c.b16 %v1921, %v1919
    %v1956 = vpack.c.b16 %v1924, %v1922
    %v1957 = vpack.c.b16 %v1925, %v1923
    %v1958 = vpack.c.b16 %v1928, %v1926
    %v1959 = vpack.c.b16 %v1929, %v1927
    %v1960 = vpack.c.b16 %v1932, %v1930
    %v1961 = vpack.c.b16 %v1933, %v1931
    %v1962 = vpack.c.b16 %v1936, %v1934
    %v1963 = vpack.c.b16 %v1937, %v1935
    %v1964 = vpack.c.b16 %v1940, %v1938
    %v1965 = vpack.c.b16 %v1941, %v1939
    %v1966 = vpack.c.b16 %v1944, %v1942
    %v1967 = vpack.c.b16 %v1945, %v1943
    %v1968 = vpack.c.b16 %v1948, %v1946
    %v1969 = vpack.c.b16 %v1949, %v1947
    %v1970 = vpack.c.b16 %v1950, %v1950
    %v1971 = vpack.c.b16 %v1951, %v1951
    %1992 = vmatprep.subr.bf16.mxu0 %v1841
    %1993 = vmatpush1.bf16.msra.mxu0 %v1840
    %1994 = vmatprep.subr.bf16.mxu0 %v1837
    %1995 = vmatpush1.bf16.msra.mxu0 %v1836
    %1996 = vmatprep.subr.bf16.mxu0 %v1833
    %1997 = vmatpush1.bf16.msra.mxu0 %v1832
    %1998 = vmatprep.subr.bf16.mxu0 %v1829
    %1999 = vmatpush1.bf16.msra.mxu0 %v1828
    %2000 = vmatprep.subr.bf16.mxu0 %v1825
    %2001 = vmatpush1.bf16.msra.mxu0 %v1824
    %2002 = vmatprep.subr.bf16.mxu0 %v1821
    %2003 = vmatpush1.bf16.msra.mxu0 %v1820
    %2004 = vmatprep.subr.bf16.mxu0 %v1817
    %2005 = vmatpush1.bf16.msra.mxu0 %v1816
    %2006 = vmatprep.subr.bf16.mxu0 %v1813
    %2007 = vmatpush1.bf16.msra.mxu0 %v1812
    %2008 = vmatprep.subr.bf16.mxu0 %v1873
    %2009 = vmatpush2.bf16.msra.mxu0 %v1872
    %2010 = vmatprep.subr.bf16.mxu0 %v1869
    %2011 = vmatpush2.bf16.msra.mxu0 %v1868
    %2012 = vmatprep.subr.bf16.mxu0 %v1865
    %2013 = vmatpush2.bf16.msra.mxu0 %v1864
    %2014 = vmatprep.subr.bf16.mxu0 %v1861
    %2015 = vmatpush2.bf16.msra.mxu0 %v1860
    %2016 = vmatprep.subr.bf16.mxu0 %v1857
    %2017 = vmatpush2.bf16.msra.mxu0 %v1856
    %2018 = vmatprep.subr.bf16.mxu0 %v1853
    %2019 = vmatpush2.bf16.msra.mxu0 %v1852
    %2020 = vmatprep.subr.bf16.mxu0 %v1849
    %2021 = vmatpush2.bf16.msra.mxu0 %v1848
    %2022 = vmatprep.subr.bf16.mxu0 %v1845
    %2023 = vmatpush2.bf16.msra.mxu0 %v1844
    %2024 = vmatprep.mubr.bf16.mxu0 %v1953
    %2025 = vmatmul.mubr.bf16.gmra.mxu0 %v1952
    %v2026 = vpop.f32.mrf.mxu0
    %v2027 = vadd.f32 0.0, %v2026
    %v2028 = vpop.f32.mrf.mxu0
    %v2029 = vadd.f32 0.0, %v2028
    %v2030 = vpop.f32.mrf.mxu0
    %v2031 = vadd.f32 0.0, %v2030
    %v2032 = vpop.f32.mrf.mxu0
    %v2033 = vadd.f32 0.0, %v2032
    %2034 = vmatprep.mubr.bf16.mxu0 %v1955
    %2035 = vmatmul.mubr.bf16.gmra.mxu0 %v1954
    %v2036 = vpop.f32.mrf.mxu0
    %v2037 = vadd.f32 0.0, %v2036
    %v2038 = vpop.f32.mrf.mxu0
    %v2039 = vadd.f32 0.0, %v2038
    %v2040 = vpop.f32.mrf.mxu0
    %v2041 = vadd.f32 0.0, %v2040
    %v2042 = vpop.f32.mrf.mxu0
    %v2043 = vadd.f32 0.0, %v2042
    %2044 = vmatprep.mubr.bf16.mxu0 %v1957
    %2045 = vmatmul.mubr.bf16.gmra.mxu0 %v1956
    %v2046 = vpop.f32.mrf.mxu0
    %v2047 = vadd.f32 0.0, %v2046
    %v2048 = vpop.f32.mrf.mxu0
    %v2049 = vadd.f32 0.0, %v2048
    %v2050 = vpop.f32.mrf.mxu0
    %v2051 = vadd.f32 0.0, %v2050
    %v2052 = vpop.f32.mrf.mxu0
    %v2053 = vadd.f32 0.0, %v2052
    %2054 = vmatprep.mubr.bf16.mxu0 %v1959
    %2055 = vmatmul.mubr.bf16.gmra.mxu0 %v1958
    %v2056 = vpop.f32.mrf.mxu0
    %v2057 = vadd.f32 0.0, %v2056
    %v2058 = vpop.f32.mrf.mxu0
    %v2059 = vadd.f32 0.0, %v2058
    %v2060 = vpop.f32.mrf.mxu0
    %v2061 = vadd.f32 0.0, %v2060
    %v2062 = vpop.f32.mrf.mxu0
    %v2063 = vadd.f32 0.0, %v2062
    %2064 = vmatprep.mubr.bf16.mxu0 %v1961
    %2065 = vmatmul.mubr.bf16.gmra.mxu0 %v1960
    %v2066 = vpop.f32.mrf.mxu0
    %v2067 = vadd.f32 0.0, %v2066
    %v2068 = vpop.f32.mrf.mxu0
    %v2069 = vadd.f32 0.0, %v2068
    %v2070 = vpop.f32.mrf.mxu0
    %v2071 = vadd.f32 0.0, %v2070
    %v2072 = vpop.f32.mrf.mxu0
    %v2073 = vadd.f32 0.0, %v2072
    %2074 = vmatprep.mubr.bf16.mxu0 %v1963
    %2075 = vmatmul.mubr.bf16.gmra.mxu0 %v1962
    %v2076 = vpop.f32.mrf.mxu0
    %v2077 = vadd.f32 0.0, %v2076
    %v2078 = vpop.f32.mrf.mxu0
    %v2079 = vadd.f32 0.0, %v2078
    %v2080 = vpop.f32.mrf.mxu0
    %v2081 = vadd.f32 0.0, %v2080
    %v2082 = vpop.f32.mrf.mxu0
    %v2083 = vadd.f32 0.0, %v2082
    %2084 = vmatprep.mubr.bf16.mxu0 %v1965
    %2085 = vmatmul.mubr.bf16.gmra.mxu0 %v1964
    %v2086 = vpop.f32.mrf.mxu0
    %v2087 = vadd.f32 0.0, %v2086
    %v2088 = vpop.f32.mrf.mxu0
    %v2089 = vadd.f32 0.0, %v2088
    %v2090 = vpop.f32.mrf.mxu0
    %v2091 = vadd.f32 0.0, %v2090
    %v2092 = vpop.f32.mrf.mxu0
    %v2093 = vadd.f32 0.0, %v2092
    %2094 = vmatprep.mubr.bf16.mxu0 %v1967
    %2095 = vmatmul.mubr.bf16.gmra.mxu0 %v1966
    %v2096 = vpop.f32.mrf.mxu0
    %v2097 = vadd.f32 0.0, %v2096
    %v2098 = vpop.f32.mrf.mxu0
    %v2099 = vadd.f32 0.0, %v2098
    %v2100 = vpop.f32.mrf.mxu0
    %v2101 = vadd.f32 0.0, %v2100
    %v2102 = vpop.f32.mrf.mxu0
    %v2103 = vadd.f32 0.0, %v2102
    %2104 = vmatprep.mubr.bf16.mxu0 %v1969
    %2105 = vmatmul.mubr.bf16.gmra.mxu0 %v1968
    %v2106 = vpop.f32.mrf.mxu0
    %v2107 = vadd.f32 0.0, %v2106
    %v2108 = vpop.f32.mrf.mxu0
    %v2109 = vadd.f32 0.0, %v2108
    %v2110 = vpop.f32.mrf.mxu0
    %v2111 = vadd.f32 0.0, %v2110
    %v2112 = vpop.f32.mrf.mxu0
    %v2113 = vadd.f32 0.0, %v2112
    %2114 = vmatprep.mubr.bf16.mxu0 %v1971
    %2115 = vmatmul.mubr.bf16.gmra.mxu0 %v1970
    %v2116 = vpop.f32.mrf.mxu0
    %v2117 = vadd.f32 0.0, %v2116
    %v2118 = vpop.f32.mrf.mxu0
    %v2119 = vadd.f32 0.0, %v2118
    %v2120 = vpop.f32.mrf.mxu0
    %v2121 = vpop.f32.mrf.mxu0
    %2122 = vdwg.mxu0
    %2123 = vmatprep.subr.bf16.mxu0 %v1843
    %2124 = vmatpush1.bf16.msra.mxu0 %v1842
    %2125 = vmatprep.subr.bf16.mxu0 %v1839
    %2126 = vmatpush1.bf16.msra.mxu0 %v1838
    %2127 = vmatprep.subr.bf16.mxu0 %v1835
    %2128 = vmatpush1.bf16.msra.mxu0 %v1834
    %2129 = vmatprep.subr.bf16.mxu0 %v1831
    %2130 = vmatpush1.bf16.msra.mxu0 %v1830
    %2131 = vmatprep.subr.bf16.mxu0 %v1827
    %2132 = vmatpush1.bf16.msra.mxu0 %v1826
    %2133 = vmatprep.subr.bf16.mxu0 %v1823
    %2134 = vmatpush1.bf16.msra.mxu0 %v1822
    %2135 = vmatprep.subr.bf16.mxu0 %v1819
    %2136 = vmatpush1.bf16.msra.mxu0 %v1818
    %2137 = vmatprep.subr.bf16.mxu0 %v1815
    %2138 = vmatpush1.bf16.msra.mxu0 %v1814
    %2139 = vmatprep.subr.bf16.mxu0 %v1875
    %2140 = vmatpush2.bf16.msra.mxu0 %v1874
    %2141 = vmatprep.subr.bf16.mxu0 %v1871
    %2142 = vmatpush2.bf16.msra.mxu0 %v1870
    %2143 = vmatprep.subr.bf16.mxu0 %v1867
    %2144 = vmatpush2.bf16.msra.mxu0 %v1866
    %2145 = vmatprep.subr.bf16.mxu0 %v1863
    %2146 = vmatpush2.bf16.msra.mxu0 %v1862
    %2147 = vmatprep.subr.bf16.mxu0 %v1859
    %2148 = vmatpush2.bf16.msra.mxu0 %v1858
    %2149 = vmatprep.subr.bf16.mxu0 %v1855
    %2150 = vmatpush2.bf16.msra.mxu0 %v1854
    %2151 = vmatprep.subr.bf16.mxu0 %v1851
    %2152 = vmatpush2.bf16.msra.mxu0 %v1850
    %2153 = vmatprep.subr.bf16.mxu0 %v1847
    %2154 = vmatpush2.bf16.msra.mxu0 %v1846
    %2155 = vmatprep.mubr.bf16.mxu0 %v1953
    %2156 = vmatmul.mubr.bf16.gmra.mxu0 %v1952
    %v2157 = vpop.f32.mrf.mxu0
    %v2158 = vadd.f32 0.0, %v2157
    %v2159 = vpop.f32.mrf.mxu0
    %v2160 = vadd.f32 0.0, %v2159
    %v2161 = vpop.f32.mrf.mxu0
    %v2162 = vadd.f32 0.0, %v2161
    %v2163 = vpop.f32.mrf.mxu0
    %v2164 = vadd.f32 0.0, %v2163
    %2165 = vmatprep.mubr.bf16.mxu0 %v1955
    %2166 = vmatmul.mubr.bf16.gmra.mxu0 %v1954
    %v2167 = vpop.f32.mrf.mxu0
    %v2168 = vadd.f32 0.0, %v2167
    %v2169 = vpop.f32.mrf.mxu0
    %v2170 = vadd.f32 0.0, %v2169
    %v2171 = vpop.f32.mrf.mxu0
    %v2172 = vadd.f32 0.0, %v2171
    %v2173 = vpop.f32.mrf.mxu0
    %v2174 = vadd.f32 0.0, %v2173
    %2175 = vmatprep.mubr.bf16.mxu0 %v1957
    %2176 = vmatmul.mubr.bf16.gmra.mxu0 %v1956
    %v2177 = vpop.f32.mrf.mxu0
    %v2178 = vadd.f32 0.0, %v2177
    %v2179 = vpop.f32.mrf.mxu0
    %v2180 = vadd.f32 0.0, %v2179
    %v2181 = vpop.f32.mrf.mxu0
    %v2182 = vadd.f32 0.0, %v2181
    %v2183 = vpop.f32.mrf.mxu0
    %v2184 = vadd.f32 0.0, %v2183
    %2185 = vmatprep.mubr.bf16.mxu0 %v1959
    %2186 = vmatmul.mubr.bf16.gmra.mxu0 %v1958
    %v2187 = vpop.f32.mrf.mxu0
    %v2188 = vadd.f32 0.0, %v2187
    %v2189 = vpop.f32.mrf.mxu0
    %v2190 = vadd.f32 0.0, %v2189
    %v2191 = vpop.f32.mrf.mxu0
    %v2192 = vadd.f32 0.0, %v2191
    %v2193 = vpop.f32.mrf.mxu0
    %v2194 = vadd.f32 0.0, %v2193
    %2195 = vmatprep.mubr.bf16.mxu0 %v1961
    %2196 = vmatmul.mubr.bf16.gmra.mxu0 %v1960
    %v2197 = vpop.f32.mrf.mxu0
    %v2198 = vadd.f32 0.0, %v2197
    %v2199 = vpop.f32.mrf.mxu0
    %v2200 = vadd.f32 0.0, %v2199
    %v2201 = vpop.f32.mrf.mxu0
    %v2202 = vadd.f32 0.0, %v2201
    %v2203 = vpop.f32.mrf.mxu0
    %v2204 = vadd.f32 0.0, %v2203
    %2205 = vmatprep.mubr.bf16.mxu0 %v1963
    %2206 = vmatmul.mubr.bf16.gmra.mxu0 %v1962
    %v2207 = vpop.f32.mrf.mxu0
    %v2208 = vadd.f32 0.0, %v2207
    %v2209 = vpop.f32.mrf.mxu0
    %v2210 = vadd.f32 0.0, %v2209
    %v2211 = vpop.f32.mrf.mxu0
    %v2212 = vadd.f32 0.0, %v2211
    %v2213 = vpop.f32.mrf.mxu0
    %v2214 = vadd.f32 0.0, %v2213
    %2215 = vmatprep.mubr.bf16.mxu0 %v1965
    %2216 = vmatmul.mubr.bf16.gmra.mxu0 %v1964
    %v2217 = vpop.f32.mrf.mxu0
    %v2218 = vadd.f32 0.0, %v2217
    %v2219 = vpop.f32.mrf.mxu0
    %v2220 = vadd.f32 0.0, %v2219
    %v2221 = vpop.f32.mrf.mxu0
    %v2222 = vadd.f32 0.0, %v2221
    %v2223 = vpop.f32.mrf.mxu0
    %v2224 = vadd.f32 0.0, %v2223
    %2225 = vmatprep.mubr.bf16.mxu0 %v1967
    %2226 = vmatmul.mubr.bf16.gmra.mxu0 %v1966
    %v2227 = vpop.f32.mrf.mxu0
    %v2228 = vadd.f32 0.0, %v2227
    %v2229 = vpop.f32.mrf.mxu0
    %v2230 = vadd.f32 0.0, %v2229
    %v2231 = vpop.f32.mrf.mxu0
    %v2232 = vadd.f32 0.0, %v2231
    %v2233 = vpop.f32.mrf.mxu0
    %v2234 = vadd.f32 0.0, %v2233
    %2235 = vmatprep.mubr.bf16.mxu0 %v1969
    %2236 = vmatmul.mubr.bf16.gmra.mxu0 %v1968
    %v2237 = vpop.f32.mrf.mxu0
    %v2238 = vadd.f32 0.0, %v2237
    %v2239 = vpop.f32.mrf.mxu0
    %v2240 = vadd.f32 0.0, %v2239
    %v2241 = vpop.f32.mrf.mxu0
    %v2242 = vadd.f32 0.0, %v2241
    %v2243 = vpop.f32.mrf.mxu0
    %v2244 = vadd.f32 0.0, %v2243
    %2245 = vmatprep.mubr.bf16.mxu0 %v1971
    %2246 = vmatmul.mubr.bf16.gmra.mxu0 %v1970
    %v2247 = vpop.f32.mrf.mxu0
    %v2248 = vadd.f32 0.0, %v2247
    %v2249 = vpop.f32.mrf.mxu0
    %v2250 = vadd.f32 0.0, %v2249
    %v2251 = vpop.f32.mrf.mxu0
    %v2252 = vpop.f32.mrf.mxu0
    %2253 = vdwg.mxu0
    %v2254 = vpack.c.bf16 %v2031, %v2027
    %v2255 = vpack.c.bf16 %v2033, %v2029
    %v2256 = vpack.c.bf16 %v2162, %v2158
    %v2257 = vpack.c.bf16 %v2164, %v2160
    %v2258 = vpack.c.bf16 %v2041, %v2037
    %v2259 = vpack.c.bf16 %v2043, %v2039
    %v2260 = vpack.c.bf16 %v2172, %v2168
    %v2261 = vpack.c.bf16 %v2174, %v2170
    %v2262 = vpack.c.bf16 %v2051, %v2047
    %v2263 = vpack.c.bf16 %v2053, %v2049
    %v2264 = vpack.c.bf16 %v2182, %v2178
    %v2265 = vpack.c.bf16 %v2184, %v2180
    %v2266 = vpack.c.bf16 %v2061, %v2057
    %v2267 = vpack.c.bf16 %v2063, %v2059
    %v2268 = vpack.c.bf16 %v2192, %v2188
    %v2269 = vpack.c.bf16 %v2194, %v2190
    %v2270 = vpack.c.bf16 %v2071, %v2067
    %v2271 = vpack.c.bf16 %v2073, %v2069
    %v2272 = vpack.c.bf16 %v2202, %v2198
    %v2273 = vpack.c.bf16 %v2204, %v2200
    %v2274 = vpack.c.bf16 %v2081, %v2077
    %v2275 = vpack.c.bf16 %v2083, %v2079
    %v2276 = vpack.c.bf16 %v2212, %v2208
    %v2277 = vpack.c.bf16 %v2214, %v2210
    %v2278 = vpack.c.bf16 %v2091, %v2087
    %v2279 = vpack.c.bf16 %v2093, %v2089
    %v2280 = vpack.c.bf16 %v2222, %v2218
    %v2281 = vpack.c.bf16 %v2224, %v2220
    %v2282 = vpack.c.bf16 %v2101, %v2097
    %v2283 = vpack.c.bf16 %v2103, %v2099
    %v2284 = vpack.c.bf16 %v2232, %v2228
    %v2285 = vpack.c.bf16 %v2234, %v2230
    %v2286 = vpack.c.bf16 %v2111, %v2107
    %v2287 = vpack.c.bf16 %v2113, %v2109
    %v2288 = vpack.c.bf16 %v2242, %v2238
    %v2289 = vpack.c.bf16 %v2244, %v2240
    %v2290 = vpack.c.bf16 %v2117, %v2117
    %v2291 = vpack.c.bf16 %v2119, %v2119
    %v2292 = vpack.c.bf16 %v2248, %v2248
    %v2293 = vpack.c.bf16 %v2250, %v2250
    %v2294 = vld [vmem:[%s3] sm:$0xff]
    %v2295 = vld [vmem:[%s3 + $0x8] sm:$0xf]
    %v2296 = vld [vmem:[%s3 + $0xc] sm:$0xff]
    %v2297 = vld [vmem:[%s3 + $0x14] sm:$0xf]
    %v2298 = vld [vmem:[%s3 + $0x18] sm:$0xff]
    %v2299 = vld [vmem:[%s3 + $0x20] sm:$0xf]
    %v2300 = vld [vmem:[%s3 + $0x24] sm:$0xff]
    %v2301 = vld [vmem:[%s3 + $0x2c] sm:$0xf]
    %v2302 = vld [vmem:[%s3 + $0x30] sm:$0xff]
    %v2303 = vld [vmem:[%s3 + $0x38] sm:$0xf]
    %v2304 = vld [vmem:[%s3 + $0x3c] sm:$0xff]
    %v2305 = vld [vmem:[%s3 + $0x44] sm:$0xf]
    %v2306 = vld [vmem:[%s3 + $0x48] sm:$0xff]
    %v2307 = vld [vmem:[%s3 + $0x50] sm:$0xf]
    %v2308 = vld [vmem:[%s3 + $0x54] sm:$0xff]
    %v2309 = vld [vmem:[%s3 + $0x5c] sm:$0xf]
    %v2310 = vld [vmem:[%s3 + $0x60] sm:$0xff]
    %v2311 = vld [vmem:[%s3 + $0x68] sm:$0xf]
    %v2312 = vld [vmem:[%s3 + $0x6c] sm:$0xff]
    %v2313 = vld [vmem:[%s3 + $0x74] sm:$0xf]
    %v2314 = vld [vmem:[%s3 + $0x78] sm:$0xff]
    %v2315 = vld [vmem:[%s3 + $0x80] sm:$0xf]
    %v2316 = vld [vmem:[%s3 + $0x84] sm:$0xff]
    %v2317 = vld [vmem:[%s3 + $0x8c] sm:$0xf]
    %v2318 = vld [vmem:[%s3 + $0x90] sm:$0xff]
    %v2319 = vld [vmem:[%s3 + $0x98] sm:$0xf]
    %v2320 = vld [vmem:[%s3 + $0x9c] sm:$0xff]
    %v2321 = vld [vmem:[%s3 + $0xa4] sm:$0xf]
    %v2322 = vld [vmem:[%s3 + $0xa8] sm:$0xff]
    %v2323 = vld [vmem:[%s3 + $0xb0] sm:$0xf]
    %v2324 = vld [vmem:[%s3 + $0xb4] sm:$0xff]
    %v2325 = vld [vmem:[%s3 + $0xbc] sm:$0xf]
    %v2326 = vld [vmem:[%s3 + $0xc0] sm:$0xff]
    %v2327 = vld [vmem:[%s3 + $0xc8] sm:$0xf]
    %v2328 = vld [vmem:[%s3 + $0xcc] sm:$0xff]
    %v2329 = vld [vmem:[%s3 + $0xd4] sm:$0xf]
    %v2330 = vld [vmem:[%s3 + $0xd8] sm:$0xff]
    %v2331 = vld [vmem:[%s3 + $0xe0] sm:$0xf]
    %v2332 = vld [vmem:[%s3 + $0xe4] sm:$0xff]
    %v2333 = vld [vmem:[%s3 + $0xec] sm:$0xf]
    %v2334 = vld [vmem:[%s3 + $0xf0] sm:$0xff]
    %v2335 = vld [vmem:[%s3 + $0xf8] sm:$0xf]
    %v2336 = vld [vmem:[%s3 + $0xfc] sm:$0xff]
    %v2337 = vld [vmem:[%s3 + $0x104] sm:$0xf]
    %v2338 = vld [vmem:[%s3 + $0x108] sm:$0xff]
    %v2339 = vld [vmem:[%s3 + $0x110] sm:$0xf]
    %v2340 = vld [vmem:[%s3 + $0x114] sm:$0xff]
    %v2341 = vld [vmem:[%s3 + $0x11c] sm:$0xf]
    %v2342 = vld [vmem:[%s3 + $0x120] sm:$0xff]
    %v2343 = vld [vmem:[%s3 + $0x128] sm:$0xf]
    %v2344 = vld [vmem:[%s3 + $0x12c] sm:$0xff]
    %v2345 = vld [vmem:[%s3 + $0x134] sm:$0xf]
    %v2346 = vld [vmem:[%s3 + $0x138] sm:$0xff]
    %v2347 = vld [vmem:[%s3 + $0x140] sm:$0xf]
    %v2348 = vld [vmem:[%s3 + $0x144] sm:$0xff]
    %v2349 = vld [vmem:[%s3 + $0x14c] sm:$0xf]
    %v2350 = vld [vmem:[%s3 + $0x150] sm:$0xff]
    %v2351 = vld [vmem:[%s3 + $0x158] sm:$0xf]
    %v2352 = vld [vmem:[%s3 + $0x15c] sm:$0xff]
    %v2353 = vld [vmem:[%s3 + $0x164] sm:$0xf]
    %v2354 = vld [vmem:[%s3 + $0x168] sm:$0xff]
    %v2355 = vld [vmem:[%s3 + $0x170] sm:$0xf]
    %v2356 = vld [vmem:[%s3 + $0x174] sm:$0xff]
    %v2357 = vld [vmem:[%s3 + $0x17c] sm:$0xf]
    %v2358 = vld [vmem:[%s3 + $0x180] sm:$0xff]
    %v2359 = vld [vmem:[%s3 + $0x188] sm:$0xf]
    %v2360 = vld [vmem:[%s3 + $0x18c] sm:$0xff]
    %v2361 = vld [vmem:[%s3 + $0x194] sm:$0xf]
    %v2362 = vld [vmem:[%s3 + $0x198] sm:$0xff]
    %v2363 = vld [vmem:[%s3 + $0x1a0] sm:$0xf]
    %v2364 = vld [vmem:[%s3 + $0x1a4] sm:$0xff]
    %v2365 = vld [vmem:[%s3 + $0x1ac] sm:$0xf]
    %v2366 = vld [vmem:[%s3 + $0x1b0] sm:$0xff]
    %v2367 = vld [vmem:[%s3 + $0x1b8] sm:$0xf]
    %v2368 = vld [vmem:[%s3 + $0x1bc] sm:$0xff]
    %v2369 = vld [vmem:[%s3 + $0x1c4] sm:$0xf]
    %v2370 = vld [vmem:[%s3 + $0x1c8] sm:$0xff]
    %v2371 = vld [vmem:[%s3 + $0x1d0] sm:$0xf]
    %v2372 = vld [vmem:[%s3 + $0x1d4] sm:$0xff]
    %v2373 = vld [vmem:[%s3 + $0x1dc] sm:$0xf]
    %v2374 = vld [vmem:[%s3 + $0x1e0] sm:$0xff]
    %v2375 = vld [vmem:[%s3 + $0x1e8] sm:$0xf]
    %v2376 = vld [vmem:[%s3 + $0x1ec] sm:$0xff]
    %v2377 = vld [vmem:[%s3 + $0x1f4] sm:$0xf]
    %v2378 = vld [vmem:[%s3 + $0x1f8] sm:$0xff]
    %v2379 = vld [vmem:[%s3 + $0x200] sm:$0xf]
    %v2380 = vld [vmem:[%s3 + $0x204] sm:$0xff]
    %v2381 = vld [vmem:[%s3 + $0x20c] sm:$0xf]
    %v2382 = vld [vmem:[%s3 + $0x210] sm:$0xff]
    %v2383 = vld [vmem:[%s3 + $0x218] sm:$0xf]
    %v2384 = vld [vmem:[%s3 + $0x21c] sm:$0xff]
    %v2385 = vld [vmem:[%s3 + $0x224] sm:$0xf]
    %v2386 = vld [vmem:[%s3 + $0x228] sm:$0xff]
    %v2387 = vld [vmem:[%s3 + $0x230] sm:$0xf]
    %v2388 = vld [vmem:[%s3 + $0x234] sm:$0xff]
    %v2389 = vld [vmem:[%s3 + $0x23c] sm:$0xf]
    %v2390 = vld [vmem:[%s3 + $0x240] sm:$0xff]
    %v2391 = vld [vmem:[%s3 + $0x248] sm:$0xf]
    %v2392 = vld [vmem:[%s3 + $0x24c] sm:$0xff]
    %v2393 = vld [vmem:[%s3 + $0x254] sm:$0xf]
    %v2394 = vld [vmem:[%s3 + $0x258] sm:$0xff]
    %v2395 = vld [vmem:[%s3 + $0x260] sm:$0xf]
    %v2396 = vld [vmem:[%s3 + $0x264] sm:$0xff]
    %v2397 = vld [vmem:[%s3 + $0x26c] sm:$0xf]
    %v2398 = vld [vmem:[%s3 + $0x270] sm:$0xff]
    %v2399 = vld [vmem:[%s3 + $0x278] sm:$0xf]
    %v2400 = vld [vmem:[%s3 + $0x27c] sm:$0xff]
    %v2401 = vld [vmem:[%s3 + $0x284] sm:$0xf]
    %v2402 = vld [vmem:[%s3 + $0x288] sm:$0xff]
    %v2403 = vld [vmem:[%s3 + $0x290] sm:$0xf]
    %v2404 = vld [vmem:[%s3 + $0x294] sm:$0xff]
    %v2405 = vld [vmem:[%s3 + $0x29c] sm:$0xf]
    %v2406 = vld [vmem:[%s3 + $0x2a0] sm:$0xff]
    %v2407 = vld [vmem:[%s3 + $0x2a8] sm:$0xf]
    %v2408 = vld [vmem:[%s3 + $0x2ac] sm:$0xff]
    %v2409 = vld [vmem:[%s3 + $0x2b4] sm:$0xf]
    %v2410 = vld [vmem:[%s3 + $0x2b8] sm:$0xff]
    %v2411 = vld [vmem:[%s3 + $0x2c0] sm:$0xf]
    %v2412 = vld [vmem:[%s3 + $0x2c4] sm:$0xff]
    %v2413 = vld [vmem:[%s3 + $0x2cc] sm:$0xf]
    %v2534 = vunpack.c.l.b16 %v2294
    %v2535 = vunpack.c.h.b16 %v2294
    %v2536 = vunpack.c.l.b16 %v2295
    %v2537 = vunpack.c.l.b16 %v2296
    %v2538 = vunpack.c.h.b16 %v2296
    %v2539 = vunpack.c.l.b16 %v2297
    %v2540 = vunpack.c.l.b16 %v2298
    %v2541 = vunpack.c.h.b16 %v2298
    %v2542 = vunpack.c.l.b16 %v2299
    %v2543 = vunpack.c.l.b16 %v2300
    %v2544 = vunpack.c.h.b16 %v2300
    %v2545 = vunpack.c.l.b16 %v2301
    %v2546 = vunpack.c.l.b16 %v2302
    %v2547 = vunpack.c.h.b16 %v2302
    %v2548 = vunpack.c.l.b16 %v2303
    %v2549 = vunpack.c.l.b16 %v2304
    %v2550 = vunpack.c.h.b16 %v2304
    %v2551 = vunpack.c.l.b16 %v2305
    %v2552 = vunpack.c.l.b16 %v2306
    %v2553 = vunpack.c.h.b16 %v2306
    %v2554 = vunpack.c.l.b16 %v2307
    %v2555 = vunpack.c.l.b16 %v2308
    %v2556 = vunpack.c.h.b16 %v2308
    %v2557 = vunpack.c.l.b16 %v2309
    %v2558 = vunpack.c.l.b16 %v2310
    %v2559 = vunpack.c.h.b16 %v2310
    %v2560 = vunpack.c.l.b16 %v2311
    %v2561 = vunpack.c.l.b16 %v2312
    %v2562 = vunpack.c.h.b16 %v2312
    %v2563 = vunpack.c.l.b16 %v2313
    %v2564 = vunpack.c.l.b16 %v2314
    %v2565 = vunpack.c.h.b16 %v2314
    %v2566 = vunpack.c.l.b16 %v2315
    %v2567 = vunpack.c.l.b16 %v2316
    %v2568 = vunpack.c.h.b16 %v2316
    %v2569 = vunpack.c.l.b16 %v2317
    %v2570 = vunpack.c.l.b16 %v2318
    %v2571 = vunpack.c.h.b16 %v2318
    %v2572 = vunpack.c.l.b16 %v2319
    %v2573 = vunpack.c.l.b16 %v2320
    %v2574 = vunpack.c.h.b16 %v2320
    %v2575 = vunpack.c.l.b16 %v2321
    %v2576 = vunpack.c.l.b16 %v2322
    %v2577 = vunpack.c.h.b16 %v2322
    %v2578 = vunpack.c.l.b16 %v2323
    %v2579 = vunpack.c.l.b16 %v2324
    %v2580 = vunpack.c.h.b16 %v2324
    %v2581 = vunpack.c.l.b16 %v2325
    %v2582 = vunpack.c.l.b16 %v2326
    %v2583 = vunpack.c.h.b16 %v2326
    %v2584 = vunpack.c.l.b16 %v2327
    %v2585 = vunpack.c.l.b16 %v2328
    %v2586 = vunpack.c.h.b16 %v2328
    %v2587 = vunpack.c.l.b16 %v2329
    %v2588 = vunpack.c.l.b16 %v2330
    %v2589 = vunpack.c.h.b16 %v2330
    %v2590 = vunpack.c.l.b16 %v2331
    %v2591 = vunpack.c.l.b16 %v2332
    %v2592 = vunpack.c.h.b16 %v2332
    %v2593 = vunpack.c.l.b16 %v2333
    %v2594 = vunpack.c.l.b16 %v2334
    %v2595 = vunpack.c.h.b16 %v2334
    %v2596 = vunpack.c.l.b16 %v2335
    %v2597 = vunpack.c.l.b16 %v2336
    %v2598 = vunpack.c.h.b16 %v2336
    %v2599 = vunpack.c.l.b16 %v2337
    %v2600 = vunpack.c.l.b16 %v2338
    %v2601 = vunpack.c.h.b16 %v2338
    %v2602 = vunpack.c.l.b16 %v2339
    %v2603 = vunpack.c.l.b16 %v2340
    %v2604 = vunpack.c.h.b16 %v2340
    %v2605 = vunpack.c.l.b16 %v2341
    %v2606 = vunpack.c.l.b16 %v2342
    %v2607 = vunpack.c.h.b16 %v2342
    %v2608 = vunpack.c.l.b16 %v2343
    %v2609 = vunpack.c.l.b16 %v2344
    %v2610 = vunpack.c.h.b16 %v2344
    %v2611 = vunpack.c.l.b16 %v2345
    %v2612 = vunpack.c.l.b16 %v2346
    %v2613 = vunpack.c.h.b16 %v2346
    %v2614 = vunpack.c.l.b16 %v2347
    %v2615 = vunpack.c.l.b16 %v2348
    %v2616 = vunpack.c.h.b16 %v2348
    %v2617 = vunpack.c.l.b16 %v2349
    %v2618 = vunpack.c.l.b16 %v2350
    %v2619 = vunpack.c.h.b16 %v2350
    %v2620 = vunpack.c.l.b16 %v2351
    %v2621 = vunpack.c.l.b16 %v2352
    %v2622 = vunpack.c.h.b16 %v2352
    %v2623 = vunpack.c.l.b16 %v2353
    %v2624 = vunpack.c.l.b16 %v2354
    %v2625 = vunpack.c.h.b16 %v2354
    %v2626 = vunpack.c.l.b16 %v2355
    %v2627 = vunpack.c.l.b16 %v2356
    %v2628 = vunpack.c.h.b16 %v2356
    %v2629 = vunpack.c.l.b16 %v2357
    %v2630 = vunpack.c.l.b16 %v2358
    %v2631 = vunpack.c.h.b16 %v2358
    %v2632 = vunpack.c.l.b16 %v2359
    %v2633 = vunpack.c.l.b16 %v2360
    %v2634 = vunpack.c.h.b16 %v2360
    %v2635 = vunpack.c.l.b16 %v2361
    %v2636 = vunpack.c.l.b16 %v2362
    %v2637 = vunpack.c.h.b16 %v2362
    %v2638 = vunpack.c.l.b16 %v2363
    %v2639 = vunpack.c.l.b16 %v2364
    %v2640 = vunpack.c.h.b16 %v2364
    %v2641 = vunpack.c.l.b16 %v2365
    %v2642 = vunpack.c.l.b16 %v2366
    %v2643 = vunpack.c.h.b16 %v2366
    %v2644 = vunpack.c.l.b16 %v2367
    %v2645 = vunpack.c.l.b16 %v2368
    %v2646 = vunpack.c.h.b16 %v2368
    %v2647 = vunpack.c.l.b16 %v2369
    %v2648 = vunpack.c.l.b16 %v2370
    %v2649 = vunpack.c.h.b16 %v2370
    %v2650 = vunpack.c.l.b16 %v2371
    %v2651 = vunpack.c.l.b16 %v2372
    %v2652 = vunpack.c.h.b16 %v2372
    %v2653 = vunpack.c.l.b16 %v2373
    %v2654 = vunpack.c.l.b16 %v2374
    %v2655 = vunpack.c.h.b16 %v2374
    %v2656 = vunpack.c.l.b16 %v2375
    %v2657 = vunpack.c.l.b16 %v2376
    %v2658 = vunpack.c.h.b16 %v2376
    %v2659 = vunpack.c.l.b16 %v2377
    %v2660 = vunpack.c.l.b16 %v2378
    %v2661 = vunpack.c.h.b16 %v2378
    %v2662 = vunpack.c.l.b16 %v2379
    %v2663 = vunpack.c.l.b16 %v2380
    %v2664 = vunpack.c.h.b16 %v2380
    %v2665 = vunpack.c.l.b16 %v2381
    %v2666 = vunpack.c.l.b16 %v2382
    %v2667 = vunpack.c.h.b16 %v2382
    %v2668 = vunpack.c.l.b16 %v2383
    %v2669 = vunpack.c.l.b16 %v2384
    %v2670 = vunpack.c.h.b16 %v2384
    %v2671 = vunpack.c.l.b16 %v2385
    %v2672 = vunpack.c.l.b16 %v2386
    %v2673 = vunpack.c.h.b16 %v2386
    %v2674 = vunpack.c.l.b16 %v2387
    %v2675 = vunpack.c.l.b16 %v2388
    %v2676 = vunpack.c.h.b16 %v2388
    %v2677 = vunpack.c.l.b16 %v2389
    %v2678 = vunpack.c.l.b16 %v2390
    %v2679 = vunpack.c.h.b16 %v2390
    %v2680 = vunpack.c.l.b16 %v2391
    %v2681 = vunpack.c.l.b16 %v2392
    %v2682 = vunpack.c.h.b16 %v2392
    %v2683 = vunpack.c.l.b16 %v2393
    %v2684 = vunpack.c.l.b16 %v2394
    %v2685 = vunpack.c.h.b16 %v2394
    %v2686 = vunpack.c.l.b16 %v2395
    %v2687 = vunpack.c.l.b16 %v2396
    %v2688 = vunpack.c.h.b16 %v2396
    %v2689 = vunpack.c.l.b16 %v2397
    %v2690 = vunpack.c.l.b16 %v2398
    %v2691 = vunpack.c.h.b16 %v2398
    %v2692 = vunpack.c.l.b16 %v2399
    %v2693 = vunpack.c.l.b16 %v2400
    %v2694 = vunpack.c.h.b16 %v2400
    %v2695 = vunpack.c.l.b16 %v2401
    %v2696 = vunpack.c.l.b16 %v2402
    %v2697 = vunpack.c.h.b16 %v2402
    %v2698 = vunpack.c.l.b16 %v2403
    %v2699 = vunpack.c.l.b16 %v2404
    %v2700 = vunpack.c.h.b16 %v2404
    %v2701 = vunpack.c.l.b16 %v2405
    %v2702 = vunpack.c.l.b16 %v2406
    %v2703 = vunpack.c.h.b16 %v2406
    %v2704 = vunpack.c.l.b16 %v2407
    %v2705 = vunpack.c.l.b16 %v2408
    %v2706 = vunpack.c.h.b16 %v2408
    %v2707 = vunpack.c.l.b16 %v2409
    %v2708 = vunpack.c.l.b16 %v2410
    %v2709 = vunpack.c.h.b16 %v2410
    %v2710 = vunpack.c.l.b16 %v2411
    %v2711 = vunpack.c.l.b16 %v2412
    %v2712 = vunpack.c.h.b16 %v2412
    %v2713 = vunpack.c.l.b16 %v2413
    %v2714 = vpack.c.b16 %v2537, %v2534
    %v2715 = vpack.c.b16 %v2538, %v2535
    %v2716 = vpack.c.b16 %v2539, %v2536
    %v2717 = vpack.c.b16 %v2543, %v2540
    %v2718 = vpack.c.b16 %v2544, %v2541
    %v2719 = vpack.c.b16 %v2545, %v2542
    %v2720 = vpack.c.b16 %v2549, %v2546
    %v2721 = vpack.c.b16 %v2550, %v2547
    %v2722 = vpack.c.b16 %v2551, %v2548
    %v2723 = vpack.c.b16 %v2555, %v2552
    %v2724 = vpack.c.b16 %v2556, %v2553
    %v2725 = vpack.c.b16 %v2557, %v2554
    %v2726 = vpack.c.b16 %v2561, %v2558
    %v2727 = vpack.c.b16 %v2562, %v2559
    %v2728 = vpack.c.b16 %v2563, %v2560
    %v2729 = vpack.c.b16 %v2567, %v2564
    %v2730 = vpack.c.b16 %v2568, %v2565
    %v2731 = vpack.c.b16 %v2569, %v2566
    %v2732 = vpack.c.b16 %v2573, %v2570
    %v2733 = vpack.c.b16 %v2574, %v2571
    %v2734 = vpack.c.b16 %v2575, %v2572
    %v2735 = vpack.c.b16 %v2579, %v2576
    %v2736 = vpack.c.b16 %v2580, %v2577
    %v2737 = vpack.c.b16 %v2581, %v2578
    %v2738 = vpack.c.b16 %v2585, %v2582
    %v2739 = vpack.c.b16 %v2586, %v2583
    %v2740 = vpack.c.b16 %v2587, %v2584
    %v2741 = vpack.c.b16 %v2591, %v2588
    %v2742 = vpack.c.b16 %v2592, %v2589
    %v2743 = vpack.c.b16 %v2593, %v2590
    %v2744 = vpack.c.b16 %v2597, %v2594
    %v2745 = vpack.c.b16 %v2598, %v2595
    %v2746 = vpack.c.b16 %v2599, %v2596
    %v2747 = vpack.c.b16 %v2603, %v2600
    %v2748 = vpack.c.b16 %v2604, %v2601
    %v2749 = vpack.c.b16 %v2605, %v2602
    %v2750 = vpack.c.b16 %v2609, %v2606
    %v2751 = vpack.c.b16 %v2610, %v2607
    %v2752 = vpack.c.b16 %v2611, %v2608
    %v2753 = vpack.c.b16 %v2615, %v2612
    %v2754 = vpack.c.b16 %v2616, %v2613
    %v2755 = vpack.c.b16 %v2617, %v2614
    %v2756 = vpack.c.b16 %v2621, %v2618
    %v2757 = vpack.c.b16 %v2622, %v2619
    %v2758 = vpack.c.b16 %v2623, %v2620
    %v2759 = vpack.c.b16 %v2627, %v2624
    %v2760 = vpack.c.b16 %v2628, %v2625
    %v2761 = vpack.c.b16 %v2629, %v2626
    %v2762 = vpack.c.b16 %v2633, %v2630
    %v2763 = vpack.c.b16 %v2634, %v2631
    %v2764 = vpack.c.b16 %v2635, %v2632
    %v2765 = vpack.c.b16 %v2639, %v2636
    %v2766 = vpack.c.b16 %v2640, %v2637
    %v2767 = vpack.c.b16 %v2641, %v2638
    %v2768 = vpack.c.b16 %v2645, %v2642
    %v2769 = vpack.c.b16 %v2646, %v2643
    %v2770 = vpack.c.b16 %v2647, %v2644
    %v2771 = vpack.c.b16 %v2651, %v2648
    %v2772 = vpack.c.b16 %v2652, %v2649
    %v2773 = vpack.c.b16 %v2653, %v2650
    %v2774 = vpack.c.b16 %v2657, %v2654
    %v2775 = vpack.c.b16 %v2658, %v2655
    %v2776 = vpack.c.b16 %v2659, %v2656
    %v2777 = vpack.c.b16 %v2663, %v2660
    %v2778 = vpack.c.b16 %v2664, %v2661
    %v2779 = vpack.c.b16 %v2665, %v2662
    %v2780 = vpack.c.b16 %v2669, %v2666
    %v2781 = vpack.c.b16 %v2670, %v2667
    %v2782 = vpack.c.b16 %v2671, %v2668
    %v2783 = vpack.c.b16 %v2675, %v2672
    %v2784 = vpack.c.b16 %v2676, %v2673
    %v2785 = vpack.c.b16 %v2677, %v2674
    %v2786 = vpack.c.b16 %v2681, %v2678
    %v2787 = vpack.c.b16 %v2682, %v2679
    %v2788 = vpack.c.b16 %v2683, %v2680
    %v2789 = vpack.c.b16 %v2687, %v2684
    %v2790 = vpack.c.b16 %v2688, %v2685
    %v2791 = vpack.c.b16 %v2689, %v2686
    %v2792 = vpack.c.b16 %v2693, %v2690
    %v2793 = vpack.c.b16 %v2694, %v2691
    %v2794 = vpack.c.b16 %v2695, %v2692
    %v2795 = vpack.c.b16 %v2699, %v2696
    %v2796 = vpack.c.b16 %v2700, %v2697
    %v2797 = vpack.c.b16 %v2701, %v2698
    %v2798 = vpack.c.b16 %v2705, %v2702
    %v2799 = vpack.c.b16 %v2706, %v2703
    %v2800 = vpack.c.b16 %v2707, %v2704
    %v2801 = vpack.c.b16 %v2711, %v2708
    %v2802 = vpack.c.b16 %v2712, %v2709
    %v2803 = vpack.c.b16 %v2713, %v2710
    %v2895 = vsel %vm625, %v2257, 0
    %v2898 = vsel %vm625, %v2261, 0
    %v2901 = vsel %vm625, %v2265, 0
    %v2904 = vsel %vm625, %v2269, 0
    %v2907 = vsel %vm625, %v2273, 0
    %v2910 = vsel %vm625, %v2277, 0
    %v2913 = vsel %vm625, %v2281, 0
    %v2916 = vsel %vm625, %v2285, 0
    %v2919 = vsel %vm625, %v2289, 0
    %v2922 = vsel %vm625, %v2293, 0
    %2924 = vmatprep.subr.bf16.mxu0 %v2736
    %2925 = vmatpush1.bf16.msra.mxu0 %v2735
    %2926 = vmatprep.subr.bf16.mxu0 %v2733
    %2927 = vmatpush1.bf16.msra.mxu0 %v2732
    %2928 = vmatprep.subr.bf16.mxu0 %v2730
    %2929 = vmatpush1.bf16.msra.mxu0 %v2729
    %2930 = vmatprep.subr.bf16.mxu0 %v2727
    %2931 = vmatpush1.bf16.msra.mxu0 %v2726
    %2932 = vmatprep.subr.bf16.mxu0 %v2724
    %2933 = vmatpush1.bf16.msra.mxu0 %v2723
    %2934 = vmatprep.subr.bf16.mxu0 %v2721
    %2935 = vmatpush1.bf16.msra.mxu0 %v2720
    %2936 = vmatprep.subr.bf16.mxu0 %v2718
    %2937 = vmatpush1.bf16.msra.mxu0 %v2717
    %2938 = vmatprep.subr.bf16.mxu0 %v2715
    %2939 = vmatpush1.bf16.msra.mxu0 %v2714
    %2940 = vmatprep.subr.bf16.mxu0 %v2760
    %2941 = vmatpush2.bf16.msra.mxu0 %v2759
    %2942 = vmatprep.subr.bf16.mxu0 %v2757
    %2943 = vmatpush2.bf16.msra.mxu0 %v2756
    %2944 = vmatprep.subr.bf16.mxu0 %v2754
    %2945 = vmatpush2.bf16.msra.mxu0 %v2753
    %2946 = vmatprep.subr.bf16.mxu0 %v2751
    %2947 = vmatpush2.bf16.msra.mxu0 %v2750
    %2948 = vmatprep.subr.bf16.mxu0 %v2748
    %2949 = vmatpush2.bf16.msra.mxu0 %v2747
    %2950 = vmatprep.subr.bf16.mxu0 %v2745
    %2951 = vmatpush2.bf16.msra.mxu0 %v2744
    %2952 = vmatprep.subr.bf16.mxu0 %v2742
    %2953 = vmatpush2.bf16.msra.mxu0 %v2741
    %2954 = vmatprep.subr.bf16.mxu0 %v2739
    %2955 = vmatpush2.bf16.msra.mxu0 %v2738
    %2956 = vmatprep.mubr.bf16.mxu0 %v2255
    %2957 = vmatmul.mubr.bf16.gmra.mxu0 %v2254
    %v2958 = vpop.f32.mrf.mxu0
    %v2959 = vadd.f32 0.0, %v2958
    %v2960 = vpop.f32.mrf.mxu0
    %v2961 = vadd.f32 0.0, %v2960
    %v2962 = vpop.f32.mrf.mxu0
    %v2963 = vadd.f32 0.0, %v2962
    %v2964 = vpop.f32.mrf.mxu0
    %v2965 = vadd.f32 0.0, %v2964
    %2966 = vmatprep.mubr.bf16.mxu0 %v2259
    %2967 = vmatmul.mubr.bf16.gmra.mxu0 %v2258
    %v2968 = vpop.f32.mrf.mxu0
    %v2969 = vadd.f32 0.0, %v2968
    %v2970 = vpop.f32.mrf.mxu0
    %v2971 = vadd.f32 0.0, %v2970
    %v2972 = vpop.f32.mrf.mxu0
    %v2973 = vadd.f32 0.0, %v2972
    %v2974 = vpop.f32.mrf.mxu0
    %v2975 = vadd.f32 0.0, %v2974
    %2976 = vmatprep.mubr.bf16.mxu0 %v2263
    %2977 = vmatmul.mubr.bf16.gmra.mxu0 %v2262
    %v2978 = vpop.f32.mrf.mxu0
    %v2979 = vadd.f32 0.0, %v2978
    %v2980 = vpop.f32.mrf.mxu0
    %v2981 = vadd.f32 0.0, %v2980
    %v2982 = vpop.f32.mrf.mxu0
    %v2983 = vadd.f32 0.0, %v2982
    %v2984 = vpop.f32.mrf.mxu0
    %v2985 = vadd.f32 0.0, %v2984
    %2986 = vmatprep.mubr.bf16.mxu0 %v2267
    %2987 = vmatmul.mubr.bf16.gmra.mxu0 %v2266
    %v2988 = vpop.f32.mrf.mxu0
    %v2989 = vadd.f32 0.0, %v2988
    %v2990 = vpop.f32.mrf.mxu0
    %v2991 = vadd.f32 0.0, %v2990
    %v2992 = vpop.f32.mrf.mxu0
    %v2993 = vadd.f32 0.0, %v2992
    %v2994 = vpop.f32.mrf.mxu0
    %v2995 = vadd.f32 0.0, %v2994
    %2996 = vmatprep.mubr.bf16.mxu0 %v2271
    %2997 = vmatmul.mubr.bf16.gmra.mxu0 %v2270
    %v2998 = vpop.f32.mrf.mxu0
    %v2999 = vadd.f32 0.0, %v2998
    %v3000 = vpop.f32.mrf.mxu0
    %v3001 = vadd.f32 0.0, %v3000
    %v3002 = vpop.f32.mrf.mxu0
    %v3003 = vadd.f32 0.0, %v3002
    %v3004 = vpop.f32.mrf.mxu0
    %v3005 = vadd.f32 0.0, %v3004
    %3006 = vmatprep.mubr.bf16.mxu0 %v2275
    %3007 = vmatmul.mubr.bf16.gmra.mxu0 %v2274
    %v3008 = vpop.f32.mrf.mxu0
    %v3009 = vadd.f32 0.0, %v3008
    %v3010 = vpop.f32.mrf.mxu0
    %v3011 = vadd.f32 0.0, %v3010
    %v3012 = vpop.f32.mrf.mxu0
    %v3013 = vadd.f32 0.0, %v3012
    %v3014 = vpop.f32.mrf.mxu0
    %v3015 = vadd.f32 0.0, %v3014
    %3016 = vmatprep.mubr.bf16.mxu0 %v2279
    %3017 = vmatmul.mubr.bf16.gmra.mxu0 %v2278
    %v3018 = vpop.f32.mrf.mxu0
    %v3019 = vadd.f32 0.0, %v3018
    %v3020 = vpop.f32.mrf.mxu0
    %v3021 = vadd.f32 0.0, %v3020
    %v3022 = vpop.f32.mrf.mxu0
    %v3023 = vadd.f32 0.0, %v3022
    %v3024 = vpop.f32.mrf.mxu0
    %v3025 = vadd.f32 0.0, %v3024
    %3026 = vmatprep.mubr.bf16.mxu0 %v2283
    %3027 = vmatmul.mubr.bf16.gmra.mxu0 %v2282
    %v3028 = vpop.f32.mrf.mxu0
    %v3029 = vadd.f32 0.0, %v3028
    %v3030 = vpop.f32.mrf.mxu0
    %v3031 = vadd.f32 0.0, %v3030
    %v3032 = vpop.f32.mrf.mxu0
    %v3033 = vadd.f32 0.0, %v3032
    %v3034 = vpop.f32.mrf.mxu0
    %v3035 = vadd.f32 0.0, %v3034
    %3036 = vmatprep.mubr.bf16.mxu0 %v2287
    %3037 = vmatmul.mubr.bf16.gmra.mxu0 %v2286
    %v3038 = vpop.f32.mrf.mxu0
    %v3039 = vadd.f32 0.0, %v3038
    %v3040 = vpop.f32.mrf.mxu0
    %v3041 = vadd.f32 0.0, %v3040
    %v3042 = vpop.f32.mrf.mxu0
    %v3043 = vadd.f32 0.0, %v3042
    %v3044 = vpop.f32.mrf.mxu0
    %v3045 = vadd.f32 0.0, %v3044
    %3046 = vmatprep.mubr.bf16.mxu0 %v2291
    %3047 = vmatmul.mubr.bf16.gmra.mxu0 %v2290
    %v3048 = vpop.f32.mrf.mxu0
    %v3049 = vadd.f32 0.0, %v3048
    %v3050 = vpop.f32.mrf.mxu0
    %v3051 = vadd.f32 0.0, %v3050
    %v3052 = vpop.f32.mrf.mxu0
    %v3053 = vpop.f32.mrf.mxu0
    %3054 = vdwg.mxu0
    %3055 = vmatprep.subr.bf16.mxu0 %v2784
    %3056 = vmatpush1.bf16.msra.mxu0 %v2783
    %3057 = vmatprep.subr.bf16.mxu0 %v2781
    %3058 = vmatpush1.bf16.msra.mxu0 %v2780
    %3059 = vmatprep.subr.bf16.mxu0 %v2778
    %3060 = vmatpush1.bf16.msra.mxu0 %v2777
    %3061 = vmatprep.subr.bf16.mxu0 %v2775
    %3062 = vmatpush1.bf16.msra.mxu0 %v2774
    %3063 = vmatprep.subr.bf16.mxu0 %v2772
    %3064 = vmatpush1.bf16.msra.mxu0 %v2771
    %3065 = vmatprep.subr.bf16.mxu0 %v2769
    %3066 = vmatpush1.bf16.msra.mxu0 %v2768
    %3067 = vmatprep.subr.bf16.mxu0 %v2766
    %3068 = vmatpush1.bf16.msra.mxu0 %v2765
    %3069 = vmatprep.subr.bf16.mxu0 %v2763
    %3070 = vmatpush1.bf16.msra.mxu0 %v2762
    %3071 = vmatprep.subr.bf16.mxu0 0
    %3072 = vmatpush2.bf16.msra.mxu0 0
    %3073 = vmatprep.subr.bf16.mxu0 0
    %3074 = vmatpush2.bf16.msra.mxu0 0
    %3075 = vmatprep.subr.bf16.mxu0 %v2802
    %3076 = vmatpush2.bf16.msra.mxu0 %v2801
    %3077 = vmatprep.subr.bf16.mxu0 %v2799
    %3078 = vmatpush2.bf16.msra.mxu0 %v2798
    %3079 = vmatprep.subr.bf16.mxu0 %v2796
    %3080 = vmatpush2.bf16.msra.mxu0 %v2795
    %3081 = vmatprep.subr.bf16.mxu0 %v2793
    %3082 = vmatpush2.bf16.msra.mxu0 %v2792
    %3083 = vmatprep.subr.bf16.mxu0 %v2790
    %3084 = vmatpush2.bf16.msra.mxu0 %v2789
    %3085 = vmatprep.subr.bf16.mxu0 %v2787
    %3086 = vmatpush2.bf16.msra.mxu0 %v2786
    %3087 = vmatprep.mubr.bf16.mxu0 %v2895
    %3088 = vmatmul.mubr.bf16.gmra.mxu0 %v2256
    %v3089 = vpop.f32.mrf.mxu0
    %v3090 = vadd.f32 %v2959, %v3089
    %v3091 = vpop.f32.mrf.mxu0
    %v3092 = vadd.f32 %v2961, %v3091
    %v3093 = vpop.f32.mrf.mxu0
    %v3094 = vadd.f32 %v2963, %v3093
    %v3095 = vpop.f32.mrf.mxu0
    %v3096 = vadd.f32 %v2965, %v3095
    %3097 = vmatprep.mubr.bf16.mxu0 %v2898
    %3098 = vmatmul.mubr.bf16.gmra.mxu0 %v2260
    %v3099 = vpop.f32.mrf.mxu0
    %v3100 = vadd.f32 %v2969, %v3099
    %v3101 = vpop.f32.mrf.mxu0
    %v3102 = vadd.f32 %v2971, %v3101
    %v3103 = vpop.f32.mrf.mxu0
    %v3104 = vadd.f32 %v2973, %v3103
    %v3105 = vpop.f32.mrf.mxu0
    %v3106 = vadd.f32 %v2975, %v3105
    %3107 = vmatprep.mubr.bf16.mxu0 %v2901
    %3108 = vmatmul.mubr.bf16.gmra.mxu0 %v2264
    %v3109 = vpop.f32.mrf.mxu0
    %v3110 = vadd.f32 %v2979, %v3109
    %v3111 = vpop.f32.mrf.mxu0
    %v3112 = vadd.f32 %v2981, %v3111
    %v3113 = vpop.f32.mrf.mxu0
    %v3114 = vadd.f32 %v2983, %v3113
    %v3115 = vpop.f32.mrf.mxu0
    %v3116 = vadd.f32 %v2985, %v3115
    %3117 = vmatprep.mubr.bf16.mxu0 %v2904
    %3118 = vmatmul.mubr.bf16.gmra.mxu0 %v2268
    %v3119 = vpop.f32.mrf.mxu0
    %v3120 = vadd.f32 %v2989, %v3119
    %v3121 = vpop.f32.mrf.mxu0
    %v3122 = vadd.f32 %v2991, %v3121
    %v3123 = vpop.f32.mrf.mxu0
    %v3124 = vadd.f32 %v2993, %v3123
    %v3125 = vpop.f32.mrf.mxu0
    %v3126 = vadd.f32 %v2995, %v3125
    %3127 = vmatprep.mubr.bf16.mxu0 %v2907
    %3128 = vmatmul.mubr.bf16.gmra.mxu0 %v2272
    %v3129 = vpop.f32.mrf.mxu0
    %v3130 = vadd.f32 %v2999, %v3129
    %v3131 = vpop.f32.mrf.mxu0
    %v3132 = vadd.f32 %v3001, %v3131
    %v3133 = vpop.f32.mrf.mxu0
    %v3134 = vadd.f32 %v3003, %v3133
    %v3135 = vpop.f32.mrf.mxu0
    %v3136 = vadd.f32 %v3005, %v3135
    %3137 = vmatprep.mubr.bf16.mxu0 %v2910
    %3138 = vmatmul.mubr.bf16.gmra.mxu0 %v2276
    %v3139 = vpop.f32.mrf.mxu0
    %v3140 = vadd.f32 %v3009, %v3139
    %v3141 = vpop.f32.mrf.mxu0
    %v3142 = vadd.f32 %v3011, %v3141
    %v3143 = vpop.f32.mrf.mxu0
    %v3144 = vadd.f32 %v3013, %v3143
    %v3145 = vpop.f32.mrf.mxu0
    %v3146 = vadd.f32 %v3015, %v3145
    %3147 = vmatprep.mubr.bf16.mxu0 %v2913
    %3148 = vmatmul.mubr.bf16.gmra.mxu0 %v2280
    %v3149 = vpop.f32.mrf.mxu0
    %v3150 = vadd.f32 %v3019, %v3149
    %v3151 = vpop.f32.mrf.mxu0
    %v3152 = vadd.f32 %v3021, %v3151
    %v3153 = vpop.f32.mrf.mxu0
    %v3154 = vadd.f32 %v3023, %v3153
    %v3155 = vpop.f32.mrf.mxu0
    %v3156 = vadd.f32 %v3025, %v3155
    %3157 = vmatprep.mubr.bf16.mxu0 %v2916
    %3158 = vmatmul.mubr.bf16.gmra.mxu0 %v2284
    %v3159 = vpop.f32.mrf.mxu0
    %v3160 = vadd.f32 %v3029, %v3159
    %v3161 = vpop.f32.mrf.mxu0
    %v3162 = vadd.f32 %v3031, %v3161
    %v3163 = vpop.f32.mrf.mxu0
    %v3164 = vadd.f32 %v3033, %v3163
    %v3165 = vpop.f32.mrf.mxu0
    %v3166 = vadd.f32 %v3035, %v3165
    %3167 = vmatprep.mubr.bf16.mxu0 %v2919
    %3168 = vmatmul.mubr.bf16.gmra.mxu0 %v2288
    %v3169 = vpop.f32.mrf.mxu0
    %v3170 = vadd.f32 %v3039, %v3169
    %v3171 = vpop.f32.mrf.mxu0
    %v3172 = vadd.f32 %v3041, %v3171
    %v3173 = vpop.f32.mrf.mxu0
    %v3174 = vadd.f32 %v3043, %v3173
    %v3175 = vpop.f32.mrf.mxu0
    %v3176 = vadd.f32 %v3045, %v3175
    %3177 = vmatprep.mubr.bf16.mxu0 %v2922
    %3178 = vmatmul.mubr.bf16.gmra.mxu0 %v2292
    %v3179 = vpop.f32.mrf.mxu0
    %v3180 = vadd.f32 %v3049, %v3179
    %v3181 = vpop.f32.mrf.mxu0
    %v3182 = vadd.f32 %v3051, %v3181
    %v3183 = vpop.f32.mrf.mxu0
    %v3184 = vpop.f32.mrf.mxu0
    %3185 = vdwg.mxu0
    %3186 = vmatprep.subr.bf16.mxu0 0
    %3187 = vmatpush1.bf16.msra.mxu0 %v2737
    %3188 = vmatprep.subr.bf16.mxu0 0
    %3189 = vmatpush1.bf16.msra.mxu0 %v2734
    %3190 = vmatprep.subr.bf16.mxu0 0
    %3191 = vmatpush1.bf16.msra.mxu0 %v2731
    %3192 = vmatprep.subr.bf16.mxu0 0
    %3193 = vmatpush1.bf16.msra.mxu0 %v2728
    %3194 = vmatprep.subr.bf16.mxu0 0
    %3195 = vmatpush1.bf16.msra.mxu0 %v2725
    %3196 = vmatprep.subr.bf16.mxu0 0
    %3197 = vmatpush1.bf16.msra.mxu0 %v2722
    %3198 = vmatprep.subr.bf16.mxu0 0
    %3199 = vmatpush1.bf16.msra.mxu0 %v2719
    %3200 = vmatprep.subr.bf16.mxu0 0
    %3201 = vmatpush1.bf16.msra.mxu0 %v2716
    %3202 = vmatprep.subr.bf16.mxu0 0
    %3203 = vmatpush2.bf16.msra.mxu0 %v2761
    %3204 = vmatprep.subr.bf16.mxu0 0
    %3205 = vmatpush2.bf16.msra.mxu0 %v2758
    %3206 = vmatprep.subr.bf16.mxu0 0
    %3207 = vmatpush2.bf16.msra.mxu0 %v2755
    %3208 = vmatprep.subr.bf16.mxu0 0
    %3209 = vmatpush2.bf16.msra.mxu0 %v2752
    %3210 = vmatprep.subr.bf16.mxu0 0
    %3211 = vmatpush2.bf16.msra.mxu0 %v2749
    %3212 = vmatprep.subr.bf16.mxu0 0
    %3213 = vmatpush2.bf16.msra.mxu0 %v2746
    %3214 = vmatprep.subr.bf16.mxu0 0
    %3215 = vmatpush2.bf16.msra.mxu0 %v2743
    %3216 = vmatprep.subr.bf16.mxu0 0
    %3217 = vmatpush2.bf16.msra.mxu0 %v2740
    %3218 = vmatprep.mubr.bf16.mxu0 %v2255
    %3219 = vmatmul.mubr.bf16.gmra.mxu0 %v2254
    %v3220 = vpop.f32.mrf.mxu0
    %v3221 = vadd.f32 0.0, %v3220
    %v3222 = vpop.f32.mrf.mxu0
    %v3223 = vpop.f32.mrf.mxu0
    %v3224 = vadd.f32 0.0, %v3223
    %v3225 = vpop.f32.mrf.mxu0
    %3226 = vmatprep.mubr.bf16.mxu0 %v2259
    %3227 = vmatmul.mubr.bf16.gmra.mxu0 %v2258
    %v3228 = vpop.f32.mrf.mxu0
    %v3229 = vadd.f32 0.0, %v3228
    %v3230 = vpop.f32.mrf.mxu0
    %v3231 = vpop.f32.mrf.mxu0
    %v3232 = vadd.f32 0.0, %v3231
    %v3233 = vpop.f32.mrf.mxu0
    %3234 = vmatprep.mubr.bf16.mxu0 %v2263
    %3235 = vmatmul.mubr.bf16.gmra.mxu0 %v2262
    %v3236 = vpop.f32.mrf.mxu0
    %v3237 = vadd.f32 0.0, %v3236
    %v3238 = vpop.f32.mrf.mxu0
    %v3239 = vpop.f32.mrf.mxu0
    %v3240 = vadd.f32 0.0, %v3239
    %v3241 = vpop.f32.mrf.mxu0
    %3242 = vmatprep.mubr.bf16.mxu0 %v2267
    %3243 = vmatmul.mubr.bf16.gmra.mxu0 %v2266
    %v3244 = vpop.f32.mrf.mxu0
    %v3245 = vadd.f32 0.0, %v3244
    %v3246 = vpop.f32.mrf.mxu0
    %v3247 = vpop.f32.mrf.mxu0
    %v3248 = vadd.f32 0.0, %v3247
    %v3249 = vpop.f32.mrf.mxu0
    %3250 = vmatprep.mubr.bf16.mxu0 %v2271
    %3251 = vmatmul.mubr.bf16.gmra.mxu0 %v2270
    %v3252 = vpop.f32.mrf.mxu0
    %v3253 = vadd.f32 0.0, %v3252
    %v3254 = vpop.f32.mrf.mxu0
    %v3255 = vpop.f32.mrf.mxu0
    %v3256 = vadd.f32 0.0, %v3255
    %v3257 = vpop.f32.mrf.mxu0
    %3258 = vmatprep.mubr.bf16.mxu0 %v2275
    %3259 = vmatmul.mubr.bf16.gmra.mxu0 %v2274
    %v3260 = vpop.f32.mrf.mxu0
    %v3261 = vadd.f32 0.0, %v3260
    %v3262 = vpop.f32.mrf.mxu0
    %v3263 = vpop.f32.mrf.mxu0
    %v3264 = vadd.f32 0.0, %v3263
    %v3265 = vpop.f32.mrf.mxu0
    %3266 = vmatprep.mubr.bf16.mxu0 %v2279
    %3267 = vmatmul.mubr.bf16.gmra.mxu0 %v2278
    %v3268 = vpop.f32.mrf.mxu0
    %v3269 = vadd.f32 0.0, %v3268
    %v3270 = vpop.f32.mrf.mxu0
    %v3271 = vpop.f32.mrf.mxu0
    %v3272 = vadd.f32 0.0, %v3271
    %v3273 = vpop.f32.mrf.mxu0
    %3274 = vmatprep.mubr.bf16.mxu0 %v2283
    %3275 = vmatmul.mubr.bf16.gmra.mxu0 %v2282
    %v3276 = vpop.f32.mrf.mxu0
    %v3277 = vadd.f32 0.0, %v3276
    %v3278 = vpop.f32.mrf.mxu0
    %v3279 = vpop.f32.mrf.mxu0
    %v3280 = vadd.f32 0.0, %v3279
    %v3281 = vpop.f32.mrf.mxu0
    %3282 = vmatprep.mubr.bf16.mxu0 %v2287
    %3283 = vmatmul.mubr.bf16.gmra.mxu0 %v2286
    %v3284 = vpop.f32.mrf.mxu0
    %v3285 = vadd.f32 0.0, %v3284
    %v3286 = vpop.f32.mrf.mxu0
    %v3287 = vpop.f32.mrf.mxu0
    %v3288 = vadd.f32 0.0, %v3287
    %v3289 = vpop.f32.mrf.mxu0
    %3290 = vmatprep.mubr.bf16.mxu0 %v2291
    %3291 = vmatmul.mubr.bf16.gmra.mxu0 %v2290
    %v3292 = vpop.f32.mrf.mxu0
    %v3293 = vadd.f32 0.0, %v3292
    %v3294 = vpop.f32.mrf.mxu0
    %v3295 = vpop.f32.mrf.mxu0
    %v3296 = vpop.f32.mrf.mxu0
    %3297 = vdwg.mxu0
    %3298 = vmatprep.subr.bf16.mxu0 0
    %3299 = vmatpush1.bf16.msra.mxu0 %v2785
    %3300 = vmatprep.subr.bf16.mxu0 0
    %3301 = vmatpush1.bf16.msra.mxu0 %v2782
    %3302 = vmatprep.subr.bf16.mxu0 0
    %3303 = vmatpush1.bf16.msra.mxu0 %v2779
    %3304 = vmatprep.subr.bf16.mxu0 0
    %3305 = vmatpush1.bf16.msra.mxu0 %v2776
    %3306 = vmatprep.subr.bf16.mxu0 0
    %3307 = vmatpush1.bf16.msra.mxu0 %v2773
    %3308 = vmatprep.subr.bf16.mxu0 0
    %3309 = vmatpush1.bf16.msra.mxu0 %v2770
    %3310 = vmatprep.subr.bf16.mxu0 0
    %3311 = vmatpush1.bf16.msra.mxu0 %v2767
    %3312 = vmatprep.subr.bf16.mxu0 0
    %3313 = vmatpush1.bf16.msra.mxu0 %v2764
    %3314 = vmatprep.subr.bf16.mxu0 0
    %3315 = vmatpush2.bf16.msra.mxu0 0
    %3316 = vmatprep.subr.bf16.mxu0 0
    %3317 = vmatpush2.bf16.msra.mxu0 0
    %3318 = vmatprep.subr.bf16.mxu0 0
    %3319 = vmatpush2.bf16.msra.mxu0 %v2803
    %3320 = vmatprep.subr.bf16.mxu0 0
    %3321 = vmatpush2.bf16.msra.mxu0 %v2800
    %3322 = vmatprep.subr.bf16.mxu0 0
    %3323 = vmatpush2.bf16.msra.mxu0 %v2797
    %3324 = vmatprep.subr.bf16.mxu0 0
    %3325 = vmatpush2.bf16.msra.mxu0 %v2794
    %3326 = vmatprep.subr.bf16.mxu0 0
    %3327 = vmatpush2.bf16.msra.mxu0 %v2791
    %3328 = vmatprep.subr.bf16.mxu0 0
    %3329 = vmatpush2.bf16.msra.mxu0 %v2788
    %3330 = vmatprep.mubr.bf16.mxu0 %v2895
    %3331 = vmatmul.mubr.bf16.gmra.mxu0 %v2256
    %v3332 = vpop.f32.mrf.mxu0
    %v3333 = vadd.f32 %v3221, %v3332
    %v3334 = vpop.f32.mrf.mxu0
    %v3335 = vpop.f32.mrf.mxu0
    %v3336 = vadd.f32 %v3224, %v3335
    %v3337 = vpop.f32.mrf.mxu0
    %3338 = vmatprep.mubr.bf16.mxu0 %v2898
    %3339 = vmatmul.mubr.bf16.gmra.mxu0 %v2260
    %v3340 = vpop.f32.mrf.mxu0
    %v3341 = vadd.f32 %v3229, %v3340
    %v3342 = vpop.f32.mrf.mxu0
    %v3343 = vpop.f32.mrf.mxu0
    %v3344 = vadd.f32 %v3232, %v3343
    %v3345 = vpop.f32.mrf.mxu0
    %3346 = vmatprep.mubr.bf16.mxu0 %v2901
    %3347 = vmatmul.mubr.bf16.gmra.mxu0 %v2264
    %v3348 = vpop.f32.mrf.mxu0
    %v3349 = vadd.f32 %v3237, %v3348
    %v3350 = vpop.f32.mrf.mxu0
    %v3351 = vpop.f32.mrf.mxu0
    %v3352 = vadd.f32 %v3240, %v3351
    %v3353 = vpop.f32.mrf.mxu0
    %3354 = vmatprep.mubr.bf16.mxu0 %v2904
    %3355 = vmatmul.mubr.bf16.gmra.mxu0 %v2268
    %v3356 = vpop.f32.mrf.mxu0
    %v3357 = vadd.f32 %v3245, %v3356
    %v3358 = vpop.f32.mrf.mxu0
    %v3359 = vpop.f32.mrf.mxu0
    %v3360 = vadd.f32 %v3248, %v3359
    %v3361 = vpop.f32.mrf.mxu0
    %3362 = vmatprep.mubr.bf16.mxu0 %v2907
    %3363 = vmatmul.mubr.bf16.gmra.mxu0 %v2272
    %v3364 = vpop.f32.mrf.mxu0
    %v3365 = vadd.f32 %v3253, %v3364
    %v3366 = vpop.f32.mrf.mxu0
    %v3367 = vpop.f32.mrf.mxu0
    %v3368 = vadd.f32 %v3256, %v3367
    %v3369 = vpop.f32.mrf.mxu0
    %3370 = vmatprep.mubr.bf16.mxu0 %v2910
    %3371 = vmatmul.mubr.bf16.gmra.mxu0 %v2276
    %v3372 = vpop.f32.mrf.mxu0
    %v3373 = vadd.f32 %v3261, %v3372
    %v3374 = vpop.f32.mrf.mxu0
    %v3375 = vpop.f32.mrf.mxu0
    %v3376 = vadd.f32 %v3264, %v3375
    %v3377 = vpop.f32.mrf.mxu0
    %3378 = vmatprep.mubr.bf16.mxu0 %v2913
    %3379 = vmatmul.mubr.bf16.gmra.mxu0 %v2280
    %v3380 = vpop.f32.mrf.mxu0
    %v3381 = vadd.f32 %v3269, %v3380
    %v3382 = vpop.f32.mrf.mxu0
    %v3383 = vpop.f32.mrf.mxu0
    %v3384 = vadd.f32 %v3272, %v3383
    %v3385 = vpop.f32.mrf.mxu0
    %3386 = vmatprep.mubr.bf16.mxu0 %v2916
    %3387 = vmatmul.mubr.bf16.gmra.mxu0 %v2284
    %v3388 = vpop.f32.mrf.mxu0
    %v3389 = vadd.f32 %v3277, %v3388
    %v3390 = vpop.f32.mrf.mxu0
    %v3391 = vpop.f32.mrf.mxu0
    %v3392 = vadd.f32 %v3280, %v3391
    %v3393 = vpop.f32.mrf.mxu0
    %3394 = vmatprep.mubr.bf16.mxu0 %v2919
    %3395 = vmatmul.mubr.bf16.gmra.mxu0 %v2288
    %v3396 = vpop.f32.mrf.mxu0
    %v3397 = vadd.f32 %v3285, %v3396
    %v3398 = vpop.f32.mrf.mxu0
    %v3399 = vpop.f32.mrf.mxu0
    %v3400 = vadd.f32 %v3288, %v3399
    %v3401 = vpop.f32.mrf.mxu0
    %3402 = vmatprep.mubr.bf16.mxu0 %v2922
    %3403 = vmatmul.mubr.bf16.gmra.mxu0 %v2292
    %v3404 = vpop.f32.mrf.mxu0
    %v3405 = vadd.f32 %v3293, %v3404
    %v3406 = vpop.f32.mrf.mxu0
    %v3407 = vpop.f32.mrf.mxu0
    %v3408 = vpop.f32.mrf.mxu0
    %3409 = vdwg.mxu0
    %s3410 = scalar_lea.vmem %s3, 720
    %v3411 = vld [vmem:[%s3410] sm:$0xff]
    %v3412 = vld [vmem:[%s3410 + $0x8] sm:$0xf]
    %v3413 = vld [vmem:[%s3410 + $0xc] sm:$0xff]
    %v3414 = vld [vmem:[%s3410 + $0x14] sm:$0xf]
    %v3415 = vld [vmem:[%s3410 + $0x18] sm:$0xff]
    %v3416 = vld [vmem:[%s3410 + $0x20] sm:$0xf]
    %v3417 = vld [vmem:[%s3410 + $0x24] sm:$0xff]
    %v3418 = vld [vmem:[%s3410 + $0x2c] sm:$0xf]
    %v3419 = vld [vmem:[%s3410 + $0x30] sm:$0xff]
    %v3420 = vld [vmem:[%s3410 + $0x38] sm:$0xf]
    %v3421 = vld [vmem:[%s3410 + $0x3c] sm:$0xff]
    %v3422 = vld [vmem:[%s3410 + $0x44] sm:$0xf]
    %v3423 = vld [vmem:[%s3410 + $0x48] sm:$0xff]
    %v3424 = vld [vmem:[%s3410 + $0x50] sm:$0xf]
    %v3425 = vld [vmem:[%s3410 + $0x54] sm:$0xff]
    %v3426 = vld [vmem:[%s3410 + $0x5c] sm:$0xf]
    %v3427 = vld [vmem:[%s3410 + $0x60] sm:$0xff]
    %v3428 = vld [vmem:[%s3410 + $0x68] sm:$0xf]
    %v3429 = vld [vmem:[%s3410 + $0x6c] sm:$0xff]
    %v3430 = vld [vmem:[%s3410 + $0x74] sm:$0xf]
    %v3431 = vld [vmem:[%s3410 + $0x78] sm:$0xff]
    %v3432 = vld [vmem:[%s3410 + $0x80] sm:$0xf]
    %v3433 = vld [vmem:[%s3410 + $0x84] sm:$0xff]
    %v3434 = vld [vmem:[%s3410 + $0x8c] sm:$0xf]
    %v3435 = vld [vmem:[%s3410 + $0x90] sm:$0xff]
    %v3436 = vld [vmem:[%s3410 + $0x98] sm:$0xf]
    %v3437 = vld [vmem:[%s3410 + $0x9c] sm:$0xff]
    %v3438 = vld [vmem:[%s3410 + $0xa4] sm:$0xf]
    %v3439 = vld [vmem:[%s3410 + $0xa8] sm:$0xff]
    %v3440 = vld [vmem:[%s3410 + $0xb0] sm:$0xf]
    %v3441 = vld [vmem:[%s3410 + $0xb4] sm:$0xff]
    %v3442 = vld [vmem:[%s3410 + $0xbc] sm:$0xf]
    %v3443 = vld [vmem:[%s3410 + $0xc0] sm:$0xff]
    %v3444 = vld [vmem:[%s3410 + $0xc8] sm:$0xf]
    %v3445 = vld [vmem:[%s3410 + $0xcc] sm:$0xff]
    %v3446 = vld [vmem:[%s3410 + $0xd4] sm:$0xf]
    %v3447 = vld [vmem:[%s3410 + $0xd8] sm:$0xff]
    %v3448 = vld [vmem:[%s3410 + $0xe0] sm:$0xf]
    %v3449 = vld [vmem:[%s3410 + $0xe4] sm:$0xff]
    %v3450 = vld [vmem:[%s3410 + $0xec] sm:$0xf]
    %v3451 = vld [vmem:[%s3410 + $0xf0] sm:$0xff]
    %v3452 = vld [vmem:[%s3410 + $0xf8] sm:$0xf]
    %v3453 = vld [vmem:[%s3410 + $0xfc] sm:$0xff]
    %v3454 = vld [vmem:[%s3410 + $0x104] sm:$0xf]
    %v3455 = vld [vmem:[%s3410 + $0x108] sm:$0xff]
    %v3456 = vld [vmem:[%s3410 + $0x110] sm:$0xf]
    %v3457 = vld [vmem:[%s3410 + $0x114] sm:$0xff]
    %v3458 = vld [vmem:[%s3410 + $0x11c] sm:$0xf]
    %v3459 = vld [vmem:[%s3410 + $0x120] sm:$0xff]
    %v3460 = vld [vmem:[%s3410 + $0x128] sm:$0xf]
    %v3461 = vld [vmem:[%s3410 + $0x12c] sm:$0xff]
    %v3462 = vld [vmem:[%s3410 + $0x134] sm:$0xf]
    %v3463 = vld [vmem:[%s3410 + $0x138] sm:$0xff]
    %v3464 = vld [vmem:[%s3410 + $0x140] sm:$0xf]
    %v3465 = vld [vmem:[%s3410 + $0x144] sm:$0xff]
    %v3466 = vld [vmem:[%s3410 + $0x14c] sm:$0xf]
    %v3467 = vld [vmem:[%s3410 + $0x150] sm:$0xff]
    %v3468 = vld [vmem:[%s3410 + $0x158] sm:$0xf]
    %v3469 = vld [vmem:[%s3410 + $0x15c] sm:$0xff]
    %v3470 = vld [vmem:[%s3410 + $0x164] sm:$0xf]
    %v3471 = vld [vmem:[%s3410 + $0x168] sm:$0xff]
    %v3472 = vld [vmem:[%s3410 + $0x170] sm:$0xf]
    %v3473 = vld [vmem:[%s3410 + $0x174] sm:$0xff]
    %v3474 = vld [vmem:[%s3410 + $0x17c] sm:$0xf]
    %v3475 = vld [vmem:[%s3410 + $0x180] sm:$0xff]
    %v3476 = vld [vmem:[%s3410 + $0x188] sm:$0xf]
    %v3477 = vld [vmem:[%s3410 + $0x18c] sm:$0xff]
    %v3478 = vld [vmem:[%s3410 + $0x194] sm:$0xf]
    %v3479 = vld [vmem:[%s3410 + $0x198] sm:$0xff]
    %v3480 = vld [vmem:[%s3410 + $0x1a0] sm:$0xf]
    %v3481 = vld [vmem:[%s3410 + $0x1a4] sm:$0xff]
    %v3482 = vld [vmem:[%s3410 + $0x1ac] sm:$0xf]
    %v3483 = vld [vmem:[%s3410 + $0x1b0] sm:$0xff]
    %v3484 = vld [vmem:[%s3410 + $0x1b8] sm:$0xf]
    %v3485 = vld [vmem:[%s3410 + $0x1bc] sm:$0xff]
    %v3486 = vld [vmem:[%s3410 + $0x1c4] sm:$0xf]
    %v3487 = vld [vmem:[%s3410 + $0x1c8] sm:$0xff]
    %v3488 = vld [vmem:[%s3410 + $0x1d0] sm:$0xf]
    %v3489 = vld [vmem:[%s3410 + $0x1d4] sm:$0xff]
    %v3490 = vld [vmem:[%s3410 + $0x1dc] sm:$0xf]
    %v3491 = vld [vmem:[%s3410 + $0x1e0] sm:$0xff]
    %v3492 = vld [vmem:[%s3410 + $0x1e8] sm:$0xf]
    %v3493 = vld [vmem:[%s3410 + $0x1ec] sm:$0xff]
    %v3494 = vld [vmem:[%s3410 + $0x1f4] sm:$0xf]
    %v3495 = vld [vmem:[%s3410 + $0x1f8] sm:$0xff]
    %v3496 = vld [vmem:[%s3410 + $0x200] sm:$0xf]
    %v3497 = vld [vmem:[%s3410 + $0x204] sm:$0xff]
    %v3498 = vld [vmem:[%s3410 + $0x20c] sm:$0xf]
    %v3499 = vld [vmem:[%s3410 + $0x210] sm:$0xff]
    %v3500 = vld [vmem:[%s3410 + $0x218] sm:$0xf]
    %v3501 = vld [vmem:[%s3410 + $0x21c] sm:$0xff]
    %v3502 = vld [vmem:[%s3410 + $0x224] sm:$0xf]
    %v3503 = vld [vmem:[%s3410 + $0x228] sm:$0xff]
    %v3504 = vld [vmem:[%s3410 + $0x230] sm:$0xf]
    %v3505 = vld [vmem:[%s3410 + $0x234] sm:$0xff]
    %v3506 = vld [vmem:[%s3410 + $0x23c] sm:$0xf]
    %v3507 = vld [vmem:[%s3410 + $0x240] sm:$0xff]
    %v3508 = vld [vmem:[%s3410 + $0x248] sm:$0xf]
    %v3509 = vld [vmem:[%s3410 + $0x24c] sm:$0xff]
    %v3510 = vld [vmem:[%s3410 + $0x254] sm:$0xf]
    %v3511 = vld [vmem:[%s3410 + $0x258] sm:$0xff]
    %v3512 = vld [vmem:[%s3410 + $0x260] sm:$0xf]
    %v3513 = vld [vmem:[%s3410 + $0x264] sm:$0xff]
    %v3514 = vld [vmem:[%s3410 + $0x26c] sm:$0xf]
    %v3515 = vld [vmem:[%s3410 + $0x270] sm:$0xff]
    %v3516 = vld [vmem:[%s3410 + $0x278] sm:$0xf]
    %v3517 = vld [vmem:[%s3410 + $0x27c] sm:$0xff]
    %v3518 = vld [vmem:[%s3410 + $0x284] sm:$0xf]
    %v3519 = vld [vmem:[%s3410 + $0x288] sm:$0xff]
    %v3520 = vld [vmem:[%s3410 + $0x290] sm:$0xf]
    %v3521 = vld [vmem:[%s3410 + $0x294] sm:$0xff]
    %v3522 = vld [vmem:[%s3410 + $0x29c] sm:$0xf]
    %v3523 = vld [vmem:[%s3410 + $0x2a0] sm:$0xff]
    %v3524 = vld [vmem:[%s3410 + $0x2a8] sm:$0xf]
    %v3525 = vld [vmem:[%s3410 + $0x2ac] sm:$0xff]
    %v3526 = vld [vmem:[%s3410 + $0x2b4] sm:$0xf]
    %v3527 = vld [vmem:[%s3410 + $0x2b8] sm:$0xff]
    %v3528 = vld [vmem:[%s3410 + $0x2c0] sm:$0xf]
    %v3529 = vld [vmem:[%s3410 + $0x2c4] sm:$0xff]
    %v3530 = vld [vmem:[%s3410 + $0x2cc] sm:$0xf]
    %v3651 = vunpack.c.l.b16 %v3411
    %v3652 = vunpack.c.h.b16 %v3411
    %v3653 = vunpack.c.l.b16 %v3412
    %v3654 = vunpack.c.l.b16 %v3413
    %v3655 = vunpack.c.h.b16 %v3413
    %v3656 = vunpack.c.l.b16 %v3414
    %v3657 = vunpack.c.l.b16 %v3415
    %v3658 = vunpack.c.h.b16 %v3415
    %v3659 = vunpack.c.l.b16 %v3416
    %v3660 = vunpack.c.l.b16 %v3417
    %v3661 = vunpack.c.h.b16 %v3417
    %v3662 = vunpack.c.l.b16 %v3418
    %v3663 = vunpack.c.l.b16 %v3419
    %v3664 = vunpack.c.h.b16 %v3419
    %v3665 = vunpack.c.l.b16 %v3420
    %v3666 = vunpack.c.l.b16 %v3421
    %v3667 = vunpack.c.h.b16 %v3421
    %v3668 = vunpack.c.l.b16 %v3422
    %v3669 = vunpack.c.l.b16 %v3423
    %v3670 = vunpack.c.h.b16 %v3423
    %v3671 = vunpack.c.l.b16 %v3424
    %v3672 = vunpack.c.l.b16 %v3425
    %v3673 = vunpack.c.h.b16 %v3425
    %v3674 = vunpack.c.l.b16 %v3426
    %v3675 = vunpack.c.l.b16 %v3427
    %v3676 = vunpack.c.h.b16 %v3427
    %v3677 = vunpack.c.l.b16 %v3428
    %v3678 = vunpack.c.l.b16 %v3429
    %v3679 = vunpack.c.h.b16 %v3429
    %v3680 = vunpack.c.l.b16 %v3430
    %v3681 = vunpack.c.l.b16 %v3431
    %v3682 = vunpack.c.h.b16 %v3431
    %v3683 = vunpack.c.l.b16 %v3432
    %v3684 = vunpack.c.l.b16 %v3433
    %v3685 = vunpack.c.h.b16 %v3433
    %v3686 = vunpack.c.l.b16 %v3434
    %v3687 = vunpack.c.l.b16 %v3435
    %v3688 = vunpack.c.h.b16 %v3435
    %v3689 = vunpack.c.l.b16 %v3436
    %v3690 = vunpack.c.l.b16 %v3437
    %v3691 = vunpack.c.h.b16 %v3437
    %v3692 = vunpack.c.l.b16 %v3438
    %v3693 = vunpack.c.l.b16 %v3439
    %v3694 = vunpack.c.h.b16 %v3439
    %v3695 = vunpack.c.l.b16 %v3440
    %v3696 = vunpack.c.l.b16 %v3441
    %v3697 = vunpack.c.h.b16 %v3441
    %v3698 = vunpack.c.l.b16 %v3442
    %v3699 = vunpack.c.l.b16 %v3443
    %v3700 = vunpack.c.h.b16 %v3443
    %v3701 = vunpack.c.l.b16 %v3444
    %v3702 = vunpack.c.l.b16 %v3445
    %v3703 = vunpack.c.h.b16 %v3445
    %v3704 = vunpack.c.l.b16 %v3446
    %v3705 = vunpack.c.l.b16 %v3447
    %v3706 = vunpack.c.h.b16 %v3447
    %v3707 = vunpack.c.l.b16 %v3448
    %v3708 = vunpack.c.l.b16 %v3449
    %v3709 = vunpack.c.h.b16 %v3449
    %v3710 = vunpack.c.l.b16 %v3450
    %v3711 = vunpack.c.l.b16 %v3451
    %v3712 = vunpack.c.h.b16 %v3451
    %v3713 = vunpack.c.l.b16 %v3452
    %v3714 = vunpack.c.l.b16 %v3453
    %v3715 = vunpack.c.h.b16 %v3453
    %v3716 = vunpack.c.l.b16 %v3454
    %v3717 = vunpack.c.l.b16 %v3455
    %v3718 = vunpack.c.h.b16 %v3455
    %v3719 = vunpack.c.l.b16 %v3456
    %v3720 = vunpack.c.l.b16 %v3457
    %v3721 = vunpack.c.h.b16 %v3457
    %v3722 = vunpack.c.l.b16 %v3458
    %v3723 = vunpack.c.l.b16 %v3459
    %v3724 = vunpack.c.h.b16 %v3459
    %v3725 = vunpack.c.l.b16 %v3460
    %v3726 = vunpack.c.l.b16 %v3461
    %v3727 = vunpack.c.h.b16 %v3461
    %v3728 = vunpack.c.l.b16 %v3462
    %v3729 = vunpack.c.l.b16 %v3463
    %v3730 = vunpack.c.h.b16 %v3463
    %v3731 = vunpack.c.l.b16 %v3464
    %v3732 = vunpack.c.l.b16 %v3465
    %v3733 = vunpack.c.h.b16 %v3465
    %v3734 = vunpack.c.l.b16 %v3466
    %v3735 = vunpack.c.l.b16 %v3467
    %v3736 = vunpack.c.h.b16 %v3467
    %v3737 = vunpack.c.l.b16 %v3468
    %v3738 = vunpack.c.l.b16 %v3469
    %v3739 = vunpack.c.h.b16 %v3469
    %v3740 = vunpack.c.l.b16 %v3470
    %v3741 = vunpack.c.l.b16 %v3471
    %v3742 = vunpack.c.h.b16 %v3471
    %v3743 = vunpack.c.l.b16 %v3472
    %v3744 = vunpack.c.l.b16 %v3473
    %v3745 = vunpack.c.h.b16 %v3473
    %v3746 = vunpack.c.l.b16 %v3474
    %v3747 = vunpack.c.l.b16 %v3475
    %v3748 = vunpack.c.h.b16 %v3475
    %v3749 = vunpack.c.l.b16 %v3476
    %v3750 = vunpack.c.l.b16 %v3477
    %v3751 = vunpack.c.h.b16 %v3477
    %v3752 = vunpack.c.l.b16 %v3478
    %v3753 = vunpack.c.l.b16 %v3479
    %v3754 = vunpack.c.h.b16 %v3479
    %v3755 = vunpack.c.l.b16 %v3480
    %v3756 = vunpack.c.l.b16 %v3481
    %v3757 = vunpack.c.h.b16 %v3481
    %v3758 = vunpack.c.l.b16 %v3482
    %v3759 = vunpack.c.l.b16 %v3483
    %v3760 = vunpack.c.h.b16 %v3483
    %v3761 = vunpack.c.l.b16 %v3484
    %v3762 = vunpack.c.l.b16 %v3485
    %v3763 = vunpack.c.h.b16 %v3485
    %v3764 = vunpack.c.l.b16 %v3486
    %v3765 = vunpack.c.l.b16 %v3487
    %v3766 = vunpack.c.h.b16 %v3487
    %v3767 = vunpack.c.l.b16 %v3488
    %v3768 = vunpack.c.l.b16 %v3489
    %v3769 = vunpack.c.h.b16 %v3489
    %v3770 = vunpack.c.l.b16 %v3490
    %v3771 = vunpack.c.l.b16 %v3491
    %v3772 = vunpack.c.h.b16 %v3491
    %v3773 = vunpack.c.l.b16 %v3492
    %v3774 = vunpack.c.l.b16 %v3493
    %v3775 = vunpack.c.h.b16 %v3493
    %v3776 = vunpack.c.l.b16 %v3494
    %v3777 = vunpack.c.l.b16 %v3495
    %v3778 = vunpack.c.h.b16 %v3495
    %v3779 = vunpack.c.l.b16 %v3496
    %v3780 = vunpack.c.l.b16 %v3497
    %v3781 = vunpack.c.h.b16 %v3497
    %v3782 = vunpack.c.l.b16 %v3498
    %v3783 = vunpack.c.l.b16 %v3499
    %v3784 = vunpack.c.h.b16 %v3499
    %v3785 = vunpack.c.l.b16 %v3500
    %v3786 = vunpack.c.l.b16 %v3501
    %v3787 = vunpack.c.h.b16 %v3501
    %v3788 = vunpack.c.l.b16 %v3502
    %v3789 = vunpack.c.l.b16 %v3503
    %v3790 = vunpack.c.h.b16 %v3503
    %v3791 = vunpack.c.l.b16 %v3504
    %v3792 = vunpack.c.l.b16 %v3505
    %v3793 = vunpack.c.h.b16 %v3505
    %v3794 = vunpack.c.l.b16 %v3506
    %v3795 = vunpack.c.l.b16 %v3507
    %v3796 = vunpack.c.h.b16 %v3507
    %v3797 = vunpack.c.l.b16 %v3508
    %v3798 = vunpack.c.l.b16 %v3509
    %v3799 = vunpack.c.h.b16 %v3509
    %v3800 = vunpack.c.l.b16 %v3510
    %v3801 = vunpack.c.l.b16 %v3511
    %v3802 = vunpack.c.h.b16 %v3511
    %v3803 = vunpack.c.l.b16 %v3512
    %v3804 = vunpack.c.l.b16 %v3513
    %v3805 = vunpack.c.h.b16 %v3513
    %v3806 = vunpack.c.l.b16 %v3514
    %v3807 = vunpack.c.l.b16 %v3515
    %v3808 = vunpack.c.h.b16 %v3515
    %v3809 = vunpack.c.l.b16 %v3516
    %v3810 = vunpack.c.l.b16 %v3517
    %v3811 = vunpack.c.h.b16 %v3517
    %v3812 = vunpack.c.l.b16 %v3518
    %v3813 = vunpack.c.l.b16 %v3519
    %v3814 = vunpack.c.h.b16 %v3519
    %v3815 = vunpack.c.l.b16 %v3520
    %v3816 = vunpack.c.l.b16 %v3521
    %v3817 = vunpack.c.h.b16 %v3521
    %v3818 = vunpack.c.l.b16 %v3522
    %v3819 = vunpack.c.l.b16 %v3523
    %v3820 = vunpack.c.h.b16 %v3523
    %v3821 = vunpack.c.l.b16 %v3524
    %v3822 = vunpack.c.l.b16 %v3525
    %v3823 = vunpack.c.h.b16 %v3525
    %v3824 = vunpack.c.l.b16 %v3526
    %v3825 = vunpack.c.l.b16 %v3527
    %v3826 = vunpack.c.h.b16 %v3527
    %v3827 = vunpack.c.l.b16 %v3528
    %v3828 = vunpack.c.l.b16 %v3529
    %v3829 = vunpack.c.h.b16 %v3529
    %v3830 = vunpack.c.l.b16 %v3530
    %v3831 = vpack.c.b16 %v3654, %v3651
    %v3832 = vpack.c.b16 %v3655, %v3652
    %v3833 = vpack.c.b16 %v3656, %v3653
    %v3834 = vpack.c.b16 %v3660, %v3657
    %v3835 = vpack.c.b16 %v3661, %v3658
    %v3836 = vpack.c.b16 %v3662, %v3659
    %v3837 = vpack.c.b16 %v3666, %v3663
    %v3838 = vpack.c.b16 %v3667, %v3664
    %v3839 = vpack.c.b16 %v3668, %v3665
    %v3840 = vpack.c.b16 %v3672, %v3669
    %v3841 = vpack.c.b16 %v3673, %v3670
    %v3842 = vpack.c.b16 %v3674, %v3671
    %v3843 = vpack.c.b16 %v3678, %v3675
    %v3844 = vpack.c.b16 %v3679, %v3676
    %v3845 = vpack.c.b16 %v3680, %v3677
    %v3846 = vpack.c.b16 %v3684, %v3681
    %v3847 = vpack.c.b16 %v3685, %v3682
    %v3848 = vpack.c.b16 %v3686, %v3683
    %v3849 = vpack.c.b16 %v3690, %v3687
    %v3850 = vpack.c.b16 %v3691, %v3688
    %v3851 = vpack.c.b16 %v3692, %v3689
    %v3852 = vpack.c.b16 %v3696, %v3693
    %v3853 = vpack.c.b16 %v3697, %v3694
    %v3854 = vpack.c.b16 %v3698, %v3695
    %v3855 = vpack.c.b16 %v3702, %v3699
    %v3856 = vpack.c.b16 %v3703, %v3700
    %v3857 = vpack.c.b16 %v3704, %v3701
    %v3858 = vpack.c.b16 %v3708, %v3705
    %v3859 = vpack.c.b16 %v3709, %v3706
    %v3860 = vpack.c.b16 %v3710, %v3707
    %v3861 = vpack.c.b16 %v3714, %v3711
    %v3862 = vpack.c.b16 %v3715, %v3712
    %v3863 = vpack.c.b16 %v3716, %v3713
    %v3864 = vpack.c.b16 %v3720, %v3717
    %v3865 = vpack.c.b16 %v3721, %v3718
    %v3866 = vpack.c.b16 %v3722, %v3719
    %v3867 = vpack.c.b16 %v3726, %v3723
    %v3868 = vpack.c.b16 %v3727, %v3724
    %v3869 = vpack.c.b16 %v3728, %v3725
    %v3870 = vpack.c.b16 %v3732, %v3729
    %v3871 = vpack.c.b16 %v3733, %v3730
    %v3872 = vpack.c.b16 %v3734, %v3731
    %v3873 = vpack.c.b16 %v3738, %v3735
    %v3874 = vpack.c.b16 %v3739, %v3736
    %v3875 = vpack.c.b16 %v3740, %v3737
    %v3876 = vpack.c.b16 %v3744, %v3741
    %v3877 = vpack.c.b16 %v3745, %v3742
    %v3878 = vpack.c.b16 %v3746, %v3743
    %v3879 = vpack.c.b16 %v3750, %v3747
    %v3880 = vpack.c.b16 %v3751, %v3748
    %v3881 = vpack.c.b16 %v3752, %v3749
    %v3882 = vpack.c.b16 %v3756, %v3753
    %v3883 = vpack.c.b16 %v3757, %v3754
    %v3884 = vpack.c.b16 %v3758, %v3755
    %v3885 = vpack.c.b16 %v3762, %v3759
    %v3886 = vpack.c.b16 %v3763, %v3760
    %v3887 = vpack.c.b16 %v3764, %v3761
    %v3888 = vpack.c.b16 %v3768, %v3765
    %v3889 = vpack.c.b16 %v3769, %v3766
    %v3890 = vpack.c.b16 %v3770, %v3767
    %v3891 = vpack.c.b16 %v3774, %v3771
    %v3892 = vpack.c.b16 %v3775, %v3772
    %v3893 = vpack.c.b16 %v3776, %v3773
    %v3894 = vpack.c.b16 %v3780, %v3777
    %v3895 = vpack.c.b16 %v3781, %v3778
    %v3896 = vpack.c.b16 %v3782, %v3779
    %v3897 = vpack.c.b16 %v3786, %v3783
    %v3898 = vpack.c.b16 %v3787, %v3784
    %v3899 = vpack.c.b16 %v3788, %v3785
    %v3900 = vpack.c.b16 %v3792, %v3789
    %v3901 = vpack.c.b16 %v3793, %v3790
    %v3902 = vpack.c.b16 %v3794, %v3791
    %v3903 = vpack.c.b16 %v3798, %v3795
    %v3904 = vpack.c.b16 %v3799, %v3796
    %v3905 = vpack.c.b16 %v3800, %v3797
    %v3906 = vpack.c.b16 %v3804, %v3801
    %v3907 = vpack.c.b16 %v3805, %v3802
    %v3908 = vpack.c.b16 %v3806, %v3803
    %v3909 = vpack.c.b16 %v3810, %v3807
    %v3910 = vpack.c.b16 %v3811, %v3808
    %v3911 = vpack.c.b16 %v3812, %v3809
    %v3912 = vpack.c.b16 %v3816, %v3813
    %v3913 = vpack.c.b16 %v3817, %v3814
    %v3914 = vpack.c.b16 %v3818, %v3815
    %v3915 = vpack.c.b16 %v3822, %v3819
    %v3916 = vpack.c.b16 %v3823, %v3820
    %v3917 = vpack.c.b16 %v3824, %v3821
    %v3918 = vpack.c.b16 %v3828, %v3825
    %v3919 = vpack.c.b16 %v3829, %v3826
    %v3920 = vpack.c.b16 %v3830, %v3827
    %4011 = vmatprep.subr.bf16.mxu0 %v3853
    %4012 = vmatpush1.bf16.msra.mxu0 %v3852
    %4013 = vmatprep.subr.bf16.mxu0 %v3850
    %4014 = vmatpush1.bf16.msra.mxu0 %v3849
    %4015 = vmatprep.subr.bf16.mxu0 %v3847
    %4016 = vmatpush1.bf16.msra.mxu0 %v3846
    %4017 = vmatprep.subr.bf16.mxu0 %v3844
    %4018 = vmatpush1.bf16.msra.mxu0 %v3843
    %4019 = vmatprep.subr.bf16.mxu0 %v3841
    %4020 = vmatpush1.bf16.msra.mxu0 %v3840
    %4021 = vmatprep.subr.bf16.mxu0 %v3838
    %4022 = vmatpush1.bf16.msra.mxu0 %v3837
    %4023 = vmatprep.subr.bf16.mxu0 %v3835
    %4024 = vmatpush1.bf16.msra.mxu0 %v3834
    %4025 = vmatprep.subr.bf16.mxu0 %v3832
    %4026 = vmatpush1.bf16.msra.mxu0 %v3831
    %4027 = vmatprep.subr.bf16.mxu0 %v3877
    %4028 = vmatpush2.bf16.msra.mxu0 %v3876
    %4029 = vmatprep.subr.bf16.mxu0 %v3874
    %4030 = vmatpush2.bf16.msra.mxu0 %v3873
    %4031 = vmatprep.subr.bf16.mxu0 %v3871
    %4032 = vmatpush2.bf16.msra.mxu0 %v3870
    %4033 = vmatprep.subr.bf16.mxu0 %v3868
    %4034 = vmatpush2.bf16.msra.mxu0 %v3867
    %4035 = vmatprep.subr.bf16.mxu0 %v3865
    %4036 = vmatpush2.bf16.msra.mxu0 %v3864
    %4037 = vmatprep.subr.bf16.mxu0 %v3862
    %4038 = vmatpush2.bf16.msra.mxu0 %v3861
    %4039 = vmatprep.subr.bf16.mxu0 %v3859
    %4040 = vmatpush2.bf16.msra.mxu0 %v3858
    %4041 = vmatprep.subr.bf16.mxu0 %v3856
    %4042 = vmatpush2.bf16.msra.mxu0 %v3855
    %4043 = vmatprep.mubr.bf16.mxu0 %v2255
    %4044 = vmatmul.mubr.bf16.gmra.mxu0 %v2254
    %v4045 = vpop.f32.mrf.mxu0
    %v4046 = vadd.f32 0.0, %v4045
    %v4047 = vpop.f32.mrf.mxu0
    %v4048 = vadd.f32 0.0, %v4047
    %v4049 = vpop.f32.mrf.mxu0
    %v4050 = vadd.f32 0.0, %v4049
    %v4051 = vpop.f32.mrf.mxu0
    %v4052 = vadd.f32 0.0, %v4051
    %4053 = vmatprep.mubr.bf16.mxu0 %v2259
    %4054 = vmatmul.mubr.bf16.gmra.mxu0 %v2258
    %v4055 = vpop.f32.mrf.mxu0
    %v4056 = vadd.f32 0.0, %v4055
    %v4057 = vpop.f32.mrf.mxu0
    %v4058 = vadd.f32 0.0, %v4057
    %v4059 = vpop.f32.mrf.mxu0
    %v4060 = vadd.f32 0.0, %v4059
    %v4061 = vpop.f32.mrf.mxu0
    %v4062 = vadd.f32 0.0, %v4061
    %4063 = vmatprep.mubr.bf16.mxu0 %v2263
    %4064 = vmatmul.mubr.bf16.gmra.mxu0 %v2262
    %v4065 = vpop.f32.mrf.mxu0
    %v4066 = vadd.f32 0.0, %v4065
    %v4067 = vpop.f32.mrf.mxu0
    %v4068 = vadd.f32 0.0, %v4067
    %v4069 = vpop.f32.mrf.mxu0
    %v4070 = vadd.f32 0.0, %v4069
    %v4071 = vpop.f32.mrf.mxu0
    %v4072 = vadd.f32 0.0, %v4071
    %4073 = vmatprep.mubr.bf16.mxu0 %v2267
    %4074 = vmatmul.mubr.bf16.gmra.mxu0 %v2266
    %v4075 = vpop.f32.mrf.mxu0
    %v4076 = vadd.f32 0.0, %v4075
    %v4077 = vpop.f32.mrf.mxu0
    %v4078 = vadd.f32 0.0, %v4077
    %v4079 = vpop.f32.mrf.mxu0
    %v4080 = vadd.f32 0.0, %v4079
    %v4081 = vpop.f32.mrf.mxu0
    %v4082 = vadd.f32 0.0, %v4081
    %4083 = vmatprep.mubr.bf16.mxu0 %v2271
    %4084 = vmatmul.mubr.bf16.gmra.mxu0 %v2270
    %v4085 = vpop.f32.mrf.mxu0
    %v4086 = vadd.f32 0.0, %v4085
    %v4087 = vpop.f32.mrf.mxu0
    %v4088 = vadd.f32 0.0, %v4087
    %v4089 = vpop.f32.mrf.mxu0
    %v4090 = vadd.f32 0.0, %v4089
    %v4091 = vpop.f32.mrf.mxu0
    %v4092 = vadd.f32 0.0, %v4091
    %4093 = vmatprep.mubr.bf16.mxu0 %v2275
    %4094 = vmatmul.mubr.bf16.gmra.mxu0 %v2274
    %v4095 = vpop.f32.mrf.mxu0
    %v4096 = vadd.f32 0.0, %v4095
    %v4097 = vpop.f32.mrf.mxu0
    %v4098 = vadd.f32 0.0, %v4097
    %v4099 = vpop.f32.mrf.mxu0
    %v4100 = vadd.f32 0.0, %v4099
    %v4101 = vpop.f32.mrf.mxu0
    %v4102 = vadd.f32 0.0, %v4101
    %4103 = vmatprep.mubr.bf16.mxu0 %v2279
    %4104 = vmatmul.mubr.bf16.gmra.mxu0 %v2278
    %v4105 = vpop.f32.mrf.mxu0
    %v4106 = vadd.f32 0.0, %v4105
    %v4107 = vpop.f32.mrf.mxu0
    %v4108 = vadd.f32 0.0, %v4107
    %v4109 = vpop.f32.mrf.mxu0
    %v4110 = vadd.f32 0.0, %v4109
    %v4111 = vpop.f32.mrf.mxu0
    %v4112 = vadd.f32 0.0, %v4111
    %4113 = vmatprep.mubr.bf16.mxu0 %v2283
    %4114 = vmatmul.mubr.bf16.gmra.mxu0 %v2282
    %v4115 = vpop.f32.mrf.mxu0
    %v4116 = vadd.f32 0.0, %v4115
    %v4117 = vpop.f32.mrf.mxu0
    %v4118 = vadd.f32 0.0, %v4117
    %v4119 = vpop.f32.mrf.mxu0
    %v4120 = vadd.f32 0.0, %v4119
    %v4121 = vpop.f32.mrf.mxu0
    %v4122 = vadd.f32 0.0, %v4121
    %4123 = vmatprep.mubr.bf16.mxu0 %v2287
    %4124 = vmatmul.mubr.bf16.gmra.mxu0 %v2286
    %v4125 = vpop.f32.mrf.mxu0
    %v4126 = vadd.f32 0.0, %v4125
    %v4127 = vpop.f32.mrf.mxu0
    %v4128 = vadd.f32 0.0, %v4127
    %v4129 = vpop.f32.mrf.mxu0
    %v4130 = vadd.f32 0.0, %v4129
    %v4131 = vpop.f32.mrf.mxu0
    %v4132 = vadd.f32 0.0, %v4131
    %4133 = vmatprep.mubr.bf16.mxu0 %v2291
    %4134 = vmatmul.mubr.bf16.gmra.mxu0 %v2290
    %v4135 = vpop.f32.mrf.mxu0
    %v4136 = vadd.f32 0.0, %v4135
    %v4137 = vpop.f32.mrf.mxu0
    %v4138 = vadd.f32 0.0, %v4137
    %v4139 = vpop.f32.mrf.mxu0
    %v4140 = vpop.f32.mrf.mxu0
    %4141 = vdwg.mxu0
    %4142 = vmatprep.subr.bf16.mxu0 %v3901
    %4143 = vmatpush1.bf16.msra.mxu0 %v3900
    %4144 = vmatprep.subr.bf16.mxu0 %v3898
    %4145 = vmatpush1.bf16.msra.mxu0 %v3897
    %4146 = vmatprep.subr.bf16.mxu0 %v3895
    %4147 = vmatpush1.bf16.msra.mxu0 %v3894
    %4148 = vmatprep.subr.bf16.mxu0 %v3892
    %4149 = vmatpush1.bf16.msra.mxu0 %v3891
    %4150 = vmatprep.subr.bf16.mxu0 %v3889
    %4151 = vmatpush1.bf16.msra.mxu0 %v3888
    %4152 = vmatprep.subr.bf16.mxu0 %v3886
    %4153 = vmatpush1.bf16.msra.mxu0 %v3885
    %4154 = vmatprep.subr.bf16.mxu0 %v3883
    %4155 = vmatpush1.bf16.msra.mxu0 %v3882
    %4156 = vmatprep.subr.bf16.mxu0 %v3880
    %4157 = vmatpush1.bf16.msra.mxu0 %v3879
    %4158 = vmatprep.subr.bf16.mxu0 0
    %4159 = vmatpush2.bf16.msra.mxu0 0
    %4160 = vmatprep.subr.bf16.mxu0 0
    %4161 = vmatpush2.bf16.msra.mxu0 0
    %4162 = vmatprep.subr.bf16.mxu0 %v3919
    %4163 = vmatpush2.bf16.msra.mxu0 %v3918
    %4164 = vmatprep.subr.bf16.mxu0 %v3916
    %4165 = vmatpush2.bf16.msra.mxu0 %v3915
    %4166 = vmatprep.subr.bf16.mxu0 %v3913
    %4167 = vmatpush2.bf16.msra.mxu0 %v3912
    %4168 = vmatprep.subr.bf16.mxu0 %v3910
    %4169 = vmatpush2.bf16.msra.mxu0 %v3909
    %4170 = vmatprep.subr.bf16.mxu0 %v3907
    %4171 = vmatpush2.bf16.msra.mxu0 %v3906
    %4172 = vmatprep.subr.bf16.mxu0 %v3904
    %4173 = vmatpush2.bf16.msra.mxu0 %v3903
    %4174 = vmatprep.mubr.bf16.mxu0 %v2895
    %4175 = vmatmul.mubr.bf16.gmra.mxu0 %v2256
    %v4176 = vpop.f32.mrf.mxu0
    %v4177 = vadd.f32 %v4046, %v4176
    %v4178 = vpop.f32.mrf.mxu0
    %v4179 = vadd.f32 %v4048, %v4178
    %v4180 = vpop.f32.mrf.mxu0
    %v4181 = vadd.f32 %v4050, %v4180
    %v4182 = vpop.f32.mrf.mxu0
    %v4183 = vadd.f32 %v4052, %v4182
    %4184 = vmatprep.mubr.bf16.mxu0 %v2898
    %4185 = vmatmul.mubr.bf16.gmra.mxu0 %v2260
    %v4186 = vpop.f32.mrf.mxu0
    %v4187 = vadd.f32 %v4056, %v4186
    %v4188 = vpop.f32.mrf.mxu0
    %v4189 = vadd.f32 %v4058, %v4188
    %v4190 = vpop.f32.mrf.mxu0
    %v4191 = vadd.f32 %v4060, %v4190
    %v4192 = vpop.f32.mrf.mxu0
    %v4193 = vadd.f32 %v4062, %v4192
    %4194 = vmatprep.mubr.bf16.mxu0 %v2901
    %4195 = vmatmul.mubr.bf16.gmra.mxu0 %v2264
    %v4196 = vpop.f32.mrf.mxu0
    %v4197 = vadd.f32 %v4066, %v4196
    %v4198 = vpop.f32.mrf.mxu0
    %v4199 = vadd.f32 %v4068, %v4198
    %v4200 = vpop.f32.mrf.mxu0
    %v4201 = vadd.f32 %v4070, %v4200
    %v4202 = vpop.f32.mrf.mxu0
    %v4203 = vadd.f32 %v4072, %v4202
    %4204 = vmatprep.mubr.bf16.mxu0 %v2904
    %4205 = vmatmul.mubr.bf16.gmra.mxu0 %v2268
    %v4206 = vpop.f32.mrf.mxu0
    %v4207 = vadd.f32 %v4076, %v4206
    %v4208 = vpop.f32.mrf.mxu0
    %v4209 = vadd.f32 %v4078, %v4208
    %v4210 = vpop.f32.mrf.mxu0
    %v4211 = vadd.f32 %v4080, %v4210
    %v4212 = vpop.f32.mrf.mxu0
    %v4213 = vadd.f32 %v4082, %v4212
    %4214 = vmatprep.mubr.bf16.mxu0 %v2907
    %4215 = vmatmul.mubr.bf16.gmra.mxu0 %v2272
    %v4216 = vpop.f32.mrf.mxu0
    %v4217 = vadd.f32 %v4086, %v4216
    %v4218 = vpop.f32.mrf.mxu0
    %v4219 = vadd.f32 %v4088, %v4218
    %v4220 = vpop.f32.mrf.mxu0
    %v4221 = vadd.f32 %v4090, %v4220
    %v4222 = vpop.f32.mrf.mxu0
    %v4223 = vadd.f32 %v4092, %v4222
    %4224 = vmatprep.mubr.bf16.mxu0 %v2910
    %4225 = vmatmul.mubr.bf16.gmra.mxu0 %v2276
    %v4226 = vpop.f32.mrf.mxu0
    %v4227 = vadd.f32 %v4096, %v4226
    %v4228 = vpop.f32.mrf.mxu0
    %v4229 = vadd.f32 %v4098, %v4228
    %v4230 = vpop.f32.mrf.mxu0
    %v4231 = vadd.f32 %v4100, %v4230
    %v4232 = vpop.f32.mrf.mxu0
    %v4233 = vadd.f32 %v4102, %v4232
    %4234 = vmatprep.mubr.bf16.mxu0 %v2913
    %4235 = vmatmul.mubr.bf16.gmra.mxu0 %v2280
    %v4236 = vpop.f32.mrf.mxu0
    %v4237 = vadd.f32 %v4106, %v4236
    %v4238 = vpop.f32.mrf.mxu0
    %v4239 = vadd.f32 %v4108, %v4238
    %v4240 = vpop.f32.mrf.mxu0
    %v4241 = vadd.f32 %v4110, %v4240
    %v4242 = vpop.f32.mrf.mxu0
    %v4243 = vadd.f32 %v4112, %v4242
    %4244 = vmatprep.mubr.bf16.mxu0 %v2916
    %4245 = vmatmul.mubr.bf16.gmra.mxu0 %v2284
    %v4246 = vpop.f32.mrf.mxu0
    %v4247 = vadd.f32 %v4116, %v4246
    %v4248 = vpop.f32.mrf.mxu0
    %v4249 = vadd.f32 %v4118, %v4248
    %v4250 = vpop.f32.mrf.mxu0
    %v4251 = vadd.f32 %v4120, %v4250
    %v4252 = vpop.f32.mrf.mxu0
    %v4253 = vadd.f32 %v4122, %v4252
    %4254 = vmatprep.mubr.bf16.mxu0 %v2919
    %4255 = vmatmul.mubr.bf16.gmra.mxu0 %v2288
    %v4256 = vpop.f32.mrf.mxu0
    %v4257 = vadd.f32 %v4126, %v4256
    %v4258 = vpop.f32.mrf.mxu0
    %v4259 = vadd.f32 %v4128, %v4258
    %v4260 = vpop.f32.mrf.mxu0
    %v4261 = vadd.f32 %v4130, %v4260
    %v4262 = vpop.f32.mrf.mxu0
    %v4263 = vadd.f32 %v4132, %v4262
    %4264 = vmatprep.mubr.bf16.mxu0 %v2922
    %4265 = vmatmul.mubr.bf16.gmra.mxu0 %v2292
    %v4266 = vpop.f32.mrf.mxu0
    %v4267 = vadd.f32 %v4136, %v4266
    %v4268 = vpop.f32.mrf.mxu0
    %v4269 = vadd.f32 %v4138, %v4268
    %v4270 = vpop.f32.mrf.mxu0
    %v4271 = vpop.f32.mrf.mxu0
    %4272 = vdwg.mxu0
    %4273 = vmatprep.subr.bf16.mxu0 0
    %4274 = vmatpush1.bf16.msra.mxu0 %v3854
    %4275 = vmatprep.subr.bf16.mxu0 0
    %4276 = vmatpush1.bf16.msra.mxu0 %v3851
    %4277 = vmatprep.subr.bf16.mxu0 0
    %4278 = vmatpush1.bf16.msra.mxu0 %v3848
    %4279 = vmatprep.subr.bf16.mxu0 0
    %4280 = vmatpush1.bf16.msra.mxu0 %v3845
    %4281 = vmatprep.subr.bf16.mxu0 0
    %4282 = vmatpush1.bf16.msra.mxu0 %v3842
    %4283 = vmatprep.subr.bf16.mxu0 0
    %4284 = vmatpush1.bf16.msra.mxu0 %v3839
    %4285 = vmatprep.subr.bf16.mxu0 0
    %4286 = vmatpush1.bf16.msra.mxu0 %v3836
    %4287 = vmatprep.subr.bf16.mxu0 0
    %4288 = vmatpush1.bf16.msra.mxu0 %v3833
    %4289 = vmatprep.subr.bf16.mxu0 0
    %4290 = vmatpush2.bf16.msra.mxu0 %v3878
    %4291 = vmatprep.subr.bf16.mxu0 0
    %4292 = vmatpush2.bf16.msra.mxu0 %v3875
    %4293 = vmatprep.subr.bf16.mxu0 0
    %4294 = vmatpush2.bf16.msra.mxu0 %v3872
    %4295 = vmatprep.subr.bf16.mxu0 0
    %4296 = vmatpush2.bf16.msra.mxu0 %v3869
    %4297 = vmatprep.subr.bf16.mxu0 0
    %4298 = vmatpush2.bf16.msra.mxu0 %v3866
    %4299 = vmatprep.subr.bf16.mxu0 0
    %4300 = vmatpush2.bf16.msra.mxu0 %v3863
    %4301 = vmatprep.subr.bf16.mxu0 0
    %4302 = vmatpush2.bf16.msra.mxu0 %v3860
    %4303 = vmatprep.subr.bf16.mxu0 0
    %4304 = vmatpush2.bf16.msra.mxu0 %v3857
    %4305 = vmatprep.mubr.bf16.mxu0 %v2255
    %4306 = vmatmul.mubr.bf16.gmra.mxu0 %v2254
    %v4307 = vpop.f32.mrf.mxu0
    %v4308 = vadd.f32 0.0, %v4307
    %v4309 = vpop.f32.mrf.mxu0
    %v4310 = vpop.f32.mrf.mxu0
    %v4311 = vadd.f32 0.0, %v4310
    %v4312 = vpop.f32.mrf.mxu0
    %4313 = vmatprep.mubr.bf16.mxu0 %v2259
    %4314 = vmatmul.mubr.bf16.gmra.mxu0 %v2258
    %v4315 = vpop.f32.mrf.mxu0
    %v4316 = vadd.f32 0.0, %v4315
    %v4317 = vpop.f32.mrf.mxu0
    %v4318 = vpop.f32.mrf.mxu0
    %v4319 = vadd.f32 0.0, %v4318
    %v4320 = vpop.f32.mrf.mxu0
    %4321 = vmatprep.mubr.bf16.mxu0 %v2263
    %4322 = vmatmul.mubr.bf16.gmra.mxu0 %v2262
    %v4323 = vpop.f32.mrf.mxu0
    %v4324 = vadd.f32 0.0, %v4323
    %v4325 = vpop.f32.mrf.mxu0
    %v4326 = vpop.f32.mrf.mxu0
    %v4327 = vadd.f32 0.0, %v4326
    %v4328 = vpop.f32.mrf.mxu0
    %4329 = vmatprep.mubr.bf16.mxu0 %v2267
    %4330 = vmatmul.mubr.bf16.gmra.mxu0 %v2266
    %v4331 = vpop.f32.mrf.mxu0
    %v4332 = vadd.f32 0.0, %v4331
    %v4333 = vpop.f32.mrf.mxu0
    %v4334 = vpop.f32.mrf.mxu0
    %v4335 = vadd.f32 0.0, %v4334
    %v4336 = vpop.f32.mrf.mxu0
    %4337 = vmatprep.mubr.bf16.mxu0 %v2271
    %4338 = vmatmul.mubr.bf16.gmra.mxu0 %v2270
    %v4339 = vpop.f32.mrf.mxu0
    %v4340 = vadd.f32 0.0, %v4339
    %v4341 = vpop.f32.mrf.mxu0
    %v4342 = vpop.f32.mrf.mxu0
    %v4343 = vadd.f32 0.0, %v4342
    %v4344 = vpop.f32.mrf.mxu0
    %4345 = vmatprep.mubr.bf16.mxu0 %v2275
    %4346 = vmatmul.mubr.bf16.gmra.mxu0 %v2274
    %v4347 = vpop.f32.mrf.mxu0
    %v4348 = vadd.f32 0.0, %v4347
    %v4349 = vpop.f32.mrf.mxu0
    %v4350 = vpop.f32.mrf.mxu0
    %v4351 = vadd.f32 0.0, %v4350
    %v4352 = vpop.f32.mrf.mxu0
    %4353 = vmatprep.mubr.bf16.mxu0 %v2279
    %4354 = vmatmul.mubr.bf16.gmra.mxu0 %v2278
    %v4355 = vpop.f32.mrf.mxu0
    %v4356 = vadd.f32 0.0, %v4355
    %v4357 = vpop.f32.mrf.mxu0
    %v4358 = vpop.f32.mrf.mxu0
    %v4359 = vadd.f32 0.0, %v4358
    %v4360 = vpop.f32.mrf.mxu0
    %4361 = vmatprep.mubr.bf16.mxu0 %v2283
    %4362 = vmatmul.mubr.bf16.gmra.mxu0 %v2282
    %v4363 = vpop.f32.mrf.mxu0
    %v4364 = vadd.f32 0.0, %v4363
    %v4365 = vpop.f32.mrf.mxu0
    %v4366 = vpop.f32.mrf.mxu0
    %v4367 = vadd.f32 0.0, %v4366
    %v4368 = vpop.f32.mrf.mxu0
    %4369 = vmatprep.mubr.bf16.mxu0 %v2287
    %4370 = vmatmul.mubr.bf16.gmra.mxu0 %v2286
    %v4371 = vpop.f32.mrf.mxu0
    %v4372 = vadd.f32 0.0, %v4371
    %v4373 = vpop.f32.mrf.mxu0
    %v4374 = vpop.f32.mrf.mxu0
    %v4375 = vadd.f32 0.0, %v4374
    %v4376 = vpop.f32.mrf.mxu0
    %4377 = vmatprep.mubr.bf16.mxu0 %v2291
    %4378 = vmatmul.mubr.bf16.gmra.mxu0 %v2290
    %v4379 = vpop.f32.mrf.mxu0
    %v4380 = vadd.f32 0.0, %v4379
    %v4381 = vpop.f32.mrf.mxu0
    %v4382 = vpop.f32.mrf.mxu0
    %v4383 = vpop.f32.mrf.mxu0
    %4384 = vdwg.mxu0
    %4385 = vmatprep.subr.bf16.mxu0 0
    %4386 = vmatpush1.bf16.msra.mxu0 %v3902
    %4387 = vmatprep.subr.bf16.mxu0 0
    %4388 = vmatpush1.bf16.msra.mxu0 %v3899
    %4389 = vmatprep.subr.bf16.mxu0 0
    %4390 = vmatpush1.bf16.msra.mxu0 %v3896
    %4391 = vmatprep.subr.bf16.mxu0 0
    %4392 = vmatpush1.bf16.msra.mxu0 %v3893
    %4393 = vmatprep.subr.bf16.mxu0 0
    %4394 = vmatpush1.bf16.msra.mxu0 %v3890
    %4395 = vmatprep.subr.bf16.mxu0 0
    %4396 = vmatpush1.bf16.msra.mxu0 %v3887
    %4397 = vmatprep.subr.bf16.mxu0 0
    %4398 = vmatpush1.bf16.msra.mxu0 %v3884
    %4399 = vmatprep.subr.bf16.mxu0 0
    %4400 = vmatpush1.bf16.msra.mxu0 %v3881
    %4401 = vmatprep.subr.bf16.mxu0 0
    %4402 = vmatpush2.bf16.msra.mxu0 0
    %4403 = vmatprep.subr.bf16.mxu0 0
    %4404 = vmatpush2.bf16.msra.mxu0 0
    %4405 = vmatprep.subr.bf16.mxu0 0
    %4406 = vmatpush2.bf16.msra.mxu0 %v3920
    %4407 = vmatprep.subr.bf16.mxu0 0
    %4408 = vmatpush2.bf16.msra.mxu0 %v3917
    %4409 = vmatprep.subr.bf16.mxu0 0
    %4410 = vmatpush2.bf16.msra.mxu0 %v3914
    %4411 = vmatprep.subr.bf16.mxu0 0
    %4412 = vmatpush2.bf16.msra.mxu0 %v3911
    %4413 = vmatprep.subr.bf16.mxu0 0
    %4414 = vmatpush2.bf16.msra.mxu0 %v3908
    %4415 = vmatprep.subr.bf16.mxu0 0
    %4416 = vmatpush2.bf16.msra.mxu0 %v3905
    %4417 = vmatprep.mubr.bf16.mxu0 %v2895
    %4418 = vmatmul.mubr.bf16.gmra.mxu0 %v2256
    %v4419 = vpop.f32.mrf.mxu0
    %v4420 = vadd.f32 %v4308, %v4419
    %v4421 = vpop.f32.mrf.mxu0
    %v4422 = vpop.f32.mrf.mxu0
    %v4423 = vadd.f32 %v4311, %v4422
    %v4424 = vpop.f32.mrf.mxu0
    %4425 = vmatprep.mubr.bf16.mxu0 %v2898
    %4426 = vmatmul.mubr.bf16.gmra.mxu0 %v2260
    %v4427 = vpop.f32.mrf.mxu0
    %v4428 = vadd.f32 %v4316, %v4427
    %v4429 = vpop.f32.mrf.mxu0
    %v4430 = vpop.f32.mrf.mxu0
    %v4431 = vadd.f32 %v4319, %v4430
    %v4432 = vpop.f32.mrf.mxu0
    %4433 = vmatprep.mubr.bf16.mxu0 %v2901
    %4434 = vmatmul.mubr.bf16.gmra.mxu0 %v2264
    %v4435 = vpop.f32.mrf.mxu0
    %v4436 = vadd.f32 %v4324, %v4435
    %v4437 = vpop.f32.mrf.mxu0
    %v4438 = vpop.f32.mrf.mxu0
    %v4439 = vadd.f32 %v4327, %v4438
    %v4440 = vpop.f32.mrf.mxu0
    %4441 = vmatprep.mubr.bf16.mxu0 %v2904
    %4442 = vmatmul.mubr.bf16.gmra.mxu0 %v2268
    %v4443 = vpop.f32.mrf.mxu0
    %v4444 = vadd.f32 %v4332, %v4443
    %v4445 = vpop.f32.mrf.mxu0
    %v4446 = vpop.f32.mrf.mxu0
    %v4447 = vadd.f32 %v4335, %v4446
    %v4448 = vpop.f32.mrf.mxu0
    %4449 = vmatprep.mubr.bf16.mxu0 %v2907
    %4450 = vmatmul.mubr.bf16.gmra.mxu0 %v2272
    %v4451 = vpop.f32.mrf.mxu0
    %v4452 = vadd.f32 %v4340, %v4451
    %v4453 = vpop.f32.mrf.mxu0
    %v4454 = vpop.f32.mrf.mxu0
    %v4455 = vadd.f32 %v4343, %v4454
    %v4456 = vpop.f32.mrf.mxu0
    %4457 = vmatprep.mubr.bf16.mxu0 %v2910
    %4458 = vmatmul.mubr.bf16.gmra.mxu0 %v2276
    %v4459 = vpop.f32.mrf.mxu0
    %v4460 = vadd.f32 %v4348, %v4459
    %v4461 = vpop.f32.mrf.mxu0
    %v4462 = vpop.f32.mrf.mxu0
    %v4463 = vadd.f32 %v4351, %v4462
    %v4464 = vpop.f32.mrf.mxu0
    %4465 = vmatprep.mubr.bf16.mxu0 %v2913
    %4466 = vmatmul.mubr.bf16.gmra.mxu0 %v2280
    %v4467 = vpop.f32.mrf.mxu0
    %v4468 = vadd.f32 %v4356, %v4467
    %v4469 = vpop.f32.mrf.mxu0
    %v4470 = vpop.f32.mrf.mxu0
    %v4471 = vadd.f32 %v4359, %v4470
    %v4472 = vpop.f32.mrf.mxu0
    %4473 = vmatprep.mubr.bf16.mxu0 %v2916
    %4474 = vmatmul.mubr.bf16.gmra.mxu0 %v2284
    %v4475 = vpop.f32.mrf.mxu0
    %v4476 = vadd.f32 %v4364, %v4475
    %v4477 = vpop.f32.mrf.mxu0
    %v4478 = vpop.f32.mrf.mxu0
    %v4479 = vadd.f32 %v4367, %v4478
    %v4480 = vpop.f32.mrf.mxu0
    %4481 = vmatprep.mubr.bf16.mxu0 %v2919
    %4482 = vmatmul.mubr.bf16.gmra.mxu0 %v2288
    %v4483 = vpop.f32.mrf.mxu0
    %v4484 = vadd.f32 %v4372, %v4483
    %v4485 = vpop.f32.mrf.mxu0
    %v4486 = vpop.f32.mrf.mxu0
    %v4487 = vadd.f32 %v4375, %v4486
    %v4488 = vpop.f32.mrf.mxu0
    %4489 = vmatprep.mubr.bf16.mxu0 %v2922
    %4490 = vmatmul.mubr.bf16.gmra.mxu0 %v2292
    %v4491 = vpop.f32.mrf.mxu0
    %v4492 = vadd.f32 %v4380, %v4491
    %v4493 = vpop.f32.mrf.mxu0
    %v4494 = vpop.f32.mrf.mxu0
    %v4495 = vpop.f32.mrf.mxu0
    %4496 = vdwg.mxu0
    %v4497 = vmax.f32 %v3090, %v4177
    %v4498 = vmax.f32 %v3092, %v4179
    %v4499 = vmax.f32 %v3333, %v4420
    %v4500 = vmax.f32 %v3094, %v4181
    %v4501 = vmax.f32 %v3096, %v4183
    %v4502 = vmax.f32 %v3336, %v4423
    %v4503 = vmax.f32 %v3100, %v4187
    %v4504 = vmax.f32 %v3102, %v4189
    %v4505 = vmax.f32 %v3341, %v4428
    %v4506 = vmax.f32 %v3104, %v4191
    %v4507 = vmax.f32 %v3106, %v4193
    %v4508 = vmax.f32 %v3344, %v4431
    %v4509 = vmax.f32 %v3110, %v4197
    %v4510 = vmax.f32 %v3112, %v4199
    %v4511 = vmax.f32 %v3349, %v4436
    %v4512 = vmax.f32 %v3114, %v4201
    %v4513 = vmax.f32 %v3116, %v4203
    %v4514 = vmax.f32 %v3352, %v4439
    %v4515 = vmax.f32 %v3120, %v4207
    %v4516 = vmax.f32 %v3122, %v4209
    %v4517 = vmax.f32 %v3357, %v4444
    %v4518 = vmax.f32 %v3124, %v4211
    %v4519 = vmax.f32 %v3126, %v4213
    %v4520 = vmax.f32 %v3360, %v4447
    %v4521 = vmax.f32 %v3130, %v4217
    %v4522 = vmax.f32 %v3132, %v4219
    %v4523 = vmax.f32 %v3365, %v4452
    %v4524 = vmax.f32 %v3134, %v4221
    %v4525 = vmax.f32 %v3136, %v4223
    %v4526 = vmax.f32 %v3368, %v4455
    %v4527 = vmax.f32 %v3140, %v4227
    %v4528 = vmax.f32 %v3142, %v4229
    %v4529 = vmax.f32 %v3373, %v4460
    %v4530 = vmax.f32 %v3144, %v4231
    %v4531 = vmax.f32 %v3146, %v4233
    %v4532 = vmax.f32 %v3376, %v4463
    %v4533 = vmax.f32 %v3150, %v4237
    %v4534 = vmax.f32 %v3152, %v4239
    %v4535 = vmax.f32 %v3381, %v4468
    %v4536 = vmax.f32 %v3154, %v4241
    %v4537 = vmax.f32 %v3156, %v4243
    %v4538 = vmax.f32 %v3384, %v4471
    %v4539 = vmax.f32 %v3160, %v4247
    %v4540 = vmax.f32 %v3162, %v4249
    %v4541 = vmax.f32 %v3389, %v4476
    %v4542 = vmax.f32 %v3164, %v4251
    %v4543 = vmax.f32 %v3166, %v4253
    %v4544 = vmax.f32 %v3392, %v4479
    %v4545 = vmax.f32 %v3170, %v4257
    %v4546 = vmax.f32 %v3172, %v4259
    %v4547 = vmax.f32 %v3397, %v4484
    %v4548 = vmax.f32 %v3174, %v4261
    %v4549 = vmax.f32 %v3176, %v4263
    %v4550 = vmax.f32 %v3400, %v4487
    %v4551 = vmax.f32 %v3180, %v4267
    %v4552 = vmax.f32 %v3182, %v4269
    %v4553 = vmax.f32 %v3405, %v4492
    %v4554 = vpack.c.bf16 %v4500, %v4497
    %v4555 = vpack.c.bf16 %v4501, %v4498
    %v4556 = vpack.c.bf16 %v4502, %v4499
    %v4557 = vpack.c.bf16 %v4506, %v4503
    %v4558 = vpack.c.bf16 %v4507, %v4504
    %v4559 = vpack.c.bf16 %v4508, %v4505
    %v4560 = vpack.c.bf16 %v4512, %v4509
    %v4561 = vpack.c.bf16 %v4513, %v4510
    %v4562 = vpack.c.bf16 %v4514, %v4511
    %v4563 = vpack.c.bf16 %v4518, %v4515
    %v4564 = vpack.c.bf16 %v4519, %v4516
    %v4565 = vpack.c.bf16 %v4520, %v4517
    %v4566 = vpack.c.bf16 %v4524, %v4521
    %v4567 = vpack.c.bf16 %v4525, %v4522
    %v4568 = vpack.c.bf16 %v4526, %v4523
    %v4569 = vpack.c.bf16 %v4530, %v4527
    %v4570 = vpack.c.bf16 %v4531, %v4528
    %v4571 = vpack.c.bf16 %v4532, %v4529
    %v4572 = vpack.c.bf16 %v4536, %v4533
    %v4573 = vpack.c.bf16 %v4537, %v4534
    %v4574 = vpack.c.bf16 %v4538, %v4535
    %v4575 = vpack.c.bf16 %v4542, %v4539
    %v4576 = vpack.c.bf16 %v4543, %v4540
    %v4577 = vpack.c.bf16 %v4544, %v4541
    %v4578 = vpack.c.bf16 %v4548, %v4545
    %v4579 = vpack.c.bf16 %v4549, %v4546
    %v4580 = vpack.c.bf16 %v4550, %v4547
    %v4581 = vpack.c.bf16 %v4551, %v4551
    %v4582 = vpack.c.bf16 %v4552, %v4552
    %v4583 = vpack.c.bf16 %v4553, %v4553
    %v4584 = vld [vmem:[%s5] sm:$0xff]
    %v4585 = vld [vmem:[%s5 + $0x8] sm:$0xff]
    %v4586 = vld [vmem:[%s5 + $0x10] sm:$0xf]
    %v4587 = vld [vmem:[%s5 + $0x14] sm:$0xff]
    %v4588 = vld [vmem:[%s5 + $0x1c] sm:$0xff]
    %v4589 = vld [vmem:[%s5 + $0x24] sm:$0xf]
    %v4590 = vld [vmem:[%s5 + $0x28] sm:$0xff]
    %v4591 = vld [vmem:[%s5 + $0x30] sm:$0xff]
    %v4592 = vld [vmem:[%s5 + $0x38] sm:$0xf]
    %v4593 = vld [vmem:[%s5 + $0x3c] sm:$0xff]
    %v4594 = vld [vmem:[%s5 + $0x44] sm:$0xff]
    %v4595 = vld [vmem:[%s5 + $0x4c] sm:$0xf]
    %v4596 = vld [vmem:[%s5 + $0x50] sm:$0xff]
    %v4597 = vld [vmem:[%s5 + $0x58] sm:$0xff]
    %v4598 = vld [vmem:[%s5 + $0x60] sm:$0xf]
    %v4599 = vld [vmem:[%s5 + $0x64] sm:$0xff]
    %v4600 = vld [vmem:[%s5 + $0x6c] sm:$0xff]
    %v4601 = vld [vmem:[%s5 + $0x74] sm:$0xf]
    %v4602 = vld [vmem:[%s5 + $0x78] sm:$0xff]
    %v4603 = vld [vmem:[%s5 + $0x80] sm:$0xff]
    %v4604 = vld [vmem:[%s5 + $0x88] sm:$0xf]
    %v4605 = vld [vmem:[%s5 + $0x8c] sm:$0xff]
    %v4606 = vld [vmem:[%s5 + $0x94] sm:$0xff]
    %v4607 = vld [vmem:[%s5 + $0x9c] sm:$0xf]
    %v4608 = vld [vmem:[%s5 + $0xa0] sm:$0xff]
    %v4609 = vld [vmem:[%s5 + $0xa8] sm:$0xff]
    %v4610 = vld [vmem:[%s5 + $0xb0] sm:$0xf]
    %v4611 = vld [vmem:[%s5 + $0xb4] sm:$0xff]
    %v4612 = vld [vmem:[%s5 + $0xbc] sm:$0xff]
    %v4613 = vld [vmem:[%s5 + $0xc4] sm:$0xf]
    %v4614 = vld [vmem:[%s5 + $0xc8] sm:$0xff]
    %v4615 = vld [vmem:[%s5 + $0xd0] sm:$0xff]
    %v4616 = vld [vmem:[%s5 + $0xd8] sm:$0xf]
    %v4617 = vld [vmem:[%s5 + $0xdc] sm:$0xff]
    %v4618 = vld [vmem:[%s5 + $0xe4] sm:$0xff]
    %v4619 = vld [vmem:[%s5 + $0xec] sm:$0xf]
    %v4620 = vld [vmem:[%s5 + $0xf0] sm:$0xff]
    %v4621 = vld [vmem:[%s5 + $0xf8] sm:$0xff]
    %v4622 = vld [vmem:[%s5 + $0x100] sm:$0xf]
    %v4623 = vld [vmem:[%s5 + $0x104] sm:$0xff]
    %v4624 = vld [vmem:[%s5 + $0x10c] sm:$0xff]
    %v4625 = vld [vmem:[%s5 + $0x114] sm:$0xf]
    %v4626 = vld [vmem:[%s5 + $0x118] sm:$0xff]
    %v4627 = vld [vmem:[%s5 + $0x120] sm:$0xff]
    %v4628 = vld [vmem:[%s5 + $0x128] sm:$0xf]
    %v4629 = vld [vmem:[%s5 + $0x12c] sm:$0xff]
    %v4630 = vld [vmem:[%s5 + $0x134] sm:$0xff]
    %v4631 = vld [vmem:[%s5 + $0x13c] sm:$0xf]
    %v4632 = vld [vmem:[%s5 + $0x140] sm:$0xff]
    %v4633 = vld [vmem:[%s5 + $0x148] sm:$0xff]
    %v4634 = vld [vmem:[%s5 + $0x150] sm:$0xf]
    %v4635 = vld [vmem:[%s5 + $0x154] sm:$0xff]
    %v4636 = vld [vmem:[%s5 + $0x15c] sm:$0xff]
    %v4637 = vld [vmem:[%s5 + $0x164] sm:$0xf]
    %v4638 = vld [vmem:[%s5 + $0x168] sm:$0xff]
    %v4639 = vld [vmem:[%s5 + $0x170] sm:$0xff]
    %v4640 = vld [vmem:[%s5 + $0x178] sm:$0xf]
    %v4641 = vld [vmem:[%s5 + $0x17c] sm:$0xff]
    %v4642 = vld [vmem:[%s5 + $0x184] sm:$0xff]
    %v4643 = vld [vmem:[%s5 + $0x18c] sm:$0xf]
    %v4644 = vld [vmem:[%s5 + $0x190] sm:$0xff]
    %v4645 = vld [vmem:[%s5 + $0x198] sm:$0xff]
    %v4646 = vld [vmem:[%s5 + $0x1a0] sm:$0xf]
    %v4647 = vld [vmem:[%s5 + $0x1a4] sm:$0xff]
    %v4648 = vld [vmem:[%s5 + $0x1ac] sm:$0xff]
    %v4649 = vld [vmem:[%s5 + $0x1b4] sm:$0xf]
    %v4650 = vld [vmem:[%s5 + $0x1b8] sm:$0xff]
    %v4651 = vld [vmem:[%s5 + $0x1c0] sm:$0xff]
    %v4652 = vld [vmem:[%s5 + $0x1c8] sm:$0xf]
    %v4653 = vld [vmem:[%s5 + $0x1cc] sm:$0xff]
    %v4654 = vld [vmem:[%s5 + $0x1d4] sm:$0xff]
    %v4655 = vld [vmem:[%s5 + $0x1dc] sm:$0xf]
    %v4656 = vld [vmem:[%s5 + $0x1e0] sm:$0xff]
    %v4657 = vld [vmem:[%s5 + $0x1e8] sm:$0xff]
    %v4658 = vld [vmem:[%s5 + $0x1f0] sm:$0xf]
    %v4659 = vld [vmem:[%s5 + $0x1f4] sm:$0xff]
    %v4660 = vld [vmem:[%s5 + $0x1fc] sm:$0xff]
    %v4661 = vld [vmem:[%s5 + $0x204] sm:$0xf]
    %v4662 = vld [vmem:[%s5 + $0x208] sm:$0xff]
    %v4663 = vld [vmem:[%s5 + $0x210] sm:$0xff]
    %v4664 = vld [vmem:[%s5 + $0x218] sm:$0xf]
    %v4665 = vld [vmem:[%s5 + $0x21c] sm:$0xff]
    %v4666 = vld [vmem:[%s5 + $0x224] sm:$0xff]
    %v4667 = vld [vmem:[%s5 + $0x22c] sm:$0xf]
    %v4668 = vld [vmem:[%s5 + $0x230] sm:$0xff]
    %v4669 = vld [vmem:[%s5 + $0x238] sm:$0xff]
    %v4670 = vld [vmem:[%s5 + $0x240] sm:$0xf]
    %v4671 = vld [vmem:[%s5 + $0x244] sm:$0xff]
    %v4672 = vld [vmem:[%s5 + $0x24c] sm:$0xff]
    %v4673 = vld [vmem:[%s5 + $0x254] sm:$0xf]
    %v4674 = vld [vmem:[%s5 + $0x258] sm:$0xff]
    %v4675 = vld [vmem:[%s5 + $0x260] sm:$0xff]
    %v4676 = vld [vmem:[%s5 + $0x268] sm:$0xf]
    %v4677 = vld [vmem:[%s5 + $0x26c] sm:$0xff]
    %v4678 = vld [vmem:[%s5 + $0x274] sm:$0xff]
    %v4679 = vld [vmem:[%s5 + $0x27c] sm:$0xf]
    %v4680 = vld [vmem:[%s5 + $0x280] sm:$0xff]
    %v4681 = vld [vmem:[%s5 + $0x288] sm:$0xff]
    %v4682 = vld [vmem:[%s5 + $0x290] sm:$0xf]
    %v4683 = vld [vmem:[%s5 + $0x294] sm:$0xff]
    %v4684 = vld [vmem:[%s5 + $0x29c] sm:$0xff]
    %v4685 = vld [vmem:[%s5 + $0x2a4] sm:$0xf]
    %v4686 = vld [vmem:[%s5 + $0x2a8] sm:$0xff]
    %v4687 = vld [vmem:[%s5 + $0x2b0] sm:$0xff]
    %v4688 = vld [vmem:[%s5 + $0x2b8] sm:$0xf]
    %v4689 = vld [vmem:[%s5 + $0x2bc] sm:$0xff]
    %v4690 = vld [vmem:[%s5 + $0x2c4] sm:$0xff]
    %v4691 = vld [vmem:[%s5 + $0x2cc] sm:$0xf]
    %v4692 = vld [vmem:[%s5 + $0x2d0] sm:$0xff]
    %v4693 = vld [vmem:[%s5 + $0x2d8] sm:$0xff]
    %v4694 = vld [vmem:[%s5 + $0x2e0] sm:$0xf]
    %v4695 = vld [vmem:[%s5 + $0x2e4] sm:$0xff]
    %v4696 = vld [vmem:[%s5 + $0x2ec] sm:$0xff]
    %v4697 = vld [vmem:[%s5 + $0x2f4] sm:$0xf]
    %v4699 = vshrl.u32 %v4554, 16
    %v4701 = vshll.u32 %v4554, 16
    %v4703 = vrot.slane %v4701, 1
    %v4704 = vor.u32 %v4699, %v4703
    %v4706 = vshll.u32 %v4557, 16
    %v4708 = vrot.slane %v4706, 1
    %v4709 = vsel %vm159, %v4704, %v4708
    %v4711 = vshrl.u32 %v4555, 16
    %v4713 = vshll.u32 %v4555, 16
    %v4715 = vrot.slane %v4713, 1
    %v4716 = vor.u32 %v4711, %v4715
    %v4718 = vshll.u32 %v4558, 16
    %v4720 = vrot.slane %v4718, 1
    %v4721 = vsel %vm159, %v4716, %v4720
    %v4723 = vshrl.u32 %v4556, 16
    %v4725 = vshll.u32 %v4556, 16
    %v4727 = vrot.slane %v4725, 1
    %v4728 = vor.u32 %v4723, %v4727
    %v4730 = vshll.u32 %v4559, 16
    %v4732 = vrot.slane %v4730, 1
    %v4733 = vsel %vm159, %v4728, %v4732
    %v4734 = vshrl.u32 %v4557, 16
    %v4736 = vor.u32 %v4734, %v4708
    %v4738 = vshll.u32 %v4560, 16
    %v4740 = vrot.slane %v4738, 1
    %v4741 = vsel %vm159, %v4736, %v4740
    %v4742 = vshrl.u32 %v4558, 16
    %v4744 = vor.u32 %v4742, %v4720
    %v4746 = vshll.u32 %v4561, 16
    %v4748 = vrot.slane %v4746, 1
    %v4749 = vsel %vm159, %v4744, %v4748
    %v4750 = vshrl.u32 %v4559, 16
    %v4752 = vor.u32 %v4750, %v4732
    %v4754 = vshll.u32 %v4562, 16
    %v4756 = vrot.slane %v4754, 1
    %v4757 = vsel %vm159, %v4752, %v4756
    %v4758 = vshrl.u32 %v4560, 16
    %v4760 = vor.u32 %v4758, %v4740
    %v4762 = vshll.u32 %v4563, 16
    %v4764 = vrot.slane %v4762, 1
    %v4765 = vsel %vm159, %v4760, %v4764
    %v4766 = vshrl.u32 %v4561, 16
    %v4768 = vor.u32 %v4766, %v4748
    %v4770 = vshll.u32 %v4564, 16
    %v4772 = vrot.slane %v4770, 1
    %v4773 = vsel %vm159, %v4768, %v4772
    %v4774 = vshrl.u32 %v4562, 16
    %v4776 = vor.u32 %v4774, %v4756
    %v4778 = vshll.u32 %v4565, 16
    %v4780 = vrot.slane %v4778, 1
    %v4781 = vsel %vm159, %v4776, %v4780
    %v4782 = vshrl.u32 %v4563, 16
    %v4784 = vor.u32 %v4782, %v4764
    %v4786 = vshll.u32 %v4566, 16
    %v4788 = vrot.slane %v4786, 1
    %v4789 = vsel %vm159, %v4784, %v4788
    %v4790 = vshrl.u32 %v4564, 16
    %v4792 = vor.u32 %v4790, %v4772
    %v4794 = vshll.u32 %v4567, 16
    %v4796 = vrot.slane %v4794, 1
    %v4797 = vsel %vm159, %v4792, %v4796
    %v4798 = vshrl.u32 %v4565, 16
    %v4800 = vor.u32 %v4798, %v4780
    %v4802 = vshll.u32 %v4568, 16
    %v4804 = vrot.slane %v4802, 1
    %v4805 = vsel %vm159, %v4800, %v4804
    %v4806 = vshrl.u32 %v4566, 16
    %v4808 = vor.u32 %v4806, %v4788
    %v4810 = vshll.u32 %v4569, 16
    %v4812 = vrot.slane %v4810, 1
    %v4813 = vsel %vm159, %v4808, %v4812
    %v4814 = vshrl.u32 %v4567, 16
    %v4816 = vor.u32 %v4814, %v4796
    %v4818 = vshll.u32 %v4570, 16
    %v4820 = vrot.slane %v4818, 1
    %v4821 = vsel %vm159, %v4816, %v4820
    %v4822 = vshrl.u32 %v4568, 16
    %v4824 = vor.u32 %v4822, %v4804
    %v4826 = vshll.u32 %v4571, 16
    %v4828 = vrot.slane %v4826, 1
    %v4829 = vsel %vm159, %v4824, %v4828
    %v4830 = vshrl.u32 %v4569, 16
    %v4832 = vor.u32 %v4830, %v4812
    %v4834 = vshll.u32 %v4572, 16
    %v4836 = vrot.slane %v4834, 1
    %v4837 = vsel %vm159, %v4832, %v4836
    %v4838 = vshrl.u32 %v4570, 16
    %v4840 = vor.u32 %v4838, %v4820
    %v4842 = vshll.u32 %v4573, 16
    %v4844 = vrot.slane %v4842, 1
    %v4845 = vsel %vm159, %v4840, %v4844
    %v4846 = vshrl.u32 %v4571, 16
    %v4848 = vor.u32 %v4846, %v4828
    %v4850 = vshll.u32 %v4574, 16
    %v4852 = vrot.slane %v4850, 1
    %v4853 = vsel %vm159, %v4848, %v4852
    %v4854 = vshrl.u32 %v4572, 16
    %v4856 = vor.u32 %v4854, %v4836
    %v4858 = vshll.u32 %v4575, 16
    %v4860 = vrot.slane %v4858, 1
    %v4861 = vsel %vm159, %v4856, %v4860
    %v4862 = vshrl.u32 %v4573, 16
    %v4864 = vor.u32 %v4862, %v4844
    %v4866 = vshll.u32 %v4576, 16
    %v4868 = vrot.slane %v4866, 1
    %v4869 = vsel %vm159, %v4864, %v4868
    %v4870 = vshrl.u32 %v4574, 16
    %v4872 = vor.u32 %v4870, %v4852
    %v4874 = vshll.u32 %v4577, 16
    %v4876 = vrot.slane %v4874, 1
    %v4877 = vsel %vm159, %v4872, %v4876
    %v4878 = vshrl.u32 %v4575, 16
    %v4880 = vor.u32 %v4878, %v4860
    %v4882 = vshll.u32 %v4578, 16
    %v4884 = vrot.slane %v4882, 1
    %v4885 = vsel %vm159, %v4880, %v4884
    %v4886 = vshrl.u32 %v4576, 16
    %v4888 = vor.u32 %v4886, %v4868
    %v4890 = vshll.u32 %v4579, 16
    %v4892 = vrot.slane %v4890, 1
    %v4893 = vsel %vm159, %v4888, %v4892
    %v4894 = vshrl.u32 %v4577, 16
    %v4896 = vor.u32 %v4894, %v4876
    %v4898 = vshll.u32 %v4580, 16
    %v4900 = vrot.slane %v4898, 1
    %v4901 = vsel %vm159, %v4896, %v4900
    %v4902 = vshrl.u32 %v4578, 16
    %v4904 = vor.u32 %v4902, %v4884
    %v4906 = vshll.u32 %v4581, 16
    %v4908 = vrot.slane %v4906, 1
    %v4909 = vsel %vm159, %v4904, %v4908
    %v4910 = vshrl.u32 %v4579, 16
    %v4912 = vor.u32 %v4910, %v4892
    %v4914 = vshll.u32 %v4582, 16
    %v4916 = vrot.slane %v4914, 1
    %v4917 = vsel %vm159, %v4912, %v4916
    %v4918 = vshrl.u32 %v4580, 16
    %v4920 = vor.u32 %v4918, %v4900
    %v4922 = vshll.u32 %v4583, 16
    %v4924 = vrot.slane %v4922, 1
    %v4925 = vsel %vm159, %v4920, %v4924
    %v4926 = vshrl.u32 %v4581, 16
    %v4928 = vor.u32 %v4926, %v4908
    %v4929 = vshrl.u32 %v4582, 16
    %v4931 = vor.u32 %v4929, %v4916
    %v4932 = vshrl.u32 %v4583, 16
    %v4934 = vor.u32 %v4932, %v4924
    %vm4956 = vcmask 1043456
    %vm4957 = vsmask.f32 3328
    %vm4958 = vmand %vm4956, %vm4957
    %v4959 = vsel %vm4958, %v4928, 0
    %v4960 = vsel %vm4958, %v4931, 0
    %v4961 = vsel %vm4958, %v4934, 0
    %s4962 = scalar_lea.vmem %s5, 760
    %v4963 = vld [vmem:[%s4962] sm:$0xff]
    %v4964 = vld [vmem:[%s4962 + $0x8] sm:$0xff]
    %v4965 = vld [vmem:[%s4962 + $0x10] sm:$0xf]
    %v4966 = vld [vmem:[%s4962 + $0x14] sm:$0xff]
    %v4967 = vld [vmem:[%s4962 + $0x1c] sm:$0xff]
    %v4968 = vld [vmem:[%s4962 + $0x24] sm:$0xf]
    %v4969 = vld [vmem:[%s4962 + $0x28] sm:$0xff]
    %v4970 = vld [vmem:[%s4962 + $0x30] sm:$0xff]
    %v4971 = vld [vmem:[%s4962 + $0x38] sm:$0xf]
    %v4972 = vld [vmem:[%s4962 + $0x3c] sm:$0xff]
    %v4973 = vld [vmem:[%s4962 + $0x44] sm:$0xff]
    %v4974 = vld [vmem:[%s4962 + $0x4c] sm:$0xf]
    %v4975 = vld [vmem:[%s4962 + $0x50] sm:$0xff]
    %v4976 = vld [vmem:[%s4962 + $0x58] sm:$0xff]
    %v4977 = vld [vmem:[%s4962 + $0x60] sm:$0xf]
    %v4978 = vld [vmem:[%s4962 + $0x64] sm:$0xff]
    %v4979 = vld [vmem:[%s4962 + $0x6c] sm:$0xff]
    %v4980 = vld [vmem:[%s4962 + $0x74] sm:$0xf]
    %v4981 = vld [vmem:[%s4962 + $0x78] sm:$0xff]
    %v4982 = vld [vmem:[%s4962 + $0x80] sm:$0xff]
    %v4983 = vld [vmem:[%s4962 + $0x88] sm:$0xf]
    %v4984 = vld [vmem:[%s4962 + $0x8c] sm:$0xff]
    %v4985 = vld [vmem:[%s4962 + $0x94] sm:$0xff]
    %v4986 = vld [vmem:[%s4962 + $0x9c] sm:$0xf]
    %v4987 = vld [vmem:[%s4962 + $0xa0] sm:$0xff]
    %v4988 = vld [vmem:[%s4962 + $0xa8] sm:$0xff]
    %v4989 = vld [vmem:[%s4962 + $0xb0] sm:$0xf]
    %v4990 = vld [vmem:[%s4962 + $0xb4] sm:$0xff]
    %v4991 = vld [vmem:[%s4962 + $0xbc] sm:$0xff]
    %v4992 = vld [vmem:[%s4962 + $0xc4] sm:$0xf]
    %v4993 = vld [vmem:[%s4962 + $0xc8] sm:$0xff]
    %v4994 = vld [vmem:[%s4962 + $0xd0] sm:$0xff]
    %v4995 = vld [vmem:[%s4962 + $0xd8] sm:$0xf]
    %v4996 = vld [vmem:[%s4962 + $0xdc] sm:$0xff]
    %v4997 = vld [vmem:[%s4962 + $0xe4] sm:$0xff]
    %v4998 = vld [vmem:[%s4962 + $0xec] sm:$0xf]
    %v4999 = vld [vmem:[%s4962 + $0xf0] sm:$0xff]
    %v5000 = vld [vmem:[%s4962 + $0xf8] sm:$0xff]
    %v5001 = vld [vmem:[%s4962 + $0x100] sm:$0xf]
    %v5002 = vld [vmem:[%s4962 + $0x104] sm:$0xff]
    %v5003 = vld [vmem:[%s4962 + $0x10c] sm:$0xff]
    %v5004 = vld [vmem:[%s4962 + $0x114] sm:$0xf]
    %v5005 = vld [vmem:[%s4962 + $0x118] sm:$0xff]
    %v5006 = vld [vmem:[%s4962 + $0x120] sm:$0xff]
    %v5007 = vld [vmem:[%s4962 + $0x128] sm:$0xf]
    %v5008 = vld [vmem:[%s4962 + $0x12c] sm:$0xff]
    %v5009 = vld [vmem:[%s4962 + $0x134] sm:$0xff]
    %v5010 = vld [vmem:[%s4962 + $0x13c] sm:$0xf]
    %v5011 = vld [vmem:[%s4962 + $0x140] sm:$0xff]
    %v5012 = vld [vmem:[%s4962 + $0x148] sm:$0xff]
    %v5013 = vld [vmem:[%s4962 + $0x150] sm:$0xf]
    %v5014 = vld [vmem:[%s4962 + $0x154] sm:$0xff]
    %v5015 = vld [vmem:[%s4962 + $0x15c] sm:$0xff]
    %v5016 = vld [vmem:[%s4962 + $0x164] sm:$0xf]
    %v5017 = vld [vmem:[%s4962 + $0x168] sm:$0xff]
    %v5018 = vld [vmem:[%s4962 + $0x170] sm:$0xff]
    %v5019 = vld [vmem:[%s4962 + $0x178] sm:$0xf]
    %v5020 = vld [vmem:[%s4962 + $0x17c] sm:$0xff]
    %v5021 = vld [vmem:[%s4962 + $0x184] sm:$0xff]
    %v5022 = vld [vmem:[%s4962 + $0x18c] sm:$0xf]
    %v5023 = vld [vmem:[%s4962 + $0x190] sm:$0xff]
    %v5024 = vld [vmem:[%s4962 + $0x198] sm:$0xff]
    %v5025 = vld [vmem:[%s4962 + $0x1a0] sm:$0xf]
    %v5026 = vld [vmem:[%s4962 + $0x1a4] sm:$0xff]
    %v5027 = vld [vmem:[%s4962 + $0x1ac] sm:$0xff]
    %v5028 = vld [vmem:[%s4962 + $0x1b4] sm:$0xf]
    %v5029 = vld [vmem:[%s4962 + $0x1b8] sm:$0xff]
    %v5030 = vld [vmem:[%s4962 + $0x1c0] sm:$0xff]
    %v5031 = vld [vmem:[%s4962 + $0x1c8] sm:$0xf]
    %v5032 = vld [vmem:[%s4962 + $0x1cc] sm:$0xff]
    %v5033 = vld [vmem:[%s4962 + $0x1d4] sm:$0xff]
    %v5034 = vld [vmem:[%s4962 + $0x1dc] sm:$0xf]
    %v5035 = vld [vmem:[%s4962 + $0x1e0] sm:$0xff]
    %v5036 = vld [vmem:[%s4962 + $0x1e8] sm:$0xff]
    %v5037 = vld [vmem:[%s4962 + $0x1f0] sm:$0xf]
    %v5038 = vld [vmem:[%s4962 + $0x1f4] sm:$0xff]
    %v5039 = vld [vmem:[%s4962 + $0x1fc] sm:$0xff]
    %v5040 = vld [vmem:[%s4962 + $0x204] sm:$0xf]
    %v5041 = vld [vmem:[%s4962 + $0x208] sm:$0xff]
    %v5042 = vld [vmem:[%s4962 + $0x210] sm:$0xff]
    %v5043 = vld [vmem:[%s4962 + $0x218] sm:$0xf]
    %v5044 = vld [vmem:[%s4962 + $0x21c] sm:$0xff]
    %v5045 = vld [vmem:[%s4962 + $0x224] sm:$0xff]
    %v5046 = vld [vmem:[%s4962 + $0x22c] sm:$0xf]
    %v5047 = vld [vmem:[%s4962 + $0x230] sm:$0xff]
    %v5048 = vld [vmem:[%s4962 + $0x238] sm:$0xff]
    %v5049 = vld [vmem:[%s4962 + $0x240] sm:$0xf]
    %v5050 = vld [vmem:[%s4962 + $0x244] sm:$0xff]
    %v5051 = vld [vmem:[%s4962 + $0x24c] sm:$0xff]
    %v5052 = vld [vmem:[%s4962 + $0x254] sm:$0xf]
    %v5053 = vld [vmem:[%s4962 + $0x258] sm:$0xff]
    %v5054 = vld [vmem:[%s4962 + $0x260] sm:$0xff]
    %v5055 = vld [vmem:[%s4962 + $0x268] sm:$0xf]
    %v5056 = vld [vmem:[%s4962 + $0x26c] sm:$0xff]
    %v5057 = vld [vmem:[%s4962 + $0x274] sm:$0xff]
    %v5058 = vld [vmem:[%s4962 + $0x27c] sm:$0xf]
    %v5059 = vld [vmem:[%s4962 + $0x280] sm:$0xff]
    %v5060 = vld [vmem:[%s4962 + $0x288] sm:$0xff]
    %v5061 = vld [vmem:[%s4962 + $0x290] sm:$0xf]
    %v5062 = vld [vmem:[%s4962 + $0x294] sm:$0xff]
    %v5063 = vld [vmem:[%s4962 + $0x29c] sm:$0xff]
    %v5064 = vld [vmem:[%s4962 + $0x2a4] sm:$0xf]
    %v5065 = vld [vmem:[%s4962 + $0x2a8] sm:$0xff]
    %v5066 = vld [vmem:[%s4962 + $0x2b0] sm:$0xff]
    %v5067 = vld [vmem:[%s4962 + $0x2b8] sm:$0xf]
    %v5068 = vld [vmem:[%s4962 + $0x2bc] sm:$0xff]
    %v5069 = vld [vmem:[%s4962 + $0x2c4] sm:$0xff]
    %v5070 = vld [vmem:[%s4962 + $0x2cc] sm:$0xf]
    %v5071 = vld [vmem:[%s4962 + $0x2d0] sm:$0xff]
    %v5072 = vld [vmem:[%s4962 + $0x2d8] sm:$0xff]
    %v5073 = vld [vmem:[%s4962 + $0x2e0] sm:$0xf]
    %v5074 = vld [vmem:[%s4962 + $0x2e4] sm:$0xff]
    %v5075 = vld [vmem:[%s4962 + $0x2ec] sm:$0xff]
    %v5076 = vld [vmem:[%s4962 + $0x2f4] sm:$0xf]
    %v5191 = vunpack.c.l.b16 %v4963
    %v5192 = vunpack.c.h.b16 %v4963
    %v5193 = vunpack.c.l.b16 %v4964
    %v5194 = vunpack.c.h.b16 %v4964
    %v5195 = vunpack.c.l.b16 %v4965
    %v5196 = vunpack.c.l.b16 %v4966
    %v5197 = vunpack.c.h.b16 %v4966
    %v5198 = vunpack.c.l.b16 %v4967
    %v5199 = vunpack.c.h.b16 %v4967
    %v5200 = vunpack.c.l.b16 %v4968
    %v5201 = vunpack.c.l.b16 %v4969
    %v5202 = vunpack.c.h.b16 %v4969
    %v5203 = vunpack.c.l.b16 %v4970
    %v5204 = vunpack.c.h.b16 %v4970
    %v5205 = vunpack.c.l.b16 %v4971
    %v5206 = vunpack.c.l.b16 %v4972
    %v5207 = vunpack.c.h.b16 %v4972
    %v5208 = vunpack.c.l.b16 %v4973
    %v5209 = vunpack.c.h.b16 %v4973
    %v5210 = vunpack.c.l.b16 %v4974
    %v5211 = vunpack.c.l.b16 %v4975
    %v5212 = vunpack.c.h.b16 %v4975
    %v5213 = vunpack.c.l.b16 %v4976
    %v5214 = vunpack.c.h.b16 %v4976
    %v5215 = vunpack.c.l.b16 %v4977
    %v5216 = vunpack.c.l.b16 %v4978
    %v5217 = vunpack.c.h.b16 %v4978
    %v5218 = vunpack.c.l.b16 %v4979
    %v5219 = vunpack.c.h.b16 %v4979
    %v5220 = vunpack.c.l.b16 %v4980
    %v5221 = vunpack.c.l.b16 %v4981
    %v5222 = vunpack.c.h.b16 %v4981
    %v5223 = vunpack.c.l.b16 %v4982
    %v5224 = vunpack.c.h.b16 %v4982
    %v5225 = vunpack.c.l.b16 %v4983
    %v5226 = vunpack.c.l.b16 %v4984
    %v5227 = vunpack.c.h.b16 %v4984
    %v5228 = vunpack.c.l.b16 %v4985
    %v5229 = vunpack.c.h.b16 %v4985
    %v5230 = vunpack.c.l.b16 %v4986
    %v5231 = vunpack.c.l.b16 %v4987
    %v5232 = vunpack.c.h.b16 %v4987
    %v5233 = vunpack.c.l.b16 %v4988
    %v5234 = vunpack.c.h.b16 %v4988
    %v5235 = vunpack.c.l.b16 %v4989
    %v5236 = vunpack.c.l.b16 %v4990
    %v5237 = vunpack.c.h.b16 %v4990
    %v5238 = vunpack.c.l.b16 %v4991
    %v5239 = vunpack.c.h.b16 %v4991
    %v5240 = vunpack.c.l.b16 %v4992
    %v5241 = vunpack.c.l.b16 %v4993
    %v5242 = vunpack.c.h.b16 %v4993
    %v5243 = vunpack.c.l.b16 %v4994
    %v5244 = vunpack.c.h.b16 %v4994
    %v5245 = vunpack.c.l.b16 %v4995
    %v5246 = vunpack.c.l.b16 %v4996
    %v5247 = vunpack.c.h.b16 %v4996
    %v5248 = vunpack.c.l.b16 %v4997
    %v5249 = vunpack.c.h.b16 %v4997
    %v5250 = vunpack.c.l.b16 %v4998
    %v5251 = vunpack.c.l.b16 %v4999
    %v5252 = vunpack.c.h.b16 %v4999
    %v5253 = vunpack.c.l.b16 %v5000
    %v5254 = vunpack.c.h.b16 %v5000
    %v5255 = vunpack.c.l.b16 %v5001
    %v5256 = vunpack.c.l.b16 %v5002
    %v5257 = vunpack.c.h.b16 %v5002
    %v5258 = vunpack.c.l.b16 %v5003
    %v5259 = vunpack.c.h.b16 %v5003
    %v5260 = vunpack.c.l.b16 %v5004
    %v5261 = vunpack.c.l.b16 %v5005
    %v5262 = vunpack.c.h.b16 %v5005
    %v5263 = vunpack.c.l.b16 %v5006
    %v5264 = vunpack.c.h.b16 %v5006
    %v5265 = vunpack.c.l.b16 %v5007
    %v5266 = vunpack.c.l.b16 %v5008
    %v5267 = vunpack.c.h.b16 %v5008
    %v5268 = vunpack.c.l.b16 %v5009
    %v5269 = vunpack.c.h.b16 %v5009
    %v5270 = vunpack.c.l.b16 %v5010
    %v5271 = vunpack.c.l.b16 %v5011
    %v5272 = vunpack.c.h.b16 %v5011
    %v5273 = vunpack.c.l.b16 %v5012
    %v5274 = vunpack.c.h.b16 %v5012
    %v5275 = vunpack.c.l.b16 %v5013
    %v5276 = vunpack.c.l.b16 %v5014
    %v5277 = vunpack.c.h.b16 %v5014
    %v5278 = vunpack.c.l.b16 %v5015
    %v5279 = vunpack.c.h.b16 %v5015
    %v5280 = vunpack.c.l.b16 %v5016
    %v5281 = vunpack.c.l.b16 %v5017
    %v5282 = vunpack.c.h.b16 %v5017
    %v5283 = vunpack.c.l.b16 %v5018
    %v5284 = vunpack.c.h.b16 %v5018
    %v5285 = vunpack.c.l.b16 %v5019
    %v5286 = vunpack.c.l.b16 %v5020
    %v5287 = vunpack.c.h.b16 %v5020
    %v5288 = vunpack.c.l.b16 %v5021
    %v5289 = vunpack.c.h.b16 %v5021
    %v5290 = vunpack.c.l.b16 %v5022
    %v5291 = vunpack.c.l.b16 %v5023
    %v5292 = vunpack.c.h.b16 %v5023
    %v5293 = vunpack.c.l.b16 %v5024
    %v5294 = vunpack.c.h.b16 %v5024
    %v5295 = vunpack.c.l.b16 %v5025
    %v5296 = vunpack.c.l.b16 %v5026
    %v5297 = vunpack.c.h.b16 %v5026
    %v5298 = vunpack.c.l.b16 %v5027
    %v5299 = vunpack.c.h.b16 %v5027
    %v5300 = vunpack.c.l.b16 %v5028
    %v5301 = vunpack.c.l.b16 %v5029
    %v5302 = vunpack.c.h.b16 %v5029
    %v5303 = vunpack.c.l.b16 %v5030
    %v5304 = vunpack.c.h.b16 %v5030
    %v5305 = vunpack.c.l.b16 %v5031
    %v5306 = vunpack.c.l.b16 %v5032
    %v5307 = vunpack.c.h.b16 %v5032
    %v5308 = vunpack.c.l.b16 %v5033
    %v5309 = vunpack.c.h.b16 %v5033
    %v5310 = vunpack.c.l.b16 %v5034
    %v5311 = vunpack.c.l.b16 %v5035
    %v5312 = vunpack.c.h.b16 %v5035
    %v5313 = vunpack.c.l.b16 %v5036
    %v5314 = vunpack.c.h.b16 %v5036
    %v5315 = vunpack.c.l.b16 %v5037
    %v5316 = vunpack.c.l.b16 %v5038
    %v5317 = vunpack.c.h.b16 %v5038
    %v5318 = vunpack.c.l.b16 %v5039
    %v5319 = vunpack.c.h.b16 %v5039
    %v5320 = vunpack.c.l.b16 %v5040
    %v5321 = vunpack.c.l.b16 %v5041
    %v5322 = vunpack.c.h.b16 %v5041
    %v5323 = vunpack.c.l.b16 %v5042
    %v5324 = vunpack.c.h.b16 %v5042
    %v5325 = vunpack.c.l.b16 %v5043
    %v5326 = vunpack.c.l.b16 %v5044
    %v5327 = vunpack.c.h.b16 %v5044
    %v5328 = vunpack.c.l.b16 %v5045
    %v5329 = vunpack.c.h.b16 %v5045
    %v5330 = vunpack.c.l.b16 %v5046
    %v5331 = vunpack.c.l.b16 %v5047
    %v5332 = vunpack.c.h.b16 %v5047
    %v5333 = vunpack.c.l.b16 %v5048
    %v5334 = vunpack.c.h.b16 %v5048
    %v5335 = vunpack.c.l.b16 %v5049
    %v5336 = vunpack.c.l.b16 %v5050
    %v5337 = vunpack.c.h.b16 %v5050
    %v5338 = vunpack.c.l.b16 %v5051
    %v5339 = vunpack.c.h.b16 %v5051
    %v5340 = vunpack.c.l.b16 %v5052
    %v5341 = vunpack.c.l.b16 %v5053
    %v5342 = vunpack.c.h.b16 %v5053
    %v5343 = vunpack.c.l.b16 %v5054
    %v5344 = vunpack.c.h.b16 %v5054
    %v5345 = vunpack.c.l.b16 %v5055
    %v5346 = vunpack.c.l.b16 %v5056
    %v5347 = vunpack.c.h.b16 %v5056
    %v5348 = vunpack.c.l.b16 %v5057
    %v5349 = vunpack.c.h.b16 %v5057
    %v5350 = vunpack.c.l.b16 %v5058
    %v5351 = vunpack.c.l.b16 %v5059
    %v5352 = vunpack.c.h.b16 %v5059
    %v5353 = vunpack.c.l.b16 %v5060
    %v5354 = vunpack.c.h.b16 %v5060
    %v5355 = vunpack.c.l.b16 %v5061
    %v5356 = vunpack.c.l.b16 %v5062
    %v5357 = vunpack.c.h.b16 %v5062
    %v5358 = vunpack.c.l.b16 %v5063
    %v5359 = vunpack.c.h.b16 %v5063
    %v5360 = vunpack.c.l.b16 %v5064
    %v5361 = vunpack.c.l.b16 %v5065
    %v5362 = vunpack.c.h.b16 %v5065
    %v5363 = vunpack.c.l.b16 %v5066
    %v5364 = vunpack.c.h.b16 %v5066
    %v5365 = vunpack.c.l.b16 %v5067
    %v5366 = vunpack.c.l.b16 %v5068
    %v5367 = vunpack.c.h.b16 %v5068
    %v5368 = vunpack.c.l.b16 %v5069
    %v5369 = vunpack.c.h.b16 %v5069
    %v5370 = vunpack.c.l.b16 %v5070
    %v5371 = vunpack.c.l.b16 %v5071
    %v5372 = vunpack.c.h.b16 %v5071
    %v5373 = vunpack.c.l.b16 %v5072
    %v5374 = vunpack.c.h.b16 %v5072
    %v5375 = vunpack.c.l.b16 %v5073
    %v5376 = vunpack.c.l.b16 %v5074
    %v5377 = vunpack.c.h.b16 %v5074
    %v5378 = vunpack.c.l.b16 %v5075
    %v5379 = vunpack.c.h.b16 %v5075
    %v5380 = vunpack.c.l.b16 %v5076
    %v5381 = vpack.c.b16 %v5196, %v5191
    %v5382 = vpack.c.b16 %v5197, %v5192
    %v5383 = vpack.c.b16 %v5198, %v5193
    %v5384 = vpack.c.b16 %v5199, %v5194
    %v5385 = vpack.c.b16 %v5200, %v5195
    %v5386 = vpack.c.b16 %v5206, %v5201
    %v5387 = vpack.c.b16 %v5207, %v5202
    %v5388 = vpack.c.b16 %v5208, %v5203
    %v5389 = vpack.c.b16 %v5209, %v5204
    %v5390 = vpack.c.b16 %v5210, %v5205
    %v5391 = vpack.c.b16 %v5216, %v5211
    %v5392 = vpack.c.b16 %v5217, %v5212
    %v5393 = vpack.c.b16 %v5218, %v5213
    %v5394 = vpack.c.b16 %v5219, %v5214
    %v5395 = vpack.c.b16 %v5220, %v5215
    %v5396 = vpack.c.b16 %v5226, %v5221
    %v5397 = vpack.c.b16 %v5227, %v5222
    %v5398 = vpack.c.b16 %v5228, %v5223
    %v5399 = vpack.c.b16 %v5229, %v5224
    %v5400 = vpack.c.b16 %v5230, %v5225
    %v5401 = vpack.c.b16 %v5236, %v5231
    %v5402 = vpack.c.b16 %v5237, %v5232
    %v5403 = vpack.c.b16 %v5238, %v5233
    %v5404 = vpack.c.b16 %v5239, %v5234
    %v5405 = vpack.c.b16 %v5240, %v5235
    %v5406 = vpack.c.b16 %v5246, %v5241
    %v5407 = vpack.c.b16 %v5247, %v5242
    %v5408 = vpack.c.b16 %v5248, %v5243
    %v5409 = vpack.c.b16 %v5249, %v5244
    %v5410 = vpack.c.b16 %v5250, %v5245
    %v5411 = vpack.c.b16 %v5256, %v5251
    %v5412 = vpack.c.b16 %v5257, %v5252
    %v5413 = vpack.c.b16 %v5258, %v5253
    %v5414 = vpack.c.b16 %v5259, %v5254
    %v5415 = vpack.c.b16 %v5260, %v5255
    %v5416 = vpack.c.b16 %v5266, %v5261
    %v5417 = vpack.c.b16 %v5267, %v5262
    %v5418 = vpack.c.b16 %v5268, %v5263
    %v5419 = vpack.c.b16 %v5269, %v5264
    %v5420 = vpack.c.b16 %v5270, %v5265
    %v5421 = vpack.c.b16 %v5276, %v5271
    %v5422 = vpack.c.b16 %v5277, %v5272
    %v5423 = vpack.c.b16 %v5278, %v5273
    %v5424 = vpack.c.b16 %v5279, %v5274
    %v5425 = vpack.c.b16 %v5280, %v5275
    %v5426 = vpack.c.b16 %v5286, %v5281
    %v5427 = vpack.c.b16 %v5287, %v5282
    %v5428 = vpack.c.b16 %v5288, %v5283
    %v5429 = vpack.c.b16 %v5289, %v5284
    %v5430 = vpack.c.b16 %v5290, %v5285
    %v5431 = vpack.c.b16 %v5296, %v5291
    %v5432 = vpack.c.b16 %v5297, %v5292
    %v5433 = vpack.c.b16 %v5298, %v5293
    %v5434 = vpack.c.b16 %v5299, %v5294
    %v5435 = vpack.c.b16 %v5300, %v5295
    %v5436 = vpack.c.b16 %v5306, %v5301
    %v5437 = vpack.c.b16 %v5307, %v5302
    %v5438 = vpack.c.b16 %v5308, %v5303
    %v5439 = vpack.c.b16 %v5309, %v5304
    %v5440 = vpack.c.b16 %v5310, %v5305
    %v5441 = vpack.c.b16 %v5316, %v5311
    %v5442 = vpack.c.b16 %v5317, %v5312
    %v5443 = vpack.c.b16 %v5318, %v5313
    %v5444 = vpack.c.b16 %v5319, %v5314
    %v5445 = vpack.c.b16 %v5320, %v5315
    %v5446 = vpack.c.b16 %v5326, %v5321
    %v5447 = vpack.c.b16 %v5327, %v5322
    %v5448 = vpack.c.b16 %v5328, %v5323
    %v5449 = vpack.c.b16 %v5329, %v5324
    %v5450 = vpack.c.b16 %v5330, %v5325
    %v5451 = vpack.c.b16 %v5336, %v5331
    %v5452 = vpack.c.b16 %v5337, %v5332
    %v5453 = vpack.c.b16 %v5338, %v5333
    %v5454 = vpack.c.b16 %v5339, %v5334
    %v5455 = vpack.c.b16 %v5340, %v5335
    %v5456 = vpack.c.b16 %v5346, %v5341
    %v5457 = vpack.c.b16 %v5347, %v5342
    %v5458 = vpack.c.b16 %v5348, %v5343
    %v5459 = vpack.c.b16 %v5349, %v5344
    %v5460 = vpack.c.b16 %v5350, %v5345
    %v5461 = vpack.c.b16 %v5356, %v5351
    %v5462 = vpack.c.b16 %v5357, %v5352
    %v5463 = vpack.c.b16 %v5358, %v5353
    %v5464 = vpack.c.b16 %v5359, %v5354
    %v5465 = vpack.c.b16 %v5360, %v5355
    %v5466 = vpack.c.b16 %v5366, %v5361
    %v5467 = vpack.c.b16 %v5367, %v5362
    %v5468 = vpack.c.b16 %v5368, %v5363
    %v5469 = vpack.c.b16 %v5369, %v5364
    %v5470 = vpack.c.b16 %v5370, %v5365
    %v5471 = vpack.c.b16 %v5376, %v5371
    %v5472 = vpack.c.b16 %v5377, %v5372
    %v5473 = vpack.c.b16 %v5378, %v5373
    %v5474 = vpack.c.b16 %v5379, %v5374
    %v5475 = vpack.c.b16 %v5380, %v5375
    %vm5571 = vcmask 392192
    %v5573 = vsel %vm5571, %v4733, 0
    %v5576 = vsel %vm5571, %v4757, 0
    %v5579 = vsel %vm5571, %v4781, 0
    %v5582 = vsel %vm5571, %v4805, 0
    %v5585 = vsel %vm5571, %v4829, 0
    %v5588 = vsel %vm5571, %v4853, 0
    %v5591 = vsel %vm5571, %v4877, 0
    %v5594 = vsel %vm5571, %v4901, 0
    %v5597 = vsel %vm5571, %v4925, 0
    %v5600 = vsel %vm5571, %v4961, 0
    %5602 = vmatprep.subr.bf16.mxu0 %v5417
    %5603 = vmatpush1.bf16.msra.mxu0 %v5416
    %5604 = vmatprep.subr.bf16.mxu0 %v5412
    %5605 = vmatpush1.bf16.msra.mxu0 %v5411
    %5606 = vmatprep.subr.bf16.mxu0 %v5407
    %5607 = vmatpush1.bf16.msra.mxu0 %v5406
    %5608 = vmatprep.subr.bf16.mxu0 %v5402
    %5609 = vmatpush1.bf16.msra.mxu0 %v5401
    %5610 = vmatprep.subr.bf16.mxu0 %v5397
    %5611 = vmatpush1.bf16.msra.mxu0 %v5396
    %5612 = vmatprep.subr.bf16.mxu0 %v5392
    %5613 = vmatpush1.bf16.msra.mxu0 %v5391
    %5614 = vmatprep.subr.bf16.mxu0 %v5387
    %5615 = vmatpush1.bf16.msra.mxu0 %v5386
    %5616 = vmatprep.subr.bf16.mxu0 %v5382
    %5617 = vmatpush1.bf16.msra.mxu0 %v5381
    %5618 = vmatprep.subr.bf16.mxu0 %v5457
    %5619 = vmatpush2.bf16.msra.mxu0 %v5456
    %5620 = vmatprep.subr.bf16.mxu0 %v5452
    %5621 = vmatpush2.bf16.msra.mxu0 %v5451
    %5622 = vmatprep.subr.bf16.mxu0 %v5447
    %5623 = vmatpush2.bf16.msra.mxu0 %v5446
    %5624 = vmatprep.subr.bf16.mxu0 %v5442
    %5625 = vmatpush2.bf16.msra.mxu0 %v5441
    %5626 = vmatprep.subr.bf16.mxu0 %v5437
    %5627 = vmatpush2.bf16.msra.mxu0 %v5436
    %5628 = vmatprep.subr.bf16.mxu0 %v5432
    %5629 = vmatpush2.bf16.msra.mxu0 %v5431
    %5630 = vmatprep.subr.bf16.mxu0 %v5427
    %5631 = vmatpush2.bf16.msra.mxu0 %v5426
    %5632 = vmatprep.subr.bf16.mxu0 %v5422
    %5633 = vmatpush2.bf16.msra.mxu0 %v5421
    %5634 = vmatprep.mubr.bf16.mxu0 %v4721
    %5635 = vmatmul.mubr.bf16.gmra.mxu0 %v4709
    %v5636 = vpop.f32.mrf.mxu0
    %v5637 = vadd.f32 0.0, %v5636
    %v5638 = vpop.f32.mrf.mxu0
    %v5639 = vadd.f32 0.0, %v5638
    %v5640 = vpop.f32.mrf.mxu0
    %v5641 = vadd.f32 0.0, %v5640
    %v5642 = vpop.f32.mrf.mxu0
    %v5643 = vadd.f32 0.0, %v5642
    %5644 = vmatprep.mubr.bf16.mxu0 %v4749
    %5645 = vmatmul.mubr.bf16.gmra.mxu0 %v4741
    %v5646 = vpop.f32.mrf.mxu0
    %v5647 = vadd.f32 0.0, %v5646
    %v5648 = vpop.f32.mrf.mxu0
    %v5649 = vadd.f32 0.0, %v5648
    %v5650 = vpop.f32.mrf.mxu0
    %v5651 = vadd.f32 0.0, %v5650
    %v5652 = vpop.f32.mrf.mxu0
    %v5653 = vadd.f32 0.0, %v5652
    %5654 = vmatprep.mubr.bf16.mxu0 %v4773
    %5655 = vmatmul.mubr.bf16.gmra.mxu0 %v4765
    %v5656 = vpop.f32.mrf.mxu0
    %v5657 = vadd.f32 0.0, %v5656
    %v5658 = vpop.f32.mrf.mxu0
    %v5659 = vadd.f32 0.0, %v5658
    %v5660 = vpop.f32.mrf.mxu0
    %v5661 = vadd.f32 0.0, %v5660
    %v5662 = vpop.f32.mrf.mxu0
    %v5663 = vadd.f32 0.0, %v5662
    %5664 = vmatprep.mubr.bf16.mxu0 %v4797
    %5665 = vmatmul.mubr.bf16.gmra.mxu0 %v4789
    %v5666 = vpop.f32.mrf.mxu0
    %v5667 = vadd.f32 0.0, %v5666
    %v5668 = vpop.f32.mrf.mxu0
    %v5669 = vadd.f32 0.0, %v5668
    %v5670 = vpop.f32.mrf.mxu0
    %v5671 = vadd.f32 0.0, %v5670
    %v5672 = vpop.f32.mrf.mxu0
    %v5673 = vadd.f32 0.0, %v5672
    %5674 = vmatprep.mubr.bf16.mxu0 %v4821
    %5675 = vmatmul.mubr.bf16.gmra.mxu0 %v4813
    %v5676 = vpop.f32.mrf.mxu0
    %v5677 = vadd.f32 0.0, %v5676
    %v5678 = vpop.f32.mrf.mxu0
    %v5679 = vadd.f32 0.0, %v5678
    %v5680 = vpop.f32.mrf.mxu0
    %v5681 = vadd.f32 0.0, %v5680
    %v5682 = vpop.f32.mrf.mxu0
    %v5683 = vadd.f32 0.0, %v5682
    %5684 = vmatprep.mubr.bf16.mxu0 %v4845
    %5685 = vmatmul.mubr.bf16.gmra.mxu0 %v4837
    %v5686 = vpop.f32.mrf.mxu0
    %v5687 = vadd.f32 0.0, %v5686
    %v5688 = vpop.f32.mrf.mxu0
    %v5689 = vadd.f32 0.0, %v5688
    %v5690 = vpop.f32.mrf.mxu0
    %v5691 = vadd.f32 0.0, %v5690
    %v5692 = vpop.f32.mrf.mxu0
    %v5693 = vadd.f32 0.0, %v5692
    %5694 = vmatprep.mubr.bf16.mxu0 %v4869
    %5695 = vmatmul.mubr.bf16.gmra.mxu0 %v4861
    %v5696 = vpop.f32.mrf.mxu0
    %v5697 = vadd.f32 0.0, %v5696
    %v5698 = vpop.f32.mrf.mxu0
    %v5699 = vadd.f32 0.0, %v5698
    %v5700 = vpop.f32.mrf.mxu0
    %v5701 = vadd.f32 0.0, %v5700
    %v5702 = vpop.f32.mrf.mxu0
    %v5703 = vadd.f32 0.0, %v5702
    %5704 = vmatprep.mubr.bf16.mxu0 %v4893
    %5705 = vmatmul.mubr.bf16.gmra.mxu0 %v4885
    %v5706 = vpop.f32.mrf.mxu0
    %v5707 = vadd.f32 0.0, %v5706
    %v5708 = vpop.f32.mrf.mxu0
    %v5709 = vadd.f32 0.0, %v5708
    %v5710 = vpop.f32.mrf.mxu0
    %v5711 = vadd.f32 0.0, %v5710
    %v5712 = vpop.f32.mrf.mxu0
    %v5713 = vadd.f32 0.0, %v5712
    %5714 = vmatprep.mubr.bf16.mxu0 %v4917
    %5715 = vmatmul.mubr.bf16.gmra.mxu0 %v4909
    %v5716 = vpop.f32.mrf.mxu0
    %v5717 = vadd.f32 0.0, %v5716
    %v5718 = vpop.f32.mrf.mxu0
    %v5719 = vadd.f32 0.0, %v5718
    %v5720 = vpop.f32.mrf.mxu0
    %v5721 = vadd.f32 0.0, %v5720
    %v5722 = vpop.f32.mrf.mxu0
    %v5723 = vadd.f32 0.0, %v5722
    %5724 = vmatprep.mubr.bf16.mxu0 %v4960
    %5725 = vmatmul.mubr.bf16.gmra.mxu0 %v4959
    %v5726 = vpop.f32.mrf.mxu0
    %v5727 = vadd.f32 0.0, %v5726
    %v5728 = vpop.f32.mrf.mxu0
    %v5729 = vadd.f32 0.0, %v5728
    %v5730 = vpop.f32.mrf.mxu0
    %v5731 = vpop.f32.mrf.mxu0
    %5732 = vdwg.mxu0
    %5733 = vmatprep.subr.bf16.mxu0 0
    %5734 = vmatpush1.bf16.msra.mxu0 0
    %5735 = vmatprep.subr.bf16.mxu0 0
    %5736 = vmatpush1.bf16.msra.mxu0 0
    %5737 = vmatprep.subr.bf16.mxu0 0
    %5738 = vmatpush1.bf16.msra.mxu0 0
    %5739 = vmatprep.subr.bf16.mxu0 0
    %5740 = vmatpush1.bf16.msra.mxu0 0
    %5741 = vmatprep.subr.bf16.mxu0 0
    %5742 = vmatpush1.bf16.msra.mxu0 0
    %5743 = vmatprep.subr.bf16.mxu0 %v5472
    %5744 = vmatpush1.bf16.msra.mxu0 %v5471
    %5745 = vmatprep.subr.bf16.mxu0 %v5467
    %5746 = vmatpush1.bf16.msra.mxu0 %v5466
    %5747 = vmatprep.subr.bf16.mxu0 %v5462
    %5748 = vmatpush1.bf16.msra.mxu0 %v5461
    %5749 = vmatprep.subr.bf16.mxu0 0
    %5750 = vmatpush2.bf16.msra.mxu0 0
    %5751 = vmatprep.subr.bf16.mxu0 0
    %5752 = vmatpush2.bf16.msra.mxu0 0
    %5753 = vmatprep.subr.bf16.mxu0 0
    %5754 = vmatpush2.bf16.msra.mxu0 0
    %5755 = vmatprep.subr.bf16.mxu0 0
    %5756 = vmatpush2.bf16.msra.mxu0 0
    %5757 = vmatprep.subr.bf16.mxu0 0
    %5758 = vmatpush2.bf16.msra.mxu0 0
    %5759 = vmatprep.subr.bf16.mxu0 0
    %5760 = vmatpush2.bf16.msra.mxu0 0
    %5761 = vmatprep.subr.bf16.mxu0 0
    %5762 = vmatpush2.bf16.msra.mxu0 0
    %5763 = vmatprep.subr.bf16.mxu0 0
    %5764 = vmatpush2.bf16.msra.mxu0 0
    %5765 = vmatprep.mubr.bf16.mxu0 0
    %5766 = vmatmul.mubr.bf16.gmra.mxu0 %v5573
    %v5767 = vpop.f32.mrf.mxu0
    %v5768 = vadd.f32 %v5637, %v5767
    %v5769 = vpop.f32.mrf.mxu0
    %v5770 = vadd.f32 %v5639, %v5769
    %v5771 = vpop.f32.mrf.mxu0
    %v5772 = vadd.f32 %v5641, %v5771
    %v5773 = vpop.f32.mrf.mxu0
    %v5774 = vadd.f32 %v5643, %v5773
    %5775 = vmatprep.mubr.bf16.mxu0 0
    %5776 = vmatmul.mubr.bf16.gmra.mxu0 %v5576
    %v5777 = vpop.f32.mrf.mxu0
    %v5778 = vadd.f32 %v5647, %v5777
    %v5779 = vpop.f32.mrf.mxu0
    %v5780 = vadd.f32 %v5649, %v5779
    %v5781 = vpop.f32.mrf.mxu0
    %v5782 = vadd.f32 %v5651, %v5781
    %v5783 = vpop.f32.mrf.mxu0
    %v5784 = vadd.f32 %v5653, %v5783
    %5785 = vmatprep.mubr.bf16.mxu0 0
    %5786 = vmatmul.mubr.bf16.gmra.mxu0 %v5579
    %v5787 = vpop.f32.mrf.mxu0
    %v5788 = vadd.f32 %v5657, %v5787
    %v5789 = vpop.f32.mrf.mxu0
    %v5790 = vadd.f32 %v5659, %v5789
    %v5791 = vpop.f32.mrf.mxu0
    %v5792 = vadd.f32 %v5661, %v5791
    %v5793 = vpop.f32.mrf.mxu0
    %v5794 = vadd.f32 %v5663, %v5793
    %5795 = vmatprep.mubr.bf16.mxu0 0
    %5796 = vmatmul.mubr.bf16.gmra.mxu0 %v5582
    %v5797 = vpop.f32.mrf.mxu0
    %v5798 = vadd.f32 %v5667, %v5797
    %v5799 = vpop.f32.mrf.mxu0
    %v5800 = vadd.f32 %v5669, %v5799
    %v5801 = vpop.f32.mrf.mxu0
    %v5802 = vadd.f32 %v5671, %v5801
    %v5803 = vpop.f32.mrf.mxu0
    %v5804 = vadd.f32 %v5673, %v5803
    %5805 = vmatprep.mubr.bf16.mxu0 0
    %5806 = vmatmul.mubr.bf16.gmra.mxu0 %v5585
    %v5807 = vpop.f32.mrf.mxu0
    %v5808 = vadd.f32 %v5677, %v5807
    %v5809 = vpop.f32.mrf.mxu0
    %v5810 = vadd.f32 %v5679, %v5809
    %v5811 = vpop.f32.mrf.mxu0
    %v5812 = vadd.f32 %v5681, %v5811
    %v5813 = vpop.f32.mrf.mxu0
    %v5814 = vadd.f32 %v5683, %v5813
    %5815 = vmatprep.mubr.bf16.mxu0 0
    %5816 = vmatmul.mubr.bf16.gmra.mxu0 %v5588
    %v5817 = vpop.f32.mrf.mxu0
    %v5818 = vadd.f32 %v5687, %v5817
    %v5819 = vpop.f32.mrf.mxu0
    %v5820 = vadd.f32 %v5689, %v5819
    %v5821 = vpop.f32.mrf.mxu0
    %v5822 = vadd.f32 %v5691, %v5821
    %v5823 = vpop.f32.mrf.mxu0
    %v5824 = vadd.f32 %v5693, %v5823
    %5825 = vmatprep.mubr.bf16.mxu0 0
    %5826 = vmatmul.mubr.bf16.gmra.mxu0 %v5591
    %v5827 = vpop.f32.mrf.mxu0
    %v5828 = vadd.f32 %v5697, %v5827
    %v5829 = vpop.f32.mrf.mxu0
    %v5830 = vadd.f32 %v5699, %v5829
    %v5831 = vpop.f32.mrf.mxu0
    %v5832 = vadd.f32 %v5701, %v5831
    %v5833 = vpop.f32.mrf.mxu0
    %v5834 = vadd.f32 %v5703, %v5833
    %5835 = vmatprep.mubr.bf16.mxu0 0
    %5836 = vmatmul.mubr.bf16.gmra.mxu0 %v5594
    %v5837 = vpop.f32.mrf.mxu0
    %v5838 = vadd.f32 %v5707, %v5837
    %v5839 = vpop.f32.mrf.mxu0
    %v5840 = vadd.f32 %v5709, %v5839
    %v5841 = vpop.f32.mrf.mxu0
    %v5842 = vadd.f32 %v5711, %v5841
    %v5843 = vpop.f32.mrf.mxu0
    %v5844 = vadd.f32 %v5713, %v5843
    %5845 = vmatprep.mubr.bf16.mxu0 0
    %5846 = vmatmul.mubr.bf16.gmra.mxu0 %v5597
    %v5847 = vpop.f32.mrf.mxu0
    %v5848 = vadd.f32 %v5717, %v5847
    %v5849 = vpop.f32.mrf.mxu0
    %v5850 = vadd.f32 %v5719, %v5849
    %v5851 = vpop.f32.mrf.mxu0
    %v5852 = vadd.f32 %v5721, %v5851
    %v5853 = vpop.f32.mrf.mxu0
    %v5854 = vadd.f32 %v5723, %v5853
    %5855 = vmatprep.mubr.bf16.mxu0 0
    %5856 = vmatmul.mubr.bf16.gmra.mxu0 %v5600
    %v5857 = vpop.f32.mrf.mxu0
    %v5858 = vadd.f32 %v5727, %v5857
    %v5859 = vpop.f32.mrf.mxu0
    %v5860 = vadd.f32 %v5729, %v5859
    %v5861 = vpop.f32.mrf.mxu0
    %v5862 = vpop.f32.mrf.mxu0
    %5863 = vdwg.mxu0
    %5864 = vmatprep.subr.bf16.mxu0 %v5419
    %5865 = vmatpush1.bf16.msra.mxu0 %v5418
    %5866 = vmatprep.subr.bf16.mxu0 %v5414
    %5867 = vmatpush1.bf16.msra.mxu0 %v5413
    %5868 = vmatprep.subr.bf16.mxu0 %v5409
    %5869 = vmatpush1.bf16.msra.mxu0 %v5408
    %5870 = vmatprep.subr.bf16.mxu0 %v5404
    %5871 = vmatpush1.bf16.msra.mxu0 %v5403
    %5872 = vmatprep.subr.bf16.mxu0 %v5399
    %5873 = vmatpush1.bf16.msra.mxu0 %v5398
    %5874 = vmatprep.subr.bf16.mxu0 %v5394
    %5875 = vmatpush1.bf16.msra.mxu0 %v5393
    %5876 = vmatprep.subr.bf16.mxu0 %v5389
    %5877 = vmatpush1.bf16.msra.mxu0 %v5388
    %5878 = vmatprep.subr.bf16.mxu0 %v5384
    %5879 = vmatpush1.bf16.msra.mxu0 %v5383
    %5880 = vmatprep.subr.bf16.mxu0 %v5459
    %5881 = vmatpush2.bf16.msra.mxu0 %v5458
    %5882 = vmatprep.subr.bf16.mxu0 %v5454
    %5883 = vmatpush2.bf16.msra.mxu0 %v5453
    %5884 = vmatprep.subr.bf16.mxu0 %v5449
    %5885 = vmatpush2.bf16.msra.mxu0 %v5448
    %5886 = vmatprep.subr.bf16.mxu0 %v5444
    %5887 = vmatpush2.bf16.msra.mxu0 %v5443
    %5888 = vmatprep.subr.bf16.mxu0 %v5439
    %5889 = vmatpush2.bf16.msra.mxu0 %v5438
    %5890 = vmatprep.subr.bf16.mxu0 %v5434
    %5891 = vmatpush2.bf16.msra.mxu0 %v5433
    %5892 = vmatprep.subr.bf16.mxu0 %v5429
    %5893 = vmatpush2.bf16.msra.mxu0 %v5428
    %5894 = vmatprep.subr.bf16.mxu0 %v5424
    %5895 = vmatpush2.bf16.msra.mxu0 %v5423
    %5896 = vmatprep.mubr.bf16.mxu0 %v4721
    %5897 = vmatmul.mubr.bf16.gmra.mxu0 %v4709
    %v5898 = vpop.f32.mrf.mxu0
    %v5899 = vadd.f32 0.0, %v5898
    %v5900 = vpop.f32.mrf.mxu0
    %v5901 = vadd.f32 0.0, %v5900
    %v5902 = vpop.f32.mrf.mxu0
    %v5903 = vadd.f32 0.0, %v5902
    %v5904 = vpop.f32.mrf.mxu0
    %v5905 = vadd.f32 0.0, %v5904
    %5906 = vmatprep.mubr.bf16.mxu0 %v4749
    %5907 = vmatmul.mubr.bf16.gmra.mxu0 %v4741
    %v5908 = vpop.f32.mrf.mxu0
    %v5909 = vadd.f32 0.0, %v5908
    %v5910 = vpop.f32.mrf.mxu0
    %v5911 = vadd.f32 0.0, %v5910
    %v5912 = vpop.f32.mrf.mxu0
    %v5913 = vadd.f32 0.0, %v5912
    %v5914 = vpop.f32.mrf.mxu0
    %v5915 = vadd.f32 0.0, %v5914
    %5916 = vmatprep.mubr.bf16.mxu0 %v4773
    %5917 = vmatmul.mubr.bf16.gmra.mxu0 %v4765
    %v5918 = vpop.f32.mrf.mxu0
    %v5919 = vadd.f32 0.0, %v5918
    %v5920 = vpop.f32.mrf.mxu0
    %v5921 = vadd.f32 0.0, %v5920
    %v5922 = vpop.f32.mrf.mxu0
    %v5923 = vadd.f32 0.0, %v5922
    %v5924 = vpop.f32.mrf.mxu0
    %v5925 = vadd.f32 0.0, %v5924
    %5926 = vmatprep.mubr.bf16.mxu0 %v4797
    %5927 = vmatmul.mubr.bf16.gmra.mxu0 %v4789
    %v5928 = vpop.f32.mrf.mxu0
    %v5929 = vadd.f32 0.0, %v5928
    %v5930 = vpop.f32.mrf.mxu0
    %v5931 = vadd.f32 0.0, %v5930
    %v5932 = vpop.f32.mrf.mxu0
    %v5933 = vadd.f32 0.0, %v5932
    %v5934 = vpop.f32.mrf.mxu0
    %v5935 = vadd.f32 0.0, %v5934
    %5936 = vmatprep.mubr.bf16.mxu0 %v4821
    %5937 = vmatmul.mubr.bf16.gmra.mxu0 %v4813
    %v5938 = vpop.f32.mrf.mxu0
    %v5939 = vadd.f32 0.0, %v5938
    %v5940 = vpop.f32.mrf.mxu0
    %v5941 = vadd.f32 0.0, %v5940
    %v5942 = vpop.f32.mrf.mxu0
    %v5943 = vadd.f32 0.0, %v5942
    %v5944 = vpop.f32.mrf.mxu0
    %v5945 = vadd.f32 0.0, %v5944
    %5946 = vmatprep.mubr.bf16.mxu0 %v4845
    %5947 = vmatmul.mubr.bf16.gmra.mxu0 %v4837
    %v5948 = vpop.f32.mrf.mxu0
    %v5949 = vadd.f32 0.0, %v5948
    %v5950 = vpop.f32.mrf.mxu0
    %v5951 = vadd.f32 0.0, %v5950
    %v5952 = vpop.f32.mrf.mxu0
    %v5953 = vadd.f32 0.0, %v5952
    %v5954 = vpop.f32.mrf.mxu0
    %v5955 = vadd.f32 0.0, %v5954
    %5956 = vmatprep.mubr.bf16.mxu0 %v4869
    %5957 = vmatmul.mubr.bf16.gmra.mxu0 %v4861
    %v5958 = vpop.f32.mrf.mxu0
    %v5959 = vadd.f32 0.0, %v5958
    %v5960 = vpop.f32.mrf.mxu0
    %v5961 = vadd.f32 0.0, %v5960
    %v5962 = vpop.f32.mrf.mxu0
    %v5963 = vadd.f32 0.0, %v5962
    %v5964 = vpop.f32.mrf.mxu0
    %v5965 = vadd.f32 0.0, %v5964
    %5966 = vmatprep.mubr.bf16.mxu0 %v4893
    %5967 = vmatmul.mubr.bf16.gmra.mxu0 %v4885
    %v5968 = vpop.f32.mrf.mxu0
    %v5969 = vadd.f32 0.0, %v5968
    %v5970 = vpop.f32.mrf.mxu0
    %v5971 = vadd.f32 0.0, %v5970
    %v5972 = vpop.f32.mrf.mxu0
    %v5973 = vadd.f32 0.0, %v5972
    %v5974 = vpop.f32.mrf.mxu0
    %v5975 = vadd.f32 0.0, %v5974
    %5976 = vmatprep.mubr.bf16.mxu0 %v4917
    %5977 = vmatmul.mubr.bf16.gmra.mxu0 %v4909
    %v5978 = vpop.f32.mrf.mxu0
    %v5979 = vadd.f32 0.0, %v5978
    %v5980 = vpop.f32.mrf.mxu0
    %v5981 = vadd.f32 0.0, %v5980
    %v5982 = vpop.f32.mrf.mxu0
    %v5983 = vadd.f32 0.0, %v5982
    %v5984 = vpop.f32.mrf.mxu0
    %v5985 = vadd.f32 0.0, %v5984
    %5986 = vmatprep.mubr.bf16.mxu0 %v4960
    %5987 = vmatmul.mubr.bf16.gmra.mxu0 %v4959
    %v5988 = vpop.f32.mrf.mxu0
    %v5989 = vadd.f32 0.0, %v5988
    %v5990 = vpop.f32.mrf.mxu0
    %v5991 = vadd.f32 0.0, %v5990
    %v5992 = vpop.f32.mrf.mxu0
    %v5993 = vpop.f32.mrf.mxu0
    %5994 = vdwg.mxu0
    %5995 = vmatprep.subr.bf16.mxu0 0
    %5996 = vmatpush1.bf16.msra.mxu0 0
    %5997 = vmatprep.subr.bf16.mxu0 0
    %5998 = vmatpush1.bf16.msra.mxu0 0
    %5999 = vmatprep.subr.bf16.mxu0 0
    %6000 = vmatpush1.bf16.msra.mxu0 0
    %6001 = vmatprep.subr.bf16.mxu0 0
    %6002 = vmatpush1.bf16.msra.mxu0 0
    %6003 = vmatprep.subr.bf16.mxu0 0
    %6004 = vmatpush1.bf16.msra.mxu0 0
    %6005 = vmatprep.subr.bf16.mxu0 %v5474
    %6006 = vmatpush1.bf16.msra.mxu0 %v5473
    %6007 = vmatprep.subr.bf16.mxu0 %v5469
    %6008 = vmatpush1.bf16.msra.mxu0 %v5468
    %6009 = vmatprep.subr.bf16.mxu0 %v5464
    %6010 = vmatpush1.bf16.msra.mxu0 %v5463
    %6011 = vmatprep.subr.bf16.mxu0 0
    %6012 = vmatpush2.bf16.msra.mxu0 0
    %6013 = vmatprep.subr.bf16.mxu0 0
    %6014 = vmatpush2.bf16.msra.mxu0 0
    %6015 = vmatprep.subr.bf16.mxu0 0
    %6016 = vmatpush2.bf16.msra.mxu0 0
    %6017 = vmatprep.subr.bf16.mxu0 0
    %6018 = vmatpush2.bf16.msra.mxu0 0
    %6019 = vmatprep.subr.bf16.mxu0 0
    %6020 = vmatpush2.bf16.msra.mxu0 0
    %6021 = vmatprep.subr.bf16.mxu0 0
    %6022 = vmatpush2.bf16.msra.mxu0 0
    %6023 = vmatprep.subr.bf16.mxu0 0
    %6024 = vmatpush2.bf16.msra.mxu0 0
    %6025 = vmatprep.subr.bf16.mxu0 0
    %6026 = vmatpush2.bf16.msra.mxu0 0
    %6027 = vmatprep.mubr.bf16.mxu0 0
    %6028 = vmatmul.mubr.bf16.gmra.mxu0 %v5573
    %v6029 = vpop.f32.mrf.mxu0
    %v6030 = vadd.f32 %v5899, %v6029
    %v6031 = vpop.f32.mrf.mxu0
    %v6032 = vadd.f32 %v5901, %v6031
    %v6033 = vpop.f32.mrf.mxu0
    %v6034 = vadd.f32 %v5903, %v6033
    %v6035 = vpop.f32.mrf.mxu0
    %v6036 = vadd.f32 %v5905, %v6035
    %6037 = vmatprep.mubr.bf16.mxu0 0
    %6038 = vmatmul.mubr.bf16.gmra.mxu0 %v5576
    %v6039 = vpop.f32.mrf.mxu0
    %v6040 = vadd.f32 %v5909, %v6039
    %v6041 = vpop.f32.mrf.mxu0
    %v6042 = vadd.f32 %v5911, %v6041
    %v6043 = vpop.f32.mrf.mxu0
    %v6044 = vadd.f32 %v5913, %v6043
    %v6045 = vpop.f32.mrf.mxu0
    %v6046 = vadd.f32 %v5915, %v6045
    %6047 = vmatprep.mubr.bf16.mxu0 0
    %6048 = vmatmul.mubr.bf16.gmra.mxu0 %v5579
    %v6049 = vpop.f32.mrf.mxu0
    %v6050 = vadd.f32 %v5919, %v6049
    %v6051 = vpop.f32.mrf.mxu0
    %v6052 = vadd.f32 %v5921, %v6051
    %v6053 = vpop.f32.mrf.mxu0
    %v6054 = vadd.f32 %v5923, %v6053
    %v6055 = vpop.f32.mrf.mxu0
    %v6056 = vadd.f32 %v5925, %v6055
    %6057 = vmatprep.mubr.bf16.mxu0 0
    %6058 = vmatmul.mubr.bf16.gmra.mxu0 %v5582
    %v6059 = vpop.f32.mrf.mxu0
    %v6060 = vadd.f32 %v5929, %v6059
    %v6061 = vpop.f32.mrf.mxu0
    %v6062 = vadd.f32 %v5931, %v6061
    %v6063 = vpop.f32.mrf.mxu0
    %v6064 = vadd.f32 %v5933, %v6063
    %v6065 = vpop.f32.mrf.mxu0
    %v6066 = vadd.f32 %v5935, %v6065
    %6067 = vmatprep.mubr.bf16.mxu0 0
    %6068 = vmatmul.mubr.bf16.gmra.mxu0 %v5585
    %v6069 = vpop.f32.mrf.mxu0
    %v6070 = vadd.f32 %v5939, %v6069
    %v6071 = vpop.f32.mrf.mxu0
    %v6072 = vadd.f32 %v5941, %v6071
    %v6073 = vpop.f32.mrf.mxu0
    %v6074 = vadd.f32 %v5943, %v6073
    %v6075 = vpop.f32.mrf.mxu0
    %v6076 = vadd.f32 %v5945, %v6075
    %6077 = vmatprep.mubr.bf16.mxu0 0
    %6078 = vmatmul.mubr.bf16.gmra.mxu0 %v5588
    %v6079 = vpop.f32.mrf.mxu0
    %v6080 = vadd.f32 %v5949, %v6079
    %v6081 = vpop.f32.mrf.mxu0
    %v6082 = vadd.f32 %v5951, %v6081
    %v6083 = vpop.f32.mrf.mxu0
    %v6084 = vadd.f32 %v5953, %v6083
    %v6085 = vpop.f32.mrf.mxu0
    %v6086 = vadd.f32 %v5955, %v6085
    %6087 = vmatprep.mubr.bf16.mxu0 0
    %6088 = vmatmul.mubr.bf16.gmra.mxu0 %v5591
    %v6089 = vpop.f32.mrf.mxu0
    %v6090 = vadd.f32 %v5959, %v6089
    %v6091 = vpop.f32.mrf.mxu0
    %v6092 = vadd.f32 %v5961, %v6091
    %v6093 = vpop.f32.mrf.mxu0
    %v6094 = vadd.f32 %v5963, %v6093
    %v6095 = vpop.f32.mrf.mxu0
    %v6096 = vadd.f32 %v5965, %v6095
    %6097 = vmatprep.mubr.bf16.mxu0 0
    %6098 = vmatmul.mubr.bf16.gmra.mxu0 %v5594
    %v6099 = vpop.f32.mrf.mxu0
    %v6100 = vadd.f32 %v5969, %v6099
    %v6101 = vpop.f32.mrf.mxu0
    %v6102 = vadd.f32 %v5971, %v6101
    %v6103 = vpop.f32.mrf.mxu0
    %v6104 = vadd.f32 %v5973, %v6103
    %v6105 = vpop.f32.mrf.mxu0
    %v6106 = vadd.f32 %v5975, %v6105
    %6107 = vmatprep.mubr.bf16.mxu0 0
    %6108 = vmatmul.mubr.bf16.gmra.mxu0 %v5597
    %v6109 = vpop.f32.mrf.mxu0
    %v6110 = vadd.f32 %v5979, %v6109
    %v6111 = vpop.f32.mrf.mxu0
    %v6112 = vadd.f32 %v5981, %v6111
    %v6113 = vpop.f32.mrf.mxu0
    %v6114 = vadd.f32 %v5983, %v6113
    %v6115 = vpop.f32.mrf.mxu0
    %v6116 = vadd.f32 %v5985, %v6115
    %6117 = vmatprep.mubr.bf16.mxu0 0
    %6118 = vmatmul.mubr.bf16.gmra.mxu0 %v5600
    %v6119 = vpop.f32.mrf.mxu0
    %v6120 = vadd.f32 %v5989, %v6119
    %v6121 = vpop.f32.mrf.mxu0
    %v6122 = vadd.f32 %v5991, %v6121
    %v6123 = vpop.f32.mrf.mxu0
    %v6124 = vpop.f32.mrf.mxu0
    %6125 = vdwg.mxu0
    %6126 = vmatprep.subr.bf16.mxu0 0
    %6127 = vmatpush1.bf16.msra.mxu0 %v5420
    %6128 = vmatprep.subr.bf16.mxu0 0
    %6129 = vmatpush1.bf16.msra.mxu0 %v5415
    %6130 = vmatprep.subr.bf16.mxu0 0
    %6131 = vmatpush1.bf16.msra.mxu0 %v5410
    %6132 = vmatprep.subr.bf16.mxu0 0
    %6133 = vmatpush1.bf16.msra.mxu0 %v5405
    %6134 = vmatprep.subr.bf16.mxu0 0
    %6135 = vmatpush1.bf16.msra.mxu0 %v5400
    %6136 = vmatprep.subr.bf16.mxu0 0
    %6137 = vmatpush1.bf16.msra.mxu0 %v5395
    %6138 = vmatprep.subr.bf16.mxu0 0
    %6139 = vmatpush1.bf16.msra.mxu0 %v5390
    %6140 = vmatprep.subr.bf16.mxu0 0
    %6141 = vmatpush1.bf16.msra.mxu0 %v5385
    %6142 = vmatprep.subr.bf16.mxu0 0
    %6143 = vmatpush2.bf16.msra.mxu0 %v5460
    %6144 = vmatprep.subr.bf16.mxu0 0
    %6145 = vmatpush2.bf16.msra.mxu0 %v5455
    %6146 = vmatprep.subr.bf16.mxu0 0
    %6147 = vmatpush2.bf16.msra.mxu0 %v5450
    %6148 = vmatprep.subr.bf16.mxu0 0
    %6149 = vmatpush2.bf16.msra.mxu0 %v5445
    %6150 = vmatprep.subr.bf16.mxu0 0
    %6151 = vmatpush2.bf16.msra.mxu0 %v5440
    %6152 = vmatprep.subr.bf16.mxu0 0
    %6153 = vmatpush2.bf16.msra.mxu0 %v5435
    %6154 = vmatprep.subr.bf16.mxu0 0
    %6155 = vmatpush2.bf16.msra.mxu0 %v5430
    %6156 = vmatprep.subr.bf16.mxu0 0
    %6157 = vmatpush2.bf16.msra.mxu0 %v5425
    %6158 = vmatprep.mubr.bf16.mxu0 %v4721
    %6159 = vmatmul.mubr.bf16.gmra.mxu0 %v4709
    %v6160 = vpop.f32.mrf.mxu0
    %v6161 = vadd.f32 0.0, %v6160
    %v6162 = vpop.f32.mrf.mxu0
    %v6163 = vpop.f32.mrf.mxu0
    %v6164 = vadd.f32 0.0, %v6163
    %v6165 = vpop.f32.mrf.mxu0
    %6166 = vmatprep.mubr.bf16.mxu0 %v4749
    %6167 = vmatmul.mubr.bf16.gmra.mxu0 %v4741
    %v6168 = vpop.f32.mrf.mxu0
    %v6169 = vadd.f32 0.0, %v6168
    %v6170 = vpop.f32.mrf.mxu0
    %v6171 = vpop.f32.mrf.mxu0
    %v6172 = vadd.f32 0.0, %v6171
    %v6173 = vpop.f32.mrf.mxu0
    %6174 = vmatprep.mubr.bf16.mxu0 %v4773
    %6175 = vmatmul.mubr.bf16.gmra.mxu0 %v4765
    %v6176 = vpop.f32.mrf.mxu0
    %v6177 = vadd.f32 0.0, %v6176
    %v6178 = vpop.f32.mrf.mxu0
    %v6179 = vpop.f32.mrf.mxu0
    %v6180 = vadd.f32 0.0, %v6179
    %v6181 = vpop.f32.mrf.mxu0
    %6182 = vmatprep.mubr.bf16.mxu0 %v4797
    %6183 = vmatmul.mubr.bf16.gmra.mxu0 %v4789
    %v6184 = vpop.f32.mrf.mxu0
    %v6185 = vadd.f32 0.0, %v6184
    %v6186 = vpop.f32.mrf.mxu0
    %v6187 = vpop.f32.mrf.mxu0
    %v6188 = vadd.f32 0.0, %v6187
    %v6189 = vpop.f32.mrf.mxu0
    %6190 = vmatprep.mubr.bf16.mxu0 %v4821
    %6191 = vmatmul.mubr.bf16.gmra.mxu0 %v4813
    %v6192 = vpop.f32.mrf.mxu0
    %v6193 = vadd.f32 0.0, %v6192
    %v6194 = vpop.f32.mrf.mxu0
    %v6195 = vpop.f32.mrf.mxu0
    %v6196 = vadd.f32 0.0, %v6195
    %v6197 = vpop.f32.mrf.mxu0
    %6198 = vmatprep.mubr.bf16.mxu0 %v4845
    %6199 = vmatmul.mubr.bf16.gmra.mxu0 %v4837
    %v6200 = vpop.f32.mrf.mxu0
    %v6201 = vadd.f32 0.0, %v6200
    %v6202 = vpop.f32.mrf.mxu0
    %v6203 = vpop.f32.mrf.mxu0
    %v6204 = vadd.f32 0.0, %v6203
    %v6205 = vpop.f32.mrf.mxu0
    %6206 = vmatprep.mubr.bf16.mxu0 %v4869
    %6207 = vmatmul.mubr.bf16.gmra.mxu0 %v4861
    %v6208 = vpop.f32.mrf.mxu0
    %v6209 = vadd.f32 0.0, %v6208
    %v6210 = vpop.f32.mrf.mxu0
    %v6211 = vpop.f32.mrf.mxu0
    %v6212 = vadd.f32 0.0, %v6211
    %v6213 = vpop.f32.mrf.mxu0
    %6214 = vmatprep.mubr.bf16.mxu0 %v4893
    %6215 = vmatmul.mubr.bf16.gmra.mxu0 %v4885
    %v6216 = vpop.f32.mrf.mxu0
    %v6217 = vadd.f32 0.0, %v6216
    %v6218 = vpop.f32.mrf.mxu0
    %v6219 = vpop.f32.mrf.mxu0
    %v6220 = vadd.f32 0.0, %v6219
    %v6221 = vpop.f32.mrf.mxu0
    %6222 = vmatprep.mubr.bf16.mxu0 %v4917
    %6223 = vmatmul.mubr.bf16.gmra.mxu0 %v4909
    %v6224 = vpop.f32.mrf.mxu0
    %v6225 = vadd.f32 0.0, %v6224
    %v6226 = vpop.f32.mrf.mxu0
    %v6227 = vpop.f32.mrf.mxu0
    %v6228 = vadd.f32 0.0, %v6227
    %v6229 = vpop.f32.mrf.mxu0
    %6230 = vmatprep.mubr.bf16.mxu0 %v4960
    %6231 = vmatmul.mubr.bf16.gmra.mxu0 %v4959
    %v6232 = vpop.f32.mrf.mxu0
    %v6233 = vadd.f32 0.0, %v6232
    %v6234 = vpop.f32.mrf.mxu0
    %v6235 = vpop.f32.mrf.mxu0
    %v6236 = vpop.f32.mrf.mxu0
    %6237 = vdwg.mxu0
    %6238 = vmatprep.subr.bf16.mxu0 0
    %6239 = vmatpush1.bf16.msra.mxu0 0
    %6240 = vmatprep.subr.bf16.mxu0 0
    %6241 = vmatpush1.bf16.msra.mxu0 0
    %6242 = vmatprep.subr.bf16.mxu0 0
    %6243 = vmatpush1.bf16.msra.mxu0 0
    %6244 = vmatprep.subr.bf16.mxu0 0
    %6245 = vmatpush1.bf16.msra.mxu0 0
    %6246 = vmatprep.subr.bf16.mxu0 0
    %6247 = vmatpush1.bf16.msra.mxu0 0
    %6248 = vmatprep.subr.bf16.mxu0 0
    %6249 = vmatpush1.bf16.msra.mxu0 %v5475
    %6250 = vmatprep.subr.bf16.mxu0 0
    %6251 = vmatpush1.bf16.msra.mxu0 %v5470
    %6252 = vmatprep.subr.bf16.mxu0 0
    %6253 = vmatpush1.bf16.msra.mxu0 %v5465
    %6254 = vmatprep.subr.bf16.mxu0 0
    %6255 = vmatpush2.bf16.msra.mxu0 0
    %6256 = vmatprep.subr.bf16.mxu0 0
    %6257 = vmatpush2.bf16.msra.mxu0 0
    %6258 = vmatprep.subr.bf16.mxu0 0
    %6259 = vmatpush2.bf16.msra.mxu0 0
    %6260 = vmatprep.subr.bf16.mxu0 0
    %6261 = vmatpush2.bf16.msra.mxu0 0
    %6262 = vmatprep.subr.bf16.mxu0 0
    %6263 = vmatpush2.bf16.msra.mxu0 0
    %6264 = vmatprep.subr.bf16.mxu0 0
    %6265 = vmatpush2.bf16.msra.mxu0 0
    %6266 = vmatprep.subr.bf16.mxu0 0
    %6267 = vmatpush2.bf16.msra.mxu0 0
    %6268 = vmatprep.subr.bf16.mxu0 0
    %6269 = vmatpush2.bf16.msra.mxu0 0
    %6270 = vmatprep.mubr.bf16.mxu0 0
    %6271 = vmatmul.mubr.bf16.gmra.mxu0 %v5573
    %v6272 = vpop.f32.mrf.mxu0
    %v6273 = vadd.f32 %v6161, %v6272
    %v6274 = vpop.f32.mrf.mxu0
    %v6275 = vpop.f32.mrf.mxu0
    %v6276 = vadd.f32 %v6164, %v6275
    %v6277 = vpop.f32.mrf.mxu0
    %6278 = vmatprep.mubr.bf16.mxu0 0
    %6279 = vmatmul.mubr.bf16.gmra.mxu0 %v5576
    %v6280 = vpop.f32.mrf.mxu0
    %v6281 = vadd.f32 %v6169, %v6280
    %v6282 = vpop.f32.mrf.mxu0
    %v6283 = vpop.f32.mrf.mxu0
    %v6284 = vadd.f32 %v6172, %v6283
    %v6285 = vpop.f32.mrf.mxu0
    %6286 = vmatprep.mubr.bf16.mxu0 0
    %6287 = vmatmul.mubr.bf16.gmra.mxu0 %v5579
    %v6288 = vpop.f32.mrf.mxu0
    %v6289 = vadd.f32 %v6177, %v6288
    %v6290 = vpop.f32.mrf.mxu0
    %v6291 = vpop.f32.mrf.mxu0
    %v6292 = vadd.f32 %v6180, %v6291
    %v6293 = vpop.f32.mrf.mxu0
    %6294 = vmatprep.mubr.bf16.mxu0 0
    %6295 = vmatmul.mubr.bf16.gmra.mxu0 %v5582
    %v6296 = vpop.f32.mrf.mxu0
    %v6297 = vadd.f32 %v6185, %v6296
    %v6298 = vpop.f32.mrf.mxu0
    %v6299 = vpop.f32.mrf.mxu0
    %v6300 = vadd.f32 %v6188, %v6299
    %v6301 = vpop.f32.mrf.mxu0
    %6302 = vmatprep.mubr.bf16.mxu0 0
    %6303 = vmatmul.mubr.bf16.gmra.mxu0 %v5585
    %v6304 = vpop.f32.mrf.mxu0
    %v6305 = vadd.f32 %v6193, %v6304
    %v6306 = vpop.f32.mrf.mxu0
    %v6307 = vpop.f32.mrf.mxu0
    %v6308 = vadd.f32 %v6196, %v6307
    %v6309 = vpop.f32.mrf.mxu0
    %6310 = vmatprep.mubr.bf16.mxu0 0
    %6311 = vmatmul.mubr.bf16.gmra.mxu0 %v5588
    %v6312 = vpop.f32.mrf.mxu0
    %v6313 = vadd.f32 %v6201, %v6312
    %v6314 = vpop.f32.mrf.mxu0
    %v6315 = vpop.f32.mrf.mxu0
    %v6316 = vadd.f32 %v6204, %v6315
    %v6317 = vpop.f32.mrf.mxu0
    %6318 = vmatprep.mubr.bf16.mxu0 0
    %6319 = vmatmul.mubr.bf16.gmra.mxu0 %v5591
    %v6320 = vpop.f32.mrf.mxu0
    %v6321 = vadd.f32 %v6209, %v6320
    %v6322 = vpop.f32.mrf.mxu0
    %v6323 = vpop.f32.mrf.mxu0
    %v6324 = vadd.f32 %v6212, %v6323
    %v6325 = vpop.f32.mrf.mxu0
    %6326 = vmatprep.mubr.bf16.mxu0 0
    %6327 = vmatmul.mubr.bf16.gmra.mxu0 %v5594
    %v6328 = vpop.f32.mrf.mxu0
    %v6329 = vadd.f32 %v6217, %v6328
    %v6330 = vpop.f32.mrf.mxu0
    %v6331 = vpop.f32.mrf.mxu0
    %v6332 = vadd.f32 %v6220, %v6331
    %v6333 = vpop.f32.mrf.mxu0
    %6334 = vmatprep.mubr.bf16.mxu0 0
    %6335 = vmatmul.mubr.bf16.gmra.mxu0 %v5597
    %v6336 = vpop.f32.mrf.mxu0
    %v6337 = vadd.f32 %v6225, %v6336
    %v6338 = vpop.f32.mrf.mxu0
    %v6339 = vpop.f32.mrf.mxu0
    %v6340 = vadd.f32 %v6228, %v6339
    %v6341 = vpop.f32.mrf.mxu0
    %6342 = vmatprep.mubr.bf16.mxu0 0
    %6343 = vmatmul.mubr.bf16.gmra.mxu0 %v5600
    %v6344 = vpop.f32.mrf.mxu0
    %v6345 = vadd.f32 %v6233, %v6344
    %v6346 = vpop.f32.mrf.mxu0
    %v6347 = vpop.f32.mrf.mxu0
    %v6348 = vpop.f32.mrf.mxu0
    %6349 = vdwg.mxu0
    %v6464 = vunpack.c.l.b16 %v4584
    %v6465 = vunpack.c.h.b16 %v4584
    %v6466 = vunpack.c.l.b16 %v4585
    %v6467 = vunpack.c.h.b16 %v4585
    %v6468 = vunpack.c.l.b16 %v4586
    %v6469 = vunpack.c.l.b16 %v4587
    %v6470 = vunpack.c.h.b16 %v4587
    %v6471 = vunpack.c.l.b16 %v4588
    %v6472 = vunpack.c.h.b16 %v4588
    %v6473 = vunpack.c.l.b16 %v4589
    %v6474 = vunpack.c.l.b16 %v4590
    %v6475 = vunpack.c.h.b16 %v4590
    %v6476 = vunpack.c.l.b16 %v4591
    %v6477 = vunpack.c.h.b16 %v4591
    %v6478 = vunpack.c.l.b16 %v4592
    %v6479 = vunpack.c.l.b16 %v4593
    %v6480 = vunpack.c.h.b16 %v4593
    %v6481 = vunpack.c.l.b16 %v4594
    %v6482 = vunpack.c.h.b16 %v4594
    %v6483 = vunpack.c.l.b16 %v4595
    %v6484 = vunpack.c.l.b16 %v4596
    %v6485 = vunpack.c.h.b16 %v4596
    %v6486 = vunpack.c.l.b16 %v4597
    %v6487 = vunpack.c.h.b16 %v4597
    %v6488 = vunpack.c.l.b16 %v4598
    %v6489 = vunpack.c.l.b16 %v4599
    %v6490 = vunpack.c.h.b16 %v4599
    %v6491 = vunpack.c.l.b16 %v4600
    %v6492 = vunpack.c.h.b16 %v4600
    %v6493 = vunpack.c.l.b16 %v4601
    %v6494 = vunpack.c.l.b16 %v4602
    %v6495 = vunpack.c.h.b16 %v4602
    %v6496 = vunpack.c.l.b16 %v4603
    %v6497 = vunpack.c.h.b16 %v4603
    %v6498 = vunpack.c.l.b16 %v4604
    %v6499 = vunpack.c.l.b16 %v4605
    %v6500 = vunpack.c.h.b16 %v4605
    %v6501 = vunpack.c.l.b16 %v4606
    %v6502 = vunpack.c.h.b16 %v4606
    %v6503 = vunpack.c.l.b16 %v4607
    %v6504 = vunpack.c.l.b16 %v4608
    %v6505 = vunpack.c.h.b16 %v4608
    %v6506 = vunpack.c.l.b16 %v4609
    %v6507 = vunpack.c.h.b16 %v4609
    %v6508 = vunpack.c.l.b16 %v4610
    %v6509 = vunpack.c.l.b16 %v4611
    %v6510 = vunpack.c.h.b16 %v4611
    %v6511 = vunpack.c.l.b16 %v4612
    %v6512 = vunpack.c.h.b16 %v4612
    %v6513 = vunpack.c.l.b16 %v4613
    %v6514 = vunpack.c.l.b16 %v4614
    %v6515 = vunpack.c.h.b16 %v4614
    %v6516 = vunpack.c.l.b16 %v4615
    %v6517 = vunpack.c.h.b16 %v4615
    %v6518 = vunpack.c.l.b16 %v4616
    %v6519 = vunpack.c.l.b16 %v4617
    %v6520 = vunpack.c.h.b16 %v4617
    %v6521 = vunpack.c.l.b16 %v4618
    %v6522 = vunpack.c.h.b16 %v4618
    %v6523 = vunpack.c.l.b16 %v4619
    %v6524 = vunpack.c.l.b16 %v4620
    %v6525 = vunpack.c.h.b16 %v4620
    %v6526 = vunpack.c.l.b16 %v4621
    %v6527 = vunpack.c.h.b16 %v4621
    %v6528 = vunpack.c.l.b16 %v4622
    %v6529 = vunpack.c.l.b16 %v4623
    %v6530 = vunpack.c.h.b16 %v4623
    %v6531 = vunpack.c.l.b16 %v4624
    %v6532 = vunpack.c.h.b16 %v4624
    %v6533 = vunpack.c.l.b16 %v4625
    %v6534 = vunpack.c.l.b16 %v4626
    %v6535 = vunpack.c.h.b16 %v4626
    %v6536 = vunpack.c.l.b16 %v4627
    %v6537 = vunpack.c.h.b16 %v4627
    %v6538 = vunpack.c.l.b16 %v4628
    %v6539 = vunpack.c.l.b16 %v4629
    %v6540 = vunpack.c.h.b16 %v4629
    %v6541 = vunpack.c.l.b16 %v4630
    %v6542 = vunpack.c.h.b16 %v4630
    %v6543 = vunpack.c.l.b16 %v4631
    %v6544 = vunpack.c.l.b16 %v4632
    %v6545 = vunpack.c.h.b16 %v4632
    %v6546 = vunpack.c.l.b16 %v4633
    %v6547 = vunpack.c.h.b16 %v4633
    %v6548 = vunpack.c.l.b16 %v4634
    %v6549 = vunpack.c.l.b16 %v4635
    %v6550 = vunpack.c.h.b16 %v4635
    %v6551 = vunpack.c.l.b16 %v4636
    %v6552 = vunpack.c.h.b16 %v4636
    %v6553 = vunpack.c.l.b16 %v4637
    %v6554 = vunpack.c.l.b16 %v4638
    %v6555 = vunpack.c.h.b16 %v4638
    %v6556 = vunpack.c.l.b16 %v4639
    %v6557 = vunpack.c.h.b16 %v4639
    %v6558 = vunpack.c.l.b16 %v4640
    %v6559 = vunpack.c.l.b16 %v4641
    %v6560 = vunpack.c.h.b16 %v4641
    %v6561 = vunpack.c.l.b16 %v4642
    %v6562 = vunpack.c.h.b16 %v4642
    %v6563 = vunpack.c.l.b16 %v4643
    %v6564 = vunpack.c.l.b16 %v4644
    %v6565 = vunpack.c.h.b16 %v4644
    %v6566 = vunpack.c.l.b16 %v4645
    %v6567 = vunpack.c.h.b16 %v4645
    %v6568 = vunpack.c.l.b16 %v4646
    %v6569 = vunpack.c.l.b16 %v4647
    %v6570 = vunpack.c.h.b16 %v4647
    %v6571 = vunpack.c.l.b16 %v4648
    %v6572 = vunpack.c.h.b16 %v4648
    %v6573 = vunpack.c.l.b16 %v4649
    %v6574 = vunpack.c.l.b16 %v4650
    %v6575 = vunpack.c.h.b16 %v4650
    %v6576 = vunpack.c.l.b16 %v4651
    %v6577 = vunpack.c.h.b16 %v4651
    %v6578 = vunpack.c.l.b16 %v4652
    %v6579 = vunpack.c.l.b16 %v4653
    %v6580 = vunpack.c.h.b16 %v4653
    %v6581 = vunpack.c.l.b16 %v4654
    %v6582 = vunpack.c.h.b16 %v4654
    %v6583 = vunpack.c.l.b16 %v4655
    %v6584 = vunpack.c.l.b16 %v4656
    %v6585 = vunpack.c.h.b16 %v4656
    %v6586 = vunpack.c.l.b16 %v4657
    %v6587 = vunpack.c.h.b16 %v4657
    %v6588 = vunpack.c.l.b16 %v4658
    %v6589 = vunpack.c.l.b16 %v4659
    %v6590 = vunpack.c.h.b16 %v4659
    %v6591 = vunpack.c.l.b16 %v4660
    %v6592 = vunpack.c.h.b16 %v4660
    %v6593 = vunpack.c.l.b16 %v4661
    %v6594 = vunpack.c.l.b16 %v4662
    %v6595 = vunpack.c.h.b16 %v4662
    %v6596 = vunpack.c.l.b16 %v4663
    %v6597 = vunpack.c.h.b16 %v4663
    %v6598 = vunpack.c.l.b16 %v4664
    %v6599 = vunpack.c.l.b16 %v4665
    %v6600 = vunpack.c.h.b16 %v4665
    %v6601 = vunpack.c.l.b16 %v4666
    %v6602 = vunpack.c.h.b16 %v4666
    %v6603 = vunpack.c.l.b16 %v4667
    %v6604 = vunpack.c.l.b16 %v4668
    %v6605 = vunpack.c.h.b16 %v4668
    %v6606 = vunpack.c.l.b16 %v4669
    %v6607 = vunpack.c.h.b16 %v4669
    %v6608 = vunpack.c.l.b16 %v4670
    %v6609 = vunpack.c.l.b16 %v4671
    %v6610 = vunpack.c.h.b16 %v4671
    %v6611 = vunpack.c.l.b16 %v4672
    %v6612 = vunpack.c.h.b16 %v4672
    %v6613 = vunpack.c.l.b16 %v4673
    %v6614 = vunpack.c.l.b16 %v4674
    %v6615 = vunpack.c.h.b16 %v4674
    %v6616 = vunpack.c.l.b16 %v4675
    %v6617 = vunpack.c.h.b16 %v4675
    %v6618 = vunpack.c.l.b16 %v4676
    %v6619 = vunpack.c.l.b16 %v4677
    %v6620 = vunpack.c.h.b16 %v4677
    %v6621 = vunpack.c.l.b16 %v4678
    %v6622 = vunpack.c.h.b16 %v4678
    %v6623 = vunpack.c.l.b16 %v4679
    %v6624 = vunpack.c.l.b16 %v4680
    %v6625 = vunpack.c.h.b16 %v4680
    %v6626 = vunpack.c.l.b16 %v4681
    %v6627 = vunpack.c.h.b16 %v4681
    %v6628 = vunpack.c.l.b16 %v4682
    %v6629 = vunpack.c.l.b16 %v4683
    %v6630 = vunpack.c.h.b16 %v4683
    %v6631 = vunpack.c.l.b16 %v4684
    %v6632 = vunpack.c.h.b16 %v4684
    %v6633 = vunpack.c.l.b16 %v4685
    %v6634 = vunpack.c.l.b16 %v4686
    %v6635 = vunpack.c.h.b16 %v4686
    %v6636 = vunpack.c.l.b16 %v4687
    %v6637 = vunpack.c.h.b16 %v4687
    %v6638 = vunpack.c.l.b16 %v4688
    %v6639 = vunpack.c.l.b16 %v4689
    %v6640 = vunpack.c.h.b16 %v4689
    %v6641 = vunpack.c.l.b16 %v4690
    %v6642 = vunpack.c.h.b16 %v4690
    %v6643 = vunpack.c.l.b16 %v4691
    %v6644 = vunpack.c.l.b16 %v4692
    %v6645 = vunpack.c.h.b16 %v4692
    %v6646 = vunpack.c.l.b16 %v4693
    %v6647 = vunpack.c.h.b16 %v4693
    %v6648 = vunpack.c.l.b16 %v4694
    %v6649 = vunpack.c.l.b16 %v4695
    %v6650 = vunpack.c.h.b16 %v4695
    %v6651 = vunpack.c.l.b16 %v4696
    %v6652 = vunpack.c.h.b16 %v4696
    %v6653 = vunpack.c.l.b16 %v4697
    %v6654 = vpack.c.b16 %v6469, %v6464
    %v6655 = vpack.c.b16 %v6470, %v6465
    %v6656 = vpack.c.b16 %v6471, %v6466
    %v6657 = vpack.c.b16 %v6472, %v6467
    %v6658 = vpack.c.b16 %v6473, %v6468
    %v6659 = vpack.c.b16 %v6479, %v6474
    %v6660 = vpack.c.b16 %v6480, %v6475
    %v6661 = vpack.c.b16 %v6481, %v6476
    %v6662 = vpack.c.b16 %v6482, %v6477
    %v6663 = vpack.c.b16 %v6483, %v6478
    %v6664 = vpack.c.b16 %v6489, %v6484
    %v6665 = vpack.c.b16 %v6490, %v6485
    %v6666 = vpack.c.b16 %v6491, %v6486
    %v6667 = vpack.c.b16 %v6492, %v6487
    %v6668 = vpack.c.b16 %v6493, %v6488
    %v6669 = vpack.c.b16 %v6499, %v6494
    %v6670 = vpack.c.b16 %v6500, %v6495
    %v6671 = vpack.c.b16 %v6501, %v6496
    %v6672 = vpack.c.b16 %v6502, %v6497
    %v6673 = vpack.c.b16 %v6503, %v6498
    %v6674 = vpack.c.b16 %v6509, %v6504
    %v6675 = vpack.c.b16 %v6510, %v6505
    %v6676 = vpack.c.b16 %v6511, %v6506
    %v6677 = vpack.c.b16 %v6512, %v6507
    %v6678 = vpack.c.b16 %v6513, %v6508
    %v6679 = vpack.c.b16 %v6519, %v6514
    %v6680 = vpack.c.b16 %v6520, %v6515
    %v6681 = vpack.c.b16 %v6521, %v6516
    %v6682 = vpack.c.b16 %v6522, %v6517
    %v6683 = vpack.c.b16 %v6523, %v6518
    %v6684 = vpack.c.b16 %v6529, %v6524
    %v6685 = vpack.c.b16 %v6530, %v6525
    %v6686 = vpack.c.b16 %v6531, %v6526
    %v6687 = vpack.c.b16 %v6532, %v6527
    %v6688 = vpack.c.b16 %v6533, %v6528
    %v6689 = vpack.c.b16 %v6539, %v6534
    %v6690 = vpack.c.b16 %v6540, %v6535
    %v6691 = vpack.c.b16 %v6541, %v6536
    %v6692 = vpack.c.b16 %v6542, %v6537
    %v6693 = vpack.c.b16 %v6543, %v6538
    %v6694 = vpack.c.b16 %v6549, %v6544
    %v6695 = vpack.c.b16 %v6550, %v6545
    %v6696 = vpack.c.b16 %v6551, %v6546
    %v6697 = vpack.c.b16 %v6552, %v6547
    %v6698 = vpack.c.b16 %v6553, %v6548
    %v6699 = vpack.c.b16 %v6559, %v6554
    %v6700 = vpack.c.b16 %v6560, %v6555
    %v6701 = vpack.c.b16 %v6561, %v6556
    %v6702 = vpack.c.b16 %v6562, %v6557
    %v6703 = vpack.c.b16 %v6563, %v6558
    %v6704 = vpack.c.b16 %v6569, %v6564
    %v6705 = vpack.c.b16 %v6570, %v6565
    %v6706 = vpack.c.b16 %v6571, %v6566
    %v6707 = vpack.c.b16 %v6572, %v6567
    %v6708 = vpack.c.b16 %v6573, %v6568
    %v6709 = vpack.c.b16 %v6579, %v6574
    %v6710 = vpack.c.b16 %v6580, %v6575
    %v6711 = vpack.c.b16 %v6581, %v6576
    %v6712 = vpack.c.b16 %v6582, %v6577
    %v6713 = vpack.c.b16 %v6583, %v6578
    %v6714 = vpack.c.b16 %v6589, %v6584
    %v6715 = vpack.c.b16 %v6590, %v6585
    %v6716 = vpack.c.b16 %v6591, %v6586
    %v6717 = vpack.c.b16 %v6592, %v6587
    %v6718 = vpack.c.b16 %v6593, %v6588
    %v6719 = vpack.c.b16 %v6599, %v6594
    %v6720 = vpack.c.b16 %v6600, %v6595
    %v6721 = vpack.c.b16 %v6601, %v6596
    %v6722 = vpack.c.b16 %v6602, %v6597
    %v6723 = vpack.c.b16 %v6603, %v6598
    %v6724 = vpack.c.b16 %v6609, %v6604
    %v6725 = vpack.c.b16 %v6610, %v6605
    %v6726 = vpack.c.b16 %v6611, %v6606
    %v6727 = vpack.c.b16 %v6612, %v6607
    %v6728 = vpack.c.b16 %v6613, %v6608
    %v6729 = vpack.c.b16 %v6619, %v6614
    %v6730 = vpack.c.b16 %v6620, %v6615
    %v6731 = vpack.c.b16 %v6621, %v6616
    %v6732 = vpack.c.b16 %v6622, %v6617
    %v6733 = vpack.c.b16 %v6623, %v6618
    %v6734 = vpack.c.b16 %v6629, %v6624
    %v6735 = vpack.c.b16 %v6630, %v6625
    %v6736 = vpack.c.b16 %v6631, %v6626
    %v6737 = vpack.c.b16 %v6632, %v6627
    %v6738 = vpack.c.b16 %v6633, %v6628
    %v6739 = vpack.c.b16 %v6639, %v6634
    %v6740 = vpack.c.b16 %v6640, %v6635
    %v6741 = vpack.c.b16 %v6641, %v6636
    %v6742 = vpack.c.b16 %v6642, %v6637
    %v6743 = vpack.c.b16 %v6643, %v6638
    %v6744 = vpack.c.b16 %v6649, %v6644
    %v6745 = vpack.c.b16 %v6650, %v6645
    %v6746 = vpack.c.b16 %v6651, %v6646
    %v6747 = vpack.c.b16 %v6652, %v6647
    %v6748 = vpack.c.b16 %v6653, %v6648
    %v6844 = vsel %vm5571, %v4556, 0
    %v6846 = vsel %vm5571, %v4559, 0
    %v6848 = vsel %vm5571, %v4562, 0
    %v6850 = vsel %vm5571, %v4565, 0
    %v6852 = vsel %vm5571, %v4568, 0
    %v6854 = vsel %vm5571, %v4571, 0
    %v6856 = vsel %vm5571, %v4574, 0
    %v6858 = vsel %vm5571, %v4577, 0
    %v6860 = vsel %vm5571, %v4580, 0
    %v6862 = vsel %vm5571, %v4583, 0
    %6864 = vmatprep.subr.bf16.mxu0 %v6690
    %6865 = vmatpush1.bf16.msra.mxu0 %v6689
    %6866 = vmatprep.subr.bf16.mxu0 %v6685
    %6867 = vmatpush1.bf16.msra.mxu0 %v6684
    %6868 = vmatprep.subr.bf16.mxu0 %v6680
    %6869 = vmatpush1.bf16.msra.mxu0 %v6679
    %6870 = vmatprep.subr.bf16.mxu0 %v6675
    %6871 = vmatpush1.bf16.msra.mxu0 %v6674
    %6872 = vmatprep.subr.bf16.mxu0 %v6670
    %6873 = vmatpush1.bf16.msra.mxu0 %v6669
    %6874 = vmatprep.subr.bf16.mxu0 %v6665
    %6875 = vmatpush1.bf16.msra.mxu0 %v6664
    %6876 = vmatprep.subr.bf16.mxu0 %v6660
    %6877 = vmatpush1.bf16.msra.mxu0 %v6659
    %6878 = vmatprep.subr.bf16.mxu0 %v6655
    %6879 = vmatpush1.bf16.msra.mxu0 %v6654
    %6880 = vmatprep.subr.bf16.mxu0 %v6730
    %6881 = vmatpush2.bf16.msra.mxu0 %v6729
    %6882 = vmatprep.subr.bf16.mxu0 %v6725
    %6883 = vmatpush2.bf16.msra.mxu0 %v6724
    %6884 = vmatprep.subr.bf16.mxu0 %v6720
    %6885 = vmatpush2.bf16.msra.mxu0 %v6719
    %6886 = vmatprep.subr.bf16.mxu0 %v6715
    %6887 = vmatpush2.bf16.msra.mxu0 %v6714
    %6888 = vmatprep.subr.bf16.mxu0 %v6710
    %6889 = vmatpush2.bf16.msra.mxu0 %v6709
    %6890 = vmatprep.subr.bf16.mxu0 %v6705
    %6891 = vmatpush2.bf16.msra.mxu0 %v6704
    %6892 = vmatprep.subr.bf16.mxu0 %v6700
    %6893 = vmatpush2.bf16.msra.mxu0 %v6699
    %6894 = vmatprep.subr.bf16.mxu0 %v6695
    %6895 = vmatpush2.bf16.msra.mxu0 %v6694
    %6896 = vmatprep.mubr.bf16.mxu0 %v4555
    %6897 = vmatmul.mubr.bf16.gmra.mxu0 %v4554
    %v6898 = vpop.f32.mrf.mxu0
    %v6899 = vadd.f32 %v5768, %v6898
    %v6900 = vpop.f32.mrf.mxu0
    %v6901 = vadd.f32 %v5770, %v6900
    %v6902 = vpop.f32.mrf.mxu0
    %v6903 = vadd.f32 %v5772, %v6902
    %v6904 = vpop.f32.mrf.mxu0
    %v6905 = vadd.f32 %v5774, %v6904
    %6906 = vmatprep.mubr.bf16.mxu0 %v4558
    %6907 = vmatmul.mubr.bf16.gmra.mxu0 %v4557
    %v6908 = vpop.f32.mrf.mxu0
    %v6909 = vadd.f32 %v5778, %v6908
    %v6910 = vpop.f32.mrf.mxu0
    %v6911 = vadd.f32 %v5780, %v6910
    %v6912 = vpop.f32.mrf.mxu0
    %v6913 = vadd.f32 %v5782, %v6912
    %v6914 = vpop.f32.mrf.mxu0
    %v6915 = vadd.f32 %v5784, %v6914
    %6916 = vmatprep.mubr.bf16.mxu0 %v4561
    %6917 = vmatmul.mubr.bf16.gmra.mxu0 %v4560
    %v6918 = vpop.f32.mrf.mxu0
    %v6919 = vadd.f32 %v5788, %v6918
    %v6920 = vpop.f32.mrf.mxu0
    %v6921 = vadd.f32 %v5790, %v6920
    %v6922 = vpop.f32.mrf.mxu0
    %v6923 = vadd.f32 %v5792, %v6922
    %v6924 = vpop.f32.mrf.mxu0
    %v6925 = vadd.f32 %v5794, %v6924
    %6926 = vmatprep.mubr.bf16.mxu0 %v4564
    %6927 = vmatmul.mubr.bf16.gmra.mxu0 %v4563
    %v6928 = vpop.f32.mrf.mxu0
    %v6929 = vadd.f32 %v5798, %v6928
    %v6930 = vpop.f32.mrf.mxu0
    %v6931 = vadd.f32 %v5800, %v6930
    %v6932 = vpop.f32.mrf.mxu0
    %v6933 = vadd.f32 %v5802, %v6932
    %v6934 = vpop.f32.mrf.mxu0
    %v6935 = vadd.f32 %v5804, %v6934
    %6936 = vmatprep.mubr.bf16.mxu0 %v4567
    %6937 = vmatmul.mubr.bf16.gmra.mxu0 %v4566
    %v6938 = vpop.f32.mrf.mxu0
    %v6939 = vadd.f32 %v5808, %v6938
    %v6940 = vpop.f32.mrf.mxu0
    %v6941 = vadd.f32 %v5810, %v6940
    %v6942 = vpop.f32.mrf.mxu0
    %v6943 = vadd.f32 %v5812, %v6942
    %v6944 = vpop.f32.mrf.mxu0
    %v6945 = vadd.f32 %v5814, %v6944
    %6946 = vmatprep.mubr.bf16.mxu0 %v4570
    %6947 = vmatmul.mubr.bf16.gmra.mxu0 %v4569
    %v6948 = vpop.f32.mrf.mxu0
    %v6949 = vadd.f32 %v5818, %v6948
    %v6950 = vpop.f32.mrf.mxu0
    %v6951 = vadd.f32 %v5820, %v6950
    %v6952 = vpop.f32.mrf.mxu0
    %v6953 = vadd.f32 %v5822, %v6952
    %v6954 = vpop.f32.mrf.mxu0
    %v6955 = vadd.f32 %v5824, %v6954
    %6956 = vmatprep.mubr.bf16.mxu0 %v4573
    %6957 = vmatmul.mubr.bf16.gmra.mxu0 %v4572
    %v6958 = vpop.f32.mrf.mxu0
    %v6959 = vadd.f32 %v5828, %v6958
    %v6960 = vpop.f32.mrf.mxu0
    %v6961 = vadd.f32 %v5830, %v6960
    %v6962 = vpop.f32.mrf.mxu0
    %v6963 = vadd.f32 %v5832, %v6962
    %v6964 = vpop.f32.mrf.mxu0
    %v6965 = vadd.f32 %v5834, %v6964
    %6966 = vmatprep.mubr.bf16.mxu0 %v4576
    %6967 = vmatmul.mubr.bf16.gmra.mxu0 %v4575
    %v6968 = vpop.f32.mrf.mxu0
    %v6969 = vadd.f32 %v5838, %v6968
    %v6970 = vpop.f32.mrf.mxu0
    %v6971 = vadd.f32 %v5840, %v6970
    %v6972 = vpop.f32.mrf.mxu0
    %v6973 = vadd.f32 %v5842, %v6972
    %v6974 = vpop.f32.mrf.mxu0
    %v6975 = vadd.f32 %v5844, %v6974
    %6976 = vmatprep.mubr.bf16.mxu0 %v4579
    %6977 = vmatmul.mubr.bf16.gmra.mxu0 %v4578
    %v6978 = vpop.f32.mrf.mxu0
    %v6979 = vadd.f32 %v5848, %v6978
    %v6980 = vpop.f32.mrf.mxu0
    %v6981 = vadd.f32 %v5850, %v6980
    %v6982 = vpop.f32.mrf.mxu0
    %v6983 = vadd.f32 %v5852, %v6982
    %v6984 = vpop.f32.mrf.mxu0
    %v6985 = vadd.f32 %v5854, %v6984
    %6986 = vmatprep.mubr.bf16.mxu0 %v4582
    %6987 = vmatmul.mubr.bf16.gmra.mxu0 %v4581
    %v6988 = vpop.f32.mrf.mxu0
    %v6989 = vadd.f32 %v5858, %v6988
    %v6990 = vpop.f32.mrf.mxu0
    %v6991 = vadd.f32 %v5860, %v6990
    %v6992 = vpop.f32.mrf.mxu0
    %v6993 = vpop.f32.mrf.mxu0
    %6994 = vdwg.mxu0
    %6995 = vmatprep.subr.bf16.mxu0 0
    %6996 = vmatpush1.bf16.msra.mxu0 0
    %6997 = vmatprep.subr.bf16.mxu0 0
    %6998 = vmatpush1.bf16.msra.mxu0 0
    %6999 = vmatprep.subr.bf16.mxu0 0
    %7000 = vmatpush1.bf16.msra.mxu0 0
    %7001 = vmatprep.subr.bf16.mxu0 0
    %7002 = vmatpush1.bf16.msra.mxu0 0
    %7003 = vmatprep.subr.bf16.mxu0 0
    %7004 = vmatpush1.bf16.msra.mxu0 0
    %7005 = vmatprep.subr.bf16.mxu0 %v6745
    %7006 = vmatpush1.bf16.msra.mxu0 %v6744
    %7007 = vmatprep.subr.bf16.mxu0 %v6740
    %7008 = vmatpush1.bf16.msra.mxu0 %v6739
    %7009 = vmatprep.subr.bf16.mxu0 %v6735
    %7010 = vmatpush1.bf16.msra.mxu0 %v6734
    %7011 = vmatprep.subr.bf16.mxu0 0
    %7012 = vmatpush2.bf16.msra.mxu0 0
    %7013 = vmatprep.subr.bf16.mxu0 0
    %7014 = vmatpush2.bf16.msra.mxu0 0
    %7015 = vmatprep.subr.bf16.mxu0 0
    %7016 = vmatpush2.bf16.msra.mxu0 0
    %7017 = vmatprep.subr.bf16.mxu0 0
    %7018 = vmatpush2.bf16.msra.mxu0 0
    %7019 = vmatprep.subr.bf16.mxu0 0
    %7020 = vmatpush2.bf16.msra.mxu0 0
    %7021 = vmatprep.subr.bf16.mxu0 0
    %7022 = vmatpush2.bf16.msra.mxu0 0
    %7023 = vmatprep.subr.bf16.mxu0 0
    %7024 = vmatpush2.bf16.msra.mxu0 0
    %7025 = vmatprep.subr.bf16.mxu0 0
    %7026 = vmatpush2.bf16.msra.mxu0 0
    %7027 = vmatprep.mubr.bf16.mxu0 0
    %7028 = vmatmul.mubr.bf16.gmra.mxu0 %v6844
    %v7029 = vpop.f32.mrf.mxu0
    %v7030 = vadd.f32 %v6899, %v7029
    %v7031 = vpop.f32.mrf.mxu0
    %v7032 = vadd.f32 %v6901, %v7031
    %v7033 = vpop.f32.mrf.mxu0
    %v7034 = vadd.f32 %v6903, %v7033
    %v7035 = vpop.f32.mrf.mxu0
    %v7036 = vadd.f32 %v6905, %v7035
    %7037 = vmatprep.mubr.bf16.mxu0 0
    %7038 = vmatmul.mubr.bf16.gmra.mxu0 %v6846
    %v7039 = vpop.f32.mrf.mxu0
    %v7040 = vadd.f32 %v6909, %v7039
    %v7041 = vpop.f32.mrf.mxu0
    %v7042 = vadd.f32 %v6911, %v7041
    %v7043 = vpop.f32.mrf.mxu0
    %v7044 = vadd.f32 %v6913, %v7043
    %v7045 = vpop.f32.mrf.mxu0
    %v7046 = vadd.f32 %v6915, %v7045
    %7047 = vmatprep.mubr.bf16.mxu0 0
    %7048 = vmatmul.mubr.bf16.gmra.mxu0 %v6848
    %v7049 = vpop.f32.mrf.mxu0
    %v7050 = vadd.f32 %v6919, %v7049
    %v7051 = vpop.f32.mrf.mxu0
    %v7052 = vadd.f32 %v6921, %v7051
    %v7053 = vpop.f32.mrf.mxu0
    %v7054 = vadd.f32 %v6923, %v7053
    %v7055 = vpop.f32.mrf.mxu0
    %v7056 = vadd.f32 %v6925, %v7055
    %7057 = vmatprep.mubr.bf16.mxu0 0
    %7058 = vmatmul.mubr.bf16.gmra.mxu0 %v6850
    %v7059 = vpop.f32.mrf.mxu0
    %v7060 = vadd.f32 %v6929, %v7059
    %v7061 = vpop.f32.mrf.mxu0
    %v7062 = vadd.f32 %v6931, %v7061
    %v7063 = vpop.f32.mrf.mxu0
    %v7064 = vadd.f32 %v6933, %v7063
    %v7065 = vpop.f32.mrf.mxu0
    %v7066 = vadd.f32 %v6935, %v7065
    %7067 = vmatprep.mubr.bf16.mxu0 0
    %7068 = vmatmul.mubr.bf16.gmra.mxu0 %v6852
    %v7069 = vpop.f32.mrf.mxu0
    %v7070 = vadd.f32 %v6939, %v7069
    %v7071 = vpop.f32.mrf.mxu0
    %v7072 = vadd.f32 %v6941, %v7071
    %v7073 = vpop.f32.mrf.mxu0
    %v7074 = vadd.f32 %v6943, %v7073
    %v7075 = vpop.f32.mrf.mxu0
    %v7076 = vadd.f32 %v6945, %v7075
    %7077 = vmatprep.mubr.bf16.mxu0 0
    %7078 = vmatmul.mubr.bf16.gmra.mxu0 %v6854
    %v7079 = vpop.f32.mrf.mxu0
    %v7080 = vadd.f32 %v6949, %v7079
    %v7081 = vpop.f32.mrf.mxu0
    %v7082 = vadd.f32 %v6951, %v7081
    %v7083 = vpop.f32.mrf.mxu0
    %v7084 = vadd.f32 %v6953, %v7083
    %v7085 = vpop.f32.mrf.mxu0
    %v7086 = vadd.f32 %v6955, %v7085
    %7087 = vmatprep.mubr.bf16.mxu0 0
    %7088 = vmatmul.mubr.bf16.gmra.mxu0 %v6856
    %v7089 = vpop.f32.mrf.mxu0
    %v7090 = vadd.f32 %v6959, %v7089
    %v7091 = vpop.f32.mrf.mxu0
    %v7092 = vadd.f32 %v6961, %v7091
    %v7093 = vpop.f32.mrf.mxu0
    %v7094 = vadd.f32 %v6963, %v7093
    %v7095 = vpop.f32.mrf.mxu0
    %v7096 = vadd.f32 %v6965, %v7095
    %7097 = vmatprep.mubr.bf16.mxu0 0
    %7098 = vmatmul.mubr.bf16.gmra.mxu0 %v6858
    %v7099 = vpop.f32.mrf.mxu0
    %v7100 = vadd.f32 %v6969, %v7099
    %v7101 = vpop.f32.mrf.mxu0
    %v7102 = vadd.f32 %v6971, %v7101
    %v7103 = vpop.f32.mrf.mxu0
    %v7104 = vadd.f32 %v6973, %v7103
    %v7105 = vpop.f32.mrf.mxu0
    %v7106 = vadd.f32 %v6975, %v7105
    %7107 = vmatprep.mubr.bf16.mxu0 0
    %7108 = vmatmul.mubr.bf16.gmra.mxu0 %v6860
    %v7109 = vpop.f32.mrf.mxu0
    %v7110 = vadd.f32 %v6979, %v7109
    %v7111 = vpop.f32.mrf.mxu0
    %v7112 = vadd.f32 %v6981, %v7111
    %v7113 = vpop.f32.mrf.mxu0
    %v7114 = vadd.f32 %v6983, %v7113
    %v7115 = vpop.f32.mrf.mxu0
    %v7116 = vadd.f32 %v6985, %v7115
    %7117 = vmatprep.mubr.bf16.mxu0 0
    %7118 = vmatmul.mubr.bf16.gmra.mxu0 %v6862
    %v7119 = vpop.f32.mrf.mxu0
    %v7120 = vadd.f32 %v6989, %v7119
    %v7121 = vpop.f32.mrf.mxu0
    %v7122 = vadd.f32 %v6991, %v7121
    %v7123 = vpop.f32.mrf.mxu0
    %v7124 = vpop.f32.mrf.mxu0
    %7125 = vdwg.mxu0
    %7126 = vmatprep.subr.bf16.mxu0 %v6692
    %7127 = vmatpush1.bf16.msra.mxu0 %v6691
    %7128 = vmatprep.subr.bf16.mxu0 %v6687
    %7129 = vmatpush1.bf16.msra.mxu0 %v6686
    %7130 = vmatprep.subr.bf16.mxu0 %v6682
    %7131 = vmatpush1.bf16.msra.mxu0 %v6681
    %7132 = vmatprep.subr.bf16.mxu0 %v6677
    %7133 = vmatpush1.bf16.msra.mxu0 %v6676
    %7134 = vmatprep.subr.bf16.mxu0 %v6672
    %7135 = vmatpush1.bf16.msra.mxu0 %v6671
    %7136 = vmatprep.subr.bf16.mxu0 %v6667
    %7137 = vmatpush1.bf16.msra.mxu0 %v6666
    %7138 = vmatprep.subr.bf16.mxu0 %v6662
    %7139 = vmatpush1.bf16.msra.mxu0 %v6661
    %7140 = vmatprep.subr.bf16.mxu0 %v6657
    %7141 = vmatpush1.bf16.msra.mxu0 %v6656
    %7142 = vmatprep.subr.bf16.mxu0 %v6732
    %7143 = vmatpush2.bf16.msra.mxu0 %v6731
    %7144 = vmatprep.subr.bf16.mxu0 %v6727
    %7145 = vmatpush2.bf16.msra.mxu0 %v6726
    %7146 = vmatprep.subr.bf16.mxu0 %v6722
    %7147 = vmatpush2.bf16.msra.mxu0 %v6721
    %7148 = vmatprep.subr.bf16.mxu0 %v6717
    %7149 = vmatpush2.bf16.msra.mxu0 %v6716
    %7150 = vmatprep.subr.bf16.mxu0 %v6712
    %7151 = vmatpush2.bf16.msra.mxu0 %v6711
    %7152 = vmatprep.subr.bf16.mxu0 %v6707
    %7153 = vmatpush2.bf16.msra.mxu0 %v6706
    %7154 = vmatprep.subr.bf16.mxu0 %v6702
    %7155 = vmatpush2.bf16.msra.mxu0 %v6701
    %7156 = vmatprep.subr.bf16.mxu0 %v6697
    %7157 = vmatpush2.bf16.msra.mxu0 %v6696
    %7158 = vmatprep.mubr.bf16.mxu0 %v4555
    %7159 = vmatmul.mubr.bf16.gmra.mxu0 %v4554
    %v7160 = vpop.f32.mrf.mxu0
    %v7161 = vadd.f32 %v6030, %v7160
    %v7162 = vpop.f32.mrf.mxu0
    %v7163 = vadd.f32 %v6032, %v7162
    %v7164 = vpop.f32.mrf.mxu0
    %v7165 = vadd.f32 %v6034, %v7164
    %v7166 = vpop.f32.mrf.mxu0
    %v7167 = vadd.f32 %v6036, %v7166
    %7168 = vmatprep.mubr.bf16.mxu0 %v4558
    %7169 = vmatmul.mubr.bf16.gmra.mxu0 %v4557
    %v7170 = vpop.f32.mrf.mxu0
    %v7171 = vadd.f32 %v6040, %v7170
    %v7172 = vpop.f32.mrf.mxu0
    %v7173 = vadd.f32 %v6042, %v7172
    %v7174 = vpop.f32.mrf.mxu0
    %v7175 = vadd.f32 %v6044, %v7174
    %v7176 = vpop.f32.mrf.mxu0
    %v7177 = vadd.f32 %v6046, %v7176
    %7178 = vmatprep.mubr.bf16.mxu0 %v4561
    %7179 = vmatmul.mubr.bf16.gmra.mxu0 %v4560
    %v7180 = vpop.f32.mrf.mxu0
    %v7181 = vadd.f32 %v6050, %v7180
    %v7182 = vpop.f32.mrf.mxu0
    %v7183 = vadd.f32 %v6052, %v7182
    %v7184 = vpop.f32.mrf.mxu0
    %v7185 = vadd.f32 %v6054, %v7184
    %v7186 = vpop.f32.mrf.mxu0
    %v7187 = vadd.f32 %v6056, %v7186
    %7188 = vmatprep.mubr.bf16.mxu0 %v4564
    %7189 = vmatmul.mubr.bf16.gmra.mxu0 %v4563
    %v7190 = vpop.f32.mrf.mxu0
    %v7191 = vadd.f32 %v6060, %v7190
    %v7192 = vpop.f32.mrf.mxu0
    %v7193 = vadd.f32 %v6062, %v7192
    %v7194 = vpop.f32.mrf.mxu0
    %v7195 = vadd.f32 %v6064, %v7194
    %v7196 = vpop.f32.mrf.mxu0
    %v7197 = vadd.f32 %v6066, %v7196
    %7198 = vmatprep.mubr.bf16.mxu0 %v4567
    %7199 = vmatmul.mubr.bf16.gmra.mxu0 %v4566
    %v7200 = vpop.f32.mrf.mxu0
    %v7201 = vadd.f32 %v6070, %v7200
    %v7202 = vpop.f32.mrf.mxu0
    %v7203 = vadd.f32 %v6072, %v7202
    %v7204 = vpop.f32.mrf.mxu0
    %v7205 = vadd.f32 %v6074, %v7204
    %v7206 = vpop.f32.mrf.mxu0
    %v7207 = vadd.f32 %v6076, %v7206
    %7208 = vmatprep.mubr.bf16.mxu0 %v4570
    %7209 = vmatmul.mubr.bf16.gmra.mxu0 %v4569
    %v7210 = vpop.f32.mrf.mxu0
    %v7211 = vadd.f32 %v6080, %v7210
    %v7212 = vpop.f32.mrf.mxu0
    %v7213 = vadd.f32 %v6082, %v7212
    %v7214 = vpop.f32.mrf.mxu0
    %v7215 = vadd.f32 %v6084, %v7214
    %v7216 = vpop.f32.mrf.mxu0
    %v7217 = vadd.f32 %v6086, %v7216
    %7218 = vmatprep.mubr.bf16.mxu0 %v4573
    %7219 = vmatmul.mubr.bf16.gmra.mxu0 %v4572
    %v7220 = vpop.f32.mrf.mxu0
    %v7221 = vadd.f32 %v6090, %v7220
    %v7222 = vpop.f32.mrf.mxu0
    %v7223 = vadd.f32 %v6092, %v7222
    %v7224 = vpop.f32.mrf.mxu0
    %v7225 = vadd.f32 %v6094, %v7224
    %v7226 = vpop.f32.mrf.mxu0
    %v7227 = vadd.f32 %v6096, %v7226
    %7228 = vmatprep.mubr.bf16.mxu0 %v4576
    %7229 = vmatmul.mubr.bf16.gmra.mxu0 %v4575
    %v7230 = vpop.f32.mrf.mxu0
    %v7231 = vadd.f32 %v6100, %v7230
    %v7232 = vpop.f32.mrf.mxu0
    %v7233 = vadd.f32 %v6102, %v7232
    %v7234 = vpop.f32.mrf.mxu0
    %v7235 = vadd.f32 %v6104, %v7234
    %v7236 = vpop.f32.mrf.mxu0
    %v7237 = vadd.f32 %v6106, %v7236
    %7238 = vmatprep.mubr.bf16.mxu0 %v4579
    %7239 = vmatmul.mubr.bf16.gmra.mxu0 %v4578
    %v7240 = vpop.f32.mrf.mxu0
    %v7241 = vadd.f32 %v6110, %v7240
    %v7242 = vpop.f32.mrf.mxu0
    %v7243 = vadd.f32 %v6112, %v7242
    %v7244 = vpop.f32.mrf.mxu0
    %v7245 = vadd.f32 %v6114, %v7244
    %v7246 = vpop.f32.mrf.mxu0
    %v7247 = vadd.f32 %v6116, %v7246
    %7248 = vmatprep.mubr.bf16.mxu0 %v4582
    %7249 = vmatmul.mubr.bf16.gmra.mxu0 %v4581
    %v7250 = vpop.f32.mrf.mxu0
    %v7251 = vadd.f32 %v6120, %v7250
    %v7252 = vpop.f32.mrf.mxu0
    %v7253 = vadd.f32 %v6122, %v7252
    %v7254 = vpop.f32.mrf.mxu0
    %v7255 = vpop.f32.mrf.mxu0
    %7256 = vdwg.mxu0
    %7257 = vmatprep.subr.bf16.mxu0 0
    %7258 = vmatpush1.bf16.msra.mxu0 0
    %7259 = vmatprep.subr.bf16.mxu0 0
    %7260 = vmatpush1.bf16.msra.mxu0 0
    %7261 = vmatprep.subr.bf16.mxu0 0
    %7262 = vmatpush1.bf16.msra.mxu0 0
    %7263 = vmatprep.subr.bf16.mxu0 0
    %7264 = vmatpush1.bf16.msra.mxu0 0
    %7265 = vmatprep.subr.bf16.mxu0 0
    %7266 = vmatpush1.bf16.msra.mxu0 0
    %7267 = vmatprep.subr.bf16.mxu0 %v6747
    %7268 = vmatpush1.bf16.msra.mxu0 %v6746
    %7269 = vmatprep.subr.bf16.mxu0 %v6742
    %7270 = vmatpush1.bf16.msra.mxu0 %v6741
    %7271 = vmatprep.subr.bf16.mxu0 %v6737
    %7272 = vmatpush1.bf16.msra.mxu0 %v6736
    %7273 = vmatprep.subr.bf16.mxu0 0
    %7274 = vmatpush2.bf16.msra.mxu0 0
    %7275 = vmatprep.subr.bf16.mxu0 0
    %7276 = vmatpush2.bf16.msra.mxu0 0
    %7277 = vmatprep.subr.bf16.mxu0 0
    %7278 = vmatpush2.bf16.msra.mxu0 0
    %7279 = vmatprep.subr.bf16.mxu0 0
    %7280 = vmatpush2.bf16.msra.mxu0 0
    %7281 = vmatprep.subr.bf16.mxu0 0
    %7282 = vmatpush2.bf16.msra.mxu0 0
    %7283 = vmatprep.subr.bf16.mxu0 0
    %7284 = vmatpush2.bf16.msra.mxu0 0
    %7285 = vmatprep.subr.bf16.mxu0 0
    %7286 = vmatpush2.bf16.msra.mxu0 0
    %7287 = vmatprep.subr.bf16.mxu0 0
    %7288 = vmatpush2.bf16.msra.mxu0 0
    %7289 = vmatprep.mubr.bf16.mxu0 0
    %7290 = vmatmul.mubr.bf16.gmra.mxu0 %v6844
    %v7291 = vpop.f32.mrf.mxu0
    %v7292 = vadd.f32 %v7161, %v7291
    %v7293 = vpop.f32.mrf.mxu0
    %v7294 = vadd.f32 %v7163, %v7293
    %v7295 = vpop.f32.mrf.mxu0
    %v7296 = vadd.f32 %v7165, %v7295
    %v7297 = vpop.f32.mrf.mxu0
    %v7298 = vadd.f32 %v7167, %v7297
    %7299 = vmatprep.mubr.bf16.mxu0 0
    %7300 = vmatmul.mubr.bf16.gmra.mxu0 %v6846
    %v7301 = vpop.f32.mrf.mxu0
    %v7302 = vadd.f32 %v7171, %v7301
    %v7303 = vpop.f32.mrf.mxu0
    %v7304 = vadd.f32 %v7173, %v7303
    %v7305 = vpop.f32.mrf.mxu0
    %v7306 = vadd.f32 %v7175, %v7305
    %v7307 = vpop.f32.mrf.mxu0
    %v7308 = vadd.f32 %v7177, %v7307
    %7309 = vmatprep.mubr.bf16.mxu0 0
    %7310 = vmatmul.mubr.bf16.gmra.mxu0 %v6848
    %v7311 = vpop.f32.mrf.mxu0
    %v7312 = vadd.f32 %v7181, %v7311
    %v7313 = vpop.f32.mrf.mxu0
    %v7314 = vadd.f32 %v7183, %v7313
    %v7315 = vpop.f32.mrf.mxu0
    %v7316 = vadd.f32 %v7185, %v7315
    %v7317 = vpop.f32.mrf.mxu0
    %v7318 = vadd.f32 %v7187, %v7317
    %7319 = vmatprep.mubr.bf16.mxu0 0
    %7320 = vmatmul.mubr.bf16.gmra.mxu0 %v6850
    %v7321 = vpop.f32.mrf.mxu0
    %v7322 = vadd.f32 %v7191, %v7321
    %v7323 = vpop.f32.mrf.mxu0
    %v7324 = vadd.f32 %v7193, %v7323
    %v7325 = vpop.f32.mrf.mxu0
    %v7326 = vadd.f32 %v7195, %v7325
    %v7327 = vpop.f32.mrf.mxu0
    %v7328 = vadd.f32 %v7197, %v7327
    %7329 = vmatprep.mubr.bf16.mxu0 0
    %7330 = vmatmul.mubr.bf16.gmra.mxu0 %v6852
    %v7331 = vpop.f32.mrf.mxu0
    %v7332 = vadd.f32 %v7201, %v7331
    %v7333 = vpop.f32.mrf.mxu0
    %v7334 = vadd.f32 %v7203, %v7333
    %v7335 = vpop.f32.mrf.mxu0
    %v7336 = vadd.f32 %v7205, %v7335
    %v7337 = vpop.f32.mrf.mxu0
    %v7338 = vadd.f32 %v7207, %v7337
    %7339 = vmatprep.mubr.bf16.mxu0 0
    %7340 = vmatmul.mubr.bf16.gmra.mxu0 %v6854
    %v7341 = vpop.f32.mrf.mxu0
    %v7342 = vadd.f32 %v7211, %v7341
    %v7343 = vpop.f32.mrf.mxu0
    %v7344 = vadd.f32 %v7213, %v7343
    %v7345 = vpop.f32.mrf.mxu0
    %v7346 = vadd.f32 %v7215, %v7345
    %v7347 = vpop.f32.mrf.mxu0
    %v7348 = vadd.f32 %v7217, %v7347
    %7349 = vmatprep.mubr.bf16.mxu0 0
    %7350 = vmatmul.mubr.bf16.gmra.mxu0 %v6856
    %v7351 = vpop.f32.mrf.mxu0
    %v7352 = vadd.f32 %v7221, %v7351
    %v7353 = vpop.f32.mrf.mxu0
    %v7354 = vadd.f32 %v7223, %v7353
    %v7355 = vpop.f32.mrf.mxu0
    %v7356 = vadd.f32 %v7225, %v7355
    %v7357 = vpop.f32.mrf.mxu0
    %v7358 = vadd.f32 %v7227, %v7357
    %7359 = vmatprep.mubr.bf16.mxu0 0
    %7360 = vmatmul.mubr.bf16.gmra.mxu0 %v6858
    %v7361 = vpop.f32.mrf.mxu0
    %v7362 = vadd.f32 %v7231, %v7361
    %v7363 = vpop.f32.mrf.mxu0
    %v7364 = vadd.f32 %v7233, %v7363
    %v7365 = vpop.f32.mrf.mxu0
    %v7366 = vadd.f32 %v7235, %v7365
    %v7367 = vpop.f32.mrf.mxu0
    %v7368 = vadd.f32 %v7237, %v7367
    %7369 = vmatprep.mubr.bf16.mxu0 0
    %7370 = vmatmul.mubr.bf16.gmra.mxu0 %v6860
    %v7371 = vpop.f32.mrf.mxu0
    %v7372 = vadd.f32 %v7241, %v7371
    %v7373 = vpop.f32.mrf.mxu0
    %v7374 = vadd.f32 %v7243, %v7373
    %v7375 = vpop.f32.mrf.mxu0
    %v7376 = vadd.f32 %v7245, %v7375
    %v7377 = vpop.f32.mrf.mxu0
    %v7378 = vadd.f32 %v7247, %v7377
    %7379 = vmatprep.mubr.bf16.mxu0 0
    %7380 = vmatmul.mubr.bf16.gmra.mxu0 %v6862
    %v7381 = vpop.f32.mrf.mxu0
    %v7382 = vadd.f32 %v7251, %v7381
    %v7383 = vpop.f32.mrf.mxu0
    %v7384 = vadd.f32 %v7253, %v7383
    %v7385 = vpop.f32.mrf.mxu0
    %v7386 = vpop.f32.mrf.mxu0
    %7387 = vdwg.mxu0
    %7388 = vmatprep.subr.bf16.mxu0 0
    %7389 = vmatpush1.bf16.msra.mxu0 %v6693
    %7390 = vmatprep.subr.bf16.mxu0 0
    %7391 = vmatpush1.bf16.msra.mxu0 %v6688
    %7392 = vmatprep.subr.bf16.mxu0 0
    %7393 = vmatpush1.bf16.msra.mxu0 %v6683
    %7394 = vmatprep.subr.bf16.mxu0 0
    %7395 = vmatpush1.bf16.msra.mxu0 %v6678
    %7396 = vmatprep.subr.bf16.mxu0 0
    %7397 = vmatpush1.bf16.msra.mxu0 %v6673
    %7398 = vmatprep.subr.bf16.mxu0 0
    %7399 = vmatpush1.bf16.msra.mxu0 %v6668
    %7400 = vmatprep.subr.bf16.mxu0 0
    %7401 = vmatpush1.bf16.msra.mxu0 %v6663
    %7402 = vmatprep.subr.bf16.mxu0 0
    %7403 = vmatpush1.bf16.msra.mxu0 %v6658
    %7404 = vmatprep.subr.bf16.mxu0 0
    %7405 = vmatpush2.bf16.msra.mxu0 %v6733
    %7406 = vmatprep.subr.bf16.mxu0 0
    %7407 = vmatpush2.bf16.msra.mxu0 %v6728
    %7408 = vmatprep.subr.bf16.mxu0 0
    %7409 = vmatpush2.bf16.msra.mxu0 %v6723
    %7410 = vmatprep.subr.bf16.mxu0 0
    %7411 = vmatpush2.bf16.msra.mxu0 %v6718
    %7412 = vmatprep.subr.bf16.mxu0 0
    %7413 = vmatpush2.bf16.msra.mxu0 %v6713
    %7414 = vmatprep.subr.bf16.mxu0 0
    %7415 = vmatpush2.bf16.msra.mxu0 %v6708
    %7416 = vmatprep.subr.bf16.mxu0 0
    %7417 = vmatpush2.bf16.msra.mxu0 %v6703
    %7418 = vmatprep.subr.bf16.mxu0 0
    %7419 = vmatpush2.bf16.msra.mxu0 %v6698
    %7420 = vmatprep.mubr.bf16.mxu0 %v4555
    %7421 = vmatmul.mubr.bf16.gmra.mxu0 %v4554
    %v7422 = vpop.f32.mrf.mxu0
    %v7423 = vadd.f32 %v6273, %v7422
    %v7424 = vpop.f32.mrf.mxu0
    %v7425 = vpop.f32.mrf.mxu0
    %v7426 = vadd.f32 %v6276, %v7425
    %v7427 = vpop.f32.mrf.mxu0
    %7428 = vmatprep.mubr.bf16.mxu0 %v4558
    %7429 = vmatmul.mubr.bf16.gmra.mxu0 %v4557
    %v7430 = vpop.f32.mrf.mxu0
    %v7431 = vadd.f32 %v6281, %v7430
    %v7432 = vpop.f32.mrf.mxu0
    %v7433 = vpop.f32.mrf.mxu0
    %v7434 = vadd.f32 %v6284, %v7433
    %v7435 = vpop.f32.mrf.mxu0
    %7436 = vmatprep.mubr.bf16.mxu0 %v4561
    %7437 = vmatmul.mubr.bf16.gmra.mxu0 %v4560
    %v7438 = vpop.f32.mrf.mxu0
    %v7439 = vadd.f32 %v6289, %v7438
    %v7440 = vpop.f32.mrf.mxu0
    %v7441 = vpop.f32.mrf.mxu0
    %v7442 = vadd.f32 %v6292, %v7441
    %v7443 = vpop.f32.mrf.mxu0
    %7444 = vmatprep.mubr.bf16.mxu0 %v4564
    %7445 = vmatmul.mubr.bf16.gmra.mxu0 %v4563
    %v7446 = vpop.f32.mrf.mxu0
    %v7447 = vadd.f32 %v6297, %v7446
    %v7448 = vpop.f32.mrf.mxu0
    %v7449 = vpop.f32.mrf.mxu0
    %v7450 = vadd.f32 %v6300, %v7449
    %v7451 = vpop.f32.mrf.mxu0
    %7452 = vmatprep.mubr.bf16.mxu0 %v4567
    %7453 = vmatmul.mubr.bf16.gmra.mxu0 %v4566
    %v7454 = vpop.f32.mrf.mxu0
    %v7455 = vadd.f32 %v6305, %v7454
    %v7456 = vpop.f32.mrf.mxu0
    %v7457 = vpop.f32.mrf.mxu0
    %v7458 = vadd.f32 %v6308, %v7457
    %v7459 = vpop.f32.mrf.mxu0
    %7460 = vmatprep.mubr.bf16.mxu0 %v4570
    %7461 = vmatmul.mubr.bf16.gmra.mxu0 %v4569
    %v7462 = vpop.f32.mrf.mxu0
    %v7463 = vadd.f32 %v6313, %v7462
    %v7464 = vpop.f32.mrf.mxu0
    %v7465 = vpop.f32.mrf.mxu0
    %v7466 = vadd.f32 %v6316, %v7465
    %v7467 = vpop.f32.mrf.mxu0
    %7468 = vmatprep.mubr.bf16.mxu0 %v4573
    %7469 = vmatmul.mubr.bf16.gmra.mxu0 %v4572
    %v7470 = vpop.f32.mrf.mxu0
    %v7471 = vadd.f32 %v6321, %v7470
    %v7472 = vpop.f32.mrf.mxu0
    %v7473 = vpop.f32.mrf.mxu0
    %v7474 = vadd.f32 %v6324, %v7473
    %v7475 = vpop.f32.mrf.mxu0
    %7476 = vmatprep.mubr.bf16.mxu0 %v4576
    %7477 = vmatmul.mubr.bf16.gmra.mxu0 %v4575
    %v7478 = vpop.f32.mrf.mxu0
    %v7479 = vadd.f32 %v6329, %v7478
    %v7480 = vpop.f32.mrf.mxu0
    %v7481 = vpop.f32.mrf.mxu0
    %v7482 = vadd.f32 %v6332, %v7481
    %v7483 = vpop.f32.mrf.mxu0
    %7484 = vmatprep.mubr.bf16.mxu0 %v4579
    %7485 = vmatmul.mubr.bf16.gmra.mxu0 %v4578
    %v7486 = vpop.f32.mrf.mxu0
    %v7487 = vadd.f32 %v6337, %v7486
    %v7488 = vpop.f32.mrf.mxu0
    %v7489 = vpop.f32.mrf.mxu0
    %v7490 = vadd.f32 %v6340, %v7489
    %v7491 = vpop.f32.mrf.mxu0
    %7492 = vmatprep.mubr.bf16.mxu0 %v4582
    %7493 = vmatmul.mubr.bf16.gmra.mxu0 %v4581
    %v7494 = vpop.f32.mrf.mxu0
    %v7495 = vadd.f32 %v6345, %v7494
    %v7496 = vpop.f32.mrf.mxu0
    %v7497 = vpop.f32.mrf.mxu0
    %v7498 = vpop.f32.mrf.mxu0
    %7499 = vdwg.mxu0
    %7500 = vmatprep.subr.bf16.mxu0 0
    %7501 = vmatpush1.bf16.msra.mxu0 0
    %7502 = vmatprep.subr.bf16.mxu0 0
    %7503 = vmatpush1.bf16.msra.mxu0 0
    %7504 = vmatprep.subr.bf16.mxu0 0
    %7505 = vmatpush1.bf16.msra.mxu0 0
    %7506 = vmatprep.subr.bf16.mxu0 0
    %7507 = vmatpush1.bf16.msra.mxu0 0
    %7508 = vmatprep.subr.bf16.mxu0 0
    %7509 = vmatpush1.bf16.msra.mxu0 0
    %7510 = vmatprep.subr.bf16.mxu0 0
    %7511 = vmatpush1.bf16.msra.mxu0 %v6748
    %7512 = vmatprep.subr.bf16.mxu0 0
    %7513 = vmatpush1.bf16.msra.mxu0 %v6743
    %7514 = vmatprep.subr.bf16.mxu0 0
    %7515 = vmatpush1.bf16.msra.mxu0 %v6738
    %7516 = vmatprep.subr.bf16.mxu0 0
    %7517 = vmatpush2.bf16.msra.mxu0 0
    %7518 = vmatprep.subr.bf16.mxu0 0
    %7519 = vmatpush2.bf16.msra.mxu0 0
    %7520 = vmatprep.subr.bf16.mxu0 0
    %7521 = vmatpush2.bf16.msra.mxu0 0
    %7522 = vmatprep.subr.bf16.mxu0 0
    %7523 = vmatpush2.bf16.msra.mxu0 0
    %7524 = vmatprep.subr.bf16.mxu0 0
    %7525 = vmatpush2.bf16.msra.mxu0 0
    %7526 = vmatprep.subr.bf16.mxu0 0
    %7527 = vmatpush2.bf16.msra.mxu0 0
    %7528 = vmatprep.subr.bf16.mxu0 0
    %7529 = vmatpush2.bf16.msra.mxu0 0
    %7530 = vmatprep.subr.bf16.mxu0 0
    %7531 = vmatpush2.bf16.msra.mxu0 0
    %7532 = vmatprep.mubr.bf16.mxu0 0
    %7533 = vmatmul.mubr.bf16.gmra.mxu0 %v6844
    %v7534 = vpop.f32.mrf.mxu0
    %v7535 = vadd.f32 %v7423, %v7534
    %v7536 = vpop.f32.mrf.mxu0
    %v7537 = vpop.f32.mrf.mxu0
    %v7538 = vadd.f32 %v7426, %v7537
    %v7539 = vpop.f32.mrf.mxu0
    %7540 = vmatprep.mubr.bf16.mxu0 0
    %7541 = vmatmul.mubr.bf16.gmra.mxu0 %v6846
    %v7542 = vpop.f32.mrf.mxu0
    %v7543 = vadd.f32 %v7431, %v7542
    %v7544 = vpop.f32.mrf.mxu0
    %v7545 = vpop.f32.mrf.mxu0
    %v7546 = vadd.f32 %v7434, %v7545
    %v7547 = vpop.f32.mrf.mxu0
    %7548 = vmatprep.mubr.bf16.mxu0 0
    %7549 = vmatmul.mubr.bf16.gmra.mxu0 %v6848
    %v7550 = vpop.f32.mrf.mxu0
    %v7551 = vadd.f32 %v7439, %v7550
    %v7552 = vpop.f32.mrf.mxu0
    %v7553 = vpop.f32.mrf.mxu0
    %v7554 = vadd.f32 %v7442, %v7553
    %v7555 = vpop.f32.mrf.mxu0
    %7556 = vmatprep.mubr.bf16.mxu0 0
    %7557 = vmatmul.mubr.bf16.gmra.mxu0 %v6850
    %v7558 = vpop.f32.mrf.mxu0
    %v7559 = vadd.f32 %v7447, %v7558
    %v7560 = vpop.f32.mrf.mxu0
    %v7561 = vpop.f32.mrf.mxu0
    %v7562 = vadd.f32 %v7450, %v7561
    %v7563 = vpop.f32.mrf.mxu0
    %7564 = vmatprep.mubr.bf16.mxu0 0
    %7565 = vmatmul.mubr.bf16.gmra.mxu0 %v6852
    %v7566 = vpop.f32.mrf.mxu0
    %v7567 = vadd.f32 %v7455, %v7566
    %v7568 = vpop.f32.mrf.mxu0
    %v7569 = vpop.f32.mrf.mxu0
    %v7570 = vadd.f32 %v7458, %v7569
    %v7571 = vpop.f32.mrf.mxu0
    %7572 = vmatprep.mubr.bf16.mxu0 0
    %7573 = vmatmul.mubr.bf16.gmra.mxu0 %v6854
    %v7574 = vpop.f32.mrf.mxu0
    %v7575 = vadd.f32 %v7463, %v7574
    %v7576 = vpop.f32.mrf.mxu0
    %v7577 = vpop.f32.mrf.mxu0
    %v7578 = vadd.f32 %v7466, %v7577
    %v7579 = vpop.f32.mrf.mxu0
    %7580 = vmatprep.mubr.bf16.mxu0 0
    %7581 = vmatmul.mubr.bf16.gmra.mxu0 %v6856
    %v7582 = vpop.f32.mrf.mxu0
    %v7583 = vadd.f32 %v7471, %v7582
    %v7584 = vpop.f32.mrf.mxu0
    %v7585 = vpop.f32.mrf.mxu0
    %v7586 = vadd.f32 %v7474, %v7585
    %v7587 = vpop.f32.mrf.mxu0
    %7588 = vmatprep.mubr.bf16.mxu0 0
    %7589 = vmatmul.mubr.bf16.gmra.mxu0 %v6858
    %v7590 = vpop.f32.mrf.mxu0
    %v7591 = vadd.f32 %v7479, %v7590
    %v7592 = vpop.f32.mrf.mxu0
    %v7593 = vpop.f32.mrf.mxu0
    %v7594 = vadd.f32 %v7482, %v7593
    %v7595 = vpop.f32.mrf.mxu0
    %7596 = vmatprep.mubr.bf16.mxu0 0
    %7597 = vmatmul.mubr.bf16.gmra.mxu0 %v6860
    %v7598 = vpop.f32.mrf.mxu0
    %v7599 = vadd.f32 %v7487, %v7598
    %v7600 = vpop.f32.mrf.mxu0
    %v7601 = vpop.f32.mrf.mxu0
    %v7602 = vadd.f32 %v7490, %v7601
    %v7603 = vpop.f32.mrf.mxu0
    %7604 = vmatprep.mubr.bf16.mxu0 0
    %7605 = vmatmul.mubr.bf16.gmra.mxu0 %v6862
    %v7606 = vpop.f32.mrf.mxu0
    %v7607 = vadd.f32 %v7495, %v7606
    %v7608 = vpop.f32.mrf.mxu0
    %v7609 = vpop.f32.mrf.mxu0
    %v7610 = vpop.f32.mrf.mxu0
    %7611 = vdwg.mxu0
    %v7642 = vrot.slane %v4554, 1
    %v7643 = vrot.slane %v4557, 1
    %v7644 = vsel %vm291, %v7642, %v7643
    %v7645 = vrot.slane %v4555, 1
    %v7646 = vrot.slane %v4558, 1
    %v7647 = vsel %vm291, %v7645, %v7646
    %v7648 = vrot.slane %v4556, 1
    %v7649 = vrot.slane %v4559, 1
    %v7650 = vsel %vm291, %v7648, %v7649
    %v7651 = vrot.slane %v4560, 1
    %v7652 = vsel %vm291, %v7643, %v7651
    %v7653 = vrot.slane %v4561, 1
    %v7654 = vsel %vm291, %v7646, %v7653
    %v7655 = vrot.slane %v4562, 1
    %v7656 = vsel %vm291, %v7649, %v7655
    %v7657 = vrot.slane %v4563, 1
    %v7658 = vsel %vm291, %v7651, %v7657
    %v7659 = vrot.slane %v4564, 1
    %v7660 = vsel %vm291, %v7653, %v7659
    %v7661 = vrot.slane %v4565, 1
    %v7662 = vsel %vm291, %v7655, %v7661
    %v7663 = vrot.slane %v4566, 1
    %v7664 = vsel %vm291, %v7657, %v7663
    %v7665 = vrot.slane %v4567, 1
    %v7666 = vsel %vm291, %v7659, %v7665
    %v7667 = vrot.slane %v4568, 1
    %v7668 = vsel %vm291, %v7661, %v7667
    %v7669 = vrot.slane %v4569, 1
    %v7670 = vsel %vm291, %v7663, %v7669
    %v7671 = vrot.slane %v4570, 1
    %v7672 = vsel %vm291, %v7665, %v7671
    %v7673 = vrot.slane %v4571, 1
    %v7674 = vsel %vm291, %v7667, %v7673
    %v7675 = vrot.slane %v4572, 1
    %v7676 = vsel %vm291, %v7669, %v7675
    %v7677 = vrot.slane %v4573, 1
    %v7678 = vsel %vm291, %v7671, %v7677
    %v7679 = vrot.slane %v4574, 1
    %v7680 = vsel %vm291, %v7673, %v7679
    %v7681 = vrot.slane %v4575, 1
    %v7682 = vsel %vm291, %v7675, %v7681
    %v7683 = vrot.slane %v4576, 1
    %v7684 = vsel %vm291, %v7677, %v7683
    %v7685 = vrot.slane %v4577, 1
    %v7686 = vsel %vm291, %v7679, %v7685
    %v7687 = vrot.slane %v4578, 1
    %v7688 = vsel %vm291, %v7681, %v7687
    %v7689 = vrot.slane %v4579, 1
    %v7690 = vsel %vm291, %v7683, %v7689
    %v7691 = vrot.slane %v4580, 1
    %v7692 = vsel %vm291, %v7685, %v7691
    %v7693 = vrot.slane %v4581, 1
    %v7694 = vsel %vm291, %v7687, %v7693
    %v7695 = vrot.slane %v4582, 1
    %v7696 = vsel %vm291, %v7689, %v7695
    %v7697 = vrot.slane %v4583, 1
    %v7698 = vsel %vm291, %v7691, %v7697
    %vm7717 = vcmask 1042432
    %v7719 = vsel %vm7717, %v7693, 0
    %v7722 = vsel %vm7717, %v7695, 0
    %v7725 = vsel %vm7717, %v7697, 0
    %s7726 = scalar_lea.vmem %s5, 1520
    %v7727 = vld [vmem:[%s7726] sm:$0xff]
    %v7728 = vld [vmem:[%s7726 + $0x8] sm:$0xff]
    %v7729 = vld [vmem:[%s7726 + $0x10] sm:$0xf]
    %v7730 = vld [vmem:[%s7726 + $0x14] sm:$0xff]
    %v7731 = vld [vmem:[%s7726 + $0x1c] sm:$0xff]
    %v7732 = vld [vmem:[%s7726 + $0x24] sm:$0xf]
    %v7733 = vld [vmem:[%s7726 + $0x28] sm:$0xff]
    %v7734 = vld [vmem:[%s7726 + $0x30] sm:$0xff]
    %v7735 = vld [vmem:[%s7726 + $0x38] sm:$0xf]
    %v7736 = vld [vmem:[%s7726 + $0x3c] sm:$0xff]
    %v7737 = vld [vmem:[%s7726 + $0x44] sm:$0xff]
    %v7738 = vld [vmem:[%s7726 + $0x4c] sm:$0xf]
    %v7739 = vld [vmem:[%s7726 + $0x50] sm:$0xff]
    %v7740 = vld [vmem:[%s7726 + $0x58] sm:$0xff]
    %v7741 = vld [vmem:[%s7726 + $0x60] sm:$0xf]
    %v7742 = vld [vmem:[%s7726 + $0x64] sm:$0xff]
    %v7743 = vld [vmem:[%s7726 + $0x6c] sm:$0xff]
    %v7744 = vld [vmem:[%s7726 + $0x74] sm:$0xf]
    %v7745 = vld [vmem:[%s7726 + $0x78] sm:$0xff]
    %v7746 = vld [vmem:[%s7726 + $0x80] sm:$0xff]
    %v7747 = vld [vmem:[%s7726 + $0x88] sm:$0xf]
    %v7748 = vld [vmem:[%s7726 + $0x8c] sm:$0xff]
    %v7749 = vld [vmem:[%s7726 + $0x94] sm:$0xff]
    %v7750 = vld [vmem:[%s7726 + $0x9c] sm:$0xf]
    %v7751 = vld [vmem:[%s7726 + $0xa0] sm:$0xff]
    %v7752 = vld [vmem:[%s7726 + $0xa8] sm:$0xff]
    %v7753 = vld [vmem:[%s7726 + $0xb0] sm:$0xf]
    %v7754 = vld [vmem:[%s7726 + $0xb4] sm:$0xff]
    %v7755 = vld [vmem:[%s7726 + $0xbc] sm:$0xff]
    %v7756 = vld [vmem:[%s7726 + $0xc4] sm:$0xf]
    %v7757 = vld [vmem:[%s7726 + $0xc8] sm:$0xff]
    %v7758 = vld [vmem:[%s7726 + $0xd0] sm:$0xff]
    %v7759 = vld [vmem:[%s7726 + $0xd8] sm:$0xf]
    %v7760 = vld [vmem:[%s7726 + $0xdc] sm:$0xff]
    %v7761 = vld [vmem:[%s7726 + $0xe4] sm:$0xff]
    %v7762 = vld [vmem:[%s7726 + $0xec] sm:$0xf]
    %v7763 = vld [vmem:[%s7726 + $0xf0] sm:$0xff]
    %v7764 = vld [vmem:[%s7726 + $0xf8] sm:$0xff]
    %v7765 = vld [vmem:[%s7726 + $0x100] sm:$0xf]
    %v7766 = vld [vmem:[%s7726 + $0x104] sm:$0xff]
    %v7767 = vld [vmem:[%s7726 + $0x10c] sm:$0xff]
    %v7768 = vld [vmem:[%s7726 + $0x114] sm:$0xf]
    %v7769 = vld [vmem:[%s7726 + $0x118] sm:$0xff]
    %v7770 = vld [vmem:[%s7726 + $0x120] sm:$0xff]
    %v7771 = vld [vmem:[%s7726 + $0x128] sm:$0xf]
    %v7772 = vld [vmem:[%s7726 + $0x12c] sm:$0xff]
    %v7773 = vld [vmem:[%s7726 + $0x134] sm:$0xff]
    %v7774 = vld [vmem:[%s7726 + $0x13c] sm:$0xf]
    %v7775 = vld [vmem:[%s7726 + $0x140] sm:$0xff]
    %v7776 = vld [vmem:[%s7726 + $0x148] sm:$0xff]
    %v7777 = vld [vmem:[%s7726 + $0x150] sm:$0xf]
    %v7778 = vld [vmem:[%s7726 + $0x154] sm:$0xff]
    %v7779 = vld [vmem:[%s7726 + $0x15c] sm:$0xff]
    %v7780 = vld [vmem:[%s7726 + $0x164] sm:$0xf]
    %v7781 = vld [vmem:[%s7726 + $0x168] sm:$0xff]
    %v7782 = vld [vmem:[%s7726 + $0x170] sm:$0xff]
    %v7783 = vld [vmem:[%s7726 + $0x178] sm:$0xf]
    %v7784 = vld [vmem:[%s7726 + $0x17c] sm:$0xff]
    %v7785 = vld [vmem:[%s7726 + $0x184] sm:$0xff]
    %v7786 = vld [vmem:[%s7726 + $0x18c] sm:$0xf]
    %v7787 = vld [vmem:[%s7726 + $0x190] sm:$0xff]
    %v7788 = vld [vmem:[%s7726 + $0x198] sm:$0xff]
    %v7789 = vld [vmem:[%s7726 + $0x1a0] sm:$0xf]
    %v7790 = vld [vmem:[%s7726 + $0x1a4] sm:$0xff]
    %v7791 = vld [vmem:[%s7726 + $0x1ac] sm:$0xff]
    %v7792 = vld [vmem:[%s7726 + $0x1b4] sm:$0xf]
    %v7793 = vld [vmem:[%s7726 + $0x1b8] sm:$0xff]
    %v7794 = vld [vmem:[%s7726 + $0x1c0] sm:$0xff]
    %v7795 = vld [vmem:[%s7726 + $0x1c8] sm:$0xf]
    %v7796 = vld [vmem:[%s7726 + $0x1cc] sm:$0xff]
    %v7797 = vld [vmem:[%s7726 + $0x1d4] sm:$0xff]
    %v7798 = vld [vmem:[%s7726 + $0x1dc] sm:$0xf]
    %v7799 = vld [vmem:[%s7726 + $0x1e0] sm:$0xff]
    %v7800 = vld [vmem:[%s7726 + $0x1e8] sm:$0xff]
    %v7801 = vld [vmem:[%s7726 + $0x1f0] sm:$0xf]
    %v7802 = vld [vmem:[%s7726 + $0x1f4] sm:$0xff]
    %v7803 = vld [vmem:[%s7726 + $0x1fc] sm:$0xff]
    %v7804 = vld [vmem:[%s7726 + $0x204] sm:$0xf]
    %v7805 = vld [vmem:[%s7726 + $0x208] sm:$0xff]
    %v7806 = vld [vmem:[%s7726 + $0x210] sm:$0xff]
    %v7807 = vld [vmem:[%s7726 + $0x218] sm:$0xf]
    %v7808 = vld [vmem:[%s7726 + $0x21c] sm:$0xff]
    %v7809 = vld [vmem:[%s7726 + $0x224] sm:$0xff]
    %v7810 = vld [vmem:[%s7726 + $0x22c] sm:$0xf]
    %v7811 = vld [vmem:[%s7726 + $0x230] sm:$0xff]
    %v7812 = vld [vmem:[%s7726 + $0x238] sm:$0xff]
    %v7813 = vld [vmem:[%s7726 + $0x240] sm:$0xf]
    %v7814 = vld [vmem:[%s7726 + $0x244] sm:$0xff]
    %v7815 = vld [vmem:[%s7726 + $0x24c] sm:$0xff]
    %v7816 = vld [vmem:[%s7726 + $0x254] sm:$0xf]
    %v7817 = vld [vmem:[%s7726 + $0x258] sm:$0xff]
    %v7818 = vld [vmem:[%s7726 + $0x260] sm:$0xff]
    %v7819 = vld [vmem:[%s7726 + $0x268] sm:$0xf]
    %v7820 = vld [vmem:[%s7726 + $0x26c] sm:$0xff]
    %v7821 = vld [vmem:[%s7726 + $0x274] sm:$0xff]
    %v7822 = vld [vmem:[%s7726 + $0x27c] sm:$0xf]
    %v7823 = vld [vmem:[%s7726 + $0x280] sm:$0xff]
    %v7824 = vld [vmem:[%s7726 + $0x288] sm:$0xff]
    %v7825 = vld [vmem:[%s7726 + $0x290] sm:$0xf]
    %v7826 = vld [vmem:[%s7726 + $0x294] sm:$0xff]
    %v7827 = vld [vmem:[%s7726 + $0x29c] sm:$0xff]
    %v7828 = vld [vmem:[%s7726 + $0x2a4] sm:$0xf]
    %v7829 = vld [vmem:[%s7726 + $0x2a8] sm:$0xff]
    %v7830 = vld [vmem:[%s7726 + $0x2b0] sm:$0xff]
    %v7831 = vld [vmem:[%s7726 + $0x2b8] sm:$0xf]
    %v7832 = vld [vmem:[%s7726 + $0x2bc] sm:$0xff]
    %v7833 = vld [vmem:[%s7726 + $0x2c4] sm:$0xff]
    %v7834 = vld [vmem:[%s7726 + $0x2cc] sm:$0xf]
    %v7835 = vld [vmem:[%s7726 + $0x2d0] sm:$0xff]
    %v7836 = vld [vmem:[%s7726 + $0x2d8] sm:$0xff]
    %v7837 = vld [vmem:[%s7726 + $0x2e0] sm:$0xf]
    %v7838 = vld [vmem:[%s7726 + $0x2e4] sm:$0xff]
    %v7839 = vld [vmem:[%s7726 + $0x2ec] sm:$0xff]
    %v7840 = vld [vmem:[%s7726 + $0x2f4] sm:$0xf]
    %v7955 = vunpack.c.l.b16 %v7727
    %v7956 = vunpack.c.h.b16 %v7727
    %v7957 = vunpack.c.l.b16 %v7728
    %v7958 = vunpack.c.h.b16 %v7728
    %v7959 = vunpack.c.l.b16 %v7729
    %v7960 = vunpack.c.l.b16 %v7730
    %v7961 = vunpack.c.h.b16 %v7730
    %v7962 = vunpack.c.l.b16 %v7731
    %v7963 = vunpack.c.h.b16 %v7731
    %v7964 = vunpack.c.l.b16 %v7732
    %v7965 = vunpack.c.l.b16 %v7733
    %v7966 = vunpack.c.h.b16 %v7733
    %v7967 = vunpack.c.l.b16 %v7734
    %v7968 = vunpack.c.h.b16 %v7734
    %v7969 = vunpack.c.l.b16 %v7735
    %v7970 = vunpack.c.l.b16 %v7736
    %v7971 = vunpack.c.h.b16 %v7736
    %v7972 = vunpack.c.l.b16 %v7737
    %v7973 = vunpack.c.h.b16 %v7737
    %v7974 = vunpack.c.l.b16 %v7738
    %v7975 = vunpack.c.l.b16 %v7739
    %v7976 = vunpack.c.h.b16 %v7739
    %v7977 = vunpack.c.l.b16 %v7740
    %v7978 = vunpack.c.h.b16 %v7740
    %v7979 = vunpack.c.l.b16 %v7741
    %v7980 = vunpack.c.l.b16 %v7742
    %v7981 = vunpack.c.h.b16 %v7742
    %v7982 = vunpack.c.l.b16 %v7743
    %v7983 = vunpack.c.h.b16 %v7743
    %v7984 = vunpack.c.l.b16 %v7744
    %v7985 = vunpack.c.l.b16 %v7745
    %v7986 = vunpack.c.h.b16 %v7745
    %v7987 = vunpack.c.l.b16 %v7746
    %v7988 = vunpack.c.h.b16 %v7746
    %v7989 = vunpack.c.l.b16 %v7747
    %v7990 = vunpack.c.l.b16 %v7748
    %v7991 = vunpack.c.h.b16 %v7748
    %v7992 = vunpack.c.l.b16 %v7749
    %v7993 = vunpack.c.h.b16 %v7749
    %v7994 = vunpack.c.l.b16 %v7750
    %v7995 = vunpack.c.l.b16 %v7751
    %v7996 = vunpack.c.h.b16 %v7751
    %v7997 = vunpack.c.l.b16 %v7752
    %v7998 = vunpack.c.h.b16 %v7752
    %v7999 = vunpack.c.l.b16 %v7753
    %v8000 = vunpack.c.l.b16 %v7754
    %v8001 = vunpack.c.h.b16 %v7754
    %v8002 = vunpack.c.l.b16 %v7755
    %v8003 = vunpack.c.h.b16 %v7755
    %v8004 = vunpack.c.l.b16 %v7756
    %v8005 = vunpack.c.l.b16 %v7757
    %v8006 = vunpack.c.h.b16 %v7757
    %v8007 = vunpack.c.l.b16 %v7758
    %v8008 = vunpack.c.h.b16 %v7758
    %v8009 = vunpack.c.l.b16 %v7759
    %v8010 = vunpack.c.l.b16 %v7760
    %v8011 = vunpack.c.h.b16 %v7760
    %v8012 = vunpack.c.l.b16 %v7761
    %v8013 = vunpack.c.h.b16 %v7761
    %v8014 = vunpack.c.l.b16 %v7762
    %v8015 = vunpack.c.l.b16 %v7763
    %v8016 = vunpack.c.h.b16 %v7763
    %v8017 = vunpack.c.l.b16 %v7764
    %v8018 = vunpack.c.h.b16 %v7764
    %v8019 = vunpack.c.l.b16 %v7765
    %v8020 = vunpack.c.l.b16 %v7766
    %v8021 = vunpack.c.h.b16 %v7766
    %v8022 = vunpack.c.l.b16 %v7767
    %v8023 = vunpack.c.h.b16 %v7767
    %v8024 = vunpack.c.l.b16 %v7768
    %v8025 = vunpack.c.l.b16 %v7769
    %v8026 = vunpack.c.h.b16 %v7769
    %v8027 = vunpack.c.l.b16 %v7770
    %v8028 = vunpack.c.h.b16 %v7770
    %v8029 = vunpack.c.l.b16 %v7771
    %v8030 = vunpack.c.l.b16 %v7772
    %v8031 = vunpack.c.h.b16 %v7772
    %v8032 = vunpack.c.l.b16 %v7773
    %v8033 = vunpack.c.h.b16 %v7773
    %v8034 = vunpack.c.l.b16 %v7774
    %v8035 = vunpack.c.l.b16 %v7775
    %v8036 = vunpack.c.h.b16 %v7775
    %v8037 = vunpack.c.l.b16 %v7776
    %v8038 = vunpack.c.h.b16 %v7776
    %v8039 = vunpack.c.l.b16 %v7777
    %v8040 = vunpack.c.l.b16 %v7778
    %v8041 = vunpack.c.h.b16 %v7778
    %v8042 = vunpack.c.l.b16 %v7779
    %v8043 = vunpack.c.h.b16 %v7779
    %v8044 = vunpack.c.l.b16 %v7780
    %v8045 = vunpack.c.l.b16 %v7781
    %v8046 = vunpack.c.h.b16 %v7781
    %v8047 = vunpack.c.l.b16 %v7782
    %v8048 = vunpack.c.h.b16 %v7782
    %v8049 = vunpack.c.l.b16 %v7783
    %v8050 = vunpack.c.l.b16 %v7784
    %v8051 = vunpack.c.h.b16 %v7784
    %v8052 = vunpack.c.l.b16 %v7785
    %v8053 = vunpack.c.h.b16 %v7785
    %v8054 = vunpack.c.l.b16 %v7786
    %v8055 = vunpack.c.l.b16 %v7787
    %v8056 = vunpack.c.h.b16 %v7787
    %v8057 = vunpack.c.l.b16 %v7788
    %v8058 = vunpack.c.h.b16 %v7788
    %v8059 = vunpack.c.l.b16 %v7789
    %v8060 = vunpack.c.l.b16 %v7790
    %v8061 = vunpack.c.h.b16 %v7790
    %v8062 = vunpack.c.l.b16 %v7791
    %v8063 = vunpack.c.h.b16 %v7791
    %v8064 = vunpack.c.l.b16 %v7792
    %v8065 = vunpack.c.l.b16 %v7793
    %v8066 = vunpack.c.h.b16 %v7793
    %v8067 = vunpack.c.l.b16 %v7794
    %v8068 = vunpack.c.h.b16 %v7794
    %v8069 = vunpack.c.l.b16 %v7795
    %v8070 = vunpack.c.l.b16 %v7796
    %v8071 = vunpack.c.h.b16 %v7796
    %v8072 = vunpack.c.l.b16 %v7797
    %v8073 = vunpack.c.h.b16 %v7797
    %v8074 = vunpack.c.l.b16 %v7798
    %v8075 = vunpack.c.l.b16 %v7799
    %v8076 = vunpack.c.h.b16 %v7799
    %v8077 = vunpack.c.l.b16 %v7800
    %v8078 = vunpack.c.h.b16 %v7800
    %v8079 = vunpack.c.l.b16 %v7801
    %v8080 = vunpack.c.l.b16 %v7802
    %v8081 = vunpack.c.h.b16 %v7802
    %v8082 = vunpack.c.l.b16 %v7803
    %v8083 = vunpack.c.h.b16 %v7803
    %v8084 = vunpack.c.l.b16 %v7804
    %v8085 = vunpack.c.l.b16 %v7805
    %v8086 = vunpack.c.h.b16 %v7805
    %v8087 = vunpack.c.l.b16 %v7806
    %v8088 = vunpack.c.h.b16 %v7806
    %v8089 = vunpack.c.l.b16 %v7807
    %v8090 = vunpack.c.l.b16 %v7808
    %v8091 = vunpack.c.h.b16 %v7808
    %v8092 = vunpack.c.l.b16 %v7809
    %v8093 = vunpack.c.h.b16 %v7809
    %v8094 = vunpack.c.l.b16 %v7810
    %v8095 = vunpack.c.l.b16 %v7811
    %v8096 = vunpack.c.h.b16 %v7811
    %v8097 = vunpack.c.l.b16 %v7812
    %v8098 = vunpack.c.h.b16 %v7812
    %v8099 = vunpack.c.l.b16 %v7813
    %v8100 = vunpack.c.l.b16 %v7814
    %v8101 = vunpack.c.h.b16 %v7814
    %v8102 = vunpack.c.l.b16 %v7815
    %v8103 = vunpack.c.h.b16 %v7815
    %v8104 = vunpack.c.l.b16 %v7816
    %v8105 = vunpack.c.l.b16 %v7817
    %v8106 = vunpack.c.h.b16 %v7817
    %v8107 = vunpack.c.l.b16 %v7818
    %v8108 = vunpack.c.h.b16 %v7818
    %v8109 = vunpack.c.l.b16 %v7819
    %v8110 = vunpack.c.l.b16 %v7820
    %v8111 = vunpack.c.h.b16 %v7820
    %v8112 = vunpack.c.l.b16 %v7821
    %v8113 = vunpack.c.h.b16 %v7821
    %v8114 = vunpack.c.l.b16 %v7822
    %v8115 = vunpack.c.l.b16 %v7823
    %v8116 = vunpack.c.h.b16 %v7823
    %v8117 = vunpack.c.l.b16 %v7824
    %v8118 = vunpack.c.h.b16 %v7824
    %v8119 = vunpack.c.l.b16 %v7825
    %v8120 = vunpack.c.l.b16 %v7826
    %v8121 = vunpack.c.h.b16 %v7826
    %v8122 = vunpack.c.l.b16 %v7827
    %v8123 = vunpack.c.h.b16 %v7827
    %v8124 = vunpack.c.l.b16 %v7828
    %v8125 = vunpack.c.l.b16 %v7829
    %v8126 = vunpack.c.h.b16 %v7829
    %v8127 = vunpack.c.l.b16 %v7830
    %v8128 = vunpack.c.h.b16 %v7830
    %v8129 = vunpack.c.l.b16 %v7831
    %v8130 = vunpack.c.l.b16 %v7832
    %v8131 = vunpack.c.h.b16 %v7832
    %v8132 = vunpack.c.l.b16 %v7833
    %v8133 = vunpack.c.h.b16 %v7833
    %v8134 = vunpack.c.l.b16 %v7834
    %v8135 = vunpack.c.l.b16 %v7835
    %v8136 = vunpack.c.h.b16 %v7835
    %v8137 = vunpack.c.l.b16 %v7836
    %v8138 = vunpack.c.h.b16 %v7836
    %v8139 = vunpack.c.l.b16 %v7837
    %v8140 = vunpack.c.l.b16 %v7838
    %v8141 = vunpack.c.h.b16 %v7838
    %v8142 = vunpack.c.l.b16 %v7839
    %v8143 = vunpack.c.h.b16 %v7839
    %v8144 = vunpack.c.l.b16 %v7840
    %v8145 = vpack.c.b16 %v7960, %v7955
    %v8146 = vpack.c.b16 %v7961, %v7956
    %v8147 = vpack.c.b16 %v7962, %v7957
    %v8148 = vpack.c.b16 %v7963, %v7958
    %v8149 = vpack.c.b16 %v7964, %v7959
    %v8150 = vpack.c.b16 %v7970, %v7965
    %v8151 = vpack.c.b16 %v7971, %v7966
    %v8152 = vpack.c.b16 %v7972, %v7967
    %v8153 = vpack.c.b16 %v7973, %v7968
    %v8154 = vpack.c.b16 %v7974, %v7969
    %v8155 = vpack.c.b16 %v7980, %v7975
    %v8156 = vpack.c.b16 %v7981, %v7976
    %v8157 = vpack.c.b16 %v7982, %v7977
    %v8158 = vpack.c.b16 %v7983, %v7978
    %v8159 = vpack.c.b16 %v7984, %v7979
    %v8160 = vpack.c.b16 %v7990, %v7985
    %v8161 = vpack.c.b16 %v7991, %v7986
    %v8162 = vpack.c.b16 %v7992, %v7987
    %v8163 = vpack.c.b16 %v7993, %v7988
    %v8164 = vpack.c.b16 %v7994, %v7989
    %v8165 = vpack.c.b16 %v8000, %v7995
    %v8166 = vpack.c.b16 %v8001, %v7996
    %v8167 = vpack.c.b16 %v8002, %v7997
    %v8168 = vpack.c.b16 %v8003, %v7998
    %v8169 = vpack.c.b16 %v8004, %v7999
    %v8170 = vpack.c.b16 %v8010, %v8005
    %v8171 = vpack.c.b16 %v8011, %v8006
    %v8172 = vpack.c.b16 %v8012, %v8007
    %v8173 = vpack.c.b16 %v8013, %v8008
    %v8174 = vpack.c.b16 %v8014, %v8009
    %v8175 = vpack.c.b16 %v8020, %v8015
    %v8176 = vpack.c.b16 %v8021, %v8016
    %v8177 = vpack.c.b16 %v8022, %v8017
    %v8178 = vpack.c.b16 %v8023, %v8018
    %v8179 = vpack.c.b16 %v8024, %v8019
    %v8180 = vpack.c.b16 %v8030, %v8025
    %v8181 = vpack.c.b16 %v8031, %v8026
    %v8182 = vpack.c.b16 %v8032, %v8027
    %v8183 = vpack.c.b16 %v8033, %v8028
    %v8184 = vpack.c.b16 %v8034, %v8029
    %v8185 = vpack.c.b16 %v8040, %v8035
    %v8186 = vpack.c.b16 %v8041, %v8036
    %v8187 = vpack.c.b16 %v8042, %v8037
    %v8188 = vpack.c.b16 %v8043, %v8038
    %v8189 = vpack.c.b16 %v8044, %v8039
    %v8190 = vpack.c.b16 %v8050, %v8045
    %v8191 = vpack.c.b16 %v8051, %v8046
    %v8192 = vpack.c.b16 %v8052, %v8047
    %v8193 = vpack.c.b16 %v8053, %v8048
    %v8194 = vpack.c.b16 %v8054, %v8049
    %v8195 = vpack.c.b16 %v8060, %v8055
    %v8196 = vpack.c.b16 %v8061, %v8056
    %v8197 = vpack.c.b16 %v8062, %v8057
    %v8198 = vpack.c.b16 %v8063, %v8058
    %v8199 = vpack.c.b16 %v8064, %v8059
    %v8200 = vpack.c.b16 %v8070, %v8065
    %v8201 = vpack.c.b16 %v8071, %v8066
    %v8202 = vpack.c.b16 %v8072, %v8067
    %v8203 = vpack.c.b16 %v8073, %v8068
    %v8204 = vpack.c.b16 %v8074, %v8069
    %v8205 = vpack.c.b16 %v8080, %v8075
    %v8206 = vpack.c.b16 %v8081, %v8076
    %v8207 = vpack.c.b16 %v8082, %v8077
    %v8208 = vpack.c.b16 %v8083, %v8078
    %v8209 = vpack.c.b16 %v8084, %v8079
    %v8210 = vpack.c.b16 %v8090, %v8085
    %v8211 = vpack.c.b16 %v8091, %v8086
    %v8212 = vpack.c.b16 %v8092, %v8087
    %v8213 = vpack.c.b16 %v8093, %v8088
    %v8214 = vpack.c.b16 %v8094, %v8089
    %v8215 = vpack.c.b16 %v8100, %v8095
    %v8216 = vpack.c.b16 %v8101, %v8096
    %v8217 = vpack.c.b16 %v8102, %v8097
    %v8218 = vpack.c.b16 %v8103, %v8098
    %v8219 = vpack.c.b16 %v8104, %v8099
    %v8220 = vpack.c.b16 %v8110, %v8105
    %v8221 = vpack.c.b16 %v8111, %v8106
    %v8222 = vpack.c.b16 %v8112, %v8107
    %v8223 = vpack.c.b16 %v8113, %v8108
    %v8224 = vpack.c.b16 %v8114, %v8109
    %v8225 = vpack.c.b16 %v8120, %v8115
    %v8226 = vpack.c.b16 %v8121, %v8116
    %v8227 = vpack.c.b16 %v8122, %v8117
    %v8228 = vpack.c.b16 %v8123, %v8118
    %v8229 = vpack.c.b16 %v8124, %v8119
    %v8230 = vpack.c.b16 %v8130, %v8125
    %v8231 = vpack.c.b16 %v8131, %v8126
    %v8232 = vpack.c.b16 %v8132, %v8127
    %v8233 = vpack.c.b16 %v8133, %v8128
    %v8234 = vpack.c.b16 %v8134, %v8129
    %v8235 = vpack.c.b16 %v8140, %v8135
    %v8236 = vpack.c.b16 %v8141, %v8136
    %v8237 = vpack.c.b16 %v8142, %v8137
    %v8238 = vpack.c.b16 %v8143, %v8138
    %v8239 = vpack.c.b16 %v8144, %v8139
    %v8336 = vsel %vm5571, %v7650, 0
    %v8339 = vsel %vm5571, %v7656, 0
    %v8342 = vsel %vm5571, %v7662, 0
    %v8345 = vsel %vm5571, %v7668, 0
    %v8348 = vsel %vm5571, %v7674, 0
    %v8351 = vsel %vm5571, %v7680, 0
    %v8354 = vsel %vm5571, %v7686, 0
    %v8357 = vsel %vm5571, %v7692, 0
    %v8360 = vsel %vm5571, %v7698, 0
    %v8362 = vsel %vm5571, %v7725, 0
    %8364 = vmatprep.subr.bf16.mxu0 %v8181
    %8365 = vmatpush1.bf16.msra.mxu0 %v8180
    %8366 = vmatprep.subr.bf16.mxu0 %v8176
    %8367 = vmatpush1.bf16.msra.mxu0 %v8175
    %8368 = vmatprep.subr.bf16.mxu0 %v8171
    %8369 = vmatpush1.bf16.msra.mxu0 %v8170
    %8370 = vmatprep.subr.bf16.mxu0 %v8166
    %8371 = vmatpush1.bf16.msra.mxu0 %v8165
    %8372 = vmatprep.subr.bf16.mxu0 %v8161
    %8373 = vmatpush1.bf16.msra.mxu0 %v8160
    %8374 = vmatprep.subr.bf16.mxu0 %v8156
    %8375 = vmatpush1.bf16.msra.mxu0 %v8155
    %8376 = vmatprep.subr.bf16.mxu0 %v8151
    %8377 = vmatpush1.bf16.msra.mxu0 %v8150
    %8378 = vmatprep.subr.bf16.mxu0 %v8146
    %8379 = vmatpush1.bf16.msra.mxu0 %v8145
    %8380 = vmatprep.subr.bf16.mxu0 %v8221
    %8381 = vmatpush2.bf16.msra.mxu0 %v8220
    %8382 = vmatprep.subr.bf16.mxu0 %v8216
    %8383 = vmatpush2.bf16.msra.mxu0 %v8215
    %8384 = vmatprep.subr.bf16.mxu0 %v8211
    %8385 = vmatpush2.bf16.msra.mxu0 %v8210
    %8386 = vmatprep.subr.bf16.mxu0 %v8206
    %8387 = vmatpush2.bf16.msra.mxu0 %v8205
    %8388 = vmatprep.subr.bf16.mxu0 %v8201
    %8389 = vmatpush2.bf16.msra.mxu0 %v8200
    %8390 = vmatprep.subr.bf16.mxu0 %v8196
    %8391 = vmatpush2.bf16.msra.mxu0 %v8195
    %8392 = vmatprep.subr.bf16.mxu0 %v8191
    %8393 = vmatpush2.bf16.msra.mxu0 %v8190
    %8394 = vmatprep.subr.bf16.mxu0 %v8186
    %8395 = vmatpush2.bf16.msra.mxu0 %v8185
    %8396 = vmatprep.mubr.bf16.mxu0 %v7647
    %8397 = vmatmul.mubr.bf16.gmra.mxu0 %v7644
    %v8398 = vpop.f32.mrf.mxu0
    %v8399 = vadd.f32 0.0, %v8398
    %v8400 = vpop.f32.mrf.mxu0
    %v8401 = vadd.f32 0.0, %v8400
    %v8402 = vpop.f32.mrf.mxu0
    %v8403 = vadd.f32 0.0, %v8402
    %v8404 = vpop.f32.mrf.mxu0
    %v8405 = vadd.f32 0.0, %v8404
    %8406 = vmatprep.mubr.bf16.mxu0 %v7654
    %8407 = vmatmul.mubr.bf16.gmra.mxu0 %v7652
    %v8408 = vpop.f32.mrf.mxu0
    %v8409 = vadd.f32 0.0, %v8408
    %v8410 = vpop.f32.mrf.mxu0
    %v8411 = vadd.f32 0.0, %v8410
    %v8412 = vpop.f32.mrf.mxu0
    %v8413 = vadd.f32 0.0, %v8412
    %v8414 = vpop.f32.mrf.mxu0
    %v8415 = vadd.f32 0.0, %v8414
    %8416 = vmatprep.mubr.bf16.mxu0 %v7660
    %8417 = vmatmul.mubr.bf16.gmra.mxu0 %v7658
    %v8418 = vpop.f32.mrf.mxu0
    %v8419 = vadd.f32 0.0, %v8418
    %v8420 = vpop.f32.mrf.mxu0
    %v8421 = vadd.f32 0.0, %v8420
    %v8422 = vpop.f32.mrf.mxu0
    %v8423 = vadd.f32 0.0, %v8422
    %v8424 = vpop.f32.mrf.mxu0
    %v8425 = vadd.f32 0.0, %v8424
    %8426 = vmatprep.mubr.bf16.mxu0 %v7666
    %8427 = vmatmul.mubr.bf16.gmra.mxu0 %v7664
    %v8428 = vpop.f32.mrf.mxu0
    %v8429 = vadd.f32 0.0, %v8428
    %v8430 = vpop.f32.mrf.mxu0
    %v8431 = vadd.f32 0.0, %v8430
    %v8432 = vpop.f32.mrf.mxu0
    %v8433 = vadd.f32 0.0, %v8432
    %v8434 = vpop.f32.mrf.mxu0
    %v8435 = vadd.f32 0.0, %v8434
    %8436 = vmatprep.mubr.bf16.mxu0 %v7672
    %8437 = vmatmul.mubr.bf16.gmra.mxu0 %v7670
    %v8438 = vpop.f32.mrf.mxu0
    %v8439 = vadd.f32 0.0, %v8438
    %v8440 = vpop.f32.mrf.mxu0
    %v8441 = vadd.f32 0.0, %v8440
    %v8442 = vpop.f32.mrf.mxu0
    %v8443 = vadd.f32 0.0, %v8442
    %v8444 = vpop.f32.mrf.mxu0
    %v8445 = vadd.f32 0.0, %v8444
    %8446 = vmatprep.mubr.bf16.mxu0 %v7678
    %8447 = vmatmul.mubr.bf16.gmra.mxu0 %v7676
    %v8448 = vpop.f32.mrf.mxu0
    %v8449 = vadd.f32 0.0, %v8448
    %v8450 = vpop.f32.mrf.mxu0
    %v8451 = vadd.f32 0.0, %v8450
    %v8452 = vpop.f32.mrf.mxu0
    %v8453 = vadd.f32 0.0, %v8452
    %v8454 = vpop.f32.mrf.mxu0
    %v8455 = vadd.f32 0.0, %v8454
    %8456 = vmatprep.mubr.bf16.mxu0 %v7684
    %8457 = vmatmul.mubr.bf16.gmra.mxu0 %v7682
    %v8458 = vpop.f32.mrf.mxu0
    %v8459 = vadd.f32 0.0, %v8458
    %v8460 = vpop.f32.mrf.mxu0
    %v8461 = vadd.f32 0.0, %v8460
    %v8462 = vpop.f32.mrf.mxu0
    %v8463 = vadd.f32 0.0, %v8462
    %v8464 = vpop.f32.mrf.mxu0
    %v8465 = vadd.f32 0.0, %v8464
    %8466 = vmatprep.mubr.bf16.mxu0 %v7690
    %8467 = vmatmul.mubr.bf16.gmra.mxu0 %v7688
    %v8468 = vpop.f32.mrf.mxu0
    %v8469 = vadd.f32 0.0, %v8468
    %v8470 = vpop.f32.mrf.mxu0
    %v8471 = vadd.f32 0.0, %v8470
    %v8472 = vpop.f32.mrf.mxu0
    %v8473 = vadd.f32 0.0, %v8472
    %v8474 = vpop.f32.mrf.mxu0
    %v8475 = vadd.f32 0.0, %v8474
    %8476 = vmatprep.mubr.bf16.mxu0 %v7696
    %8477 = vmatmul.mubr.bf16.gmra.mxu0 %v7694
    %v8478 = vpop.f32.mrf.mxu0
    %v8479 = vadd.f32 0.0, %v8478
    %v8480 = vpop.f32.mrf.mxu0
    %v8481 = vadd.f32 0.0, %v8480
    %v8482 = vpop.f32.mrf.mxu0
    %v8483 = vadd.f32 0.0, %v8482
    %v8484 = vpop.f32.mrf.mxu0
    %v8485 = vadd.f32 0.0, %v8484
    %8486 = vmatprep.mubr.bf16.mxu0 %v7722
    %8487 = vmatmul.mubr.bf16.gmra.mxu0 %v7719
    %v8488 = vpop.f32.mrf.mxu0
    %v8489 = vadd.f32 0.0, %v8488
    %v8490 = vpop.f32.mrf.mxu0
    %v8491 = vadd.f32 0.0, %v8490
    %v8492 = vpop.f32.mrf.mxu0
    %v8493 = vpop.f32.mrf.mxu0
    %8494 = vdwg.mxu0
    %8495 = vmatprep.subr.bf16.mxu0 0
    %8496 = vmatpush1.bf16.msra.mxu0 0
    %8497 = vmatprep.subr.bf16.mxu0 0
    %8498 = vmatpush1.bf16.msra.mxu0 0
    %8499 = vmatprep.subr.bf16.mxu0 0
    %8500 = vmatpush1.bf16.msra.mxu0 0
    %8501 = vmatprep.subr.bf16.mxu0 0
    %8502 = vmatpush1.bf16.msra.mxu0 0
    %8503 = vmatprep.subr.bf16.mxu0 0
    %8504 = vmatpush1.bf16.msra.mxu0 0
    %8505 = vmatprep.subr.bf16.mxu0 %v8236
    %8506 = vmatpush1.bf16.msra.mxu0 %v8235
    %8507 = vmatprep.subr.bf16.mxu0 %v8231
    %8508 = vmatpush1.bf16.msra.mxu0 %v8230
    %8509 = vmatprep.subr.bf16.mxu0 %v8226
    %8510 = vmatpush1.bf16.msra.mxu0 %v8225
    %8511 = vmatprep.subr.bf16.mxu0 0
    %8512 = vmatpush2.bf16.msra.mxu0 0
    %8513 = vmatprep.subr.bf16.mxu0 0
    %8514 = vmatpush2.bf16.msra.mxu0 0
    %8515 = vmatprep.subr.bf16.mxu0 0
    %8516 = vmatpush2.bf16.msra.mxu0 0
    %8517 = vmatprep.subr.bf16.mxu0 0
    %8518 = vmatpush2.bf16.msra.mxu0 0
    %8519 = vmatprep.subr.bf16.mxu0 0
    %8520 = vmatpush2.bf16.msra.mxu0 0
    %8521 = vmatprep.subr.bf16.mxu0 0
    %8522 = vmatpush2.bf16.msra.mxu0 0
    %8523 = vmatprep.subr.bf16.mxu0 0
    %8524 = vmatpush2.bf16.msra.mxu0 0
    %8525 = vmatprep.subr.bf16.mxu0 0
    %8526 = vmatpush2.bf16.msra.mxu0 0
    %8527 = vmatprep.mubr.bf16.mxu0 0
    %8528 = vmatmul.mubr.bf16.gmra.mxu0 %v8336
    %v8529 = vpop.f32.mrf.mxu0
    %v8530 = vadd.f32 %v8399, %v8529
    %v8531 = vpop.f32.mrf.mxu0
    %v8532 = vadd.f32 %v8401, %v8531
    %v8533 = vpop.f32.mrf.mxu0
    %v8534 = vadd.f32 %v8403, %v8533
    %v8535 = vpop.f32.mrf.mxu0
    %v8536 = vadd.f32 %v8405, %v8535
    %8537 = vmatprep.mubr.bf16.mxu0 0
    %8538 = vmatmul.mubr.bf16.gmra.mxu0 %v8339
    %v8539 = vpop.f32.mrf.mxu0
    %v8540 = vadd.f32 %v8409, %v8539
    %v8541 = vpop.f32.mrf.mxu0
    %v8542 = vadd.f32 %v8411, %v8541
    %v8543 = vpop.f32.mrf.mxu0
    %v8544 = vadd.f32 %v8413, %v8543
    %v8545 = vpop.f32.mrf.mxu0
    %v8546 = vadd.f32 %v8415, %v8545
    %8547 = vmatprep.mubr.bf16.mxu0 0
    %8548 = vmatmul.mubr.bf16.gmra.mxu0 %v8342
    %v8549 = vpop.f32.mrf.mxu0
    %v8550 = vadd.f32 %v8419, %v8549
    %v8551 = vpop.f32.mrf.mxu0
    %v8552 = vadd.f32 %v8421, %v8551
    %v8553 = vpop.f32.mrf.mxu0
    %v8554 = vadd.f32 %v8423, %v8553
    %v8555 = vpop.f32.mrf.mxu0
    %v8556 = vadd.f32 %v8425, %v8555
    %8557 = vmatprep.mubr.bf16.mxu0 0
    %8558 = vmatmul.mubr.bf16.gmra.mxu0 %v8345
    %v8559 = vpop.f32.mrf.mxu0
    %v8560 = vadd.f32 %v8429, %v8559
    %v8561 = vpop.f32.mrf.mxu0
    %v8562 = vadd.f32 %v8431, %v8561
    %v8563 = vpop.f32.mrf.mxu0
    %v8564 = vadd.f32 %v8433, %v8563
    %v8565 = vpop.f32.mrf.mxu0
    %v8566 = vadd.f32 %v8435, %v8565
    %8567 = vmatprep.mubr.bf16.mxu0 0
    %8568 = vmatmul.mubr.bf16.gmra.mxu0 %v8348
    %v8569 = vpop.f32.mrf.mxu0
    %v8570 = vadd.f32 %v8439, %v8569
    %v8571 = vpop.f32.mrf.mxu0
    %v8572 = vadd.f32 %v8441, %v8571
    %v8573 = vpop.f32.mrf.mxu0
    %v8574 = vadd.f32 %v8443, %v8573
    %v8575 = vpop.f32.mrf.mxu0
    %v8576 = vadd.f32 %v8445, %v8575
    %8577 = vmatprep.mubr.bf16.mxu0 0
    %8578 = vmatmul.mubr.bf16.gmra.mxu0 %v8351
    %v8579 = vpop.f32.mrf.mxu0
    %v8580 = vadd.f32 %v8449, %v8579
    %v8581 = vpop.f32.mrf.mxu0
    %v8582 = vadd.f32 %v8451, %v8581
    %v8583 = vpop.f32.mrf.mxu0
    %v8584 = vadd.f32 %v8453, %v8583
    %v8585 = vpop.f32.mrf.mxu0
    %v8586 = vadd.f32 %v8455, %v8585
    %8587 = vmatprep.mubr.bf16.mxu0 0
    %8588 = vmatmul.mubr.bf16.gmra.mxu0 %v8354
    %v8589 = vpop.f32.mrf.mxu0
    %v8590 = vadd.f32 %v8459, %v8589
    %v8591 = vpop.f32.mrf.mxu0
    %v8592 = vadd.f32 %v8461, %v8591
    %v8593 = vpop.f32.mrf.mxu0
    %v8594 = vadd.f32 %v8463, %v8593
    %v8595 = vpop.f32.mrf.mxu0
    %v8596 = vadd.f32 %v8465, %v8595
    %8597 = vmatprep.mubr.bf16.mxu0 0
    %8598 = vmatmul.mubr.bf16.gmra.mxu0 %v8357
    %v8599 = vpop.f32.mrf.mxu0
    %v8600 = vadd.f32 %v8469, %v8599
    %v8601 = vpop.f32.mrf.mxu0
    %v8602 = vadd.f32 %v8471, %v8601
    %v8603 = vpop.f32.mrf.mxu0
    %v8604 = vadd.f32 %v8473, %v8603
    %v8605 = vpop.f32.mrf.mxu0
    %v8606 = vadd.f32 %v8475, %v8605
    %8607 = vmatprep.mubr.bf16.mxu0 0
    %8608 = vmatmul.mubr.bf16.gmra.mxu0 %v8360
    %v8609 = vpop.f32.mrf.mxu0
    %v8610 = vadd.f32 %v8479, %v8609
    %v8611 = vpop.f32.mrf.mxu0
    %v8612 = vadd.f32 %v8481, %v8611
    %v8613 = vpop.f32.mrf.mxu0
    %v8614 = vadd.f32 %v8483, %v8613
    %v8615 = vpop.f32.mrf.mxu0
    %v8616 = vadd.f32 %v8485, %v8615
    %8617 = vmatprep.mubr.bf16.mxu0 0
    %8618 = vmatmul.mubr.bf16.gmra.mxu0 %v8362
    %v8619 = vpop.f32.mrf.mxu0
    %v8620 = vadd.f32 %v8489, %v8619
    %v8621 = vpop.f32.mrf.mxu0
    %v8622 = vadd.f32 %v8491, %v8621
    %v8623 = vpop.f32.mrf.mxu0
    %v8624 = vpop.f32.mrf.mxu0
    %8625 = vdwg.mxu0
    %8626 = vmatprep.subr.bf16.mxu0 %v8183
    %8627 = vmatpush1.bf16.msra.mxu0 %v8182
    %8628 = vmatprep.subr.bf16.mxu0 %v8178
    %8629 = vmatpush1.bf16.msra.mxu0 %v8177
    %8630 = vmatprep.subr.bf16.mxu0 %v8173
    %8631 = vmatpush1.bf16.msra.mxu0 %v8172
    %8632 = vmatprep.subr.bf16.mxu0 %v8168
    %8633 = vmatpush1.bf16.msra.mxu0 %v8167
    %8634 = vmatprep.subr.bf16.mxu0 %v8163
    %8635 = vmatpush1.bf16.msra.mxu0 %v8162
    %8636 = vmatprep.subr.bf16.mxu0 %v8158
    %8637 = vmatpush1.bf16.msra.mxu0 %v8157
    %8638 = vmatprep.subr.bf16.mxu0 %v8153
    %8639 = vmatpush1.bf16.msra.mxu0 %v8152
    %8640 = vmatprep.subr.bf16.mxu0 %v8148
    %8641 = vmatpush1.bf16.msra.mxu0 %v8147
    %8642 = vmatprep.subr.bf16.mxu0 %v8223
    %8643 = vmatpush2.bf16.msra.mxu0 %v8222
    %8644 = vmatprep.subr.bf16.mxu0 %v8218
    %8645 = vmatpush2.bf16.msra.mxu0 %v8217
    %8646 = vmatprep.subr.bf16.mxu0 %v8213
    %8647 = vmatpush2.bf16.msra.mxu0 %v8212
    %8648 = vmatprep.subr.bf16.mxu0 %v8208
    %8649 = vmatpush2.bf16.msra.mxu0 %v8207
    %8650 = vmatprep.subr.bf16.mxu0 %v8203
    %8651 = vmatpush2.bf16.msra.mxu0 %v8202
    %8652 = vmatprep.subr.bf16.mxu0 %v8198
    %8653 = vmatpush2.bf16.msra.mxu0 %v8197
    %8654 = vmatprep.subr.bf16.mxu0 %v8193
    %8655 = vmatpush2.bf16.msra.mxu0 %v8192
    %8656 = vmatprep.subr.bf16.mxu0 %v8188
    %8657 = vmatpush2.bf16.msra.mxu0 %v8187
    %8658 = vmatprep.mubr.bf16.mxu0 %v7647
    %8659 = vmatmul.mubr.bf16.gmra.mxu0 %v7644
    %v8660 = vpop.f32.mrf.mxu0
    %v8661 = vadd.f32 0.0, %v8660
    %v8662 = vpop.f32.mrf.mxu0
    %v8663 = vadd.f32 0.0, %v8662
    %v8664 = vpop.f32.mrf.mxu0
    %v8665 = vadd.f32 0.0, %v8664
    %v8666 = vpop.f32.mrf.mxu0
    %v8667 = vadd.f32 0.0, %v8666
    %8668 = vmatprep.mubr.bf16.mxu0 %v7654
    %8669 = vmatmul.mubr.bf16.gmra.mxu0 %v7652
    %v8670 = vpop.f32.mrf.mxu0
    %v8671 = vadd.f32 0.0, %v8670
    %v8672 = vpop.f32.mrf.mxu0
    %v8673 = vadd.f32 0.0, %v8672
    %v8674 = vpop.f32.mrf.mxu0
    %v8675 = vadd.f32 0.0, %v8674
    %v8676 = vpop.f32.mrf.mxu0
    %v8677 = vadd.f32 0.0, %v8676
    %8678 = vmatprep.mubr.bf16.mxu0 %v7660
    %8679 = vmatmul.mubr.bf16.gmra.mxu0 %v7658
    %v8680 = vpop.f32.mrf.mxu0
    %v8681 = vadd.f32 0.0, %v8680
    %v8682 = vpop.f32.mrf.mxu0
    %v8683 = vadd.f32 0.0, %v8682
    %v8684 = vpop.f32.mrf.mxu0
    %v8685 = vadd.f32 0.0, %v8684
    %v8686 = vpop.f32.mrf.mxu0
    %v8687 = vadd.f32 0.0, %v8686
    %8688 = vmatprep.mubr.bf16.mxu0 %v7666
    %8689 = vmatmul.mubr.bf16.gmra.mxu0 %v7664
    %v8690 = vpop.f32.mrf.mxu0
    %v8691 = vadd.f32 0.0, %v8690
    %v8692 = vpop.f32.mrf.mxu0
    %v8693 = vadd.f32 0.0, %v8692
    %v8694 = vpop.f32.mrf.mxu0
    %v8695 = vadd.f32 0.0, %v8694
    %v8696 = vpop.f32.mrf.mxu0
    %v8697 = vadd.f32 0.0, %v8696
    %8698 = vmatprep.mubr.bf16.mxu0 %v7672
    %8699 = vmatmul.mubr.bf16.gmra.mxu0 %v7670
    %v8700 = vpop.f32.mrf.mxu0
    %v8701 = vadd.f32 0.0, %v8700
    %v8702 = vpop.f32.mrf.mxu0
    %v8703 = vadd.f32 0.0, %v8702
    %v8704 = vpop.f32.mrf.mxu0
    %v8705 = vadd.f32 0.0, %v8704
    %v8706 = vpop.f32.mrf.mxu0
    %v8707 = vadd.f32 0.0, %v8706
    %8708 = vmatprep.mubr.bf16.mxu0 %v7678
    %8709 = vmatmul.mubr.bf16.gmra.mxu0 %v7676
    %v8710 = vpop.f32.mrf.mxu0
    %v8711 = vadd.f32 0.0, %v8710
    %v8712 = vpop.f32.mrf.mxu0
    %v8713 = vadd.f32 0.0, %v8712
    %v8714 = vpop.f32.mrf.mxu0
    %v8715 = vadd.f32 0.0, %v8714
    %v8716 = vpop.f32.mrf.mxu0
    %v8717 = vadd.f32 0.0, %v8716
    %8718 = vmatprep.mubr.bf16.mxu0 %v7684
    %8719 = vmatmul.mubr.bf16.gmra.mxu0 %v7682
    %v8720 = vpop.f32.mrf.mxu0
    %v8721 = vadd.f32 0.0, %v8720
    %v8722 = vpop.f32.mrf.mxu0
    %v8723 = vadd.f32 0.0, %v8722
    %v8724 = vpop.f32.mrf.mxu0
    %v8725 = vadd.f32 0.0, %v8724
    %v8726 = vpop.f32.mrf.mxu0
    %v8727 = vadd.f32 0.0, %v8726
    %8728 = vmatprep.mubr.bf16.mxu0 %v7690
    %8729 = vmatmul.mubr.bf16.gmra.mxu0 %v7688
    %v8730 = vpop.f32.mrf.mxu0
    %v8731 = vadd.f32 0.0, %v8730
    %v8732 = vpop.f32.mrf.mxu0
    %v8733 = vadd.f32 0.0, %v8732
    %v8734 = vpop.f32.mrf.mxu0
    %v8735 = vadd.f32 0.0, %v8734
    %v8736 = vpop.f32.mrf.mxu0
    %v8737 = vadd.f32 0.0, %v8736
    %8738 = vmatprep.mubr.bf16.mxu0 %v7696
    %8739 = vmatmul.mubr.bf16.gmra.mxu0 %v7694
    %v8740 = vpop.f32.mrf.mxu0
    %v8741 = vadd.f32 0.0, %v8740
    %v8742 = vpop.f32.mrf.mxu0
    %v8743 = vadd.f32 0.0, %v8742
    %v8744 = vpop.f32.mrf.mxu0
    %v8745 = vadd.f32 0.0, %v8744
    %v8746 = vpop.f32.mrf.mxu0
    %v8747 = vadd.f32 0.0, %v8746
    %8748 = vmatprep.mubr.bf16.mxu0 %v7722
    %8749 = vmatmul.mubr.bf16.gmra.mxu0 %v7719
    %v8750 = vpop.f32.mrf.mxu0
    %v8751 = vadd.f32 0.0, %v8750
    %v8752 = vpop.f32.mrf.mxu0
    %v8753 = vadd.f32 0.0, %v8752
    %v8754 = vpop.f32.mrf.mxu0
    %v8755 = vpop.f32.mrf.mxu0
    %8756 = vdwg.mxu0
    %8757 = vmatprep.subr.bf16.mxu0 0
    %8758 = vmatpush1.bf16.msra.mxu0 0
    %8759 = vmatprep.subr.bf16.mxu0 0
    %8760 = vmatpush1.bf16.msra.mxu0 0
    %8761 = vmatprep.subr.bf16.mxu0 0
    %8762 = vmatpush1.bf16.msra.mxu0 0
    %8763 = vmatprep.subr.bf16.mxu0 0
    %8764 = vmatpush1.bf16.msra.mxu0 0
    %8765 = vmatprep.subr.bf16.mxu0 0
    %8766 = vmatpush1.bf16.msra.mxu0 0
    %8767 = vmatprep.subr.bf16.mxu0 %v8238
    %8768 = vmatpush1.bf16.msra.mxu0 %v8237
    %8769 = vmatprep.subr.bf16.mxu0 %v8233
    %8770 = vmatpush1.bf16.msra.mxu0 %v8232
    %8771 = vmatprep.subr.bf16.mxu0 %v8228
    %8772 = vmatpush1.bf16.msra.mxu0 %v8227
    %8773 = vmatprep.subr.bf16.mxu0 0
    %8774 = vmatpush2.bf16.msra.mxu0 0
    %8775 = vmatprep.subr.bf16.mxu0 0
    %8776 = vmatpush2.bf16.msra.mxu0 0
    %8777 = vmatprep.subr.bf16.mxu0 0
    %8778 = vmatpush2.bf16.msra.mxu0 0
    %8779 = vmatprep.subr.bf16.mxu0 0
    %8780 = vmatpush2.bf16.msra.mxu0 0
    %8781 = vmatprep.subr.bf16.mxu0 0
    %8782 = vmatpush2.bf16.msra.mxu0 0
    %8783 = vmatprep.subr.bf16.mxu0 0
    %8784 = vmatpush2.bf16.msra.mxu0 0
    %8785 = vmatprep.subr.bf16.mxu0 0
    %8786 = vmatpush2.bf16.msra.mxu0 0
    %8787 = vmatprep.subr.bf16.mxu0 0
    %8788 = vmatpush2.bf16.msra.mxu0 0
    %8789 = vmatprep.mubr.bf16.mxu0 0
    %8790 = vmatmul.mubr.bf16.gmra.mxu0 %v8336
    %v8791 = vpop.f32.mrf.mxu0
    %v8792 = vadd.f32 %v8661, %v8791
    %v8793 = vpop.f32.mrf.mxu0
    %v8794 = vadd.f32 %v8663, %v8793
    %v8795 = vpop.f32.mrf.mxu0
    %v8796 = vadd.f32 %v8665, %v8795
    %v8797 = vpop.f32.mrf.mxu0
    %v8798 = vadd.f32 %v8667, %v8797
    %8799 = vmatprep.mubr.bf16.mxu0 0
    %8800 = vmatmul.mubr.bf16.gmra.mxu0 %v8339
    %v8801 = vpop.f32.mrf.mxu0
    %v8802 = vadd.f32 %v8671, %v8801
    %v8803 = vpop.f32.mrf.mxu0
    %v8804 = vadd.f32 %v8673, %v8803
    %v8805 = vpop.f32.mrf.mxu0
    %v8806 = vadd.f32 %v8675, %v8805
    %v8807 = vpop.f32.mrf.mxu0
    %v8808 = vadd.f32 %v8677, %v8807
    %8809 = vmatprep.mubr.bf16.mxu0 0
    %8810 = vmatmul.mubr.bf16.gmra.mxu0 %v8342
    %v8811 = vpop.f32.mrf.mxu0
    %v8812 = vadd.f32 %v8681, %v8811
    %v8813 = vpop.f32.mrf.mxu0
    %v8814 = vadd.f32 %v8683, %v8813
    %v8815 = vpop.f32.mrf.mxu0
    %v8816 = vadd.f32 %v8685, %v8815
    %v8817 = vpop.f32.mrf.mxu0
    %v8818 = vadd.f32 %v8687, %v8817
    %8819 = vmatprep.mubr.bf16.mxu0 0
    %8820 = vmatmul.mubr.bf16.gmra.mxu0 %v8345
    %v8821 = vpop.f32.mrf.mxu0
    %v8822 = vadd.f32 %v8691, %v8821
    %v8823 = vpop.f32.mrf.mxu0
    %v8824 = vadd.f32 %v8693, %v8823
    %v8825 = vpop.f32.mrf.mxu0
    %v8826 = vadd.f32 %v8695, %v8825
    %v8827 = vpop.f32.mrf.mxu0
    %v8828 = vadd.f32 %v8697, %v8827
    %8829 = vmatprep.mubr.bf16.mxu0 0
    %8830 = vmatmul.mubr.bf16.gmra.mxu0 %v8348
    %v8831 = vpop.f32.mrf.mxu0
    %v8832 = vadd.f32 %v8701, %v8831
    %v8833 = vpop.f32.mrf.mxu0
    %v8834 = vadd.f32 %v8703, %v8833
    %v8835 = vpop.f32.mrf.mxu0
    %v8836 = vadd.f32 %v8705, %v8835
    %v8837 = vpop.f32.mrf.mxu0
    %v8838 = vadd.f32 %v8707, %v8837
    %8839 = vmatprep.mubr.bf16.mxu0 0
    %8840 = vmatmul.mubr.bf16.gmra.mxu0 %v8351
    %v8841 = vpop.f32.mrf.mxu0
    %v8842 = vadd.f32 %v8711, %v8841
    %v8843 = vpop.f32.mrf.mxu0
    %v8844 = vadd.f32 %v8713, %v8843
    %v8845 = vpop.f32.mrf.mxu0
    %v8846 = vadd.f32 %v8715, %v8845
    %v8847 = vpop.f32.mrf.mxu0
    %v8848 = vadd.f32 %v8717, %v8847
    %8849 = vmatprep.mubr.bf16.mxu0 0
    %8850 = vmatmul.mubr.bf16.gmra.mxu0 %v8354
    %v8851 = vpop.f32.mrf.mxu0
    %v8852 = vadd.f32 %v8721, %v8851
    %v8853 = vpop.f32.mrf.mxu0
    %v8854 = vadd.f32 %v8723, %v8853
    %v8855 = vpop.f32.mrf.mxu0
    %v8856 = vadd.f32 %v8725, %v8855
    %v8857 = vpop.f32.mrf.mxu0
    %v8858 = vadd.f32 %v8727, %v8857
    %8859 = vmatprep.mubr.bf16.mxu0 0
    %8860 = vmatmul.mubr.bf16.gmra.mxu0 %v8357
    %v8861 = vpop.f32.mrf.mxu0
    %v8862 = vadd.f32 %v8731, %v8861
    %v8863 = vpop.f32.mrf.mxu0
    %v8864 = vadd.f32 %v8733, %v8863
    %v8865 = vpop.f32.mrf.mxu0
    %v8866 = vadd.f32 %v8735, %v8865
    %v8867 = vpop.f32.mrf.mxu0
    %v8868 = vadd.f32 %v8737, %v8867
    %8869 = vmatprep.mubr.bf16.mxu0 0
    %8870 = vmatmul.mubr.bf16.gmra.mxu0 %v8360
    %v8871 = vpop.f32.mrf.mxu0
    %v8872 = vadd.f32 %v8741, %v8871
    %v8873 = vpop.f32.mrf.mxu0
    %v8874 = vadd.f32 %v8743, %v8873
    %v8875 = vpop.f32.mrf.mxu0
    %v8876 = vadd.f32 %v8745, %v8875
    %v8877 = vpop.f32.mrf.mxu0
    %v8878 = vadd.f32 %v8747, %v8877
    %8879 = vmatprep.mubr.bf16.mxu0 0
    %8880 = vmatmul.mubr.bf16.gmra.mxu0 %v8362
    %v8881 = vpop.f32.mrf.mxu0
    %v8882 = vadd.f32 %v8751, %v8881
    %v8883 = vpop.f32.mrf.mxu0
    %v8884 = vadd.f32 %v8753, %v8883
    %v8885 = vpop.f32.mrf.mxu0
    %v8886 = vpop.f32.mrf.mxu0
    %8887 = vdwg.mxu0
    %8888 = vmatprep.subr.bf16.mxu0 0
    %8889 = vmatpush1.bf16.msra.mxu0 %v8184
    %8890 = vmatprep.subr.bf16.mxu0 0
    %8891 = vmatpush1.bf16.msra.mxu0 %v8179
    %8892 = vmatprep.subr.bf16.mxu0 0
    %8893 = vmatpush1.bf16.msra.mxu0 %v8174
    %8894 = vmatprep.subr.bf16.mxu0 0
    %8895 = vmatpush1.bf16.msra.mxu0 %v8169
    %8896 = vmatprep.subr.bf16.mxu0 0
    %8897 = vmatpush1.bf16.msra.mxu0 %v8164
    %8898 = vmatprep.subr.bf16.mxu0 0
    %8899 = vmatpush1.bf16.msra.mxu0 %v8159
    %8900 = vmatprep.subr.bf16.mxu0 0
    %8901 = vmatpush1.bf16.msra.mxu0 %v8154
    %8902 = vmatprep.subr.bf16.mxu0 0
    %8903 = vmatpush1.bf16.msra.mxu0 %v8149
    %8904 = vmatprep.subr.bf16.mxu0 0
    %8905 = vmatpush2.bf16.msra.mxu0 %v8224
    %8906 = vmatprep.subr.bf16.mxu0 0
    %8907 = vmatpush2.bf16.msra.mxu0 %v8219
    %8908 = vmatprep.subr.bf16.mxu0 0
    %8909 = vmatpush2.bf16.msra.mxu0 %v8214
    %8910 = vmatprep.subr.bf16.mxu0 0
    %8911 = vmatpush2.bf16.msra.mxu0 %v8209
    %8912 = vmatprep.subr.bf16.mxu0 0
    %8913 = vmatpush2.bf16.msra.mxu0 %v8204
    %8914 = vmatprep.subr.bf16.mxu0 0
    %8915 = vmatpush2.bf16.msra.mxu0 %v8199
    %8916 = vmatprep.subr.bf16.mxu0 0
    %8917 = vmatpush2.bf16.msra.mxu0 %v8194
    %8918 = vmatprep.subr.bf16.mxu0 0
    %8919 = vmatpush2.bf16.msra.mxu0 %v8189
    %8920 = vmatprep.mubr.bf16.mxu0 %v7647
    %8921 = vmatmul.mubr.bf16.gmra.mxu0 %v7644
    %v8922 = vpop.f32.mrf.mxu0
    %v8923 = vadd.f32 0.0, %v8922
    %v8924 = vpop.f32.mrf.mxu0
    %v8925 = vpop.f32.mrf.mxu0
    %v8926 = vadd.f32 0.0, %v8925
    %v8927 = vpop.f32.mrf.mxu0
    %8928 = vmatprep.mubr.bf16.mxu0 %v7654
    %8929 = vmatmul.mubr.bf16.gmra.mxu0 %v7652
    %v8930 = vpop.f32.mrf.mxu0
    %v8931 = vadd.f32 0.0, %v8930
    %v8932 = vpop.f32.mrf.mxu0
    %v8933 = vpop.f32.mrf.mxu0
    %v8934 = vadd.f32 0.0, %v8933
    %v8935 = vpop.f32.mrf.mxu0
    %8936 = vmatprep.mubr.bf16.mxu0 %v7660
    %8937 = vmatmul.mubr.bf16.gmra.mxu0 %v7658
    %v8938 = vpop.f32.mrf.mxu0
    %v8939 = vadd.f32 0.0, %v8938
    %v8940 = vpop.f32.mrf.mxu0
    %v8941 = vpop.f32.mrf.mxu0
    %v8942 = vadd.f32 0.0, %v8941
    %v8943 = vpop.f32.mrf.mxu0
    %8944 = vmatprep.mubr.bf16.mxu0 %v7666
    %8945 = vmatmul.mubr.bf16.gmra.mxu0 %v7664
    %v8946 = vpop.f32.mrf.mxu0
    %v8947 = vadd.f32 0.0, %v8946
    %v8948 = vpop.f32.mrf.mxu0
    %v8949 = vpop.f32.mrf.mxu0
    %v8950 = vadd.f32 0.0, %v8949
    %v8951 = vpop.f32.mrf.mxu0
    %8952 = vmatprep.mubr.bf16.mxu0 %v7672
    %8953 = vmatmul.mubr.bf16.gmra.mxu0 %v7670
    %v8954 = vpop.f32.mrf.mxu0
    %v8955 = vadd.f32 0.0, %v8954
    %v8956 = vpop.f32.mrf.mxu0
    %v8957 = vpop.f32.mrf.mxu0
    %v8958 = vadd.f32 0.0, %v8957
    %v8959 = vpop.f32.mrf.mxu0
    %8960 = vmatprep.mubr.bf16.mxu0 %v7678
    %8961 = vmatmul.mubr.bf16.gmra.mxu0 %v7676
    %v8962 = vpop.f32.mrf.mxu0
    %v8963 = vadd.f32 0.0, %v8962
    %v8964 = vpop.f32.mrf.mxu0
    %v8965 = vpop.f32.mrf.mxu0
    %v8966 = vadd.f32 0.0, %v8965
    %v8967 = vpop.f32.mrf.mxu0
    %8968 = vmatprep.mubr.bf16.mxu0 %v7684
    %8969 = vmatmul.mubr.bf16.gmra.mxu0 %v7682
    %v8970 = vpop.f32.mrf.mxu0
    %v8971 = vadd.f32 0.0, %v8970
    %v8972 = vpop.f32.mrf.mxu0
    %v8973 = vpop.f32.mrf.mxu0
    %v8974 = vadd.f32 0.0, %v8973
    %v8975 = vpop.f32.mrf.mxu0
    %8976 = vmatprep.mubr.bf16.mxu0 %v7690
    %8977 = vmatmul.mubr.bf16.gmra.mxu0 %v7688
    %v8978 = vpop.f32.mrf.mxu0
    %v8979 = vadd.f32 0.0, %v8978
    %v8980 = vpop.f32.mrf.mxu0
    %v8981 = vpop.f32.mrf.mxu0
    %v8982 = vadd.f32 0.0, %v8981
    %v8983 = vpop.f32.mrf.mxu0
    %8984 = vmatprep.mubr.bf16.mxu0 %v7696
    %8985 = vmatmul.mubr.bf16.gmra.mxu0 %v7694
    %v8986 = vpop.f32.mrf.mxu0
    %v8987 = vadd.f32 0.0, %v8986
    %v8988 = vpop.f32.mrf.mxu0
    %v8989 = vpop.f32.mrf.mxu0
    %v8990 = vadd.f32 0.0, %v8989
    %v8991 = vpop.f32.mrf.mxu0
    %8992 = vmatprep.mubr.bf16.mxu0 %v7722
    %8993 = vmatmul.mubr.bf16.gmra.mxu0 %v7719
    %v8994 = vpop.f32.mrf.mxu0
    %v8995 = vadd.f32 0.0, %v8994
    %v8996 = vpop.f32.mrf.mxu0
    %v8997 = vpop.f32.mrf.mxu0
    %v8998 = vpop.f32.mrf.mxu0
    %8999 = vdwg.mxu0
    %9000 = vmatprep.subr.bf16.mxu0 0
    %9001 = vmatpush1.bf16.msra.mxu0 0
    %9002 = vmatprep.subr.bf16.mxu0 0
    %9003 = vmatpush1.bf16.msra.mxu0 0
    %9004 = vmatprep.subr.bf16.mxu0 0
    %9005 = vmatpush1.bf16.msra.mxu0 0
    %9006 = vmatprep.subr.bf16.mxu0 0
    %9007 = vmatpush1.bf16.msra.mxu0 0
    %9008 = vmatprep.subr.bf16.mxu0 0
    %9009 = vmatpush1.bf16.msra.mxu0 0
    %9010 = vmatprep.subr.bf16.mxu0 0
    %9011 = vmatpush1.bf16.msra.mxu0 %v8239
    %9012 = vmatprep.subr.bf16.mxu0 0
    %9013 = vmatpush1.bf16.msra.mxu0 %v8234
    %9014 = vmatprep.subr.bf16.mxu0 0
    %9015 = vmatpush1.bf16.msra.mxu0 %v8229
    %9016 = vmatprep.subr.bf16.mxu0 0
    %9017 = vmatpush2.bf16.msra.mxu0 0
    %9018 = vmatprep.subr.bf16.mxu0 0
    %9019 = vmatpush2.bf16.msra.mxu0 0
    %9020 = vmatprep.subr.bf16.mxu0 0
    %9021 = vmatpush2.bf16.msra.mxu0 0
    %9022 = vmatprep.subr.bf16.mxu0 0
    %9023 = vmatpush2.bf16.msra.mxu0 0
    %9024 = vmatprep.subr.bf16.mxu0 0
    %9025 = vmatpush2.bf16.msra.mxu0 0
    %9026 = vmatprep.subr.bf16.mxu0 0
    %9027 = vmatpush2.bf16.msra.mxu0 0
    %9028 = vmatprep.subr.bf16.mxu0 0
    %9029 = vmatpush2.bf16.msra.mxu0 0
    %9030 = vmatprep.subr.bf16.mxu0 0
    %9031 = vmatpush2.bf16.msra.mxu0 0
    %9032 = vmatprep.mubr.bf16.mxu0 0
    %9033 = vmatmul.mubr.bf16.gmra.mxu0 %v8336
    %v9034 = vpop.f32.mrf.mxu0
    %v9035 = vadd.f32 %v8923, %v9034
    %v9036 = vpop.f32.mrf.mxu0
    %v9037 = vpop.f32.mrf.mxu0
    %v9038 = vadd.f32 %v8926, %v9037
    %v9039 = vpop.f32.mrf.mxu0
    %9040 = vmatprep.mubr.bf16.mxu0 0
    %9041 = vmatmul.mubr.bf16.gmra.mxu0 %v8339
    %v9042 = vpop.f32.mrf.mxu0
    %v9043 = vadd.f32 %v8931, %v9042
    %v9044 = vpop.f32.mrf.mxu0
    %v9045 = vpop.f32.mrf.mxu0
    %v9046 = vadd.f32 %v8934, %v9045
    %v9047 = vpop.f32.mrf.mxu0
    %9048 = vmatprep.mubr.bf16.mxu0 0
    %9049 = vmatmul.mubr.bf16.gmra.mxu0 %v8342
    %v9050 = vpop.f32.mrf.mxu0
    %v9051 = vadd.f32 %v8939, %v9050
    %v9052 = vpop.f32.mrf.mxu0
    %v9053 = vpop.f32.mrf.mxu0
    %v9054 = vadd.f32 %v8942, %v9053
    %v9055 = vpop.f32.mrf.mxu0
    %9056 = vmatprep.mubr.bf16.mxu0 0
    %9057 = vmatmul.mubr.bf16.gmra.mxu0 %v8345
    %v9058 = vpop.f32.mrf.mxu0
    %v9059 = vadd.f32 %v8947, %v9058
    %v9060 = vpop.f32.mrf.mxu0
    %v9061 = vpop.f32.mrf.mxu0
    %v9062 = vadd.f32 %v8950, %v9061
    %v9063 = vpop.f32.mrf.mxu0
    %9064 = vmatprep.mubr.bf16.mxu0 0
    %9065 = vmatmul.mubr.bf16.gmra.mxu0 %v8348
    %v9066 = vpop.f32.mrf.mxu0
    %v9067 = vadd.f32 %v8955, %v9066
    %v9068 = vpop.f32.mrf.mxu0
    %v9069 = vpop.f32.mrf.mxu0
    %v9070 = vadd.f32 %v8958, %v9069
    %v9071 = vpop.f32.mrf.mxu0
    %9072 = vmatprep.mubr.bf16.mxu0 0
    %9073 = vmatmul.mubr.bf16.gmra.mxu0 %v8351
    %v9074 = vpop.f32.mrf.mxu0
    %v9075 = vadd.f32 %v8963, %v9074
    %v9076 = vpop.f32.mrf.mxu0
    %v9077 = vpop.f32.mrf.mxu0
    %v9078 = vadd.f32 %v8966, %v9077
    %v9079 = vpop.f32.mrf.mxu0
    %9080 = vmatprep.mubr.bf16.mxu0 0
    %9081 = vmatmul.mubr.bf16.gmra.mxu0 %v8354
    %v9082 = vpop.f32.mrf.mxu0
    %v9083 = vadd.f32 %v8971, %v9082
    %v9084 = vpop.f32.mrf.mxu0
    %v9085 = vpop.f32.mrf.mxu0
    %v9086 = vadd.f32 %v8974, %v9085
    %v9087 = vpop.f32.mrf.mxu0
    %9088 = vmatprep.mubr.bf16.mxu0 0
    %9089 = vmatmul.mubr.bf16.gmra.mxu0 %v8357
    %v9090 = vpop.f32.mrf.mxu0
    %v9091 = vadd.f32 %v8979, %v9090
    %v9092 = vpop.f32.mrf.mxu0
    %v9093 = vpop.f32.mrf.mxu0
    %v9094 = vadd.f32 %v8982, %v9093
    %v9095 = vpop.f32.mrf.mxu0
    %9096 = vmatprep.mubr.bf16.mxu0 0
    %9097 = vmatmul.mubr.bf16.gmra.mxu0 %v8360
    %v9098 = vpop.f32.mrf.mxu0
    %v9099 = vadd.f32 %v8987, %v9098
    %v9100 = vpop.f32.mrf.mxu0
    %v9101 = vpop.f32.mrf.mxu0
    %v9102 = vadd.f32 %v8990, %v9101
    %v9103 = vpop.f32.mrf.mxu0
    %9104 = vmatprep.mubr.bf16.mxu0 0
    %9105 = vmatmul.mubr.bf16.gmra.mxu0 %v8362
    %v9106 = vpop.f32.mrf.mxu0
    %v9107 = vadd.f32 %v8995, %v9106
    %v9108 = vpop.f32.mrf.mxu0
    %v9109 = vpop.f32.mrf.mxu0
    %v9110 = vpop.f32.mrf.mxu0
    %9111 = vdwg.mxu0
    %v9112 = vadd.f32 %v7030, %v8530
    %v9113 = vadd.f32 %v7032, %v8532
    %v9114 = vadd.f32 %v7292, %v8792
    %v9115 = vadd.f32 %v7294, %v8794
    %v9116 = vadd.f32 %v7535, %v9035
    %v9117 = vadd.f32 %v7034, %v8534
    %v9118 = vadd.f32 %v7036, %v8536
    %v9119 = vadd.f32 %v7296, %v8796
    %v9120 = vadd.f32 %v7298, %v8798
    %v9121 = vadd.f32 %v7538, %v9038
    %v9122 = vadd.f32 %v7040, %v8540
    %v9123 = vadd.f32 %v7042, %v8542
    %v9124 = vadd.f32 %v7302, %v8802
    %v9125 = vadd.f32 %v7304, %v8804
    %v9126 = vadd.f32 %v7543, %v9043
    %v9127 = vadd.f32 %v7044, %v8544
    %v9128 = vadd.f32 %v7046, %v8546
    %v9129 = vadd.f32 %v7306, %v8806
    %v9130 = vadd.f32 %v7308, %v8808
    %v9131 = vadd.f32 %v7546, %v9046
    %v9132 = vadd.f32 %v7050, %v8550
    %v9133 = vadd.f32 %v7052, %v8552
    %v9134 = vadd.f32 %v7312, %v8812
    %v9135 = vadd.f32 %v7314, %v8814
    %v9136 = vadd.f32 %v7551, %v9051
    %v9137 = vadd.f32 %v7054, %v8554
    %v9138 = vadd.f32 %v7056, %v8556
    %v9139 = vadd.f32 %v7316, %v8816
    %v9140 = vadd.f32 %v7318, %v8818
    %v9141 = vadd.f32 %v7554, %v9054
    %v9142 = vadd.f32 %v7060, %v8560
    %v9143 = vadd.f32 %v7062, %v8562
    %v9144 = vadd.f32 %v7322, %v8822
    %v9145 = vadd.f32 %v7324, %v8824
    %v9146 = vadd.f32 %v7559, %v9059
    %v9147 = vadd.f32 %v7064, %v8564
    %v9148 = vadd.f32 %v7066, %v8566
    %v9149 = vadd.f32 %v7326, %v8826
    %v9150 = vadd.f32 %v7328, %v8828
    %v9151 = vadd.f32 %v7562, %v9062
    %v9152 = vadd.f32 %v7070, %v8570
    %v9153 = vadd.f32 %v7072, %v8572
    %v9154 = vadd.f32 %v7332, %v8832
    %v9155 = vadd.f32 %v7334, %v8834
    %v9156 = vadd.f32 %v7567, %v9067
    %v9157 = vadd.f32 %v7074, %v8574
    %v9158 = vadd.f32 %v7076, %v8576
    %v9159 = vadd.f32 %v7336, %v8836
    %v9160 = vadd.f32 %v7338, %v8838
    %v9161 = vadd.f32 %v7570, %v9070
    %v9162 = vadd.f32 %v7080, %v8580
    %v9163 = vadd.f32 %v7082, %v8582
    %v9164 = vadd.f32 %v7342, %v8842
    %v9165 = vadd.f32 %v7344, %v8844
    %v9166 = vadd.f32 %v7575, %v9075
    %v9167 = vadd.f32 %v7084, %v8584
    %v9168 = vadd.f32 %v7086, %v8586
    %v9169 = vadd.f32 %v7346, %v8846
    %v9170 = vadd.f32 %v7348, %v8848
    %v9171 = vadd.f32 %v7578, %v9078
    %v9172 = vadd.f32 %v7090, %v8590
    %v9173 = vadd.f32 %v7092, %v8592
    %v9174 = vadd.f32 %v7352, %v8852
    %v9175 = vadd.f32 %v7354, %v8854
    %v9176 = vadd.f32 %v7583, %v9083
    %v9177 = vadd.f32 %v7094, %v8594
    %v9178 = vadd.f32 %v7096, %v8596
    %v9179 = vadd.f32 %v7356, %v8856
    %v9180 = vadd.f32 %v7358, %v8858
    %v9181 = vadd.f32 %v7586, %v9086
    %v9182 = vadd.f32 %v7100, %v8600
    %v9183 = vadd.f32 %v7102, %v8602
    %v9184 = vadd.f32 %v7362, %v8862
    %v9185 = vadd.f32 %v7364, %v8864
    %v9186 = vadd.f32 %v7591, %v9091
    %v9187 = vadd.f32 %v7104, %v8604
    %v9188 = vadd.f32 %v7106, %v8606
    %v9189 = vadd.f32 %v7366, %v8866
    %v9190 = vadd.f32 %v7368, %v8868
    %v9191 = vadd.f32 %v7594, %v9094
    %v9192 = vadd.f32 %v7110, %v8610
    %v9193 = vadd.f32 %v7112, %v8612
    %v9194 = vadd.f32 %v7372, %v8872
    %v9195 = vadd.f32 %v7374, %v8874
    %v9196 = vadd.f32 %v7599, %v9099
    %v9197 = vadd.f32 %v7114, %v8614
    %v9198 = vadd.f32 %v7116, %v8616
    %v9199 = vadd.f32 %v7376, %v8876
    %v9200 = vadd.f32 %v7378, %v8878
    %v9201 = vadd.f32 %v7602, %v9102
    %v9202 = vadd.f32 %v7120, %v8620
    %v9203 = vadd.f32 %v7122, %v8622
    %v9204 = vadd.f32 %v7382, %v8882
    %v9205 = vadd.f32 %v7384, %v8884
    %v9206 = vadd.f32 %v7607, %v9107
    %v9207 = vld [vmem:[%s6] sm:$0x1f]
    %v9209 = vlaneseq
    %v9210 = vshrl.u32 %v9209, 7
    %v9211 = vsub.s32 0, %v9210
    %v9212 = vrot.slane %v9207, %v9211
    %v9213 = vlaneseq
    %v9214 = vshrl.u32 %v9213, 7
    %v9215 = vsub.s32 1, %v9214
    %v9216 = vrot.slane %v9207, %v9215
    %v9217 = vlaneseq
    %v9218 = vshrl.u32 %v9217, 7
    %v9219 = vsub.s32 2, %v9218
    %v9220 = vrot.slane %v9207, %v9219
    %v9221 = vlaneseq
    %v9222 = vshrl.u32 %v9221, 7
    %v9223 = vsub.s32 3, %v9222
    %v9224 = vrot.slane %v9207, %v9223
    %v9225 = vlaneseq
    %v9226 = vshrl.u32 %v9225, 7
    %v9227 = vsub.s32 4, %v9226
    %v9228 = vrot.slane %v9207, %v9227
    %v9234 = vadd.f32 %v9112, %v9212
    %v9235 = vadd.f32 %v9113, %v9216
    %v9236 = vadd.f32 %v9114, %v9220
    %v9237 = vadd.f32 %v9115, %v9224
    %v9238 = vadd.f32 %v9116, %v9228
    %v9239 = vadd.f32 %v9117, %v9212
    %v9240 = vadd.f32 %v9118, %v9216
    %v9241 = vadd.f32 %v9119, %v9220
    %v9242 = vadd.f32 %v9120, %v9224
    %v9243 = vadd.f32 %v9121, %v9228
    %v9244 = vadd.f32 %v9122, %v9212
    %v9245 = vadd.f32 %v9123, %v9216
    %v9246 = vadd.f32 %v9124, %v9220
    %v9247 = vadd.f32 %v9125, %v9224
    %v9248 = vadd.f32 %v9126, %v9228
    %v9249 = vadd.f32 %v9127, %v9212
    %v9250 = vadd.f32 %v9128, %v9216
    %v9251 = vadd.f32 %v9129, %v9220
    %v9252 = vadd.f32 %v9130, %v9224
    %v9253 = vadd.f32 %v9131, %v9228
    %v9254 = vadd.f32 %v9132, %v9212
    %v9255 = vadd.f32 %v9133, %v9216
    %v9256 = vadd.f32 %v9134, %v9220
    %v9257 = vadd.f32 %v9135, %v9224
    %v9258 = vadd.f32 %v9136, %v9228
    %v9259 = vadd.f32 %v9137, %v9212
    %v9260 = vadd.f32 %v9138, %v9216
    %v9261 = vadd.f32 %v9139, %v9220
    %v9262 = vadd.f32 %v9140, %v9224
    %v9263 = vadd.f32 %v9141, %v9228
    %v9264 = vadd.f32 %v9142, %v9212
    %v9265 = vadd.f32 %v9143, %v9216
    %v9266 = vadd.f32 %v9144, %v9220
    %v9267 = vadd.f32 %v9145, %v9224
    %v9268 = vadd.f32 %v9146, %v9228
    %v9269 = vadd.f32 %v9147, %v9212
    %v9270 = vadd.f32 %v9148, %v9216
    %v9271 = vadd.f32 %v9149, %v9220
    %v9272 = vadd.f32 %v9150, %v9224
    %v9273 = vadd.f32 %v9151, %v9228
    %v9274 = vadd.f32 %v9152, %v9212
    %v9275 = vadd.f32 %v9153, %v9216
    %v9276 = vadd.f32 %v9154, %v9220
    %v9277 = vadd.f32 %v9155, %v9224
    %v9278 = vadd.f32 %v9156, %v9228
    %v9279 = vadd.f32 %v9157, %v9212
    %v9280 = vadd.f32 %v9158, %v9216
    %v9281 = vadd.f32 %v9159, %v9220
    %v9282 = vadd.f32 %v9160, %v9224
    %v9283 = vadd.f32 %v9161, %v9228
    %v9284 = vadd.f32 %v9162, %v9212
    %v9285 = vadd.f32 %v9163, %v9216
    %v9286 = vadd.f32 %v9164, %v9220
    %v9287 = vadd.f32 %v9165, %v9224
    %v9288 = vadd.f32 %v9166, %v9228
    %v9289 = vadd.f32 %v9167, %v9212
    %v9290 = vadd.f32 %v9168, %v9216
    %v9291 = vadd.f32 %v9169, %v9220
    %v9292 = vadd.f32 %v9170, %v9224
    %v9293 = vadd.f32 %v9171, %v9228
    %v9294 = vadd.f32 %v9172, %v9212
    %v9295 = vadd.f32 %v9173, %v9216
    %v9296 = vadd.f32 %v9174, %v9220
    %v9297 = vadd.f32 %v9175, %v9224
    %v9298 = vadd.f32 %v9176, %v9228
    %v9299 = vadd.f32 %v9177, %v9212
    %v9300 = vadd.f32 %v9178, %v9216
    %v9301 = vadd.f32 %v9179, %v9220
    %v9302 = vadd.f32 %v9180, %v9224
    %v9303 = vadd.f32 %v9181, %v9228
    %v9304 = vadd.f32 %v9182, %v9212
    %v9305 = vadd.f32 %v9183, %v9216
    %v9306 = vadd.f32 %v9184, %v9220
    %v9307 = vadd.f32 %v9185, %v9224
    %v9308 = vadd.f32 %v9186, %v9228
    %v9309 = vadd.f32 %v9187, %v9212
    %v9310 = vadd.f32 %v9188, %v9216
    %v9311 = vadd.f32 %v9189, %v9220
    %v9312 = vadd.f32 %v9190, %v9224
    %v9313 = vadd.f32 %v9191, %v9228
    %v9314 = vadd.f32 %v9192, %v9212
    %v9315 = vadd.f32 %v9193, %v9216
    %v9316 = vadd.f32 %v9194, %v9220
    %v9317 = vadd.f32 %v9195, %v9224
    %v9318 = vadd.f32 %v9196, %v9228
    %v9319 = vadd.f32 %v9197, %v9212
    %v9320 = vadd.f32 %v9198, %v9216
    %v9321 = vadd.f32 %v9199, %v9220
    %v9322 = vadd.f32 %v9200, %v9224
    %v9323 = vadd.f32 %v9201, %v9228
    %v9324 = vadd.f32 %v9202, %v9212
    %v9325 = vadd.f32 %v9203, %v9216
    %v9326 = vadd.f32 %v9204, %v9220
    %v9327 = vadd.f32 %v9205, %v9224
    %v9328 = vadd.f32 %v9206, %v9228
    %v9329 = vmax.f32 %v9234, 0.0
    %v9330 = vmax.f32 %v9235, 0.0
    %v9331 = vmax.f32 %v9236, 0.0
    %v9332 = vmax.f32 %v9237, 0.0
    %v9333 = vmax.f32 %v9238, 0.0
    %v9334 = vmax.f32 %v9239, 0.0
    %v9335 = vmax.f32 %v9240, 0.0
    %v9336 = vmax.f32 %v9241, 0.0
    %v9337 = vmax.f32 %v9242, 0.0
    %v9338 = vmax.f32 %v9243, 0.0
    %v9339 = vmax.f32 %v9244, 0.0
    %v9340 = vmax.f32 %v9245, 0.0
    %v9341 = vmax.f32 %v9246, 0.0
    %v9342 = vmax.f32 %v9247, 0.0
    %v9343 = vmax.f32 %v9248, 0.0
    %v9344 = vmax.f32 %v9249, 0.0
    %v9345 = vmax.f32 %v9250, 0.0
    %v9346 = vmax.f32 %v9251, 0.0
    %v9347 = vmax.f32 %v9252, 0.0
    %v9348 = vmax.f32 %v9253, 0.0
    %v9349 = vmax.f32 %v9254, 0.0
    %v9350 = vmax.f32 %v9255, 0.0
    %v9351 = vmax.f32 %v9256, 0.0
    %v9352 = vmax.f32 %v9257, 0.0
    %v9353 = vmax.f32 %v9258, 0.0
    %v9354 = vmax.f32 %v9259, 0.0
    %v9355 = vmax.f32 %v9260, 0.0
    %v9356 = vmax.f32 %v9261, 0.0
    %v9357 = vmax.f32 %v9262, 0.0
    %v9358 = vmax.f32 %v9263, 0.0
    %v9359 = vmax.f32 %v9264, 0.0
    %v9360 = vmax.f32 %v9265, 0.0
    %v9361 = vmax.f32 %v9266, 0.0
    %v9362 = vmax.f32 %v9267, 0.0
    %v9363 = vmax.f32 %v9268, 0.0
    %v9364 = vmax.f32 %v9269, 0.0
    %v9365 = vmax.f32 %v9270, 0.0
    %v9366 = vmax.f32 %v9271, 0.0
    %v9367 = vmax.f32 %v9272, 0.0
    %v9368 = vmax.f32 %v9273, 0.0
    %v9369 = vmax.f32 %v9274, 0.0
    %v9370 = vmax.f32 %v9275, 0.0
    %v9371 = vmax.f32 %v9276, 0.0
    %v9372 = vmax.f32 %v9277, 0.0
    %v9373 = vmax.f32 %v9278, 0.0
    %v9374 = vmax.f32 %v9279, 0.0
    %v9375 = vmax.f32 %v9280, 0.0
    %v9376 = vmax.f32 %v9281, 0.0
    %v9377 = vmax.f32 %v9282, 0.0
    %v9378 = vmax.f32 %v9283, 0.0
    %v9379 = vmax.f32 %v9284, 0.0
    %v9380 = vmax.f32 %v9285, 0.0
    %v9381 = vmax.f32 %v9286, 0.0
    %v9382 = vmax.f32 %v9287, 0.0
    %v9383 = vmax.f32 %v9288, 0.0
    %v9384 = vmax.f32 %v9289, 0.0
    %v9385 = vmax.f32 %v9290, 0.0
    %v9386 = vmax.f32 %v9291, 0.0
    %v9387 = vmax.f32 %v9292, 0.0
    %v9388 = vmax.f32 %v9293, 0.0
    %v9389 = vmax.f32 %v9294, 0.0
    %v9390 = vmax.f32 %v9295, 0.0
    %v9391 = vmax.f32 %v9296, 0.0
    %v9392 = vmax.f32 %v9297, 0.0
    %v9393 = vmax.f32 %v9298, 0.0
    %v9394 = vmax.f32 %v9299, 0.0
    %v9395 = vmax.f32 %v9300, 0.0
    %v9396 = vmax.f32 %v9301, 0.0
    %v9397 = vmax.f32 %v9302, 0.0
    %v9398 = vmax.f32 %v9303, 0.0
    %v9399 = vmax.f32 %v9304, 0.0
    %v9400 = vmax.f32 %v9305, 0.0
    %v9401 = vmax.f32 %v9306, 0.0
    %v9402 = vmax.f32 %v9307, 0.0
    %v9403 = vmax.f32 %v9308, 0.0
    %v9404 = vmax.f32 %v9309, 0.0
    %v9405 = vmax.f32 %v9310, 0.0
    %v9406 = vmax.f32 %v9311, 0.0
    %v9407 = vmax.f32 %v9312, 0.0
    %v9408 = vmax.f32 %v9313, 0.0
    %v9409 = vmax.f32 %v9314, 0.0
    %v9410 = vmax.f32 %v9315, 0.0
    %v9411 = vmax.f32 %v9316, 0.0
    %v9412 = vmax.f32 %v9317, 0.0
    %v9413 = vmax.f32 %v9318, 0.0
    %v9414 = vmax.f32 %v9319, 0.0
    %v9415 = vmax.f32 %v9320, 0.0
    %v9416 = vmax.f32 %v9321, 0.0
    %v9417 = vmax.f32 %v9322, 0.0
    %v9418 = vmax.f32 %v9323, 0.0
    %v9419 = vmax.f32 %v9324, 0.0
    %v9420 = vmax.f32 %v9325, 0.0
    %v9421 = vmax.f32 %v9326, 0.0
    %v9422 = vmax.f32 %v9327, 0.0
    %v9423 = vmax.f32 %v9328, 0.0
    %v9424 = vpack.c.bf16 %v9334, %v9329
    %v9425 = vpack.c.bf16 %v9335, %v9330
    %v9426 = vpack.c.bf16 %v9336, %v9331
    %v9427 = vpack.c.bf16 %v9337, %v9332
    %v9428 = vpack.c.bf16 %v9338, %v9333
    %v9429 = vpack.c.bf16 %v9344, %v9339
    %v9430 = vpack.c.bf16 %v9345, %v9340
    %v9431 = vpack.c.bf16 %v9346, %v9341
    %v9432 = vpack.c.bf16 %v9347, %v9342
    %v9433 = vpack.c.bf16 %v9348, %v9343
    %v9434 = vpack.c.bf16 %v9354, %v9349
    %v9435 = vpack.c.bf16 %v9355, %v9350
    %v9436 = vpack.c.bf16 %v9356, %v9351
    %v9437 = vpack.c.bf16 %v9357, %v9352
    %v9438 = vpack.c.bf16 %v9358, %v9353
    %v9439 = vpack.c.bf16 %v9364, %v9359
    %v9440 = vpack.c.bf16 %v9365, %v9360
    %v9441 = vpack.c.bf16 %v9366, %v9361
    %v9442 = vpack.c.bf16 %v9367, %v9362
    %v9443 = vpack.c.bf16 %v9368, %v9363
    %v9444 = vpack.c.bf16 %v9374, %v9369
    %v9445 = vpack.c.bf16 %v9375, %v9370
    %v9446 = vpack.c.bf16 %v9376, %v9371
    %v9447 = vpack.c.bf16 %v9377, %v9372
    %v9448 = vpack.c.bf16 %v9378, %v9373
    %v9449 = vpack.c.bf16 %v9384, %v9379
    %v9450 = vpack.c.bf16 %v9385, %v9380
    %v9451 = vpack.c.bf16 %v9386, %v9381
    %v9452 = vpack.c.bf16 %v9387, %v9382
    %v9453 = vpack.c.bf16 %v9388, %v9383
    %v9454 = vpack.c.bf16 %v9394, %v9389
    %v9455 = vpack.c.bf16 %v9395, %v9390
    %v9456 = vpack.c.bf16 %v9396, %v9391
    %v9457 = vpack.c.bf16 %v9397, %v9392
    %v9458 = vpack.c.bf16 %v9398, %v9393
    %v9459 = vpack.c.bf16 %v9404, %v9399
    %v9460 = vpack.c.bf16 %v9405, %v9400
    %v9461 = vpack.c.bf16 %v9406, %v9401
    %v9462 = vpack.c.bf16 %v9407, %v9402
    %v9463 = vpack.c.bf16 %v9408, %v9403
    %v9464 = vpack.c.bf16 %v9414, %v9409
    %v9465 = vpack.c.bf16 %v9415, %v9410
    %v9466 = vpack.c.bf16 %v9416, %v9411
    %v9467 = vpack.c.bf16 %v9417, %v9412
    %v9468 = vpack.c.bf16 %v9418, %v9413
    %v9469 = vpack.c.bf16 %v9419, %v9419
    %v9470 = vpack.c.bf16 %v9420, %v9420
    %v9471 = vpack.c.bf16 %v9421, %v9421
    %v9472 = vpack.c.bf16 %v9422, %v9422
    %v9473 = vpack.c.bf16 %v9423, %v9423
    %v9475 = vshrl.u32 %v9424, 16
    %v9477 = vshll.u32 %v9424, 16
    %v9479 = vrot.slane %v9477, 1
    %v9480 = vor.u32 %v9475, %v9479
    %v9482 = vshll.u32 %v9429, 16
    %v9484 = vrot.slane %v9482, 1
    %v9485 = vsel %vm159, %v9480, %v9484
    %v9487 = vshrl.u32 %v9425, 16
    %v9489 = vshll.u32 %v9425, 16
    %v9491 = vrot.slane %v9489, 1
    %v9492 = vor.u32 %v9487, %v9491
    %v9494 = vshll.u32 %v9430, 16
    %v9496 = vrot.slane %v9494, 1
    %v9497 = vsel %vm159, %v9492, %v9496
    %v9499 = vshrl.u32 %v9426, 16
    %v9501 = vshll.u32 %v9426, 16
    %v9503 = vrot.slane %v9501, 1
    %v9504 = vor.u32 %v9499, %v9503
    %v9506 = vshll.u32 %v9431, 16
    %v9508 = vrot.slane %v9506, 1
    %v9509 = vsel %vm159, %v9504, %v9508
    %v9511 = vshrl.u32 %v9427, 16
    %v9513 = vshll.u32 %v9427, 16
    %v9515 = vrot.slane %v9513, 1
    %v9516 = vor.u32 %v9511, %v9515
    %v9518 = vshll.u32 %v9432, 16
    %v9520 = vrot.slane %v9518, 1
    %v9521 = vsel %vm159, %v9516, %v9520
    %v9523 = vshrl.u32 %v9428, 16
    %v9525 = vshll.u32 %v9428, 16
    %v9527 = vrot.slane %v9525, 1
    %v9528 = vor.u32 %v9523, %v9527
    %v9530 = vshll.u32 %v9433, 16
    %v9532 = vrot.slane %v9530, 1
    %v9533 = vsel %vm159, %v9528, %v9532
    %v9534 = vshrl.u32 %v9429, 16
    %v9536 = vor.u32 %v9534, %v9484
    %v9538 = vshll.u32 %v9434, 16
    %v9540 = vrot.slane %v9538, 1
    %v9541 = vsel %vm159, %v9536, %v9540
    %v9542 = vshrl.u32 %v9430, 16
    %v9544 = vor.u32 %v9542, %v9496
    %v9546 = vshll.u32 %v9435, 16
    %v9548 = vrot.slane %v9546, 1
    %v9549 = vsel %vm159, %v9544, %v9548
    %v9550 = vshrl.u32 %v9431, 16
    %v9552 = vor.u32 %v9550, %v9508
    %v9554 = vshll.u32 %v9436, 16
    %v9556 = vrot.slane %v9554, 1
    %v9557 = vsel %vm159, %v9552, %v9556
    %v9558 = vshrl.u32 %v9432, 16
    %v9560 = vor.u32 %v9558, %v9520
    %v9562 = vshll.u32 %v9437, 16
    %v9564 = vrot.slane %v9562, 1
    %v9565 = vsel %vm159, %v9560, %v9564
    %v9566 = vshrl.u32 %v9433, 16
    %v9568 = vor.u32 %v9566, %v9532
    %v9570 = vshll.u32 %v9438, 16
    %v9572 = vrot.slane %v9570, 1
    %v9573 = vsel %vm159, %v9568, %v9572
    %v9574 = vshrl.u32 %v9434, 16
    %v9576 = vor.u32 %v9574, %v9540
    %v9578 = vshll.u32 %v9439, 16
    %v9580 = vrot.slane %v9578, 1
    %v9581 = vsel %vm159, %v9576, %v9580
    %v9582 = vshrl.u32 %v9435, 16
    %v9584 = vor.u32 %v9582, %v9548
    %v9586 = vshll.u32 %v9440, 16
    %v9588 = vrot.slane %v9586, 1
    %v9589 = vsel %vm159, %v9584, %v9588
    %v9590 = vshrl.u32 %v9436, 16
    %v9592 = vor.u32 %v9590, %v9556
    %v9594 = vshll.u32 %v9441, 16
    %v9596 = vrot.slane %v9594, 1
    %v9597 = vsel %vm159, %v9592, %v9596
    %v9598 = vshrl.u32 %v9437, 16
    %v9600 = vor.u32 %v9598, %v9564
    %v9602 = vshll.u32 %v9442, 16
    %v9604 = vrot.slane %v9602, 1
    %v9605 = vsel %vm159, %v9600, %v9604
    %v9606 = vshrl.u32 %v9438, 16
    %v9608 = vor.u32 %v9606, %v9572
    %v9610 = vshll.u32 %v9443, 16
    %v9612 = vrot.slane %v9610, 1
    %v9613 = vsel %vm159, %v9608, %v9612
    %v9614 = vshrl.u32 %v9439, 16
    %v9616 = vor.u32 %v9614, %v9580
    %v9618 = vshll.u32 %v9444, 16
    %v9620 = vrot.slane %v9618, 1
    %v9621 = vsel %vm159, %v9616, %v9620
    %v9622 = vshrl.u32 %v9440, 16
    %v9624 = vor.u32 %v9622, %v9588
    %v9626 = vshll.u32 %v9445, 16
    %v9628 = vrot.slane %v9626, 1
    %v9629 = vsel %vm159, %v9624, %v9628
    %v9630 = vshrl.u32 %v9441, 16
    %v9632 = vor.u32 %v9630, %v9596
    %v9634 = vshll.u32 %v9446, 16
    %v9636 = vrot.slane %v9634, 1
    %v9637 = vsel %vm159, %v9632, %v9636
    %v9638 = vshrl.u32 %v9442, 16
    %v9640 = vor.u32 %v9638, %v9604
    %v9642 = vshll.u32 %v9447, 16
    %v9644 = vrot.slane %v9642, 1
    %v9645 = vsel %vm159, %v9640, %v9644
    %v9646 = vshrl.u32 %v9443, 16
    %v9648 = vor.u32 %v9646, %v9612
    %v9650 = vshll.u32 %v9448, 16
    %v9652 = vrot.slane %v9650, 1
    %v9653 = vsel %vm159, %v9648, %v9652
    %v9654 = vshrl.u32 %v9444, 16
    %v9656 = vor.u32 %v9654, %v9620
    %v9658 = vshll.u32 %v9449, 16
    %v9660 = vrot.slane %v9658, 1
    %v9661 = vsel %vm159, %v9656, %v9660
    %v9662 = vshrl.u32 %v9445, 16
    %v9664 = vor.u32 %v9662, %v9628
    %v9666 = vshll.u32 %v9450, 16
    %v9668 = vrot.slane %v9666, 1
    %v9669 = vsel %vm159, %v9664, %v9668
    %v9670 = vshrl.u32 %v9446, 16
    %v9672 = vor.u32 %v9670, %v9636
    %v9674 = vshll.u32 %v9451, 16
    %v9676 = vrot.slane %v9674, 1
    %v9677 = vsel %vm159, %v9672, %v9676
    %v9678 = vshrl.u32 %v9447, 16
    %v9680 = vor.u32 %v9678, %v9644
    %v9682 = vshll.u32 %v9452, 16
    %v9684 = vrot.slane %v9682, 1
    %v9685 = vsel %vm159, %v9680, %v9684
    %v9686 = vshrl.u32 %v9448, 16
    %v9688 = vor.u32 %v9686, %v9652
    %v9690 = vshll.u32 %v9453, 16
    %v9692 = vrot.slane %v9690, 1
    %v9693 = vsel %vm159, %v9688, %v9692
    %v9694 = vshrl.u32 %v9449, 16
    %v9696 = vor.u32 %v9694, %v9660
    %v9698 = vshll.u32 %v9454, 16
    %v9700 = vrot.slane %v9698, 1
    %v9701 = vsel %vm159, %v9696, %v9700
    %v9702 = vshrl.u32 %v9450, 16
    %v9704 = vor.u32 %v9702, %v9668
    %v9706 = vshll.u32 %v9455, 16
    %v9708 = vrot.slane %v9706, 1
    %v9709 = vsel %vm159, %v9704, %v9708
    %v9710 = vshrl.u32 %v9451, 16
    %v9712 = vor.u32 %v9710, %v9676
    %v9714 = vshll.u32 %v9456, 16
    %v9716 = vrot.slane %v9714, 1
    %v9717 = vsel %vm159, %v9712, %v9716
    %v9718 = vshrl.u32 %v9452, 16
    %v9720 = vor.u32 %v9718, %v9684
    %v9722 = vshll.u32 %v9457, 16
    %v9724 = vrot.slane %v9722, 1
    %v9725 = vsel %vm159, %v9720, %v9724
    %v9726 = vshrl.u32 %v9453, 16
    %v9728 = vor.u32 %v9726, %v9692
    %v9730 = vshll.u32 %v9458, 16
    %v9732 = vrot.slane %v9730, 1
    %v9733 = vsel %vm159, %v9728, %v9732
    %v9734 = vshrl.u32 %v9454, 16
    %v9736 = vor.u32 %v9734, %v9700
    %v9738 = vshll.u32 %v9459, 16
    %v9740 = vrot.slane %v9738, 1
    %v9741 = vsel %vm159, %v9736, %v9740
    %v9742 = vshrl.u32 %v9455, 16
    %v9744 = vor.u32 %v9742, %v9708
    %v9746 = vshll.u32 %v9460, 16
    %v9748 = vrot.slane %v9746, 1
    %v9749 = vsel %vm159, %v9744, %v9748
    %v9750 = vshrl.u32 %v9456, 16
    %v9752 = vor.u32 %v9750, %v9716
    %v9754 = vshll.u32 %v9461, 16
    %v9756 = vrot.slane %v9754, 1
    %v9757 = vsel %vm159, %v9752, %v9756
    %v9758 = vshrl.u32 %v9457, 16
    %v9760 = vor.u32 %v9758, %v9724
    %v9762 = vshll.u32 %v9462, 16
    %v9764 = vrot.slane %v9762, 1
    %v9765 = vsel %vm159, %v9760, %v9764
    %v9766 = vshrl.u32 %v9458, 16
    %v9768 = vor.u32 %v9766, %v9732
    %v9770 = vshll.u32 %v9463, 16
    %v9772 = vrot.slane %v9770, 1
    %v9773 = vsel %vm159, %v9768, %v9772
    %v9774 = vshrl.u32 %v9459, 16
    %v9776 = vor.u32 %v9774, %v9740
    %v9778 = vshll.u32 %v9464, 16
    %v9780 = vrot.slane %v9778, 1
    %v9781 = vsel %vm159, %v9776, %v9780
    %v9782 = vshrl.u32 %v9460, 16
    %v9784 = vor.u32 %v9782, %v9748
    %v9786 = vshll.u32 %v9465, 16
    %v9788 = vrot.slane %v9786, 1
    %v9789 = vsel %vm159, %v9784, %v9788
    %v9790 = vshrl.u32 %v9461, 16
    %v9792 = vor.u32 %v9790, %v9756
    %v9794 = vshll.u32 %v9466, 16
    %v9796 = vrot.slane %v9794, 1
    %v9797 = vsel %vm159, %v9792, %v9796
    %v9798 = vshrl.u32 %v9462, 16
    %v9800 = vor.u32 %v9798, %v9764
    %v9802 = vshll.u32 %v9467, 16
    %v9804 = vrot.slane %v9802, 1
    %v9805 = vsel %vm159, %v9800, %v9804
    %v9806 = vshrl.u32 %v9463, 16
    %v9808 = vor.u32 %v9806, %v9772
    %v9810 = vshll.u32 %v9468, 16
    %v9812 = vrot.slane %v9810, 1
    %v9813 = vsel %vm159, %v9808, %v9812
    %v9814 = vshrl.u32 %v9464, 16
    %v9816 = vor.u32 %v9814, %v9780
    %v9818 = vshll.u32 %v9469, 16
    %v9820 = vrot.slane %v9818, 1
    %v9821 = vsel %vm159, %v9816, %v9820
    %v9822 = vshrl.u32 %v9465, 16
    %v9824 = vor.u32 %v9822, %v9788
    %v9826 = vshll.u32 %v9470, 16
    %v9828 = vrot.slane %v9826, 1
    %v9829 = vsel %vm159, %v9824, %v9828
    %v9830 = vshrl.u32 %v9466, 16
    %v9832 = vor.u32 %v9830, %v9796
    %v9834 = vshll.u32 %v9471, 16
    %v9836 = vrot.slane %v9834, 1
    %v9837 = vsel %vm159, %v9832, %v9836
    %v9838 = vshrl.u32 %v9467, 16
    %v9840 = vor.u32 %v9838, %v9804
    %v9842 = vshll.u32 %v9472, 16
    %v9844 = vrot.slane %v9842, 1
    %v9845 = vsel %vm159, %v9840, %v9844
    %v9846 = vshrl.u32 %v9468, 16
    %v9848 = vor.u32 %v9846, %v9812
    %v9850 = vshll.u32 %v9473, 16
    %v9852 = vrot.slane %v9850, 1
    %v9853 = vsel %vm159, %v9848, %v9852
    %v9854 = vshrl.u32 %v9469, 16
    %v9856 = vor.u32 %v9854, %v9820
    %v9857 = vshrl.u32 %v9470, 16
    %v9859 = vor.u32 %v9857, %v9828
    %v9860 = vshrl.u32 %v9471, 16
    %v9862 = vor.u32 %v9860, %v9836
    %v9863 = vshrl.u32 %v9472, 16
    %v9865 = vor.u32 %v9863, %v9844
    %v9866 = vshrl.u32 %v9473, 16
    %v9868 = vor.u32 %v9866, %v9852
    %v9919 = vsel %vm4958, %v9856, 0
    %v9920 = vsel %vm4958, %v9859, 0
    %v9921 = vsel %vm4958, %v9862, 0
    %v9922 = vsel %vm4958, %v9865, 0
    %v9923 = vsel %vm4958, %v9868, 0
    %v9924 = vmax.bf16 %v9424, %v9485
    %v9925 = vmax.bf16 %v9425, %v9497
    %v9926 = vmax.bf16 %v9426, %v9509
    %v9927 = vmax.bf16 %v9427, %v9521
    %v9928 = vmax.bf16 %v9428, %v9533
    %v9929 = vmax.bf16 %v9429, %v9541
    %v9930 = vmax.bf16 %v9430, %v9549
    %v9931 = vmax.bf16 %v9431, %v9557
    %v9932 = vmax.bf16 %v9432, %v9565
    %v9933 = vmax.bf16 %v9433, %v9573
    %v9934 = vmax.bf16 %v9434, %v9581
    %v9935 = vmax.bf16 %v9435, %v9589
    %v9936 = vmax.bf16 %v9436, %v9597
    %v9937 = vmax.bf16 %v9437, %v9605
    %v9938 = vmax.bf16 %v9438, %v9613
    %v9939 = vmax.bf16 %v9439, %v9621
    %v9940 = vmax.bf16 %v9440, %v9629
    %v9941 = vmax.bf16 %v9441, %v9637
    %v9942 = vmax.bf16 %v9442, %v9645
    %v9943 = vmax.bf16 %v9443, %v9653
    %v9944 = vmax.bf16 %v9444, %v9661
    %v9945 = vmax.bf16 %v9445, %v9669
    %v9946 = vmax.bf16 %v9446, %v9677
    %v9947 = vmax.bf16 %v9447, %v9685
    %v9948 = vmax.bf16 %v9448, %v9693
    %v9949 = vmax.bf16 %v9449, %v9701
    %v9950 = vmax.bf16 %v9450, %v9709
    %v9951 = vmax.bf16 %v9451, %v9717
    %v9952 = vmax.bf16 %v9452, %v9725
    %v9953 = vmax.bf16 %v9453, %v9733
    %v9954 = vmax.bf16 %v9454, %v9741
    %v9955 = vmax.bf16 %v9455, %v9749
    %v9956 = vmax.bf16 %v9456, %v9757
    %v9957 = vmax.bf16 %v9457, %v9765
    %v9958 = vmax.bf16 %v9458, %v9773
    %v9959 = vmax.bf16 %v9459, %v9781
    %v9960 = vmax.bf16 %v9460, %v9789
    %v9961 = vmax.bf16 %v9461, %v9797
    %v9962 = vmax.bf16 %v9462, %v9805
    %v9963 = vmax.bf16 %v9463, %v9813
    %v9964 = vmax.bf16 %v9464, %v9821
    %v9965 = vmax.bf16 %v9465, %v9829
    %v9966 = vmax.bf16 %v9466, %v9837
    %v9967 = vmax.bf16 %v9467, %v9845
    %v9968 = vmax.bf16 %v9468, %v9853
    %v9969 = vmax.bf16 %v9469, %v9919
    %v9970 = vmax.bf16 %v9470, %v9920
    %v9971 = vmax.bf16 %v9471, %v9921
    %v9972 = vmax.bf16 %v9472, %v9922
    %v9973 = vmax.bf16 %v9473, %v9923
    %v9974 = vld [vmem:[%s8] sm:$0xff]
    %v9975 = vld [vmem:[%s8 + $0x8] sm:$0xff]
    %v9976 = vld [vmem:[%s8 + $0x10] sm:$0xff]
    %v9977 = vld [vmem:[%s8 + $0x18] sm:$0xff]
    %v9978 = vld [vmem:[%s8 + $0x20] sm:$0xff]
    %v9979 = vld [vmem:[%s8 + $0x28] sm:$0xff]
    %v9980 = vld [vmem:[%s8 + $0x30] sm:$0xff]
    %v9981 = vld [vmem:[%s8 + $0x38] sm:$0xff]
    %v9990 = vunpack.c.l.b16 %v9974
    %v9991 = vunpack.c.h.b16 %v9974
    %v9992 = vunpack.c.l.b16 %v9975
    %v9993 = vunpack.c.h.b16 %v9975
    %v9994 = vunpack.c.l.b16 %v9976
    %v9995 = vunpack.c.h.b16 %v9976
    %v9996 = vunpack.c.l.b16 %v9977
    %v9997 = vunpack.c.h.b16 %v9977
    %v9998 = vunpack.c.l.b16 %v9978
    %v9999 = vunpack.c.h.b16 %v9978
    %v10000 = vunpack.c.l.b16 %v9979
    %v10001 = vunpack.c.h.b16 %v9979
    %v10002 = vunpack.c.l.b16 %v9980
    %v10003 = vunpack.c.h.b16 %v9980
    %v10004 = vunpack.c.l.b16 %v9981
    %v10005 = vunpack.c.h.b16 %v9981
    %v10006 = vpack.c.b16 %v9992, %v9990
    %v10007 = vpack.c.b16 %v9993, %v9991
    %v10008 = vpack.c.b16 %v9996, %v9994
    %v10009 = vpack.c.b16 %v9997, %v9995
    %v10010 = vpack.c.b16 %v10000, %v9998
    %v10011 = vpack.c.b16 %v10001, %v9999
    %v10012 = vpack.c.b16 %v10004, %v10002
    %v10013 = vpack.c.b16 %v10005, %v10003
    %vm10018 = vcmask 195584
    %v10020 = vsel %vm10018, %v10007, 0
    %v10023 = vsel %vm10018, %v10009, 0
    %v10026 = vsel %vm10018, %v10011, 0
    %v10029 = vsel %vm10018, %v10013, 0
    %vm10031 = vcmask 1043456
    %v10033 = vsel %vm10031, %v9969, 0
    %v10036 = vsel %vm10031, %v9970, 0
    %v10039 = vsel %vm10031, %v9971, 0
    %v10042 = vsel %vm10031, %v9972, 0
    %v10045 = vsel %vm10031, %v9973, 0
    %10047 = vmatprep.subr.bf16.mxu0 %v9960
    %10048 = vmatpush1.bf16.msra.mxu0 %v9959
    %10049 = vmatprep.subr.bf16.mxu0 %v9955
    %10050 = vmatpush1.bf16.msra.mxu0 %v9954
    %10051 = vmatprep.subr.bf16.mxu0 %v9950
    %10052 = vmatpush1.bf16.msra.mxu0 %v9949
    %10053 = vmatprep.subr.bf16.mxu0 %v9945
    %10054 = vmatpush1.bf16.msra.mxu0 %v9944
    %10055 = vmatprep.subr.bf16.mxu0 %v9940
    %10056 = vmatpush1.bf16.msra.mxu0 %v9939
    %10057 = vmatprep.subr.bf16.mxu0 %v9935
    %10058 = vmatpush1.bf16.msra.mxu0 %v9934
    %10059 = vmatprep.subr.bf16.mxu0 %v9930
    %10060 = vmatpush1.bf16.msra.mxu0 %v9929
    %10061 = vmatprep.subr.bf16.mxu0 %v9925
    %10062 = vmatpush1.bf16.msra.mxu0 %v9924
    %10063 = vmatprep.subr.bf16.mxu0 0
    %10064 = vmatpush2.bf16.msra.mxu0 0
    %10065 = vmatprep.subr.bf16.mxu0 0
    %10066 = vmatpush2.bf16.msra.mxu0 0
    %10067 = vmatprep.subr.bf16.mxu0 0
    %10068 = vmatpush2.bf16.msra.mxu0 0
    %10069 = vmatprep.subr.bf16.mxu0 0
    %10070 = vmatpush2.bf16.msra.mxu0 0
    %10071 = vmatprep.subr.bf16.mxu0 0
    %10072 = vmatpush2.bf16.msra.mxu0 0
    %10073 = vmatprep.subr.bf16.mxu0 0
    %10074 = vmatpush2.bf16.msra.mxu0 0
    %10075 = vmatprep.subr.bf16.mxu0 %v10036
    %10076 = vmatpush2.bf16.msra.mxu0 %v10033
    %10077 = vmatprep.subr.bf16.mxu0 %v9965
    %10078 = vmatpush2.bf16.msra.mxu0 %v9964
    %10079 = vmatprep.mubr.bf16.mxu0 %v10020
    %10080 = vmatmul.mubr.bf16.gmra.mxu0 %v10006
    %v10081 = vpop.f32.mrf.mxu0
    %v10082 = vadd.f32 0.0, %v10081
    %v10083 = vpop.f32.mrf.mxu0
    %v10084 = vadd.f32 0.0, %v10083
    %v10085 = vpop.f32.mrf.mxu0
    %v10086 = vadd.f32 0.0, %v10085
    %v10087 = vpop.f32.mrf.mxu0
    %v10088 = vadd.f32 0.0, %v10087
    %10089 = vmatprep.mubr.bf16.mxu0 %v10023
    %10090 = vmatmul.mubr.bf16.gmra.mxu0 %v10008
    %v10091 = vpop.f32.mrf.mxu0
    %v10092 = vadd.f32 0.0, %v10091
    %v10093 = vpop.f32.mrf.mxu0
    %v10094 = vadd.f32 0.0, %v10093
    %v10095 = vpop.f32.mrf.mxu0
    %v10096 = vadd.f32 0.0, %v10095
    %v10097 = vpop.f32.mrf.mxu0
    %v10098 = vadd.f32 0.0, %v10097
    %10099 = vmatprep.mubr.bf16.mxu0 %v10026
    %10100 = vmatmul.mubr.bf16.gmra.mxu0 %v10010
    %v10101 = vpop.f32.mrf.mxu0
    %v10102 = vadd.f32 0.0, %v10101
    %v10103 = vpop.f32.mrf.mxu0
    %v10104 = vadd.f32 0.0, %v10103
    %v10105 = vpop.f32.mrf.mxu0
    %v10106 = vadd.f32 0.0, %v10105
    %v10107 = vpop.f32.mrf.mxu0
    %v10108 = vadd.f32 0.0, %v10107
    %10109 = vmatprep.mubr.bf16.mxu0 %v10029
    %10110 = vmatmul.mubr.bf16.gmra.mxu0 %v10012
    %v10111 = vpop.f32.mrf.mxu0
    %v10112 = vadd.f32 0.0, %v10111
    %v10113 = vpop.f32.mrf.mxu0
    %v10114 = vadd.f32 0.0, %v10113
    %v10115 = vpop.f32.mrf.mxu0
    %v10116 = vadd.f32 0.0, %v10115
    %v10117 = vpop.f32.mrf.mxu0
    %v10118 = vadd.f32 0.0, %v10117
    %10119 = vdwg.mxu0
    %10120 = vmatprep.subr.bf16.mxu0 %v9962
    %10121 = vmatpush1.bf16.msra.mxu0 %v9961
    %10122 = vmatprep.subr.bf16.mxu0 %v9957
    %10123 = vmatpush1.bf16.msra.mxu0 %v9956
    %10124 = vmatprep.subr.bf16.mxu0 %v9952
    %10125 = vmatpush1.bf16.msra.mxu0 %v9951
    %10126 = vmatprep.subr.bf16.mxu0 %v9947
    %10127 = vmatpush1.bf16.msra.mxu0 %v9946
    %10128 = vmatprep.subr.bf16.mxu0 %v9942
    %10129 = vmatpush1.bf16.msra.mxu0 %v9941
    %10130 = vmatprep.subr.bf16.mxu0 %v9937
    %10131 = vmatpush1.bf16.msra.mxu0 %v9936
    %10132 = vmatprep.subr.bf16.mxu0 %v9932
    %10133 = vmatpush1.bf16.msra.mxu0 %v9931
    %10134 = vmatprep.subr.bf16.mxu0 %v9927
    %10135 = vmatpush1.bf16.msra.mxu0 %v9926
    %10136 = vmatprep.subr.bf16.mxu0 0
    %10137 = vmatpush2.bf16.msra.mxu0 0
    %10138 = vmatprep.subr.bf16.mxu0 0
    %10139 = vmatpush2.bf16.msra.mxu0 0
    %10140 = vmatprep.subr.bf16.mxu0 0
    %10141 = vmatpush2.bf16.msra.mxu0 0
    %10142 = vmatprep.subr.bf16.mxu0 0
    %10143 = vmatpush2.bf16.msra.mxu0 0
    %10144 = vmatprep.subr.bf16.mxu0 0
    %10145 = vmatpush2.bf16.msra.mxu0 0
    %10146 = vmatprep.subr.bf16.mxu0 0
    %10147 = vmatpush2.bf16.msra.mxu0 0
    %10148 = vmatprep.subr.bf16.mxu0 %v10042
    %10149 = vmatpush2.bf16.msra.mxu0 %v10039
    %10150 = vmatprep.subr.bf16.mxu0 %v9967
    %10151 = vmatpush2.bf16.msra.mxu0 %v9966
    %10152 = vmatprep.mubr.bf16.mxu0 %v10020
    %10153 = vmatmul.mubr.bf16.gmra.mxu0 %v10006
    %v10154 = vpop.f32.mrf.mxu0
    %v10155 = vadd.f32 0.0, %v10154
    %v10156 = vpop.f32.mrf.mxu0
    %v10157 = vadd.f32 0.0, %v10156
    %v10158 = vpop.f32.mrf.mxu0
    %v10159 = vadd.f32 0.0, %v10158
    %v10160 = vpop.f32.mrf.mxu0
    %v10161 = vadd.f32 0.0, %v10160
    %10162 = vmatprep.mubr.bf16.mxu0 %v10023
    %10163 = vmatmul.mubr.bf16.gmra.mxu0 %v10008
    %v10164 = vpop.f32.mrf.mxu0
    %v10165 = vadd.f32 0.0, %v10164
    %v10166 = vpop.f32.mrf.mxu0
    %v10167 = vadd.f32 0.0, %v10166
    %v10168 = vpop.f32.mrf.mxu0
    %v10169 = vadd.f32 0.0, %v10168
    %v10170 = vpop.f32.mrf.mxu0
    %v10171 = vadd.f32 0.0, %v10170
    %10172 = vmatprep.mubr.bf16.mxu0 %v10026
    %10173 = vmatmul.mubr.bf16.gmra.mxu0 %v10010
    %v10174 = vpop.f32.mrf.mxu0
    %v10175 = vadd.f32 0.0, %v10174
    %v10176 = vpop.f32.mrf.mxu0
    %v10177 = vadd.f32 0.0, %v10176
    %v10178 = vpop.f32.mrf.mxu0
    %v10179 = vadd.f32 0.0, %v10178
    %v10180 = vpop.f32.mrf.mxu0
    %v10181 = vadd.f32 0.0, %v10180
    %10182 = vmatprep.mubr.bf16.mxu0 %v10029
    %10183 = vmatmul.mubr.bf16.gmra.mxu0 %v10012
    %v10184 = vpop.f32.mrf.mxu0
    %v10185 = vadd.f32 0.0, %v10184
    %v10186 = vpop.f32.mrf.mxu0
    %v10187 = vadd.f32 0.0, %v10186
    %v10188 = vpop.f32.mrf.mxu0
    %v10189 = vadd.f32 0.0, %v10188
    %v10190 = vpop.f32.mrf.mxu0
    %v10191 = vadd.f32 0.0, %v10190
    %10192 = vdwg.mxu0
    %10193 = vmatprep.subr.bf16.mxu0 0
    %10194 = vmatpush1.bf16.msra.mxu0 %v9963
    %10195 = vmatprep.subr.bf16.mxu0 0
    %10196 = vmatpush1.bf16.msra.mxu0 %v9958
    %10197 = vmatprep.subr.bf16.mxu0 0
    %10198 = vmatpush1.bf16.msra.mxu0 %v9953
    %10199 = vmatprep.subr.bf16.mxu0 0
    %10200 = vmatpush1.bf16.msra.mxu0 %v9948
    %10201 = vmatprep.subr.bf16.mxu0 0
    %10202 = vmatpush1.bf16.msra.mxu0 %v9943
    %10203 = vmatprep.subr.bf16.mxu0 0
    %10204 = vmatpush1.bf16.msra.mxu0 %v9938
    %10205 = vmatprep.subr.bf16.mxu0 0
    %10206 = vmatpush1.bf16.msra.mxu0 %v9933
    %10207 = vmatprep.subr.bf16.mxu0 0
    %10208 = vmatpush1.bf16.msra.mxu0 %v9928
    %10209 = vmatprep.subr.bf16.mxu0 0
    %10210 = vmatpush2.bf16.msra.mxu0 0
    %10211 = vmatprep.subr.bf16.mxu0 0
    %10212 = vmatpush2.bf16.msra.mxu0 0
    %10213 = vmatprep.subr.bf16.mxu0 0
    %10214 = vmatpush2.bf16.msra.mxu0 0
    %10215 = vmatprep.subr.bf16.mxu0 0
    %10216 = vmatpush2.bf16.msra.mxu0 0
    %10217 = vmatprep.subr.bf16.mxu0 0
    %10218 = vmatpush2.bf16.msra.mxu0 0
    %10219 = vmatprep.subr.bf16.mxu0 0
    %10220 = vmatpush2.bf16.msra.mxu0 0
    %10221 = vmatprep.subr.bf16.mxu0 0
    %10222 = vmatpush2.bf16.msra.mxu0 %v10045
    %10223 = vmatprep.subr.bf16.mxu0 0
    %10224 = vmatpush2.bf16.msra.mxu0 %v9968
    %10225 = vmatprep.mubr.bf16.mxu0 %v10020
    %10226 = vmatmul.mubr.bf16.gmra.mxu0 %v10006
    %v10227 = vpop.f32.mrf.mxu0
    %v10228 = vadd.f32 0.0, %v10227
    %v10229 = vpop.f32.mrf.mxu0
    %v10230 = vpop.f32.mrf.mxu0
    %v10231 = vadd.f32 0.0, %v10230
    %v10232 = vpop.f32.mrf.mxu0
    %10233 = vmatprep.mubr.bf16.mxu0 %v10023
    %10234 = vmatmul.mubr.bf16.gmra.mxu0 %v10008
    %v10235 = vpop.f32.mrf.mxu0
    %v10236 = vadd.f32 0.0, %v10235
    %v10237 = vpop.f32.mrf.mxu0
    %v10238 = vpop.f32.mrf.mxu0
    %v10239 = vadd.f32 0.0, %v10238
    %v10240 = vpop.f32.mrf.mxu0
    %10241 = vmatprep.mubr.bf16.mxu0 %v10026
    %10242 = vmatmul.mubr.bf16.gmra.mxu0 %v10010
    %v10243 = vpop.f32.mrf.mxu0
    %v10244 = vadd.f32 0.0, %v10243
    %v10245 = vpop.f32.mrf.mxu0
    %v10246 = vpop.f32.mrf.mxu0
    %v10247 = vadd.f32 0.0, %v10246
    %v10248 = vpop.f32.mrf.mxu0
    %10249 = vmatprep.mubr.bf16.mxu0 %v10029
    %10250 = vmatmul.mubr.bf16.gmra.mxu0 %v10012
    %v10251 = vpop.f32.mrf.mxu0
    %v10252 = vadd.f32 0.0, %v10251
    %v10253 = vpop.f32.mrf.mxu0
    %v10254 = vpop.f32.mrf.mxu0
    %v10255 = vadd.f32 0.0, %v10254
    %v10256 = vpop.f32.mrf.mxu0
    %10257 = vdwg.mxu0
    %v10258 = vpack.c.bf16 %v10086, %v10082
    %v10259 = vpack.c.bf16 %v10088, %v10084
    %v10260 = vpack.c.bf16 %v10159, %v10155
    %v10261 = vpack.c.bf16 %v10161, %v10157
    %v10262 = vpack.c.bf16 %v10231, %v10228
    %v10263 = vpack.c.bf16 %v10096, %v10092
    %v10264 = vpack.c.bf16 %v10098, %v10094
    %v10265 = vpack.c.bf16 %v10169, %v10165
    %v10266 = vpack.c.bf16 %v10171, %v10167
    %v10267 = vpack.c.bf16 %v10239, %v10236
    %v10268 = vpack.c.bf16 %v10106, %v10102
    %v10269 = vpack.c.bf16 %v10108, %v10104
    %v10270 = vpack.c.bf16 %v10179, %v10175
    %v10271 = vpack.c.bf16 %v10181, %v10177
    %v10272 = vpack.c.bf16 %v10247, %v10244
    %v10273 = vpack.c.bf16 %v10116, %v10112
    %v10274 = vpack.c.bf16 %v10118, %v10114
    %v10275 = vpack.c.bf16 %v10189, %v10185
    %v10276 = vpack.c.bf16 %v10191, %v10187
    %v10277 = vpack.c.bf16 %v10255, %v10252
    %v10278 = vld [vmem:[#allocation2] sm:$0xff]
    %v10279 = vld [vmem:[#allocation2 + $0x8] sm:$0xff]
    %v10280 = vld [vmem:[#allocation2 + $0x10] sm:$0xff]
    %v10281 = vld [vmem:[#allocation2 + $0x18] sm:$0xff]
    %v10282 = vld [vmem:[#allocation2 + $0x20] sm:$0xff]
    %v10283 = vld [vmem:[#allocation2 + $0x28] sm:$0xff]
    %v10284 = vld [vmem:[#allocation2 + $0x30] sm:$0xff]
    %v10285 = vld [vmem:[#allocation2 + $0x38] sm:$0xff]
    %v10286 = vld [vmem:[#allocation2 + $0x40] sm:$0xff]
    %v10287 = vld [vmem:[#allocation2 + $0x48] sm:$0xff]
    %v10288 = vld [vmem:[#allocation2 + $0x50] sm:$0xff]
    %v10289 = vld [vmem:[#allocation2 + $0x58] sm:$0xff]
    %v10290 = vld [vmem:[#allocation2 + $0x60] sm:$0xff]
    %v10291 = vld [vmem:[#allocation2 + $0x68] sm:$0xff]
    %v10292 = vld [vmem:[#allocation2 + $0x70] sm:$0xff]
    %v10293 = vld [vmem:[#allocation2 + $0x78] sm:$0xff]
    %v10294 = vld [vmem:[#allocation2 + $0x80] sm:$0xff]
    %v10295 = vld [vmem:[#allocation2 + $0x88] sm:$0xff]
    %v10296 = vld [vmem:[#allocation2 + $0x90] sm:$0xff]
    %v10297 = vld [vmem:[#allocation2 + $0x98] sm:$0xff]
    %v10298 = vld [vmem:[#allocation2 + $0xa0] sm:$0xff]
    %v10299 = vld [vmem:[#allocation2 + $0xa8] sm:$0xff]
    %v10300 = vld [vmem:[#allocation2 + $0xb0] sm:$0xff]
    %v10301 = vld [vmem:[#allocation2 + $0xb8] sm:$0xff]
    %v10302 = vld [vmem:[#allocation2 + $0xc0] sm:$0xff]
    %v10303 = vld [vmem:[#allocation2 + $0xc8] sm:$0xff]
    %v10304 = vld [vmem:[#allocation2 + $0xd0] sm:$0xff]
    %v10305 = vld [vmem:[#allocation2 + $0xd8] sm:$0xff]
    %v10306 = vld [vmem:[#allocation2 + $0xe0] sm:$0xff]
    %v10307 = vld [vmem:[#allocation2 + $0xe8] sm:$0xff]
    %v10308 = vld [vmem:[#allocation2 + $0xf0] sm:$0xff]
    %v10309 = vld [vmem:[#allocation2 + $0xf8] sm:$0xff]
    %v10310 = vld [vmem:[#allocation2 + $0x100] sm:$0xff]
    %v10311 = vld [vmem:[#allocation2 + $0x108] sm:$0xff]
    %v10312 = vld [vmem:[#allocation2 + $0x110] sm:$0xff]
    %v10313 = vld [vmem:[#allocation2 + $0x118] sm:$0xff]
    %v10314 = vld [vmem:[#allocation2 + $0x120] sm:$0xff]
    %v10315 = vld [vmem:[#allocation2 + $0x128] sm:$0xff]
    %v10316 = vld [vmem:[#allocation2 + $0x130] sm:$0xff]
    %v10317 = vld [vmem:[#allocation2 + $0x138] sm:$0xff]
    %v10318 = vld [vmem:[#allocation2 + $0x140] sm:$0xff]
    %v10319 = vld [vmem:[#allocation2 + $0x148] sm:$0xff]
    %v10320 = vld [vmem:[#allocation2 + $0x150] sm:$0xff]
    %v10321 = vld [vmem:[#allocation2 + $0x158] sm:$0xff]
    %v10322 = vld [vmem:[#allocation2 + $0x160] sm:$0xff]
    %v10323 = vld [vmem:[#allocation2 + $0x168] sm:$0xff]
    %v10324 = vld [vmem:[#allocation2 + $0x170] sm:$0xff]
    %v10325 = vld [vmem:[#allocation2 + $0x178] sm:$0xff]
    %v10326 = vld [vmem:[#allocation2 + $0x180] sm:$0xff]
    %v10327 = vld [vmem:[#allocation2 + $0x188] sm:$0xff]
    %v10328 = vld [vmem:[#allocation2 + $0x190] sm:$0xff]
    %v10329 = vld [vmem:[#allocation2 + $0x198] sm:$0xff]
    %v10330 = vld [vmem:[#allocation2 + $0x1a0] sm:$0xff]
    %v10331 = vld [vmem:[#allocation2 + $0x1a8] sm:$0xff]
    %v10332 = vld [vmem:[#allocation2 + $0x1b0] sm:$0xff]
    %v10333 = vld [vmem:[#allocation2 + $0x1b8] sm:$0xff]
    %v10334 = vld [vmem:[#allocation2 + $0x1c0] sm:$0xff]
    %v10335 = vld [vmem:[#allocation2 + $0x1c8] sm:$0xff]
    %v10336 = vld [vmem:[#allocation2 + $0x1d0] sm:$0xff]
    %v10337 = vld [vmem:[#allocation2 + $0x1d8] sm:$0xff]
    %v10338 = vld [vmem:[#allocation2 + $0x1e0] sm:$0xff]
    %v10339 = vld [vmem:[#allocation2 + $0x1e8] sm:$0xff]
    %v10340 = vld [vmem:[#allocation2 + $0x1f0] sm:$0xff]
    %v10341 = vld [vmem:[#allocation2 + $0x1f8] sm:$0xff]
    %v10342 = vld [vmem:[#allocation2 + $0x200] sm:$0xff]
    %v10343 = vld [vmem:[#allocation2 + $0x208] sm:$0xff]
    %v10344 = vld [vmem:[#allocation2 + $0x210] sm:$0xff]
    %v10345 = vld [vmem:[#allocation2 + $0x218] sm:$0xff]
    %v10414 = vunpack.c.l.b16 %v10278
    %v10415 = vunpack.c.h.b16 %v10278
    %v10416 = vunpack.c.l.b16 %v10279
    %v10417 = vunpack.c.h.b16 %v10279
    %v10418 = vunpack.c.l.b16 %v10280
    %v10419 = vunpack.c.h.b16 %v10280
    %v10420 = vunpack.c.l.b16 %v10281
    %v10421 = vunpack.c.h.b16 %v10281
    %v10422 = vunpack.c.l.b16 %v10282
    %v10423 = vunpack.c.h.b16 %v10282
    %v10424 = vunpack.c.l.b16 %v10283
    %v10425 = vunpack.c.h.b16 %v10283
    %v10426 = vunpack.c.l.b16 %v10284
    %v10427 = vunpack.c.h.b16 %v10284
    %v10428 = vunpack.c.l.b16 %v10285
    %v10429 = vunpack.c.h.b16 %v10285
    %v10430 = vunpack.c.l.b16 %v10286
    %v10431 = vunpack.c.h.b16 %v10286
    %v10432 = vunpack.c.l.b16 %v10287
    %v10433 = vunpack.c.h.b16 %v10287
    %v10434 = vunpack.c.l.b16 %v10288
    %v10435 = vunpack.c.h.b16 %v10288
    %v10436 = vunpack.c.l.b16 %v10289
    %v10437 = vunpack.c.h.b16 %v10289
    %v10438 = vunpack.c.l.b16 %v10290
    %v10439 = vunpack.c.h.b16 %v10290
    %v10440 = vunpack.c.l.b16 %v10291
    %v10441 = vunpack.c.h.b16 %v10291
    %v10442 = vunpack.c.l.b16 %v10292
    %v10443 = vunpack.c.h.b16 %v10292
    %v10444 = vunpack.c.l.b16 %v10293
    %v10445 = vunpack.c.h.b16 %v10293
    %v10446 = vunpack.c.l.b16 %v10294
    %v10447 = vunpack.c.h.b16 %v10294
    %v10448 = vunpack.c.l.b16 %v10295
    %v10449 = vunpack.c.h.b16 %v10295
    %v10450 = vunpack.c.l.b16 %v10296
    %v10451 = vunpack.c.h.b16 %v10296
    %v10452 = vunpack.c.l.b16 %v10297
    %v10453 = vunpack.c.h.b16 %v10297
    %v10454 = vunpack.c.l.b16 %v10298
    %v10455 = vunpack.c.h.b16 %v10298
    %v10456 = vunpack.c.l.b16 %v10299
    %v10457 = vunpack.c.h.b16 %v10299
    %v10458 = vunpack.c.l.b16 %v10300
    %v10459 = vunpack.c.h.b16 %v10300
    %v10460 = vunpack.c.l.b16 %v10301
    %v10461 = vunpack.c.h.b16 %v10301
    %v10462 = vunpack.c.l.b16 %v10302
    %v10463 = vunpack.c.h.b16 %v10302
    %v10464 = vunpack.c.l.b16 %v10303
    %v10465 = vunpack.c.h.b16 %v10303
    %v10466 = vunpack.c.l.b16 %v10304
    %v10467 = vunpack.c.h.b16 %v10304
    %v10468 = vunpack.c.l.b16 %v10305
    %v10469 = vunpack.c.h.b16 %v10305
    %v10470 = vunpack.c.l.b16 %v10306
    %v10471 = vunpack.c.h.b16 %v10306
    %v10472 = vunpack.c.l.b16 %v10307
    %v10473 = vunpack.c.h.b16 %v10307
    %v10474 = vunpack.c.l.b16 %v10308
    %v10475 = vunpack.c.h.b16 %v10308
    %v10476 = vunpack.c.l.b16 %v10309
    %v10477 = vunpack.c.h.b16 %v10309
    %v10478 = vunpack.c.l.b16 %v10310
    %v10479 = vunpack.c.h.b16 %v10310
    %v10480 = vunpack.c.l.b16 %v10311
    %v10481 = vunpack.c.h.b16 %v10311
    %v10482 = vunpack.c.l.b16 %v10312
    %v10483 = vunpack.c.h.b16 %v10312
    %v10484 = vunpack.c.l.b16 %v10313
    %v10485 = vunpack.c.h.b16 %v10313
    %v10486 = vunpack.c.l.b16 %v10314
    %v10487 = vunpack.c.h.b16 %v10314
    %v10488 = vunpack.c.l.b16 %v10315
    %v10489 = vunpack.c.h.b16 %v10315
    %v10490 = vunpack.c.l.b16 %v10316
    %v10491 = vunpack.c.h.b16 %v10316
    %v10492 = vunpack.c.l.b16 %v10317
    %v10493 = vunpack.c.h.b16 %v10317
    %v10494 = vunpack.c.l.b16 %v10318
    %v10495 = vunpack.c.h.b16 %v10318
    %v10496 = vunpack.c.l.b16 %v10319
    %v10497 = vunpack.c.h.b16 %v10319
    %v10498 = vunpack.c.l.b16 %v10320
    %v10499 = vunpack.c.h.b16 %v10320
    %v10500 = vunpack.c.l.b16 %v10321
    %v10501 = vunpack.c.h.b16 %v10321
    %v10502 = vunpack.c.l.b16 %v10322
    %v10503 = vunpack.c.h.b16 %v10322
    %v10504 = vunpack.c.l.b16 %v10323
    %v10505 = vunpack.c.h.b16 %v10323
    %v10506 = vunpack.c.l.b16 %v10324
    %v10507 = vunpack.c.h.b16 %v10324
    %v10508 = vunpack.c.l.b16 %v10325
    %v10509 = vunpack.c.h.b16 %v10325
    %v10510 = vunpack.c.l.b16 %v10326
    %v10511 = vunpack.c.h.b16 %v10326
    %v10512 = vunpack.c.l.b16 %v10327
    %v10513 = vunpack.c.h.b16 %v10327
    %v10514 = vunpack.c.l.b16 %v10328
    %v10515 = vunpack.c.h.b16 %v10328
    %v10516 = vunpack.c.l.b16 %v10329
    %v10517 = vunpack.c.h.b16 %v10329
    %v10518 = vunpack.c.l.b16 %v10330
    %v10519 = vunpack.c.h.b16 %v10330
    %v10520 = vunpack.c.l.b16 %v10331
    %v10521 = vunpack.c.h.b16 %v10331
    %v10522 = vunpack.c.l.b16 %v10332
    %v10523 = vunpack.c.h.b16 %v10332
    %v10524 = vunpack.c.l.b16 %v10333
    %v10525 = vunpack.c.h.b16 %v10333
    %v10526 = vunpack.c.l.b16 %v10334
    %v10527 = vunpack.c.h.b16 %v10334
    %v10528 = vunpack.c.l.b16 %v10335
    %v10529 = vunpack.c.h.b16 %v10335
    %v10530 = vunpack.c.l.b16 %v10336
    %v10531 = vunpack.c.h.b16 %v10336
    %v10532 = vunpack.c.l.b16 %v10337
    %v10533 = vunpack.c.h.b16 %v10337
    %v10534 = vunpack.c.l.b16 %v10338
    %v10535 = vunpack.c.h.b16 %v10338
    %v10536 = vunpack.c.l.b16 %v10339
    %v10537 = vunpack.c.h.b16 %v10339
    %v10538 = vunpack.c.l.b16 %v10340
    %v10539 = vunpack.c.h.b16 %v10340
    %v10540 = vunpack.c.l.b16 %v10341
    %v10541 = vunpack.c.h.b16 %v10341
    %v10542 = vunpack.c.l.b16 %v10342
    %v10543 = vunpack.c.h.b16 %v10342
    %v10544 = vunpack.c.l.b16 %v10343
    %v10545 = vunpack.c.h.b16 %v10343
    %v10546 = vunpack.c.l.b16 %v10344
    %v10547 = vunpack.c.h.b16 %v10344
    %v10548 = vunpack.c.l.b16 %v10345
    %v10549 = vunpack.c.h.b16 %v10345
    %v10550 = vpack.c.b16 %v10416, %v10414
    %v10551 = vpack.c.b16 %v10417, %v10415
    %v10552 = vpack.c.b16 %v10420, %v10418
    %v10553 = vpack.c.b16 %v10421, %v10419
    %v10554 = vpack.c.b16 %v10424, %v10422
    %v10555 = vpack.c.b16 %v10425, %v10423
    %v10556 = vpack.c.b16 %v10428, %v10426
    %v10557 = vpack.c.b16 %v10429, %v10427
    %v10558 = vpack.c.b16 %v10432, %v10430
    %v10559 = vpack.c.b16 %v10433, %v10431
    %v10560 = vpack.c.b16 %v10436, %v10434
    %v10561 = vpack.c.b16 %v10437, %v10435
    %v10562 = vpack.c.b16 %v10440, %v10438
    %v10563 = vpack.c.b16 %v10441, %v10439
    %v10564 = vpack.c.b16 %v10444, %v10442
    %v10565 = vpack.c.b16 %v10445, %v10443
    %v10566 = vpack.c.b16 %v10448, %v10446
    %v10567 = vpack.c.b16 %v10449, %v10447
    %v10568 = vpack.c.b16 %v10452, %v10450
    %v10569 = vpack.c.b16 %v10453, %v10451
    %v10570 = vpack.c.b16 %v10456, %v10454
    %v10571 = vpack.c.b16 %v10457, %v10455
    %v10572 = vpack.c.b16 %v10460, %v10458
    %v10573 = vpack.c.b16 %v10461, %v10459
    %v10574 = vpack.c.b16 %v10464, %v10462
    %v10575 = vpack.c.b16 %v10465, %v10463
    %v10576 = vpack.c.b16 %v10468, %v10466
    %v10577 = vpack.c.b16 %v10469, %v10467
    %v10578 = vpack.c.b16 %v10472, %v10470
    %v10579 = vpack.c.b16 %v10473, %v10471
    %v10580 = vpack.c.b16 %v10476, %v10474
    %v10581 = vpack.c.b16 %v10477, %v10475
    %v10582 = vpack.c.b16 %v10480, %v10478
    %v10583 = vpack.c.b16 %v10481, %v10479
    %v10584 = vpack.c.b16 %v10484, %v10482
    %v10585 = vpack.c.b16 %v10485, %v10483
    %v10586 = vpack.c.b16 %v10488, %v10486
    %v10587 = vpack.c.b16 %v10489, %v10487
    %v10588 = vpack.c.b16 %v10492, %v10490
    %v10589 = vpack.c.b16 %v10493, %v10491
    %v10590 = vpack.c.b16 %v10496, %v10494
    %v10591 = vpack.c.b16 %v10497, %v10495
    %v10592 = vpack.c.b16 %v10500, %v10498
    %v10593 = vpack.c.b16 %v10501, %v10499
    %v10594 = vpack.c.b16 %v10504, %v10502
    %v10595 = vpack.c.b16 %v10505, %v10503
    %v10596 = vpack.c.b16 %v10508, %v10506
    %v10597 = vpack.c.b16 %v10509, %v10507
    %v10598 = vpack.c.b16 %v10512, %v10510
    %v10599 = vpack.c.b16 %v10513, %v10511
    %v10600 = vpack.c.b16 %v10516, %v10514
    %v10601 = vpack.c.b16 %v10517, %v10515
    %v10602 = vpack.c.b16 %v10520, %v10518
    %v10603 = vpack.c.b16 %v10521, %v10519
    %v10604 = vpack.c.b16 %v10524, %v10522
    %v10605 = vpack.c.b16 %v10525, %v10523
    %v10606 = vpack.c.b16 %v10528, %v10526
    %v10607 = vpack.c.b16 %v10529, %v10527
    %v10608 = vpack.c.b16 %v10532, %v10530
    %v10609 = vpack.c.b16 %v10533, %v10531
    %v10610 = vpack.c.b16 %v10536, %v10534
    %v10611 = vpack.c.b16 %v10537, %v10535
    %v10612 = vpack.c.b16 %v10540, %v10538
    %v10613 = vpack.c.b16 %v10541, %v10539
    %v10614 = vpack.c.b16 %v10544, %v10542
    %v10615 = vpack.c.b16 %v10545, %v10543
    %v10616 = vpack.c.b16 %v10548, %v10546
    %v10617 = vpack.c.b16 %v10549, %v10547
    %v10687 = vsel %vm393, %v10262, 0
    %v10690 = vsel %vm393, %v10267, 0
    %v10693 = vsel %vm393, %v10272, 0
    %v10696 = vsel %vm393, %v10277, 0
    %10698 = vmatprep.subr.bf16.mxu0 %v10565
    %10699 = vmatpush1.bf16.msra.mxu0 %v10564
    %10700 = vmatprep.subr.bf16.mxu0 %v10563
    %10701 = vmatpush1.bf16.msra.mxu0 %v10562
    %10702 = vmatprep.subr.bf16.mxu0 %v10561
    %10703 = vmatpush1.bf16.msra.mxu0 %v10560
    %10704 = vmatprep.subr.bf16.mxu0 %v10559
    %10705 = vmatpush1.bf16.msra.mxu0 %v10558
    %10706 = vmatprep.subr.bf16.mxu0 %v10557
    %10707 = vmatpush1.bf16.msra.mxu0 %v10556
    %10708 = vmatprep.subr.bf16.mxu0 %v10555
    %10709 = vmatpush1.bf16.msra.mxu0 %v10554
    %10710 = vmatprep.subr.bf16.mxu0 %v10553
    %10711 = vmatpush1.bf16.msra.mxu0 %v10552
    %10712 = vmatprep.subr.bf16.mxu0 %v10551
    %10713 = vmatpush1.bf16.msra.mxu0 %v10550
    %10714 = vmatprep.subr.bf16.mxu0 %v10581
    %10715 = vmatpush2.bf16.msra.mxu0 %v10580
    %10716 = vmatprep.subr.bf16.mxu0 %v10579
    %10717 = vmatpush2.bf16.msra.mxu0 %v10578
    %10718 = vmatprep.subr.bf16.mxu0 %v10577
    %10719 = vmatpush2.bf16.msra.mxu0 %v10576
    %10720 = vmatprep.subr.bf16.mxu0 %v10575
    %10721 = vmatpush2.bf16.msra.mxu0 %v10574
    %10722 = vmatprep.subr.bf16.mxu0 %v10573
    %10723 = vmatpush2.bf16.msra.mxu0 %v10572
    %10724 = vmatprep.subr.bf16.mxu0 %v10571
    %10725 = vmatpush2.bf16.msra.mxu0 %v10570
    %10726 = vmatprep.subr.bf16.mxu0 %v10569
    %10727 = vmatpush2.bf16.msra.mxu0 %v10568
    %10728 = vmatprep.subr.bf16.mxu0 %v10567
    %10729 = vmatpush2.bf16.msra.mxu0 %v10566
    %10730 = vmatprep.mubr.bf16.mxu0 %v10259
    %10731 = vmatmul.mubr.bf16.gmra.mxu0 %v10258
    %v10732 = vpop.f32.mrf.mxu0
    %v10733 = vadd.f32 0.0, %v10732
    %v10734 = vpop.f32.mrf.mxu0
    %v10735 = vadd.f32 0.0, %v10734
    %v10736 = vpop.f32.mrf.mxu0
    %v10737 = vadd.f32 0.0, %v10736
    %v10738 = vpop.f32.mrf.mxu0
    %v10739 = vadd.f32 0.0, %v10738
    %10740 = vmatprep.mubr.bf16.mxu0 %v10264
    %10741 = vmatmul.mubr.bf16.gmra.mxu0 %v10263
    %v10742 = vpop.f32.mrf.mxu0
    %v10743 = vadd.f32 0.0, %v10742
    %v10744 = vpop.f32.mrf.mxu0
    %v10745 = vadd.f32 0.0, %v10744
    %v10746 = vpop.f32.mrf.mxu0
    %v10747 = vadd.f32 0.0, %v10746
    %v10748 = vpop.f32.mrf.mxu0
    %v10749 = vadd.f32 0.0, %v10748
    %10750 = vmatprep.mubr.bf16.mxu0 %v10269
    %10751 = vmatmul.mubr.bf16.gmra.mxu0 %v10268
    %v10752 = vpop.f32.mrf.mxu0
    %v10753 = vadd.f32 0.0, %v10752
    %v10754 = vpop.f32.mrf.mxu0
    %v10755 = vadd.f32 0.0, %v10754
    %v10756 = vpop.f32.mrf.mxu0
    %v10757 = vadd.f32 0.0, %v10756
    %v10758 = vpop.f32.mrf.mxu0
    %v10759 = vadd.f32 0.0, %v10758
    %10760 = vmatprep.mubr.bf16.mxu0 %v10274
    %10761 = vmatmul.mubr.bf16.gmra.mxu0 %v10273
    %v10762 = vpop.f32.mrf.mxu0
    %v10763 = vadd.f32 0.0, %v10762
    %v10764 = vpop.f32.mrf.mxu0
    %v10765 = vadd.f32 0.0, %v10764
    %v10766 = vpop.f32.mrf.mxu0
    %v10767 = vadd.f32 0.0, %v10766
    %v10768 = vpop.f32.mrf.mxu0
    %v10769 = vadd.f32 0.0, %v10768
    %10770 = vdwg.mxu0
    %10771 = vmatprep.subr.bf16.mxu0 %v10597
    %10772 = vmatpush1.bf16.msra.mxu0 %v10596
    %10773 = vmatprep.subr.bf16.mxu0 %v10595
    %10774 = vmatpush1.bf16.msra.mxu0 %v10594
    %10775 = vmatprep.subr.bf16.mxu0 %v10593
    %10776 = vmatpush1.bf16.msra.mxu0 %v10592
    %10777 = vmatprep.subr.bf16.mxu0 %v10591
    %10778 = vmatpush1.bf16.msra.mxu0 %v10590
    %10779 = vmatprep.subr.bf16.mxu0 %v10589
    %10780 = vmatpush1.bf16.msra.mxu0 %v10588
    %10781 = vmatprep.subr.bf16.mxu0 %v10587
    %10782 = vmatpush1.bf16.msra.mxu0 %v10586
    %10783 = vmatprep.subr.bf16.mxu0 %v10585
    %10784 = vmatpush1.bf16.msra.mxu0 %v10584
    %10785 = vmatprep.subr.bf16.mxu0 %v10583
    %10786 = vmatpush1.bf16.msra.mxu0 %v10582
    %10787 = vmatprep.subr.bf16.mxu0 %v10613
    %10788 = vmatpush2.bf16.msra.mxu0 %v10612
    %10789 = vmatprep.subr.bf16.mxu0 %v10611
    %10790 = vmatpush2.bf16.msra.mxu0 %v10610
    %10791 = vmatprep.subr.bf16.mxu0 %v10609
    %10792 = vmatpush2.bf16.msra.mxu0 %v10608
    %10793 = vmatprep.subr.bf16.mxu0 %v10607
    %10794 = vmatpush2.bf16.msra.mxu0 %v10606
    %10795 = vmatprep.subr.bf16.mxu0 %v10605
    %10796 = vmatpush2.bf16.msra.mxu0 %v10604
    %10797 = vmatprep.subr.bf16.mxu0 %v10603
    %10798 = vmatpush2.bf16.msra.mxu0 %v10602
    %10799 = vmatprep.subr.bf16.mxu0 %v10601
    %10800 = vmatpush2.bf16.msra.mxu0 %v10600
    %10801 = vmatprep.subr.bf16.mxu0 %v10599
    %10802 = vmatpush2.bf16.msra.mxu0 %v10598
    %10803 = vmatprep.mubr.bf16.mxu0 %v10261
    %10804 = vmatmul.mubr.bf16.gmra.mxu0 %v10260
    %v10805 = vpop.f32.mrf.mxu0
    %v10806 = vadd.f32 %v10733, %v10805
    %v10807 = vpop.f32.mrf.mxu0
    %v10808 = vadd.f32 %v10735, %v10807
    %v10809 = vpop.f32.mrf.mxu0
    %v10810 = vadd.f32 %v10737, %v10809
    %v10811 = vpop.f32.mrf.mxu0
    %v10812 = vadd.f32 %v10739, %v10811
    %10813 = vmatprep.mubr.bf16.mxu0 %v10266
    %10814 = vmatmul.mubr.bf16.gmra.mxu0 %v10265
    %v10815 = vpop.f32.mrf.mxu0
    %v10816 = vadd.f32 %v10743, %v10815
    %v10817 = vpop.f32.mrf.mxu0
    %v10818 = vadd.f32 %v10745, %v10817
    %v10819 = vpop.f32.mrf.mxu0
    %v10820 = vadd.f32 %v10747, %v10819
    %v10821 = vpop.f32.mrf.mxu0
    %v10822 = vadd.f32 %v10749, %v10821
    %10823 = vmatprep.mubr.bf16.mxu0 %v10271
    %10824 = vmatmul.mubr.bf16.gmra.mxu0 %v10270
    %v10825 = vpop.f32.mrf.mxu0
    %v10826 = vadd.f32 %v10753, %v10825
    %v10827 = vpop.f32.mrf.mxu0
    %v10828 = vadd.f32 %v10755, %v10827
    %v10829 = vpop.f32.mrf.mxu0
    %v10830 = vadd.f32 %v10757, %v10829
    %v10831 = vpop.f32.mrf.mxu0
    %v10832 = vadd.f32 %v10759, %v10831
    %10833 = vmatprep.mubr.bf16.mxu0 %v10276
    %10834 = vmatmul.mubr.bf16.gmra.mxu0 %v10275
    %v10835 = vpop.f32.mrf.mxu0
    %v10836 = vadd.f32 %v10763, %v10835
    %v10837 = vpop.f32.mrf.mxu0
    %v10838 = vadd.f32 %v10765, %v10837
    %v10839 = vpop.f32.mrf.mxu0
    %v10840 = vadd.f32 %v10767, %v10839
    %v10841 = vpop.f32.mrf.mxu0
    %v10842 = vadd.f32 %v10769, %v10841
    %10843 = vdwg.mxu0
    %10844 = vmatprep.subr.bf16.mxu0 0
    %10845 = vmatpush1.bf16.msra.mxu0 0
    %10846 = vmatprep.subr.bf16.mxu0 0
    %10847 = vmatpush1.bf16.msra.mxu0 0
    %10848 = vmatprep.subr.bf16.mxu0 0
    %10849 = vmatpush1.bf16.msra.mxu0 0
    %10850 = vmatprep.subr.bf16.mxu0 0
    %10851 = vmatpush1.bf16.msra.mxu0 0
    %10852 = vmatprep.subr.bf16.mxu0 0
    %10853 = vmatpush1.bf16.msra.mxu0 0
    %10854 = vmatprep.subr.bf16.mxu0 0
    %10855 = vmatpush1.bf16.msra.mxu0 0
    %10856 = vmatprep.subr.bf16.mxu0 %v10617
    %10857 = vmatpush1.bf16.msra.mxu0 %v10616
    %10858 = vmatprep.subr.bf16.mxu0 %v10615
    %10859 = vmatpush1.bf16.msra.mxu0 %v10614
    %10860 = vmatprep.subr.bf16.mxu0 0
    %10861 = vmatpush2.bf16.msra.mxu0 0
    %10862 = vmatprep.subr.bf16.mxu0 0
    %10863 = vmatpush2.bf16.msra.mxu0 0
    %10864 = vmatprep.subr.bf16.mxu0 0
    %10865 = vmatpush2.bf16.msra.mxu0 0
    %10866 = vmatprep.subr.bf16.mxu0 0
    %10867 = vmatpush2.bf16.msra.mxu0 0
    %10868 = vmatprep.subr.bf16.mxu0 0
    %10869 = vmatpush2.bf16.msra.mxu0 0
    %10870 = vmatprep.subr.bf16.mxu0 0
    %10871 = vmatpush2.bf16.msra.mxu0 0
    %10872 = vmatprep.subr.bf16.mxu0 0
    %10873 = vmatpush2.bf16.msra.mxu0 0
    %10874 = vmatprep.subr.bf16.mxu0 0
    %10875 = vmatpush2.bf16.msra.mxu0 0
    %10876 = vmatprep.mubr.bf16.mxu0 0
    %10877 = vmatmul.mubr.bf16.gmra.mxu0 %v10687
    %v10878 = vpop.f32.mrf.mxu0
    %v10879 = vadd.f32 %v10806, %v10878
    %v10880 = vpop.f32.mrf.mxu0
    %v10881 = vadd.f32 %v10808, %v10880
    %v10882 = vpop.f32.mrf.mxu0
    %v10883 = vadd.f32 %v10810, %v10882
    %v10884 = vpop.f32.mrf.mxu0
    %v10885 = vadd.f32 %v10812, %v10884
    %10886 = vmatprep.mubr.bf16.mxu0 0
    %10887 = vmatmul.mubr.bf16.gmra.mxu0 %v10690
    %v10888 = vpop.f32.mrf.mxu0
    %v10889 = vadd.f32 %v10816, %v10888
    %v10890 = vpop.f32.mrf.mxu0
    %v10891 = vadd.f32 %v10818, %v10890
    %v10892 = vpop.f32.mrf.mxu0
    %v10893 = vadd.f32 %v10820, %v10892
    %v10894 = vpop.f32.mrf.mxu0
    %v10895 = vadd.f32 %v10822, %v10894
    %10896 = vmatprep.mubr.bf16.mxu0 0
    %10897 = vmatmul.mubr.bf16.gmra.mxu0 %v10693
    %v10898 = vpop.f32.mrf.mxu0
    %v10899 = vadd.f32 %v10826, %v10898
    %v10900 = vpop.f32.mrf.mxu0
    %v10901 = vadd.f32 %v10828, %v10900
    %v10902 = vpop.f32.mrf.mxu0
    %v10903 = vadd.f32 %v10830, %v10902
    %v10904 = vpop.f32.mrf.mxu0
    %v10905 = vadd.f32 %v10832, %v10904
    %10906 = vmatprep.mubr.bf16.mxu0 0
    %10907 = vmatmul.mubr.bf16.gmra.mxu0 %v10696
    %v10908 = vpop.f32.mrf.mxu0
    %v10909 = vadd.f32 %v10836, %v10908
    %v10910 = vpop.f32.mrf.mxu0
    %v10911 = vadd.f32 %v10838, %v10910
    %v10912 = vpop.f32.mrf.mxu0
    %v10913 = vadd.f32 %v10840, %v10912
    %v10914 = vpop.f32.mrf.mxu0
    %v10915 = vadd.f32 %v10842, %v10914
    %10916 = vdwg.mxu0
    %s10917 = scalar_lea.vmem [#allocation2], 544
    %v10918 = vld [vmem:[%s10917] sm:$0xff]
    %v10919 = vld [vmem:[%s10917 + $0x8] sm:$0xff]
    %v10920 = vld [vmem:[%s10917 + $0x10] sm:$0xff]
    %v10921 = vld [vmem:[%s10917 + $0x18] sm:$0xff]
    %v10922 = vld [vmem:[%s10917 + $0x20] sm:$0xff]
    %v10923 = vld [vmem:[%s10917 + $0x28] sm:$0xff]
    %v10924 = vld [vmem:[%s10917 + $0x30] sm:$0xff]
    %v10925 = vld [vmem:[%s10917 + $0x38] sm:$0xff]
    %v10926 = vld [vmem:[%s10917 + $0x40] sm:$0xff]
    %v10927 = vld [vmem:[%s10917 + $0x48] sm:$0xff]
    %v10928 = vld [vmem:[%s10917 + $0x50] sm:$0xff]
    %v10929 = vld [vmem:[%s10917 + $0x58] sm:$0xff]
    %v10930 = vld [vmem:[%s10917 + $0x60] sm:$0xff]
    %v10931 = vld [vmem:[%s10917 + $0x68] sm:$0xff]
    %v10932 = vld [vmem:[%s10917 + $0x70] sm:$0xff]
    %v10933 = vld [vmem:[%s10917 + $0x78] sm:$0xff]
    %v10934 = vld [vmem:[%s10917 + $0x80] sm:$0xff]
    %v10935 = vld [vmem:[%s10917 + $0x88] sm:$0xff]
    %v10936 = vld [vmem:[%s10917 + $0x90] sm:$0xff]
    %v10937 = vld [vmem:[%s10917 + $0x98] sm:$0xff]
    %v10938 = vld [vmem:[%s10917 + $0xa0] sm:$0xff]
    %v10939 = vld [vmem:[%s10917 + $0xa8] sm:$0xff]
    %v10940 = vld [vmem:[%s10917 + $0xb0] sm:$0xff]
    %v10941 = vld [vmem:[%s10917 + $0xb8] sm:$0xff]
    %v10942 = vld [vmem:[%s10917 + $0xc0] sm:$0xff]
    %v10943 = vld [vmem:[%s10917 + $0xc8] sm:$0xff]
    %v10944 = vld [vmem:[%s10917 + $0xd0] sm:$0xff]
    %v10945 = vld [vmem:[%s10917 + $0xd8] sm:$0xff]
    %v10946 = vld [vmem:[%s10917 + $0xe0] sm:$0xff]
    %v10947 = vld [vmem:[%s10917 + $0xe8] sm:$0xff]
    %v10948 = vld [vmem:[%s10917 + $0xf0] sm:$0xff]
    %v10949 = vld [vmem:[%s10917 + $0xf8] sm:$0xff]
    %v10950 = vld [vmem:[%s10917 + $0x100] sm:$0xff]
    %v10951 = vld [vmem:[%s10917 + $0x108] sm:$0xff]
    %v10952 = vld [vmem:[%s10917 + $0x110] sm:$0xff]
    %v10953 = vld [vmem:[%s10917 + $0x118] sm:$0xff]
    %v10954 = vld [vmem:[%s10917 + $0x120] sm:$0xff]
    %v10955 = vld [vmem:[%s10917 + $0x128] sm:$0xff]
    %v10956 = vld [vmem:[%s10917 + $0x130] sm:$0xff]
    %v10957 = vld [vmem:[%s10917 + $0x138] sm:$0xff]
    %v10958 = vld [vmem:[%s10917 + $0x140] sm:$0xff]
    %v10959 = vld [vmem:[%s10917 + $0x148] sm:$0xff]
    %v10960 = vld [vmem:[%s10917 + $0x150] sm:$0xff]
    %v10961 = vld [vmem:[%s10917 + $0x158] sm:$0xff]
    %v10962 = vld [vmem:[%s10917 + $0x160] sm:$0xff]
    %v10963 = vld [vmem:[%s10917 + $0x168] sm:$0xff]
    %v10964 = vld [vmem:[%s10917 + $0x170] sm:$0xff]
    %v10965 = vld [vmem:[%s10917 + $0x178] sm:$0xff]
    %v10966 = vld [vmem:[%s10917 + $0x180] sm:$0xff]
    %v10967 = vld [vmem:[%s10917 + $0x188] sm:$0xff]
    %v10968 = vld [vmem:[%s10917 + $0x190] sm:$0xff]
    %v10969 = vld [vmem:[%s10917 + $0x198] sm:$0xff]
    %v10970 = vld [vmem:[%s10917 + $0x1a0] sm:$0xff]
    %v10971 = vld [vmem:[%s10917 + $0x1a8] sm:$0xff]
    %v10972 = vld [vmem:[%s10917 + $0x1b0] sm:$0xff]
    %v10973 = vld [vmem:[%s10917 + $0x1b8] sm:$0xff]
    %v10974 = vld [vmem:[%s10917 + $0x1c0] sm:$0xff]
    %v10975 = vld [vmem:[%s10917 + $0x1c8] sm:$0xff]
    %v10976 = vld [vmem:[%s10917 + $0x1d0] sm:$0xff]
    %v10977 = vld [vmem:[%s10917 + $0x1d8] sm:$0xff]
    %v10978 = vld [vmem:[%s10917 + $0x1e0] sm:$0xff]
    %v10979 = vld [vmem:[%s10917 + $0x1e8] sm:$0xff]
    %v10980 = vld [vmem:[%s10917 + $0x1f0] sm:$0xff]
    %v10981 = vld [vmem:[%s10917 + $0x1f8] sm:$0xff]
    %v10982 = vld [vmem:[%s10917 + $0x200] sm:$0xff]
    %v10983 = vld [vmem:[%s10917 + $0x208] sm:$0xff]
    %v10984 = vld [vmem:[%s10917 + $0x210] sm:$0xff]
    %v10985 = vld [vmem:[%s10917 + $0x218] sm:$0xff]
    %v11054 = vunpack.c.l.b16 %v10918
    %v11055 = vunpack.c.h.b16 %v10918
    %v11056 = vunpack.c.l.b16 %v10919
    %v11057 = vunpack.c.h.b16 %v10919
    %v11058 = vunpack.c.l.b16 %v10920
    %v11059 = vunpack.c.h.b16 %v10920
    %v11060 = vunpack.c.l.b16 %v10921
    %v11061 = vunpack.c.h.b16 %v10921
    %v11062 = vunpack.c.l.b16 %v10922
    %v11063 = vunpack.c.h.b16 %v10922
    %v11064 = vunpack.c.l.b16 %v10923
    %v11065 = vunpack.c.h.b16 %v10923
    %v11066 = vunpack.c.l.b16 %v10924
    %v11067 = vunpack.c.h.b16 %v10924
    %v11068 = vunpack.c.l.b16 %v10925
    %v11069 = vunpack.c.h.b16 %v10925
    %v11070 = vunpack.c.l.b16 %v10926
    %v11071 = vunpack.c.h.b16 %v10926
    %v11072 = vunpack.c.l.b16 %v10927
    %v11073 = vunpack.c.h.b16 %v10927
    %v11074 = vunpack.c.l.b16 %v10928
    %v11075 = vunpack.c.h.b16 %v10928
    %v11076 = vunpack.c.l.b16 %v10929
    %v11077 = vunpack.c.h.b16 %v10929
    %v11078 = vunpack.c.l.b16 %v10930
    %v11079 = vunpack.c.h.b16 %v10930
    %v11080 = vunpack.c.l.b16 %v10931
    %v11081 = vunpack.c.h.b16 %v10931
    %v11082 = vunpack.c.l.b16 %v10932
    %v11083 = vunpack.c.h.b16 %v10932
    %v11084 = vunpack.c.l.b16 %v10933
    %v11085 = vunpack.c.h.b16 %v10933
    %v11086 = vunpack.c.l.b16 %v10934
    %v11087 = vunpack.c.h.b16 %v10934
    %v11088 = vunpack.c.l.b16 %v10935
    %v11089 = vunpack.c.h.b16 %v10935
    %v11090 = vunpack.c.l.b16 %v10936
    %v11091 = vunpack.c.h.b16 %v10936
    %v11092 = vunpack.c.l.b16 %v10937
    %v11093 = vunpack.c.h.b16 %v10937
    %v11094 = vunpack.c.l.b16 %v10938
    %v11095 = vunpack.c.h.b16 %v10938
    %v11096 = vunpack.c.l.b16 %v10939
    %v11097 = vunpack.c.h.b16 %v10939
    %v11098 = vunpack.c.l.b16 %v10940
    %v11099 = vunpack.c.h.b16 %v10940
    %v11100 = vunpack.c.l.b16 %v10941
    %v11101 = vunpack.c.h.b16 %v10941
    %v11102 = vunpack.c.l.b16 %v10942
    %v11103 = vunpack.c.h.b16 %v10942
    %v11104 = vunpack.c.l.b16 %v10943
    %v11105 = vunpack.c.h.b16 %v10943
    %v11106 = vunpack.c.l.b16 %v10944
    %v11107 = vunpack.c.h.b16 %v10944
    %v11108 = vunpack.c.l.b16 %v10945
    %v11109 = vunpack.c.h.b16 %v10945
    %v11110 = vunpack.c.l.b16 %v10946
    %v11111 = vunpack.c.h.b16 %v10946
    %v11112 = vunpack.c.l.b16 %v10947
    %v11113 = vunpack.c.h.b16 %v10947
    %v11114 = vunpack.c.l.b16 %v10948
    %v11115 = vunpack.c.h.b16 %v10948
    %v11116 = vunpack.c.l.b16 %v10949
    %v11117 = vunpack.c.h.b16 %v10949
    %v11118 = vunpack.c.l.b16 %v10950
    %v11119 = vunpack.c.h.b16 %v10950
    %v11120 = vunpack.c.l.b16 %v10951
    %v11121 = vunpack.c.h.b16 %v10951
    %v11122 = vunpack.c.l.b16 %v10952
    %v11123 = vunpack.c.h.b16 %v10952
    %v11124 = vunpack.c.l.b16 %v10953
    %v11125 = vunpack.c.h.b16 %v10953
    %v11126 = vunpack.c.l.b16 %v10954
    %v11127 = vunpack.c.h.b16 %v10954
    %v11128 = vunpack.c.l.b16 %v10955
    %v11129 = vunpack.c.h.b16 %v10955
    %v11130 = vunpack.c.l.b16 %v10956
    %v11131 = vunpack.c.h.b16 %v10956
    %v11132 = vunpack.c.l.b16 %v10957
    %v11133 = vunpack.c.h.b16 %v10957
    %v11134 = vunpack.c.l.b16 %v10958
    %v11135 = vunpack.c.h.b16 %v10958
    %v11136 = vunpack.c.l.b16 %v10959
    %v11137 = vunpack.c.h.b16 %v10959
    %v11138 = vunpack.c.l.b16 %v10960
    %v11139 = vunpack.c.h.b16 %v10960
    %v11140 = vunpack.c.l.b16 %v10961
    %v11141 = vunpack.c.h.b16 %v10961
    %v11142 = vunpack.c.l.b16 %v10962
    %v11143 = vunpack.c.h.b16 %v10962
    %v11144 = vunpack.c.l.b16 %v10963
    %v11145 = vunpack.c.h.b16 %v10963
    %v11146 = vunpack.c.l.b16 %v10964
    %v11147 = vunpack.c.h.b16 %v10964
    %v11148 = vunpack.c.l.b16 %v10965
    %v11149 = vunpack.c.h.b16 %v10965
    %v11150 = vunpack.c.l.b16 %v10966
    %v11151 = vunpack.c.h.b16 %v10966
    %v11152 = vunpack.c.l.b16 %v10967
    %v11153 = vunpack.c.h.b16 %v10967
    %v11154 = vunpack.c.l.b16 %v10968
    %v11155 = vunpack.c.h.b16 %v10968
    %v11156 = vunpack.c.l.b16 %v10969
    %v11157 = vunpack.c.h.b16 %v10969
    %v11158 = vunpack.c.l.b16 %v10970
    %v11159 = vunpack.c.h.b16 %v10970
    %v11160 = vunpack.c.l.b16 %v10971
    %v11161 = vunpack.c.h.b16 %v10971
    %v11162 = vunpack.c.l.b16 %v10972
    %v11163 = vunpack.c.h.b16 %v10972
    %v11164 = vunpack.c.l.b16 %v10973
    %v11165 = vunpack.c.h.b16 %v10973
    %v11166 = vunpack.c.l.b16 %v10974
    %v11167 = vunpack.c.h.b16 %v10974
    %v11168 = vunpack.c.l.b16 %v10975
    %v11169 = vunpack.c.h.b16 %v10975
    %v11170 = vunpack.c.l.b16 %v10976
    %v11171 = vunpack.c.h.b16 %v10976
    %v11172 = vunpack.c.l.b16 %v10977
    %v11173 = vunpack.c.h.b16 %v10977
    %v11174 = vunpack.c.l.b16 %v10978
    %v11175 = vunpack.c.h.b16 %v10978
    %v11176 = vunpack.c.l.b16 %v10979
    %v11177 = vunpack.c.h.b16 %v10979
    %v11178 = vunpack.c.l.b16 %v10980
    %v11179 = vunpack.c.h.b16 %v10980
    %v11180 = vunpack.c.l.b16 %v10981
    %v11181 = vunpack.c.h.b16 %v10981
    %v11182 = vunpack.c.l.b16 %v10982
    %v11183 = vunpack.c.h.b16 %v10982
    %v11184 = vunpack.c.l.b16 %v10983
    %v11185 = vunpack.c.h.b16 %v10983
    %v11186 = vunpack.c.l.b16 %v10984
    %v11187 = vunpack.c.h.b16 %v10984
    %v11188 = vunpack.c.l.b16 %v10985
    %v11189 = vunpack.c.h.b16 %v10985
    %v11190 = vpack.c.b16 %v11056, %v11054
    %v11191 = vpack.c.b16 %v11057, %v11055
    %v11192 = vpack.c.b16 %v11060, %v11058
    %v11193 = vpack.c.b16 %v11061, %v11059
    %v11194 = vpack.c.b16 %v11064, %v11062
    %v11195 = vpack.c.b16 %v11065, %v11063
    %v11196 = vpack.c.b16 %v11068, %v11066
    %v11197 = vpack.c.b16 %v11069, %v11067
    %v11198 = vpack.c.b16 %v11072, %v11070
    %v11199 = vpack.c.b16 %v11073, %v11071
    %v11200 = vpack.c.b16 %v11076, %v11074
    %v11201 = vpack.c.b16 %v11077, %v11075
    %v11202 = vpack.c.b16 %v11080, %v11078
    %v11203 = vpack.c.b16 %v11081, %v11079
    %v11204 = vpack.c.b16 %v11084, %v11082
    %v11205 = vpack.c.b16 %v11085, %v11083
    %v11206 = vpack.c.b16 %v11088, %v11086
    %v11207 = vpack.c.b16 %v11089, %v11087
    %v11208 = vpack.c.b16 %v11092, %v11090
    %v11209 = vpack.c.b16 %v11093, %v11091
    %v11210 = vpack.c.b16 %v11096, %v11094
    %v11211 = vpack.c.b16 %v11097, %v11095
    %v11212 = vpack.c.b16 %v11100, %v11098
    %v11213 = vpack.c.b16 %v11101, %v11099
    %v11214 = vpack.c.b16 %v11104, %v11102
    %v11215 = vpack.c.b16 %v11105, %v11103
    %v11216 = vpack.c.b16 %v11108, %v11106
    %v11217 = vpack.c.b16 %v11109, %v11107
    %v11218 = vpack.c.b16 %v11112, %v11110
    %v11219 = vpack.c.b16 %v11113, %v11111
    %v11220 = vpack.c.b16 %v11116, %v11114
    %v11221 = vpack.c.b16 %v11117, %v11115
    %v11222 = vpack.c.b16 %v11120, %v11118
    %v11223 = vpack.c.b16 %v11121, %v11119
    %v11224 = vpack.c.b16 %v11124, %v11122
    %v11225 = vpack.c.b16 %v11125, %v11123
    %v11226 = vpack.c.b16 %v11128, %v11126
    %v11227 = vpack.c.b16 %v11129, %v11127
    %v11228 = vpack.c.b16 %v11132, %v11130
    %v11229 = vpack.c.b16 %v11133, %v11131
    %v11230 = vpack.c.b16 %v11136, %v11134
    %v11231 = vpack.c.b16 %v11137, %v11135
    %v11232 = vpack.c.b16 %v11140, %v11138
    %v11233 = vpack.c.b16 %v11141, %v11139
    %v11234 = vpack.c.b16 %v11144, %v11142
    %v11235 = vpack.c.b16 %v11145, %v11143
    %v11236 = vpack.c.b16 %v11148, %v11146
    %v11237 = vpack.c.b16 %v11149, %v11147
    %v11238 = vpack.c.b16 %v11152, %v11150
    %v11239 = vpack.c.b16 %v11153, %v11151
    %v11240 = vpack.c.b16 %v11156, %v11154
    %v11241 = vpack.c.b16 %v11157, %v11155
    %v11242 = vpack.c.b16 %v11160, %v11158
    %v11243 = vpack.c.b16 %v11161, %v11159
    %v11244 = vpack.c.b16 %v11164, %v11162
    %v11245 = vpack.c.b16 %v11165, %v11163
    %v11246 = vpack.c.b16 %v11168, %v11166
    %v11247 = vpack.c.b16 %v11169, %v11167
    %v11248 = vpack.c.b16 %v11172, %v11170
    %v11249 = vpack.c.b16 %v11173, %v11171
    %v11250 = vpack.c.b16 %v11176, %v11174
    %v11251 = vpack.c.b16 %v11177, %v11175
    %v11252 = vpack.c.b16 %v11180, %v11178
    %v11253 = vpack.c.b16 %v11181, %v11179
    %v11254 = vpack.c.b16 %v11184, %v11182
    %v11255 = vpack.c.b16 %v11185, %v11183
    %v11256 = vpack.c.b16 %v11188, %v11186
    %v11257 = vpack.c.b16 %v11189, %v11187
    %11326 = vmatprep.subr.bf16.mxu0 %v11205
    %11327 = vmatpush1.bf16.msra.mxu0 %v11204
    %11328 = vmatprep.subr.bf16.mxu0 %v11203
    %11329 = vmatpush1.bf16.msra.mxu0 %v11202
    %11330 = vmatprep.subr.bf16.mxu0 %v11201
    %11331 = vmatpush1.bf16.msra.mxu0 %v11200
    %11332 = vmatprep.subr.bf16.mxu0 %v11199
    %11333 = vmatpush1.bf16.msra.mxu0 %v11198
    %11334 = vmatprep.subr.bf16.mxu0 %v11197
    %11335 = vmatpush1.bf16.msra.mxu0 %v11196
    %11336 = vmatprep.subr.bf16.mxu0 %v11195
    %11337 = vmatpush1.bf16.msra.mxu0 %v11194
    %11338 = vmatprep.subr.bf16.mxu0 %v11193
    %11339 = vmatpush1.bf16.msra.mxu0 %v11192
    %11340 = vmatprep.subr.bf16.mxu0 %v11191
    %11341 = vmatpush1.bf16.msra.mxu0 %v11190
    %11342 = vmatprep.subr.bf16.mxu0 %v11221
    %11343 = vmatpush2.bf16.msra.mxu0 %v11220
    %11344 = vmatprep.subr.bf16.mxu0 %v11219
    %11345 = vmatpush2.bf16.msra.mxu0 %v11218
    %11346 = vmatprep.subr.bf16.mxu0 %v11217
    %11347 = vmatpush2.bf16.msra.mxu0 %v11216
    %11348 = vmatprep.subr.bf16.mxu0 %v11215
    %11349 = vmatpush2.bf16.msra.mxu0 %v11214
    %11350 = vmatprep.subr.bf16.mxu0 %v11213
    %11351 = vmatpush2.bf16.msra.mxu0 %v11212
    %11352 = vmatprep.subr.bf16.mxu0 %v11211
    %11353 = vmatpush2.bf16.msra.mxu0 %v11210
    %11354 = vmatprep.subr.bf16.mxu0 %v11209
    %11355 = vmatpush2.bf16.msra.mxu0 %v11208
    %11356 = vmatprep.subr.bf16.mxu0 %v11207
    %11357 = vmatpush2.bf16.msra.mxu0 %v11206
    %11358 = vmatprep.mubr.bf16.mxu0 %v10259
    %11359 = vmatmul.mubr.bf16.gmra.mxu0 %v10258
    %v11360 = vpop.f32.mrf.mxu0
    %v11361 = vadd.f32 0.0, %v11360
    %v11362 = vpop.f32.mrf.mxu0
    %v11363 = vadd.f32 0.0, %v11362
    %v11364 = vpop.f32.mrf.mxu0
    %v11365 = vadd.f32 0.0, %v11364
    %v11366 = vpop.f32.mrf.mxu0
    %v11367 = vadd.f32 0.0, %v11366
    %11368 = vmatprep.mubr.bf16.mxu0 %v10264
    %11369 = vmatmul.mubr.bf16.gmra.mxu0 %v10263
    %v11370 = vpop.f32.mrf.mxu0
    %v11371 = vadd.f32 0.0, %v11370
    %v11372 = vpop.f32.mrf.mxu0
    %v11373 = vadd.f32 0.0, %v11372
    %v11374 = vpop.f32.mrf.mxu0
    %v11375 = vadd.f32 0.0, %v11374
    %v11376 = vpop.f32.mrf.mxu0
    %v11377 = vadd.f32 0.0, %v11376
    %11378 = vmatprep.mubr.bf16.mxu0 %v10269
    %11379 = vmatmul.mubr.bf16.gmra.mxu0 %v10268
    %v11380 = vpop.f32.mrf.mxu0
    %v11381 = vadd.f32 0.0, %v11380
    %v11382 = vpop.f32.mrf.mxu0
    %v11383 = vadd.f32 0.0, %v11382
    %v11384 = vpop.f32.mrf.mxu0
    %v11385 = vadd.f32 0.0, %v11384
    %v11386 = vpop.f32.mrf.mxu0
    %v11387 = vadd.f32 0.0, %v11386
    %11388 = vmatprep.mubr.bf16.mxu0 %v10274
    %11389 = vmatmul.mubr.bf16.gmra.mxu0 %v10273
    %v11390 = vpop.f32.mrf.mxu0
    %v11391 = vadd.f32 0.0, %v11390
    %v11392 = vpop.f32.mrf.mxu0
    %v11393 = vadd.f32 0.0, %v11392
    %v11394 = vpop.f32.mrf.mxu0
    %v11395 = vadd.f32 0.0, %v11394
    %v11396 = vpop.f32.mrf.mxu0
    %v11397 = vadd.f32 0.0, %v11396
    %11398 = vdwg.mxu0
    %11399 = vmatprep.subr.bf16.mxu0 %v11237
    %11400 = vmatpush1.bf16.msra.mxu0 %v11236
    %11401 = vmatprep.subr.bf16.mxu0 %v11235
    %11402 = vmatpush1.bf16.msra.mxu0 %v11234
    %11403 = vmatprep.subr.bf16.mxu0 %v11233
    %11404 = vmatpush1.bf16.msra.mxu0 %v11232
    %11405 = vmatprep.subr.bf16.mxu0 %v11231
    %11406 = vmatpush1.bf16.msra.mxu0 %v11230
    %11407 = vmatprep.subr.bf16.mxu0 %v11229
    %11408 = vmatpush1.bf16.msra.mxu0 %v11228
    %11409 = vmatprep.subr.bf16.mxu0 %v11227
    %11410 = vmatpush1.bf16.msra.mxu0 %v11226
    %11411 = vmatprep.subr.bf16.mxu0 %v11225
    %11412 = vmatpush1.bf16.msra.mxu0 %v11224
    %11413 = vmatprep.subr.bf16.mxu0 %v11223
    %11414 = vmatpush1.bf16.msra.mxu0 %v11222
    %11415 = vmatprep.subr.bf16.mxu0 %v11253
    %11416 = vmatpush2.bf16.msra.mxu0 %v11252
    %11417 = vmatprep.subr.bf16.mxu0 %v11251
    %11418 = vmatpush2.bf16.msra.mxu0 %v11250
    %11419 = vmatprep.subr.bf16.mxu0 %v11249
    %11420 = vmatpush2.bf16.msra.mxu0 %v11248
    %11421 = vmatprep.subr.bf16.mxu0 %v11247
    %11422 = vmatpush2.bf16.msra.mxu0 %v11246
    %11423 = vmatprep.subr.bf16.mxu0 %v11245
    %11424 = vmatpush2.bf16.msra.mxu0 %v11244
    %11425 = vmatprep.subr.bf16.mxu0 %v11243
    %11426 = vmatpush2.bf16.msra.mxu0 %v11242
    %11427 = vmatprep.subr.bf16.mxu0 %v11241
    %11428 = vmatpush2.bf16.msra.mxu0 %v11240
    %11429 = vmatprep.subr.bf16.mxu0 %v11239
    %11430 = vmatpush2.bf16.msra.mxu0 %v11238
    %11431 = vmatprep.mubr.bf16.mxu0 %v10261
    %11432 = vmatmul.mubr.bf16.gmra.mxu0 %v10260
    %v11433 = vpop.f32.mrf.mxu0
    %v11434 = vadd.f32 %v11361, %v11433
    %v11435 = vpop.f32.mrf.mxu0
    %v11436 = vadd.f32 %v11363, %v11435
    %v11437 = vpop.f32.mrf.mxu0
    %v11438 = vadd.f32 %v11365, %v11437
    %v11439 = vpop.f32.mrf.mxu0
    %v11440 = vadd.f32 %v11367, %v11439
    %11441 = vmatprep.mubr.bf16.mxu0 %v10266
    %11442 = vmatmul.mubr.bf16.gmra.mxu0 %v10265
    %v11443 = vpop.f32.mrf.mxu0
    %v11444 = vadd.f32 %v11371, %v11443
    %v11445 = vpop.f32.mrf.mxu0
    %v11446 = vadd.f32 %v11373, %v11445
    %v11447 = vpop.f32.mrf.mxu0
    %v11448 = vadd.f32 %v11375, %v11447
    %v11449 = vpop.f32.mrf.mxu0
    %v11450 = vadd.f32 %v11377, %v11449
    %11451 = vmatprep.mubr.bf16.mxu0 %v10271
    %11452 = vmatmul.mubr.bf16.gmra.mxu0 %v10270
    %v11453 = vpop.f32.mrf.mxu0
    %v11454 = vadd.f32 %v11381, %v11453
    %v11455 = vpop.f32.mrf.mxu0
    %v11456 = vadd.f32 %v11383, %v11455
    %v11457 = vpop.f32.mrf.mxu0
    %v11458 = vadd.f32 %v11385, %v11457
    %v11459 = vpop.f32.mrf.mxu0
    %v11460 = vadd.f32 %v11387, %v11459
    %11461 = vmatprep.mubr.bf16.mxu0 %v10276
    %11462 = vmatmul.mubr.bf16.gmra.mxu0 %v10275
    %v11463 = vpop.f32.mrf.mxu0
    %v11464 = vadd.f32 %v11391, %v11463
    %v11465 = vpop.f32.mrf.mxu0
    %v11466 = vadd.f32 %v11393, %v11465
    %v11467 = vpop.f32.mrf.mxu0
    %v11468 = vadd.f32 %v11395, %v11467
    %v11469 = vpop.f32.mrf.mxu0
    %v11470 = vadd.f32 %v11397, %v11469
    %11471 = vdwg.mxu0
    %11472 = vmatprep.subr.bf16.mxu0 0
    %11473 = vmatpush1.bf16.msra.mxu0 0
    %11474 = vmatprep.subr.bf16.mxu0 0
    %11475 = vmatpush1.bf16.msra.mxu0 0
    %11476 = vmatprep.subr.bf16.mxu0 0
    %11477 = vmatpush1.bf16.msra.mxu0 0
    %11478 = vmatprep.subr.bf16.mxu0 0
    %11479 = vmatpush1.bf16.msra.mxu0 0
    %11480 = vmatprep.subr.bf16.mxu0 0
    %11481 = vmatpush1.bf16.msra.mxu0 0
    %11482 = vmatprep.subr.bf16.mxu0 0
    %11483 = vmatpush1.bf16.msra.mxu0 0
    %11484 = vmatprep.subr.bf16.mxu0 %v11257
    %11485 = vmatpush1.bf16.msra.mxu0 %v11256
    %11486 = vmatprep.subr.bf16.mxu0 %v11255
    %11487 = vmatpush1.bf16.msra.mxu0 %v11254
    %11488 = vmatprep.subr.bf16.mxu0 0
    %11489 = vmatpush2.bf16.msra.mxu0 0
    %11490 = vmatprep.subr.bf16.mxu0 0
    %11491 = vmatpush2.bf16.msra.mxu0 0
    %11492 = vmatprep.subr.bf16.mxu0 0
    %11493 = vmatpush2.bf16.msra.mxu0 0
    %11494 = vmatprep.subr.bf16.mxu0 0
    %11495 = vmatpush2.bf16.msra.mxu0 0
    %11496 = vmatprep.subr.bf16.mxu0 0
    %11497 = vmatpush2.bf16.msra.mxu0 0
    %11498 = vmatprep.subr.bf16.mxu0 0
    %11499 = vmatpush2.bf16.msra.mxu0 0
    %11500 = vmatprep.subr.bf16.mxu0 0
    %11501 = vmatpush2.bf16.msra.mxu0 0
    %11502 = vmatprep.subr.bf16.mxu0 0
    %11503 = vmatpush2.bf16.msra.mxu0 0
    %11504 = vmatprep.mubr.bf16.mxu0 0
    %11505 = vmatmul.mubr.bf16.gmra.mxu0 %v10687
    %v11506 = vpop.f32.mrf.mxu0
    %v11507 = vadd.f32 %v11434, %v11506
    %v11508 = vpop.f32.mrf.mxu0
    %v11509 = vadd.f32 %v11436, %v11508
    %v11510 = vpop.f32.mrf.mxu0
    %v11511 = vadd.f32 %v11438, %v11510
    %v11512 = vpop.f32.mrf.mxu0
    %v11513 = vadd.f32 %v11440, %v11512
    %11514 = vmatprep.mubr.bf16.mxu0 0
    %11515 = vmatmul.mubr.bf16.gmra.mxu0 %v10690
    %v11516 = vpop.f32.mrf.mxu0
    %v11517 = vadd.f32 %v11444, %v11516
    %v11518 = vpop.f32.mrf.mxu0
    %v11519 = vadd.f32 %v11446, %v11518
    %v11520 = vpop.f32.mrf.mxu0
    %v11521 = vadd.f32 %v11448, %v11520
    %v11522 = vpop.f32.mrf.mxu0
    %v11523 = vadd.f32 %v11450, %v11522
    %11524 = vmatprep.mubr.bf16.mxu0 0
    %11525 = vmatmul.mubr.bf16.gmra.mxu0 %v10693
    %v11526 = vpop.f32.mrf.mxu0
    %v11527 = vadd.f32 %v11454, %v11526
    %v11528 = vpop.f32.mrf.mxu0
    %v11529 = vadd.f32 %v11456, %v11528
    %v11530 = vpop.f32.mrf.mxu0
    %v11531 = vadd.f32 %v11458, %v11530
    %v11532 = vpop.f32.mrf.mxu0
    %v11533 = vadd.f32 %v11460, %v11532
    %11534 = vmatprep.mubr.bf16.mxu0 0
    %11535 = vmatmul.mubr.bf16.gmra.mxu0 %v10696
    %v11536 = vpop.f32.mrf.mxu0
    %v11537 = vadd.f32 %v11464, %v11536
    %v11538 = vpop.f32.mrf.mxu0
    %v11539 = vadd.f32 %v11466, %v11538
    %v11540 = vpop.f32.mrf.mxu0
    %v11541 = vadd.f32 %v11468, %v11540
    %v11542 = vpop.f32.mrf.mxu0
    %v11543 = vadd.f32 %v11470, %v11542
    %11544 = vdwg.mxu0
    %v11545 = vmax.f32 %v10879, %v11507
    %v11546 = vmax.f32 %v10881, %v11509
    %v11547 = vmax.f32 %v10883, %v11511
    %v11548 = vmax.f32 %v10885, %v11513
    %v11549 = vmax.f32 %v10889, %v11517
    %v11550 = vmax.f32 %v10891, %v11519
    %v11551 = vmax.f32 %v10893, %v11521
    %v11552 = vmax.f32 %v10895, %v11523
    %v11553 = vmax.f32 %v10899, %v11527
    %v11554 = vmax.f32 %v10901, %v11529
    %v11555 = vmax.f32 %v10903, %v11531
    %v11556 = vmax.f32 %v10905, %v11533
    %v11557 = vmax.f32 %v10909, %v11537
    %v11558 = vmax.f32 %v10911, %v11539
    %v11559 = vmax.f32 %v10913, %v11541
    %v11560 = vmax.f32 %v10915, %v11543
    %v11561 = vpack.c.bf16 %v11547, %v11545
    %v11562 = vpack.c.bf16 %v11548, %v11546
    %v11563 = vpack.c.bf16 %v11551, %v11549
    %v11564 = vpack.c.bf16 %v11552, %v11550
    %v11565 = vpack.c.bf16 %v11555, %v11553
    %v11566 = vpack.c.bf16 %v11556, %v11554
    %v11567 = vpack.c.bf16 %v11559, %v11557
    %v11568 = vpack.c.bf16 %v11560, %v11558
    %v11577 = vunpack.c.l.b16 %v11561
    %v11578 = vunpack.c.l.b16 %v11562
    %v11579 = vunpack.c.h.b16 %v11561
    %v11580 = vunpack.c.h.b16 %v11562
    %v11581 = vunpack.c.l.b16 %v11563
    %v11582 = vunpack.c.l.b16 %v11564
    %v11583 = vunpack.c.h.b16 %v11563
    %v11584 = vunpack.c.h.b16 %v11564
    %v11585 = vunpack.c.l.b16 %v11565
    %v11586 = vunpack.c.l.b16 %v11566
    %v11587 = vunpack.c.h.b16 %v11565
    %v11588 = vunpack.c.h.b16 %v11566
    %v11589 = vunpack.c.l.b16 %v11567
    %v11590 = vunpack.c.l.b16 %v11568
    %v11591 = vunpack.c.h.b16 %v11567
    %v11592 = vunpack.c.h.b16 %v11568
    %v11593 = vpack.c.b16 %v11578, %v11577
    %v11594 = vpack.c.b16 %v11580, %v11579
    %v11595 = vpack.c.b16 %v11582, %v11581
    %v11596 = vpack.c.b16 %v11584, %v11583
    %v11597 = vpack.c.b16 %v11586, %v11585
    %v11598 = vpack.c.b16 %v11588, %v11587
    %v11599 = vpack.c.b16 %v11590, %v11589
    %v11600 = vpack.c.b16 %v11592, %v11591
    %11609 = vst [vmem:[%s9] sm:$0xff] %v11593
    %11610 = vst [vmem:[%s9 + $0x8] sm:$0xff] %v11594
    %11611 = vst [vmem:[%s9 + $0x10] sm:$0xff] %v11595
    %11612 = vst [vmem:[%s9 + $0x18] sm:$0xff] %v11596
    %11613 = vst [vmem:[%s9 + $0x20] sm:$0xff] %v11597
    %11614 = vst [vmem:[%s9 + $0x28] sm:$0xff] %v11598
    %11615 = vst [vmem:[%s9 + $0x30] sm:$0xff] %v11599
    %11616 = vst [vmem:[%s9 + $0x38] sm:$0xff] %v11600
    // Predicated region
    $region42: #{mlp_conv_net_forward.2} parent=1 // pred_check
      _
    $region43: #{mlp_conv_net_forward.2} parent=1 // pred_check_branch
      %11618 = sbr.rel (0) target = $region45
    $region44: #{mlp_conv_net_forward.2} parent=1 // pred_region
      _
    $region45: #{mlp_conv_net_forward.2} parent=1 // pred_fallthru
      _
    // Predicated region
    $region46: #{mlp_conv_net_forward.2} parent=1 // pred_check
      _
    $region47: #{mlp_conv_net_forward.2} parent=1 // pred_check_branch
      %11620 = sbr.rel (0) target = $region49
    $region48: #{mlp_conv_net_forward.2} parent=1 // pred_region
      _
    $region49: #{mlp_conv_net_forward.2} parent=1 // pred_fallthru
      _
    %11621 = vsyncpa [#allocation3], 1

</llo_original>
